<compile_context>
chip_gen: v7x
topology: tpu7x:2x2x1
jax: 0.10.0
libtpu: 0.0.40
codegen_flags: <defaults>
</compile_context>

<pallas_src>
import math
import jax
import jax.numpy as jnp
from jax.experimental import pallas as pl
from jax.experimental.pallas import tpu as pltpu

# ----------------------------- model dimensions ------------------------------
B = 2            # batch
S = 8            # sequence length
H = 32           # hidden size (scaled-down stand-in for 768)
NH = 4           # attention heads
HD = H // NH     # head dim
FFN = 64         # feed-forward inner dim
L = 4            # encoder layers
VOCAB = 100      # vocabulary size
NUM_CLASSES = 2
HEAD_PAD = 128   # lane-dense padded logits width (>= NUM_CLASSES)
D_CAT = 4 * H    # 128 -- concat of last-4 CLS states, conveniently lane-dense


# ------------------------------ kernel helpers --------------------------------
def _layer_norm(x, gamma, beta, eps=1e-5):
    mu = jnp.mean(x, axis=-1, keepdims=True)
    var = jnp.mean((x - mu) * (x - mu), axis=-1, keepdims=True)
    return (x - mu) * jax.lax.rsqrt(var + eps) * gamma + beta


def _gelu(x):
    c = math.sqrt(2.0 / math.pi)
    return 0.5 * x * (1.0 + jnp.tanh(c * (x + 0.044715 * x * x * x)))


# ------------------------- fused encoder + head kernel ------------------------
def fused_xlnet_kernel(h0_ref, mask_ref,
                       wqkv_ref, wo_ref, w1_ref, b1_ref, w2_ref, b2_ref,
                       ln_ref, fcw_ref, out_ref):
    x = h0_ref[...]                       # (B, S, H) f32
    mask_n = mask_ref[...]                # (B*NH, 1, S) f32 additive mask
    scale = 1.0 / math.sqrt(HD)
    BN = B * NH

    cls_tokens = []
    for l in range(L):                    # static unroll; weights stay resident
        wq = wqkv_ref[3 * l + 0]          # (NH, H, HD) bf16
        wk = wqkv_ref[3 * l + 1]
        wv = wqkv_ref[3 * l + 2]
        wo = wo_ref[l]                    # (NH, HD, H) bf16
        w1 = w1_ref[l]                    # (H, FFN)   bf16
        b1 = b1_ref[l]                    # (1, FFN)   f32
        w2 = w2_ref[l]                    # (FFN, H)   bf16
        b2 = b2_ref[l]                    # (1, H)     f32
        ln1g = ln_ref[4 * l + 0]          # (1, H)     f32
        ln1b = ln_ref[4 * l + 1]
        ln2g = ln_ref[4 * l + 2]
        ln2b = ln_ref[4 * l + 3]

        # ---- multi-head self-attention: all (batch, head) pairs in one
        #      batched contraction with leading dim n = B*NH ----
        xb = x.astype(jnp.bfloat16)
        xn = jnp.broadcast_to(xb[:, None], (B, NH, S, H)).reshape(BN, S, H)

        def tile_w(w):                    # (NH, a, b) -> (B*NH, a, b)
            return jnp.broadcast_to(
                w[None], (B,) + w.shape).reshape((BN,) + w.shape[1:])

        q = jnp.einsum('nsh,nhd->nsd', xn, tile_w(wq),
                       preferred_element_type=jnp.float32)
        k = jnp.einsum('nsh,nhd->nsd', xn, tile_w(wk),
                       preferred_element_type=jnp.float32)
        v = jnp.einsum('nsh,nhd->nsd', xn, tile_w(wv),
                       preferred_element_type=jnp.float32)

        s = jnp.einsum('nqd,nkd->nqk',
                       q.astype(jnp.bfloat16), k.astype(jnp.bfloat16),
                       preferred_element_type=jnp.float32) * scale
        s = s + mask_n                                   # (BN, S, S)
        s = s - jnp.max(s, axis=-1, keepdims=True)
        p = jnp.exp(s)
        p = p * pl.reciprocal(jnp.sum(p, axis=-1, keepdims=True), approx=True)

        ctx = jnp.einsum('nqk,nkd->nqd',
                         p.astype(jnp.bfloat16), v.astype(jnp.bfloat16),
                         preferred_element_type=jnp.float32)      # (BN, S, HD)
        # per-head output projection, then reduce over heads (vreg adds)
        ap = jnp.einsum('nsd,ndh->nsh',
                        ctx.astype(jnp.bfloat16), tile_w(wo),
                        preferred_element_type=jnp.float32)       # (BN, S, H)
        ap4 = ap.reshape(B, NH, S, H)
        attn = ap4[:, 0]
        for n in range(1, NH):
            attn = attn + ap4[:, n]                               # (B, S, H)

        h1 = _layer_norm(x + attn, ln1g, ln1b)                    # (B, S, H)

        # ---- feed-forward on the (B*S, H) slab (batch folded into M dim) ----
        h1_2d = h1.reshape(B * S, H)
        ff = jnp.dot(h1_2d.astype(jnp.bfloat16), w1,
                     preferred_element_type=jnp.float32) + b1
        ff = _gelu(ff)
        ff = jnp.dot(ff.astype(jnp.bfloat16), w2,
                     preferred_element_type=jnp.float32) + b2
        x = _layer_norm(h1_2d + ff, ln2g, ln2b).reshape(B, S, H)

        cls_tokens.append(x[:, 0, :])                             # (B, H)

    # MyModel head: concat last-4 hidden states' CLS token -> (B, 4H) = (B,128)
    cls_cat = jnp.concatenate([cls_tokens[-1], cls_tokens[-2],
                               cls_tokens[-3], cls_tokens[-4]], axis=-1)
    # Dropout(p=0.5) is identity in eval mode; Linear is bias-free.
    # fc weight is zero-padded to 128 output lanes (lane-dense store).
    out_ref[...] = jnp.dot(cls_cat.astype(jnp.bfloat16), fcw_ref[...],
                           preferred_element_type=jnp.float32)


# --------------------------------- wrapper -------------------------------------
def _full_spec(shape):
    n = len(shape)
    return pl.BlockSpec(shape, lambda i, n=n: (0,) * n)


@jax.jit
def my_model_forward(packed, input_ids, attn_masks, token_type_ids):
    # Embeddings: plain-JAX gathers (glue outside the kernel).
    h0 = (jnp.take(packed["word_emb"], input_ids, axis=0)
          + jnp.take(packed["seg_emb"], token_type_ids, axis=0)
          + packed["pos_emb"][None, :, :]).astype(jnp.float32)        # (B,S,H)

    # Additive attention mask, pre-broadcast over heads: 0 attend / -1e9 masked.
    mask = (1.0 - attn_masks.astype(jnp.float32)) * -1e9              # (B,S)
    mask_n = jnp.broadcast_to(mask[:, None, None, :],
                              (B, NH, 1, S)).reshape(B * NH, 1, S)

    args = (h0, mask_n, packed["wqkv"], packed["wo"], packed["w1"],
            packed["b1"], packed["w2"], packed["b2"], packed["ln"],
            packed["fc_w_pad"])

    logits_pad = pl.pallas_call(
        fused_xlnet_kernel,
        out_shape=jax.ShapeDtypeStruct((B, HEAD_PAD), jnp.float32),
        grid=(1,),
        in_specs=[_full_spec(a.shape) for a in args],
        out_specs=_full_spec((B, HEAD_PAD)),
        compiler_params=pltpu.CompilerParams(
            dimension_semantics=("arbitrary",)),
    )(*args)
    return logits_pad[:, :NUM_CLASSES]


# ------------------------------ parameter init ---------------------------------
def init_params(key):
    def normal(key, shape, std=0.02):
        return std * jax.random.normal(key, shape, dtype=jnp.float32)

    keys = jax.random.split(key, 4 + 8 * L)
    params = {
        "word_emb": normal(keys[0], (VOCAB, H)),
        "seg_emb":  normal(keys[1], (2, H)),
        "pos_emb":  normal(keys[2], (S, H)),
        "fc_w":     normal(keys[3], (4 * H, NUM_CLASSES)),
        "layers": [],
    }
    for l in range(L):
        k = keys[4 + 8 * l: 4 + 8 * (l + 1)]
        params["layers"].append({
            "wq": normal(k[0], (H, H)), "wk": normal(k[1], (H, H)),
            "wv": normal(k[2], (H, H)), "wo": normal(k[3], (H, H)),
            "ln1g": jnp.ones((1, H), jnp.float32),
            "ln1b": jnp.zeros((1, H), jnp.float32),
            "w1": normal(k[4], (H, FFN)), "b1": jnp.zeros((1, FFN), jnp.float32),
            "w2": normal(k[5], (FFN, H)), "b2": jnp.zeros((1, H), jnp.float32),
            "ln2g": jnp.ones((1, H), jnp.float32),
            "ln2b": jnp.zeros((1, H), jnp.float32),
        })
    return params


def pack_params(params):
    """Stack per-layer weights into (L,...) arrays, split QKV/output-proj
    weights per head, and cast MXU operands to bf16 (f32 accumulation)."""
    def per_head_in(w):          # (H, NH*HD) -> (NH, H, HD)
        return jnp.transpose(w.reshape(H, NH, HD), (1, 0, 2))

    wqkv, wo, w1s, b1s, w2s, b2s, lns = [], [], [], [], [], [], []
    for lp in params["layers"]:
        wqkv += [per_head_in(lp["wq"]), per_head_in(lp["wk"]),
                 per_head_in(lp["wv"])]
        wo.append(lp["wo"].reshape(NH, HD, H))        # rows are head-major
        w1s.append(lp["w1"]); b1s.append(lp["b1"])
        w2s.append(lp["w2"]); b2s.append(lp["b2"])
        lns += [lp["ln1g"], lp["ln1b"], lp["ln2g"], lp["ln2b"]]

    fc_pad = jnp.zeros((D_CAT, HEAD_PAD), jnp.float32)
    fc_pad = fc_pad.at[:, :NUM_CLASSES].set(params["fc_w"])

    return {
        "word_emb": params["word_emb"],
        "seg_emb":  params["seg_emb"],
        "pos_emb":  params["pos_emb"],
        "wqkv": jnp.stack(wqkv).astype(jnp.bfloat16),   # (3L, NH, H, HD)
        "wo":   jnp.stack(wo).astype(jnp.bfloat16),     # (L, NH, HD, H)
        "w1":   jnp.stack(w1s).astype(jnp.bfloat16),    # (L, H, FFN)
        "b1":   jnp.stack(b1s),                         # (L, 1, FFN) f32
        "w2":   jnp.stack(w2s).astype(jnp.bfloat16),    # (L, FFN, H)
        "b2":   jnp.stack(b2s),                         # (L, 1, H)   f32
        "ln":   jnp.stack(lns),                         # (4L, 1, H)  f32
        "fc_w_pad": fc_pad.astype(jnp.bfloat16),        # (4H, 128)
    }


# ----------------------------------- main ---------------------------------------
if __name__ == "__main__":
    key = jax.random.PRNGKey(0)
    pkey, ikey = jax.random.split(key)

    params = init_params(pkey)
    packed = pack_params(params)

    input_ids = jax.random.randint(ikey, (B, S), 0, VOCAB, dtype=jnp.int32)
    attn_masks = jnp.ones((B, S), dtype=jnp.int32).at[:, S - 2:].set(0)  # pad last 2
    token_type_ids = jnp.zeros((B, S), dtype=jnp.int32)

    logits = my_model_forward(packed, input_ids, attn_masks, token_type_ids)
    logits = jax.block_until_ready(logits)

    assert logits.shape == (B, NUM_CLASSES)
    assert bool(jnp.all(jnp.isfinite(logits)))
    # TODO(synk): pretrained 'xlnet-base-cased' weights / relative-position
    # two-stream attention are replaced by a deterministic synthetic encoder of
    # the same structural form; the MyModel head semantics are reproduced exactly.
    print("KERNEL_OK")
</pallas_src>

<mosaic_0001>
module attributes {stable_mosaic.version = 11 : i64} {
  func.func @fused_xlnet_kernel(%arg0: i32, %arg1: memref<2x8x32xf32, #tpu.memory_space<vmem>>, %arg2: memref<8x1x8xf32, #tpu.memory_space<vmem>>, %arg3: memref<12x4x32x8xbf16, #tpu.memory_space<vmem>>, %arg4: memref<4x4x8x32xbf16, #tpu.memory_space<vmem>>, %arg5: memref<4x32x64xbf16, #tpu.memory_space<vmem>>, %arg6: memref<4x1x64xf32, #tpu.memory_space<vmem>>, %arg7: memref<4x64x32xbf16, #tpu.memory_space<vmem>>, %arg8: memref<4x1x32xf32, #tpu.memory_space<vmem>>, %arg9: memref<16x1x32xf32, #tpu.memory_space<vmem>>, %arg10: memref<128x128xbf16, #tpu.memory_space<vmem>>, %arg11: memref<2x128xf32, #tpu.memory_space<vmem>>) attributes {dimension_semantics = [#tpu.dimension_semantics<arbitrary>], iteration_bounds = array<i64: 1>, scalar_prefetch = 0 : i64, scratch_operands = 0 : i64, tpu.core_type = #tpu.core_type<tc>, window_params = [{pipeline_mode = #tpu.pipeline_mode<synchronous>, transform_indices = @transform_0, window_bounds = array<i64: 2, 8, 32>}, {pipeline_mode = #tpu.pipeline_mode<synchronous>, transform_indices = @transform_1, window_bounds = array<i64: 8, 1, 8>}, {pipeline_mode = #tpu.pipeline_mode<synchronous>, transform_indices = @transform_2, window_bounds = array<i64: 12, 4, 32, 8>}, {pipeline_mode = #tpu.pipeline_mode<synchronous>, transform_indices = @transform_3, window_bounds = array<i64: 4, 4, 8, 32>}, {pipeline_mode = #tpu.pipeline_mode<synchronous>, transform_indices = @transform_4, window_bounds = array<i64: 4, 32, 64>}, {pipeline_mode = #tpu.pipeline_mode<synchronous>, transform_indices = @transform_5, window_bounds = array<i64: 4, 1, 64>}, {pipeline_mode = #tpu.pipeline_mode<synchronous>, transform_indices = @transform_6, window_bounds = array<i64: 4, 64, 32>}, {pipeline_mode = #tpu.pipeline_mode<synchronous>, transform_indices = @transform_7, window_bounds = array<i64: 4, 1, 32>}, {pipeline_mode = #tpu.pipeline_mode<synchronous>, transform_indices = @transform_8, window_bounds = array<i64: 16, 1, 32>}, {pipeline_mode = #tpu.pipeline_mode<synchronous>, transform_indices = @transform_9, window_bounds = array<i64: 128, 128>}, {pipeline_mode = #tpu.pipeline_mode<synchronous>, transform_indices = @transform_10, window_bounds = array<i64: 2, 128>}]} {
    %c0 = arith.constant 0 : index
    %c0_0 = arith.constant 0 : index
    %c0_1 = arith.constant 0 : index
    %0 = vector.load %arg1[%c0, %c0_0, %c0_1] : memref<2x8x32xf32, #tpu.memory_space<vmem>>, vector<2x8x32xf32>
    %c0_2 = arith.constant 0 : index
    %c0_3 = arith.constant 0 : index
    %c0_4 = arith.constant 0 : index
    %1 = vector.load %arg2[%c0_2, %c0_3, %c0_4] : memref<8x1x8xf32, #tpu.memory_space<vmem>>, vector<8x1x8xf32>
    %c0_5 = arith.constant 0 : index
    %c0_6 = arith.constant 0 : index
    %c0_7 = arith.constant 0 : index
    %c0_8 = arith.constant 0 : index
    %2 = vector.load %arg3[%c0_5, %c0_6, %c0_7, %c0_8] : memref<12x4x32x8xbf16, #tpu.memory_space<vmem>>, vector<1x4x32x8xbf16>
    %3 = vector.shape_cast %2 : vector<1x4x32x8xbf16> to vector<4x32x8xbf16>
    %c1 = arith.constant 1 : index
    %c0_9 = arith.constant 0 : index
    %c0_10 = arith.constant 0 : index
    %c0_11 = arith.constant 0 : index
    %4 = vector.load %arg3[%c1, %c0_9, %c0_10, %c0_11] : memref<12x4x32x8xbf16, #tpu.memory_space<vmem>>, vector<1x4x32x8xbf16>
    %5 = vector.shape_cast %4 : vector<1x4x32x8xbf16> to vector<4x32x8xbf16>
    %c2 = arith.constant 2 : index
    %c0_12 = arith.constant 0 : index
    %c0_13 = arith.constant 0 : index
    %c0_14 = arith.constant 0 : index
    %6 = vector.load %arg3[%c2, %c0_12, %c0_13, %c0_14] : memref<12x4x32x8xbf16, #tpu.memory_space<vmem>>, vector<1x4x32x8xbf16>
    %7 = vector.shape_cast %6 : vector<1x4x32x8xbf16> to vector<4x32x8xbf16>
    %c0_15 = arith.constant 0 : index
    %c0_16 = arith.constant 0 : index
    %c0_17 = arith.constant 0 : index
    %c0_18 = arith.constant 0 : index
    %8 = vector.load %arg4[%c0_15, %c0_16, %c0_17, %c0_18] : memref<4x4x8x32xbf16, #tpu.memory_space<vmem>>, vector<1x4x8x32xbf16>
    %9 = vector.shape_cast %8 : vector<1x4x8x32xbf16> to vector<4x8x32xbf16>
    %c0_19 = arith.constant 0 : index
    %c0_20 = arith.constant 0 : index
    %c0_21 = arith.constant 0 : index
    %10 = vector.load %arg5[%c0_19, %c0_20, %c0_21] : memref<4x32x64xbf16, #tpu.memory_space<vmem>>, vector<1x32x64xbf16>
    %11 = vector.shape_cast %10 : vector<1x32x64xbf16> to vector<32x64xbf16>
    %c0_22 = arith.constant 0 : index
    %c0_23 = arith.constant 0 : index
    %c0_24 = arith.constant 0 : index
    %12 = vector.load %arg6[%c0_22, %c0_23, %c0_24] : memref<4x1x64xf32, #tpu.memory_space<vmem>>, vector<1x1x64xf32>
    %13 = vector.shape_cast %12 : vector<1x1x64xf32> to vector<1x64xf32>
    %c0_25 = arith.constant 0 : index
    %c0_26 = arith.constant 0 : index
    %c0_27 = arith.constant 0 : index
    %14 = vector.load %arg7[%c0_25, %c0_26, %c0_27] : memref<4x64x32xbf16, #tpu.memory_space<vmem>>, vector<1x64x32xbf16>
    %15 = vector.shape_cast %14 : vector<1x64x32xbf16> to vector<64x32xbf16>
    %c0_28 = arith.constant 0 : index
    %c0_29 = arith.constant 0 : index
    %c0_30 = arith.constant 0 : index
    %16 = vector.load %arg8[%c0_28, %c0_29, %c0_30] : memref<4x1x32xf32, #tpu.memory_space<vmem>>, vector<1x1x32xf32>
    %17 = vector.shape_cast %16 : vector<1x1x32xf32> to vector<1x32xf32>
    %c0_31 = arith.constant 0 : index
    %c0_32 = arith.constant 0 : index
    %c0_33 = arith.constant 0 : index
    %18 = vector.load %arg9[%c0_31, %c0_32, %c0_33] : memref<16x1x32xf32, #tpu.memory_space<vmem>>, vector<1x1x32xf32>
    %19 = vector.shape_cast %18 : vector<1x1x32xf32> to vector<1x32xf32>
    %c1_34 = arith.constant 1 : index
    %c0_35 = arith.constant 0 : index
    %c0_36 = arith.constant 0 : index
    %20 = vector.load %arg9[%c1_34, %c0_35, %c0_36] : memref<16x1x32xf32, #tpu.memory_space<vmem>>, vector<1x1x32xf32>
    %21 = vector.shape_cast %20 : vector<1x1x32xf32> to vector<1x32xf32>
    %c2_37 = arith.constant 2 : index
    %c0_38 = arith.constant 0 : index
    %c0_39 = arith.constant 0 : index
    %22 = vector.load %arg9[%c2_37, %c0_38, %c0_39] : memref<16x1x32xf32, #tpu.memory_space<vmem>>, vector<1x1x32xf32>
    %23 = vector.shape_cast %22 : vector<1x1x32xf32> to vector<1x32xf32>
    %c3 = arith.constant 3 : index
    %c0_40 = arith.constant 0 : index
    %c0_41 = arith.constant 0 : index
    %24 = vector.load %arg9[%c3, %c0_40, %c0_41] : memref<16x1x32xf32, #tpu.memory_space<vmem>>, vector<1x1x32xf32>
    %25 = vector.shape_cast %24 : vector<1x1x32xf32> to vector<1x32xf32>
    %26 = arith.truncf %0 : vector<2x8x32xf32> to vector<2x8x32xbf16>
    %27 = vector.shape_cast %26 : vector<2x8x32xbf16> to vector<2x1x8x32xbf16>
    %28 = vector.shape_cast %27 : vector<2x1x8x32xbf16> to vector<2x1x8x32xbf16>
    %29 = vector.broadcast %28 : vector<2x1x8x32xbf16> to vector<2x4x8x32xbf16>
    %30 = vector.shape_cast %29 : vector<2x4x8x32xbf16> to vector<8x8x32xbf16>
    %31 = vector.shape_cast %3 : vector<4x32x8xbf16> to vector<1x4x32x8xbf16>
    %32 = vector.shape_cast %31 : vector<1x4x32x8xbf16> to vector<1x4x32x8xbf16>
    %33 = vector.broadcast %32 : vector<1x4x32x8xbf16> to vector<2x4x32x8xbf16>
    %34 = vector.shape_cast %33 : vector<2x4x32x8xbf16> to vector<8x32x8xbf16>
    "tpu.trace_start"() <{level = 10 : i32, message = "nsh,nhd->nsd"}> : () -> ()
    %cst = arith.constant dense<0.000000e+00> : vector<8x8x8xf32>
    %35 = tpu.matmul %30, %34, %cst {dimension_numbers = #tpu.dot_dimension_numbers<[2], [1], [1], [2], [0, 0, 0, 1, 1, 2], [0], [0]>} : vector<8x8x32xbf16>, vector<8x32x8xbf16>, vector<8x8x8xf32> -> vector<8x8x8xf32>
    "tpu.trace_stop"() : () -> ()
    %36 = vector.shape_cast %5 : vector<4x32x8xbf16> to vector<1x4x32x8xbf16>
    %37 = vector.shape_cast %36 : vector<1x4x32x8xbf16> to vector<1x4x32x8xbf16>
    %38 = vector.broadcast %37 : vector<1x4x32x8xbf16> to vector<2x4x32x8xbf16>
    %39 = vector.shape_cast %38 : vector<2x4x32x8xbf16> to vector<8x32x8xbf16>
    "tpu.trace_start"() <{level = 10 : i32, message = "nsh,nhd->nsd"}> : () -> ()
    %cst_42 = arith.constant dense<0.000000e+00> : vector<8x8x8xf32>
    %40 = tpu.matmul %30, %39, %cst_42 {dimension_numbers = #tpu.dot_dimension_numbers<[2], [1], [1], [2], [0, 0, 0, 1, 1, 2], [0], [0]>} : vector<8x8x32xbf16>, vector<8x32x8xbf16>, vector<8x8x8xf32> -> vector<8x8x8xf32>
    "tpu.trace_stop"() : () -> ()
    %41 = vector.shape_cast %7 : vector<4x32x8xbf16> to vector<1x4x32x8xbf16>
    %42 = vector.shape_cast %41 : vector<1x4x32x8xbf16> to vector<1x4x32x8xbf16>
    %43 = vector.broadcast %42 : vector<1x4x32x8xbf16> to vector<2x4x32x8xbf16>
    %44 = vector.shape_cast %43 : vector<2x4x32x8xbf16> to vector<8x32x8xbf16>
    "tpu.trace_start"() <{level = 10 : i32, message = "nsh,nhd->nsd"}> : () -> ()
    %cst_43 = arith.constant dense<0.000000e+00> : vector<8x8x8xf32>
    %45 = tpu.matmul %30, %44, %cst_43 {dimension_numbers = #tpu.dot_dimension_numbers<[2], [1], [1], [2], [0, 0, 0, 1, 1, 2], [0], [0]>} : vector<8x8x32xbf16>, vector<8x32x8xbf16>, vector<8x8x8xf32> -> vector<8x8x8xf32>
    "tpu.trace_stop"() : () -> ()
    %46 = arith.truncf %35 : vector<8x8x8xf32> to vector<8x8x8xbf16>
    %47 = arith.truncf %40 : vector<8x8x8xf32> to vector<8x8x8xbf16>
    "tpu.trace_start"() <{level = 10 : i32, message = "nqd,nkd->nqk"}> : () -> ()
    %cst_44 = arith.constant dense<0.000000e+00> : vector<8x8x8xf32>
    %48 = tpu.matmul %46, %47, %cst_44 {dimension_numbers = #tpu.dot_dimension_numbers<[2], [2], [1], [1], [0, 0, 0, 1, 1, 1], [0], [0]>} : vector<8x8x8xbf16>, vector<8x8x8xbf16>, vector<8x8x8xf32> -> vector<8x8x8xf32>
    "tpu.trace_stop"() : () -> ()
    %cst_45 = arith.constant 0.353553385 : f32
    %49 = vector.broadcast %cst_45 : f32 to vector<8x8x8xf32>
    %50 = arith.mulf %48, %49 : vector<8x8x8xf32>
    %51 = vector.broadcast %1 : vector<8x1x8xf32> to vector<8x8x8xf32>
    %52 = arith.addf %50, %51 : vector<8x8x8xf32>
    %cst_46 = arith.constant dense<0xFF800000> : vector<8x8xf32>
    %53 = vector.multi_reduction <maximumf>, %52, %cst_46 [2] : vector<8x8x8xf32> to vector<8x8xf32>
    %54 = vector.shape_cast %53 : vector<8x8xf32> to vector<8x8x1xf32>
    %55 = vector.broadcast %54 : vector<8x8x1xf32> to vector<8x8x8xf32>
    %56 = arith.subf %52, %55 : vector<8x8x8xf32>
    %57 = math.exp %56 : vector<8x8x8xf32>
    %cst_47 = arith.constant dense<0.000000e+00> : vector<8x8xf32>
    %58 = vector.multi_reduction <add>, %57, %cst_47 [2] : vector<8x8x8xf32> to vector<8x8xf32>
    %59 = vector.shape_cast %58 : vector<8x8xf32> to vector<8x8x1xf32>
    %60 = tpu.reciprocal %59 {approx = true} : vector<8x8x1xf32> -> vector<8x8x1xf32>
    %61 = vector.broadcast %60 : vector<8x8x1xf32> to vector<8x8x8xf32>
    %62 = arith.mulf %57, %61 : vector<8x8x8xf32>
    %63 = arith.truncf %62 : vector<8x8x8xf32> to vector<8x8x8xbf16>
    %64 = arith.truncf %45 : vector<8x8x8xf32> to vector<8x8x8xbf16>
    "tpu.trace_start"() <{level = 10 : i32, message = "nqk,nkd->nqd"}> : () -> ()
    %cst_48 = arith.constant dense<0.000000e+00> : vector<8x8x8xf32>
    %65 = tpu.matmul %63, %64, %cst_48 {dimension_numbers = #tpu.dot_dimension_numbers<[2], [1], [1], [2], [0, 0, 0, 1, 1, 2], [0], [0]>} : vector<8x8x8xbf16>, vector<8x8x8xbf16>, vector<8x8x8xf32> -> vector<8x8x8xf32>
    "tpu.trace_stop"() : () -> ()
    %66 = arith.truncf %65 : vector<8x8x8xf32> to vector<8x8x8xbf16>
    %67 = vector.shape_cast %9 : vector<4x8x32xbf16> to vector<1x4x8x32xbf16>
    %68 = vector.shape_cast %67 : vector<1x4x8x32xbf16> to vector<1x4x8x32xbf16>
    %69 = vector.broadcast %68 : vector<1x4x8x32xbf16> to vector<2x4x8x32xbf16>
    %70 = vector.shape_cast %69 : vector<2x4x8x32xbf16> to vector<8x8x32xbf16>
    "tpu.trace_start"() <{level = 10 : i32, message = "nsd,ndh->nsh"}> : () -> ()
    %cst_49 = arith.constant dense<0.000000e+00> : vector<8x8x32xf32>
    %71 = tpu.matmul %66, %70, %cst_49 {dimension_numbers = #tpu.dot_dimension_numbers<[2], [1], [1], [2], [0, 0, 0, 1, 1, 2], [0], [0]>} : vector<8x8x8xbf16>, vector<8x8x32xbf16>, vector<8x8x32xf32> -> vector<8x8x32xf32>
    "tpu.trace_stop"() : () -> ()
    %72 = vector.shape_cast %71 : vector<8x8x32xf32> to vector<2x4x8x32xf32>
    %73 = vector.extract_strided_slice %72 {offsets = [0, 0, 0, 0], sizes = [2, 1, 8, 32], strides = [1, 1, 1, 1]} : vector<2x4x8x32xf32> to vector<2x1x8x32xf32>
    %74 = vector.shape_cast %73 : vector<2x1x8x32xf32> to vector<2x8x32xf32>
    %75 = vector.extract_strided_slice %72 {offsets = [0, 1, 0, 0], sizes = [2, 1, 8, 32], strides = [1, 1, 1, 1]} : vector<2x4x8x32xf32> to vector<2x1x8x32xf32>
    %76 = vector.shape_cast %75 : vector<2x1x8x32xf32> to vector<2x8x32xf32>
    %77 = arith.addf %74, %76 : vector<2x8x32xf32>
    %78 = vector.extract_strided_slice %72 {offsets = [0, 2, 0, 0], sizes = [2, 1, 8, 32], strides = [1, 1, 1, 1]} : vector<2x4x8x32xf32> to vector<2x1x8x32xf32>
    %79 = vector.shape_cast %78 : vector<2x1x8x32xf32> to vector<2x8x32xf32>
    %80 = arith.addf %77, %79 : vector<2x8x32xf32>
    %81 = vector.extract_strided_slice %72 {offsets = [0, 3, 0, 0], sizes = [2, 1, 8, 32], strides = [1, 1, 1, 1]} : vector<2x4x8x32xf32> to vector<2x1x8x32xf32>
    %82 = vector.shape_cast %81 : vector<2x1x8x32xf32> to vector<2x8x32xf32>
    %83 = arith.addf %80, %82 : vector<2x8x32xf32>
    %84 = arith.addf %0, %83 : vector<2x8x32xf32>
    %cst_50 = arith.constant dense<0.000000e+00> : vector<2x8xf32>
    %85 = vector.multi_reduction <add>, %84, %cst_50 [2] : vector<2x8x32xf32> to vector<2x8xf32>
    %86 = vector.shape_cast %85 : vector<2x8xf32> to vector<2x8x1xf32>
    %cst_51 = arith.constant 3.200000e+01 : f32
    %87 = vector.broadcast %cst_51 : f32 to vector<2x8x1xf32>
    %88 = arith.divf %86, %87 : vector<2x8x1xf32>
    %89 = vector.broadcast %88 : vector<2x8x1xf32> to vector<2x8x32xf32>
    %90 = arith.subf %84, %89 : vector<2x8x32xf32>
    %91 = vector.broadcast %88 : vector<2x8x1xf32> to vector<2x8x32xf32>
    %92 = arith.subf %84, %91 : vector<2x8x32xf32>
    %93 = arith.mulf %90, %92 : vector<2x8x32xf32>
    %cst_52 = arith.constant dense<0.000000e+00> : vector<2x8xf32>
    %94 = vector.multi_reduction <add>, %93, %cst_52 [2] : vector<2x8x32xf32> to vector<2x8xf32>
    %95 = vector.shape_cast %94 : vector<2x8xf32> to vector<2x8x1xf32>
    %cst_53 = arith.constant 3.200000e+01 : f32
    %96 = vector.broadcast %cst_53 : f32 to vector<2x8x1xf32>
    %97 = arith.divf %95, %96 : vector<2x8x1xf32>
    %98 = vector.broadcast %88 : vector<2x8x1xf32> to vector<2x8x32xf32>
    %99 = arith.subf %84, %98 : vector<2x8x32xf32>
    %cst_54 = arith.constant 9.99999974E-6 : f32
    %100 = vector.broadcast %cst_54 : f32 to vector<2x8x1xf32>
    %101 = arith.addf %97, %100 : vector<2x8x1xf32>
    %102 = math.rsqrt %101 : vector<2x8x1xf32>
    %103 = vector.broadcast %102 : vector<2x8x1xf32> to vector<2x8x32xf32>
    %104 = arith.mulf %99, %103 : vector<2x8x32xf32>
    %105 = vector.shape_cast %19 : vector<1x32xf32> to vector<1x1x32xf32>
    %106 = vector.broadcast %105 : vector<1x1x32xf32> to vector<2x8x32xf32>
    %107 = arith.mulf %104, %106 : vector<2x8x32xf32>
    %108 = vector.shape_cast %21 : vector<1x32xf32> to vector<1x1x32xf32>
    %109 = vector.broadcast %108 : vector<1x1x32xf32> to vector<2x8x32xf32>
    %110 = arith.addf %107, %109 : vector<2x8x32xf32>
    %111 = vector.shape_cast %110 : vector<2x8x32xf32> to vector<16x32xf32>
    %112 = arith.truncf %111 : vector<16x32xf32> to vector<16x32xbf16>
    %cst_55 = arith.constant dense<0.000000e+00> : vector<16x64xf32>
    %113 = tpu.matmul %112, %11, %cst_55 {dimension_numbers = #tpu.dot_dimension_numbers<[1], [0], [0], [1], [0, 0, 1, 1], [], []>} : vector<16x32xbf16>, vector<32x64xbf16>, vector<16x64xf32> -> vector<16x64xf32>
    %114 = vector.broadcast %13 : vector<1x64xf32> to vector<16x64xf32>
    %115 = arith.addf %113, %114 : vector<16x64xf32>
    %cst_56 = arith.constant 5.000000e-01 : f32
    %116 = vector.broadcast %cst_56 : f32 to vector<16x64xf32>
    %117 = arith.mulf %116, %115 : vector<16x64xf32>
    %cst_57 = arith.constant 4.471500e-02 : f32
    %118 = vector.broadcast %cst_57 : f32 to vector<16x64xf32>
    %119 = arith.mulf %118, %115 : vector<16x64xf32>
    %120 = arith.mulf %119, %115 : vector<16x64xf32>
    %121 = arith.mulf %120, %115 : vector<16x64xf32>
    %122 = arith.addf %115, %121 : vector<16x64xf32>
    %cst_58 = arith.constant 0.797884583 : f32
    %123 = vector.broadcast %cst_58 : f32 to vector<16x64xf32>
    %124 = arith.mulf %123, %122 : vector<16x64xf32>
    %125 = math.tanh %124 : vector<16x64xf32>
    %cst_59 = arith.constant 1.000000e+00 : f32
    %126 = vector.broadcast %cst_59 : f32 to vector<16x64xf32>
    %127 = arith.addf %126, %125 : vector<16x64xf32>
    %128 = arith.mulf %117, %127 : vector<16x64xf32>
    %129 = arith.truncf %128 : vector<16x64xf32> to vector<16x64xbf16>
    %cst_60 = arith.constant dense<0.000000e+00> : vector<16x32xf32>
    %130 = tpu.matmul %129, %15, %cst_60 {dimension_numbers = #tpu.dot_dimension_numbers<[1], [0], [0], [1], [0, 0, 1, 1], [], []>} : vector<16x64xbf16>, vector<64x32xbf16>, vector<16x32xf32> -> vector<16x32xf32>
    %131 = vector.broadcast %17 : vector<1x32xf32> to vector<16x32xf32>
    %132 = arith.addf %130, %131 : vector<16x32xf32>
    %133 = arith.addf %111, %132 : vector<16x32xf32>
    %cst_61 = arith.constant dense<0.000000e+00> : vector<16xf32>
    %134 = vector.multi_reduction <add>, %133, %cst_61 [1] : vector<16x32xf32> to vector<16xf32>
    %135 = vector.shape_cast %134 : vector<16xf32> to vector<16x1xf32>
    %cst_62 = arith.constant 3.200000e+01 : f32
    %136 = vector.broadcast %cst_62 : f32 to vector<16x1xf32>
    %137 = arith.divf %135, %136 : vector<16x1xf32>
    %138 = vector.broadcast %137 : vector<16x1xf32> to vector<16x32xf32>
    %139 = arith.subf %133, %138 : vector<16x32xf32>
    %140 = vector.broadcast %137 : vector<16x1xf32> to vector<16x32xf32>
    %141 = arith.subf %133, %140 : vector<16x32xf32>
    %142 = arith.mulf %139, %141 : vector<16x32xf32>
    %cst_63 = arith.constant dense<0.000000e+00> : vector<16xf32>
    %143 = vector.multi_reduction <add>, %142, %cst_63 [1] : vector<16x32xf32> to vector<16xf32>
    %144 = vector.shape_cast %143 : vector<16xf32> to vector<16x1xf32>
    %cst_64 = arith.constant 3.200000e+01 : f32
    %145 = vector.broadcast %cst_64 : f32 to vector<16x1xf32>
    %146 = arith.divf %144, %145 : vector<16x1xf32>
    %147 = vector.broadcast %137 : vector<16x1xf32> to vector<16x32xf32>
    %148 = arith.subf %133, %147 : vector<16x32xf32>
    %cst_65 = arith.constant 9.99999974E-6 : f32
    %149 = vector.broadcast %cst_65 : f32 to vector<16x1xf32>
    %150 = arith.addf %146, %149 : vector<16x1xf32>
    %151 = math.rsqrt %150 : vector<16x1xf32>
    %152 = vector.broadcast %151 : vector<16x1xf32> to vector<16x32xf32>
    %153 = arith.mulf %148, %152 : vector<16x32xf32>
    %154 = vector.broadcast %23 : vector<1x32xf32> to vector<16x32xf32>
    %155 = arith.mulf %153, %154 : vector<16x32xf32>
    %156 = vector.broadcast %25 : vector<1x32xf32> to vector<16x32xf32>
    %157 = arith.addf %155, %156 : vector<16x32xf32>
    %158 = vector.shape_cast %157 : vector<16x32xf32> to vector<2x8x32xf32>
    %159 = vector.extract_strided_slice %158 {offsets = [0, 0, 0], sizes = [2, 1, 32], strides = [1, 1, 1]} : vector<2x8x32xf32> to vector<2x1x32xf32>
    %160 = vector.shape_cast %159 : vector<2x1x32xf32> to vector<2x32xf32>
    %c3_66 = arith.constant 3 : index
    %c0_67 = arith.constant 0 : index
    %c0_68 = arith.constant 0 : index
    %c0_69 = arith.constant 0 : index
    %161 = vector.load %arg3[%c3_66, %c0_67, %c0_68, %c0_69] : memref<12x4x32x8xbf16, #tpu.memory_space<vmem>>, vector<1x4x32x8xbf16>
    %162 = vector.shape_cast %161 : vector<1x4x32x8xbf16> to vector<4x32x8xbf16>
    %c4 = arith.constant 4 : index
    %c0_70 = arith.constant 0 : index
    %c0_71 = arith.constant 0 : index
    %c0_72 = arith.constant 0 : index
    %163 = vector.load %arg3[%c4, %c0_70, %c0_71, %c0_72] : memref<12x4x32x8xbf16, #tpu.memory_space<vmem>>, vector<1x4x32x8xbf16>
    %164 = vector.shape_cast %163 : vector<1x4x32x8xbf16> to vector<4x32x8xbf16>
    %c5 = arith.constant 5 : index
    %c0_73 = arith.constant 0 : index
    %c0_74 = arith.constant 0 : index
    %c0_75 = arith.constant 0 : index
    %165 = vector.load %arg3[%c5, %c0_73, %c0_74, %c0_75] : memref<12x4x32x8xbf16, #tpu.memory_space<vmem>>, vector<1x4x32x8xbf16>
    %166 = vector.shape_cast %165 : vector<1x4x32x8xbf16> to vector<4x32x8xbf16>
    %c1_76 = arith.constant 1 : index
    %c0_77 = arith.constant 0 : index
    %c0_78 = arith.constant 0 : index
    %c0_79 = arith.constant 0 : index
    %167 = vector.load %arg4[%c1_76, %c0_77, %c0_78, %c0_79] : memref<4x4x8x32xbf16, #tpu.memory_space<vmem>>, vector<1x4x8x32xbf16>
    %168 = vector.shape_cast %167 : vector<1x4x8x32xbf16> to vector<4x8x32xbf16>
    %c1_80 = arith.constant 1 : index
    %c0_81 = arith.constant 0 : index
    %c0_82 = arith.constant 0 : index
    %169 = vector.load %arg5[%c1_80, %c0_81, %c0_82] : memref<4x32x64xbf16, #tpu.memory_space<vmem>>, vector<1x32x64xbf16>
    %170 = vector.shape_cast %169 : vector<1x32x64xbf16> to vector<32x64xbf16>
    %c1_83 = arith.constant 1 : index
    %c0_84 = arith.constant 0 : index
    %c0_85 = arith.constant 0 : index
    %171 = vector.load %arg6[%c1_83, %c0_84, %c0_85] : memref<4x1x64xf32, #tpu.memory_space<vmem>>, vector<1x1x64xf32>
    %172 = vector.shape_cast %171 : vector<1x1x64xf32> to vector<1x64xf32>
    %c1_86 = arith.constant 1 : index
    %c0_87 = arith.constant 0 : index
    %c0_88 = arith.constant 0 : index
    %173 = vector.load %arg7[%c1_86, %c0_87, %c0_88] : memref<4x64x32xbf16, #tpu.memory_space<vmem>>, vector<1x64x32xbf16>
    %174 = vector.shape_cast %173 : vector<1x64x32xbf16> to vector<64x32xbf16>
    %c1_89 = arith.constant 1 : index
    %c0_90 = arith.constant 0 : index
    %c0_91 = arith.constant 0 : index
    %175 = vector.load %arg8[%c1_89, %c0_90, %c0_91] : memref<4x1x32xf32, #tpu.memory_space<vmem>>, vector<1x1x32xf32>
    %176 = vector.shape_cast %175 : vector<1x1x32xf32> to vector<1x32xf32>
    %c4_92 = arith.constant 4 : index
    %c0_93 = arith.constant 0 : index
    %c0_94 = arith.constant 0 : index
    %177 = vector.load %arg9[%c4_92, %c0_93, %c0_94] : memref<16x1x32xf32, #tpu.memory_space<vmem>>, vector<1x1x32xf32>
    %178 = vector.shape_cast %177 : vector<1x1x32xf32> to vector<1x32xf32>
    %c5_95 = arith.constant 5 : index
    %c0_96 = arith.constant 0 : index
    %c0_97 = arith.constant 0 : index
    %179 = vector.load %arg9[%c5_95, %c0_96, %c0_97] : memref<16x1x32xf32, #tpu.memory_space<vmem>>, vector<1x1x32xf32>
    %180 = vector.shape_cast %179 : vector<1x1x32xf32> to vector<1x32xf32>
    %c6 = arith.constant 6 : index
    %c0_98 = arith.constant 0 : index
    %c0_99 = arith.constant 0 : index
    %181 = vector.load %arg9[%c6, %c0_98, %c0_99] : memref<16x1x32xf32, #tpu.memory_space<vmem>>, vector<1x1x32xf32>
    %182 = vector.shape_cast %181 : vector<1x1x32xf32> to vector<1x32xf32>
    %c7 = arith.constant 7 : index
    %c0_100 = arith.constant 0 : index
    %c0_101 = arith.constant 0 : index
    %183 = vector.load %arg9[%c7, %c0_100, %c0_101] : memref<16x1x32xf32, #tpu.memory_space<vmem>>, vector<1x1x32xf32>
    %184 = vector.shape_cast %183 : vector<1x1x32xf32> to vector<1x32xf32>
    %185 = arith.truncf %158 : vector<2x8x32xf32> to vector<2x8x32xbf16>
    %186 = vector.shape_cast %185 : vector<2x8x32xbf16> to vector<2x1x8x32xbf16>
    %187 = vector.shape_cast %186 : vector<2x1x8x32xbf16> to vector<2x1x8x32xbf16>
    %188 = vector.broadcast %187 : vector<2x1x8x32xbf16> to vector<2x4x8x32xbf16>
    %189 = vector.shape_cast %188 : vector<2x4x8x32xbf16> to vector<8x8x32xbf16>
    %190 = vector.shape_cast %162 : vector<4x32x8xbf16> to vector<1x4x32x8xbf16>
    %191 = vector.shape_cast %190 : vector<1x4x32x8xbf16> to vector<1x4x32x8xbf16>
    %192 = vector.broadcast %191 : vector<1x4x32x8xbf16> to vector<2x4x32x8xbf16>
    %193 = vector.shape_cast %192 : vector<2x4x32x8xbf16> to vector<8x32x8xbf16>
    "tpu.trace_start"() <{level = 10 : i32, message = "nsh,nhd->nsd"}> : () -> ()
    %cst_102 = arith.constant dense<0.000000e+00> : vector<8x8x8xf32>
    %194 = tpu.matmul %189, %193, %cst_102 {dimension_numbers = #tpu.dot_dimension_numbers<[2], [1], [1], [2], [0, 0, 0, 1, 1, 2], [0], [0]>} : vector<8x8x32xbf16>, vector<8x32x8xbf16>, vector<8x8x8xf32> -> vector<8x8x8xf32>
    "tpu.trace_stop"() : () -> ()
    %195 = vector.shape_cast %164 : vector<4x32x8xbf16> to vector<1x4x32x8xbf16>
    %196 = vector.shape_cast %195 : vector<1x4x32x8xbf16> to vector<1x4x32x8xbf16>
    %197 = vector.broadcast %196 : vector<1x4x32x8xbf16> to vector<2x4x32x8xbf16>
    %198 = vector.shape_cast %197 : vector<2x4x32x8xbf16> to vector<8x32x8xbf16>
    "tpu.trace_start"() <{level = 10 : i32, message = "nsh,nhd->nsd"}> : () -> ()
    %cst_103 = arith.constant dense<0.000000e+00> : vector<8x8x8xf32>
    %199 = tpu.matmul %189, %198, %cst_103 {dimension_numbers = #tpu.dot_dimension_numbers<[2], [1], [1], [2], [0, 0, 0, 1, 1, 2], [0], [0]>} : vector<8x8x32xbf16>, vector<8x32x8xbf16>, vector<8x8x8xf32> -> vector<8x8x8xf32>
    "tpu.trace_stop"() : () -> ()
    %200 = vector.shape_cast %166 : vector<4x32x8xbf16> to vector<1x4x32x8xbf16>
    %201 = vector.shape_cast %200 : vector<1x4x32x8xbf16> to vector<1x4x32x8xbf16>
    %202 = vector.broadcast %201 : vector<1x4x32x8xbf16> to vector<2x4x32x8xbf16>
    %203 = vector.shape_cast %202 : vector<2x4x32x8xbf16> to vector<8x32x8xbf16>
    "tpu.trace_start"() <{level = 10 : i32, message = "nsh,nhd->nsd"}> : () -> ()
    %cst_104 = arith.constant dense<0.000000e+00> : vector<8x8x8xf32>
    %204 = tpu.matmul %189, %203, %cst_104 {dimension_numbers = #tpu.dot_dimension_numbers<[2], [1], [1], [2], [0, 0, 0, 1, 1, 2], [0], [0]>} : vector<8x8x32xbf16>, vector<8x32x8xbf16>, vector<8x8x8xf32> -> vector<8x8x8xf32>
    "tpu.trace_stop"() : () -> ()
    %205 = arith.truncf %194 : vector<8x8x8xf32> to vector<8x8x8xbf16>
    %206 = arith.truncf %199 : vector<8x8x8xf32> to vector<8x8x8xbf16>
    "tpu.trace_start"() <{level = 10 : i32, message = "nqd,nkd->nqk"}> : () -> ()
    %cst_105 = arith.constant dense<0.000000e+00> : vector<8x8x8xf32>
    %207 = tpu.matmul %205, %206, %cst_105 {dimension_numbers = #tpu.dot_dimension_numbers<[2], [2], [1], [1], [0, 0, 0, 1, 1, 1], [0], [0]>} : vector<8x8x8xbf16>, vector<8x8x8xbf16>, vector<8x8x8xf32> -> vector<8x8x8xf32>
    "tpu.trace_stop"() : () -> ()
    %cst_106 = arith.constant 0.353553385 : f32
    %208 = vector.broadcast %cst_106 : f32 to vector<8x8x8xf32>
    %209 = arith.mulf %207, %208 : vector<8x8x8xf32>
    %210 = vector.broadcast %1 : vector<8x1x8xf32> to vector<8x8x8xf32>
    %211 = arith.addf %209, %210 : vector<8x8x8xf32>
    %cst_107 = arith.constant dense<0xFF800000> : vector<8x8xf32>
    %212 = vector.multi_reduction <maximumf>, %211, %cst_107 [2] : vector<8x8x8xf32> to vector<8x8xf32>
    %213 = vector.shape_cast %212 : vector<8x8xf32> to vector<8x8x1xf32>
    %214 = vector.broadcast %213 : vector<8x8x1xf32> to vector<8x8x8xf32>
    %215 = arith.subf %211, %214 : vector<8x8x8xf32>
    %216 = math.exp %215 : vector<8x8x8xf32>
    %cst_108 = arith.constant dense<0.000000e+00> : vector<8x8xf32>
    %217 = vector.multi_reduction <add>, %216, %cst_108 [2] : vector<8x8x8xf32> to vector<8x8xf32>
    %218 = vector.shape_cast %217 : vector<8x8xf32> to vector<8x8x1xf32>
    %219 = tpu.reciprocal %218 {approx = true} : vector<8x8x1xf32> -> vector<8x8x1xf32>
    %220 = vector.broadcast %219 : vector<8x8x1xf32> to vector<8x8x8xf32>
    %221 = arith.mulf %216, %220 : vector<8x8x8xf32>
    %222 = arith.truncf %221 : vector<8x8x8xf32> to vector<8x8x8xbf16>
    %223 = arith.truncf %204 : vector<8x8x8xf32> to vector<8x8x8xbf16>
    "tpu.trace_start"() <{level = 10 : i32, message = "nqk,nkd->nqd"}> : () -> ()
    %cst_109 = arith.constant dense<0.000000e+00> : vector<8x8x8xf32>
    %224 = tpu.matmul %222, %223, %cst_109 {dimension_numbers = #tpu.dot_dimension_numbers<[2], [1], [1], [2], [0, 0, 0, 1, 1, 2], [0], [0]>} : vector<8x8x8xbf16>, vector<8x8x8xbf16>, vector<8x8x8xf32> -> vector<8x8x8xf32>
    "tpu.trace_stop"() : () -> ()
    %225 = arith.truncf %224 : vector<8x8x8xf32> to vector<8x8x8xbf16>
    %226 = vector.shape_cast %168 : vector<4x8x32xbf16> to vector<1x4x8x32xbf16>
    %227 = vector.shape_cast %226 : vector<1x4x8x32xbf16> to vector<1x4x8x32xbf16>
    %228 = vector.broadcast %227 : vector<1x4x8x32xbf16> to vector<2x4x8x32xbf16>
    %229 = vector.shape_cast %228 : vector<2x4x8x32xbf16> to vector<8x8x32xbf16>
    "tpu.trace_start"() <{level = 10 : i32, message = "nsd,ndh->nsh"}> : () -> ()
    %cst_110 = arith.constant dense<0.000000e+00> : vector<8x8x32xf32>
    %230 = tpu.matmul %225, %229, %cst_110 {dimension_numbers = #tpu.dot_dimension_numbers<[2], [1], [1], [2], [0, 0, 0, 1, 1, 2], [0], [0]>} : vector<8x8x8xbf16>, vector<8x8x32xbf16>, vector<8x8x32xf32> -> vector<8x8x32xf32>
    "tpu.trace_stop"() : () -> ()
    %231 = vector.shape_cast %230 : vector<8x8x32xf32> to vector<2x4x8x32xf32>
    %232 = vector.extract_strided_slice %231 {offsets = [0, 0, 0, 0], sizes = [2, 1, 8, 32], strides = [1, 1, 1, 1]} : vector<2x4x8x32xf32> to vector<2x1x8x32xf32>
    %233 = vector.shape_cast %232 : vector<2x1x8x32xf32> to vector<2x8x32xf32>
    %234 = vector.extract_strided_slice %231 {offsets = [0, 1, 0, 0], sizes = [2, 1, 8, 32], strides = [1, 1, 1, 1]} : vector<2x4x8x32xf32> to vector<2x1x8x32xf32>
    %235 = vector.shape_cast %234 : vector<2x1x8x32xf32> to vector<2x8x32xf32>
    %236 = arith.addf %233, %235 : vector<2x8x32xf32>
    %237 = vector.extract_strided_slice %231 {offsets = [0, 2, 0, 0], sizes = [2, 1, 8, 32], strides = [1, 1, 1, 1]} : vector<2x4x8x32xf32> to vector<2x1x8x32xf32>
    %238 = vector.shape_cast %237 : vector<2x1x8x32xf32> to vector<2x8x32xf32>
    %239 = arith.addf %236, %238 : vector<2x8x32xf32>
    %240 = vector.extract_strided_slice %231 {offsets = [0, 3, 0, 0], sizes = [2, 1, 8, 32], strides = [1, 1, 1, 1]} : vector<2x4x8x32xf32> to vector<2x1x8x32xf32>
    %241 = vector.shape_cast %240 : vector<2x1x8x32xf32> to vector<2x8x32xf32>
    %242 = arith.addf %239, %241 : vector<2x8x32xf32>
    %243 = arith.addf %158, %242 : vector<2x8x32xf32>
    %cst_111 = arith.constant dense<0.000000e+00> : vector<2x8xf32>
    %244 = vector.multi_reduction <add>, %243, %cst_111 [2] : vector<2x8x32xf32> to vector<2x8xf32>
    %245 = vector.shape_cast %244 : vector<2x8xf32> to vector<2x8x1xf32>
    %cst_112 = arith.constant 3.200000e+01 : f32
    %246 = vector.broadcast %cst_112 : f32 to vector<2x8x1xf32>
    %247 = arith.divf %245, %246 : vector<2x8x1xf32>
    %248 = vector.broadcast %247 : vector<2x8x1xf32> to vector<2x8x32xf32>
    %249 = arith.subf %243, %248 : vector<2x8x32xf32>
    %250 = vector.broadcast %247 : vector<2x8x1xf32> to vector<2x8x32xf32>
    %251 = arith.subf %243, %250 : vector<2x8x32xf32>
    %252 = arith.mulf %249, %251 : vector<2x8x32xf32>
    %cst_113 = arith.constant dense<0.000000e+00> : vector<2x8xf32>
    %253 = vector.multi_reduction <add>, %252, %cst_113 [2] : vector<2x8x32xf32> to vector<2x8xf32>
    %254 = vector.shape_cast %253 : vector<2x8xf32> to vector<2x8x1xf32>
    %cst_114 = arith.constant 3.200000e+01 : f32
    %255 = vector.broadcast %cst_114 : f32 to vector<2x8x1xf32>
    %256 = arith.divf %254, %255 : vector<2x8x1xf32>
    %257 = vector.broadcast %247 : vector<2x8x1xf32> to vector<2x8x32xf32>
    %258 = arith.subf %243, %257 : vector<2x8x32xf32>
    %cst_115 = arith.constant 9.99999974E-6 : f32
    %259 = vector.broadcast %cst_115 : f32 to vector<2x8x1xf32>
    %260 = arith.addf %256, %259 : vector<2x8x1xf32>
    %261 = math.rsqrt %260 : vector<2x8x1xf32>
    %262 = vector.broadcast %261 : vector<2x8x1xf32> to vector<2x8x32xf32>
    %263 = arith.mulf %258, %262 : vector<2x8x32xf32>
    %264 = vector.shape_cast %178 : vector<1x32xf32> to vector<1x1x32xf32>
    %265 = vector.broadcast %264 : vector<1x1x32xf32> to vector<2x8x32xf32>
    %266 = arith.mulf %263, %265 : vector<2x8x32xf32>
    %267 = vector.shape_cast %180 : vector<1x32xf32> to vector<1x1x32xf32>
    %268 = vector.broadcast %267 : vector<1x1x32xf32> to vector<2x8x32xf32>
    %269 = arith.addf %266, %268 : vector<2x8x32xf32>
    %270 = vector.shape_cast %269 : vector<2x8x32xf32> to vector<16x32xf32>
    %271 = arith.truncf %270 : vector<16x32xf32> to vector<16x32xbf16>
    %cst_116 = arith.constant dense<0.000000e+00> : vector<16x64xf32>
    %272 = tpu.matmul %271, %170, %cst_116 {dimension_numbers = #tpu.dot_dimension_numbers<[1], [0], [0], [1], [0, 0, 1, 1], [], []>} : vector<16x32xbf16>, vector<32x64xbf16>, vector<16x64xf32> -> vector<16x64xf32>
    %273 = vector.broadcast %172 : vector<1x64xf32> to vector<16x64xf32>
    %274 = arith.addf %272, %273 : vector<16x64xf32>
    %cst_117 = arith.constant 5.000000e-01 : f32
    %275 = vector.broadcast %cst_117 : f32 to vector<16x64xf32>
    %276 = arith.mulf %275, %274 : vector<16x64xf32>
    %cst_118 = arith.constant 4.471500e-02 : f32
    %277 = vector.broadcast %cst_118 : f32 to vector<16x64xf32>
    %278 = arith.mulf %277, %274 : vector<16x64xf32>
    %279 = arith.mulf %278, %274 : vector<16x64xf32>
    %280 = arith.mulf %279, %274 : vector<16x64xf32>
    %281 = arith.addf %274, %280 : vector<16x64xf32>
    %cst_119 = arith.constant 0.797884583 : f32
    %282 = vector.broadcast %cst_119 : f32 to vector<16x64xf32>
    %283 = arith.mulf %282, %281 : vector<16x64xf32>
    %284 = math.tanh %283 : vector<16x64xf32>
    %cst_120 = arith.constant 1.000000e+00 : f32
    %285 = vector.broadcast %cst_120 : f32 to vector<16x64xf32>
    %286 = arith.addf %285, %284 : vector<16x64xf32>
    %287 = arith.mulf %276, %286 : vector<16x64xf32>
    %288 = arith.truncf %287 : vector<16x64xf32> to vector<16x64xbf16>
    %cst_121 = arith.constant dense<0.000000e+00> : vector<16x32xf32>
    %289 = tpu.matmul %288, %174, %cst_121 {dimension_numbers = #tpu.dot_dimension_numbers<[1], [0], [0], [1], [0, 0, 1, 1], [], []>} : vector<16x64xbf16>, vector<64x32xbf16>, vector<16x32xf32> -> vector<16x32xf32>
    %290 = vector.broadcast %176 : vector<1x32xf32> to vector<16x32xf32>
    %291 = arith.addf %289, %290 : vector<16x32xf32>
    %292 = arith.addf %270, %291 : vector<16x32xf32>
    %cst_122 = arith.constant dense<0.000000e+00> : vector<16xf32>
    %293 = vector.multi_reduction <add>, %292, %cst_122 [1] : vector<16x32xf32> to vector<16xf32>
    %294 = vector.shape_cast %293 : vector<16xf32> to vector<16x1xf32>
    %cst_123 = arith.constant 3.200000e+01 : f32
    %295 = vector.broadcast %cst_123 : f32 to vector<16x1xf32>
    %296 = arith.divf %294, %295 : vector<16x1xf32>
    %297 = vector.broadcast %296 : vector<16x1xf32> to vector<16x32xf32>
    %298 = arith.subf %292, %297 : vector<16x32xf32>
    %299 = vector.broadcast %296 : vector<16x1xf32> to vector<16x32xf32>
    %300 = arith.subf %292, %299 : vector<16x32xf32>
    %301 = arith.mulf %298, %300 : vector<16x32xf32>
    %cst_124 = arith.constant dense<0.000000e+00> : vector<16xf32>
    %302 = vector.multi_reduction <add>, %301, %cst_124 [1] : vector<16x32xf32> to vector<16xf32>
    %303 = vector.shape_cast %302 : vector<16xf32> to vector<16x1xf32>
    %cst_125 = arith.constant 3.200000e+01 : f32
    %304 = vector.broadcast %cst_125 : f32 to vector<16x1xf32>
    %305 = arith.divf %303, %304 : vector<16x1xf32>
    %306 = vector.broadcast %296 : vector<16x1xf32> to vector<16x32xf32>
    %307 = arith.subf %292, %306 : vector<16x32xf32>
    %cst_126 = arith.constant 9.99999974E-6 : f32
    %308 = vector.broadcast %cst_126 : f32 to vector<16x1xf32>
    %309 = arith.addf %305, %308 : vector<16x1xf32>
    %310 = math.rsqrt %309 : vector<16x1xf32>
    %311 = vector.broadcast %310 : vector<16x1xf32> to vector<16x32xf32>
    %312 = arith.mulf %307, %311 : vector<16x32xf32>
    %313 = vector.broadcast %182 : vector<1x32xf32> to vector<16x32xf32>
    %314 = arith.mulf %312, %313 : vector<16x32xf32>
    %315 = vector.broadcast %184 : vector<1x32xf32> to vector<16x32xf32>
    %316 = arith.addf %314, %315 : vector<16x32xf32>
    %317 = vector.shape_cast %316 : vector<16x32xf32> to vector<2x8x32xf32>
    %318 = vector.extract_strided_slice %317 {offsets = [0, 0, 0], sizes = [2, 1, 32], strides = [1, 1, 1]} : vector<2x8x32xf32> to vector<2x1x32xf32>
    %319 = vector.shape_cast %318 : vector<2x1x32xf32> to vector<2x32xf32>
    %c6_127 = arith.constant 6 : index
    %c0_128 = arith.constant 0 : index
    %c0_129 = arith.constant 0 : index
    %c0_130 = arith.constant 0 : index
    %320 = vector.load %arg3[%c6_127, %c0_128, %c0_129, %c0_130] : memref<12x4x32x8xbf16, #tpu.memory_space<vmem>>, vector<1x4x32x8xbf16>
    %321 = vector.shape_cast %320 : vector<1x4x32x8xbf16> to vector<4x32x8xbf16>
    %c7_131 = arith.constant 7 : index
    %c0_132 = arith.constant 0 : index
    %c0_133 = arith.constant 0 : index
    %c0_134 = arith.constant 0 : index
    %322 = vector.load %arg3[%c7_131, %c0_132, %c0_133, %c0_134] : memref<12x4x32x8xbf16, #tpu.memory_space<vmem>>, vector<1x4x32x8xbf16>
    %323 = vector.shape_cast %322 : vector<1x4x32x8xbf16> to vector<4x32x8xbf16>
    %c8 = arith.constant 8 : index
    %c0_135 = arith.constant 0 : index
    %c0_136 = arith.constant 0 : index
    %c0_137 = arith.constant 0 : index
    %324 = vector.load %arg3[%c8, %c0_135, %c0_136, %c0_137] : memref<12x4x32x8xbf16, #tpu.memory_space<vmem>>, vector<1x4x32x8xbf16>
    %325 = vector.shape_cast %324 : vector<1x4x32x8xbf16> to vector<4x32x8xbf16>
    %c2_138 = arith.constant 2 : index
    %c0_139 = arith.constant 0 : index
    %c0_140 = arith.constant 0 : index
    %c0_141 = arith.constant 0 : index
    %326 = vector.load %arg4[%c2_138, %c0_139, %c0_140, %c0_141] : memref<4x4x8x32xbf16, #tpu.memory_space<vmem>>, vector<1x4x8x32xbf16>
    %327 = vector.shape_cast %326 : vector<1x4x8x32xbf16> to vector<4x8x32xbf16>
    %c2_142 = arith.constant 2 : index
    %c0_143 = arith.constant 0 : index
    %c0_144 = arith.constant 0 : index
    %328 = vector.load %arg5[%c2_142, %c0_143, %c0_144] : memref<4x32x64xbf16, #tpu.memory_space<vmem>>, vector<1x32x64xbf16>
    %329 = vector.shape_cast %328 : vector<1x32x64xbf16> to vector<32x64xbf16>
    %c2_145 = arith.constant 2 : index
    %c0_146 = arith.constant 0 : index
    %c0_147 = arith.constant 0 : index
    %330 = vector.load %arg6[%c2_145, %c0_146, %c0_147] : memref<4x1x64xf32, #tpu.memory_space<vmem>>, vector<1x1x64xf32>
    %331 = vector.shape_cast %330 : vector<1x1x64xf32> to vector<1x64xf32>
    %c2_148 = arith.constant 2 : index
    %c0_149 = arith.constant 0 : index
    %c0_150 = arith.constant 0 : index
    %332 = vector.load %arg7[%c2_148, %c0_149, %c0_150] : memref<4x64x32xbf16, #tpu.memory_space<vmem>>, vector<1x64x32xbf16>
    %333 = vector.shape_cast %332 : vector<1x64x32xbf16> to vector<64x32xbf16>
    %c2_151 = arith.constant 2 : index
    %c0_152 = arith.constant 0 : index
    %c0_153 = arith.constant 0 : index
    %334 = vector.load %arg8[%c2_151, %c0_152, %c0_153] : memref<4x1x32xf32, #tpu.memory_space<vmem>>, vector<1x1x32xf32>
    %335 = vector.shape_cast %334 : vector<1x1x32xf32> to vector<1x32xf32>
    %c8_154 = arith.constant 8 : index
    %c0_155 = arith.constant 0 : index
    %c0_156 = arith.constant 0 : index
    %336 = vector.load %arg9[%c8_154, %c0_155, %c0_156] : memref<16x1x32xf32, #tpu.memory_space<vmem>>, vector<1x1x32xf32>
    %337 = vector.shape_cast %336 : vector<1x1x32xf32> to vector<1x32xf32>
    %c9 = arith.constant 9 : index
    %c0_157 = arith.constant 0 : index
    %c0_158 = arith.constant 0 : index
    %338 = vector.load %arg9[%c9, %c0_157, %c0_158] : memref<16x1x32xf32, #tpu.memory_space<vmem>>, vector<1x1x32xf32>
    %339 = vector.shape_cast %338 : vector<1x1x32xf32> to vector<1x32xf32>
    %c10 = arith.constant 10 : index
    %c0_159 = arith.constant 0 : index
    %c0_160 = arith.constant 0 : index
    %340 = vector.load %arg9[%c10, %c0_159, %c0_160] : memref<16x1x32xf32, #tpu.memory_space<vmem>>, vector<1x1x32xf32>
    %341 = vector.shape_cast %340 : vector<1x1x32xf32> to vector<1x32xf32>
    %c11 = arith.constant 11 : index
    %c0_161 = arith.constant 0 : index
    %c0_162 = arith.constant 0 : index
    %342 = vector.load %arg9[%c11, %c0_161, %c0_162] : memref<16x1x32xf32, #tpu.memory_space<vmem>>, vector<1x1x32xf32>
    %343 = vector.shape_cast %342 : vector<1x1x32xf32> to vector<1x32xf32>
    %344 = arith.truncf %317 : vector<2x8x32xf32> to vector<2x8x32xbf16>
    %345 = vector.shape_cast %344 : vector<2x8x32xbf16> to vector<2x1x8x32xbf16>
    %346 = vector.shape_cast %345 : vector<2x1x8x32xbf16> to vector<2x1x8x32xbf16>
    %347 = vector.broadcast %346 : vector<2x1x8x32xbf16> to vector<2x4x8x32xbf16>
    %348 = vector.shape_cast %347 : vector<2x4x8x32xbf16> to vector<8x8x32xbf16>
    %349 = vector.shape_cast %321 : vector<4x32x8xbf16> to vector<1x4x32x8xbf16>
    %350 = vector.shape_cast %349 : vector<1x4x32x8xbf16> to vector<1x4x32x8xbf16>
    %351 = vector.broadcast %350 : vector<1x4x32x8xbf16> to vector<2x4x32x8xbf16>
    %352 = vector.shape_cast %351 : vector<2x4x32x8xbf16> to vector<8x32x8xbf16>
    "tpu.trace_start"() <{level = 10 : i32, message = "nsh,nhd->nsd"}> : () -> ()
    %cst_163 = arith.constant dense<0.000000e+00> : vector<8x8x8xf32>
    %353 = tpu.matmul %348, %352, %cst_163 {dimension_numbers = #tpu.dot_dimension_numbers<[2], [1], [1], [2], [0, 0, 0, 1, 1, 2], [0], [0]>} : vector<8x8x32xbf16>, vector<8x32x8xbf16>, vector<8x8x8xf32> -> vector<8x8x8xf32>
    "tpu.trace_stop"() : () -> ()
    %354 = vector.shape_cast %323 : vector<4x32x8xbf16> to vector<1x4x32x8xbf16>
    %355 = vector.shape_cast %354 : vector<1x4x32x8xbf16> to vector<1x4x32x8xbf16>
    %356 = vector.broadcast %355 : vector<1x4x32x8xbf16> to vector<2x4x32x8xbf16>
    %357 = vector.shape_cast %356 : vector<2x4x32x8xbf16> to vector<8x32x8xbf16>
    "tpu.trace_start"() <{level = 10 : i32, message = "nsh,nhd->nsd"}> : () -> ()
    %cst_164 = arith.constant dense<0.000000e+00> : vector<8x8x8xf32>
    %358 = tpu.matmul %348, %357, %cst_164 {dimension_numbers = #tpu.dot_dimension_numbers<[2], [1], [1], [2], [0, 0, 0, 1, 1, 2], [0], [0]>} : vector<8x8x32xbf16>, vector<8x32x8xbf16>, vector<8x8x8xf32> -> vector<8x8x8xf32>
    "tpu.trace_stop"() : () -> ()
    %359 = vector.shape_cast %325 : vector<4x32x8xbf16> to vector<1x4x32x8xbf16>
    %360 = vector.shape_cast %359 : vector<1x4x32x8xbf16> to vector<1x4x32x8xbf16>
    %361 = vector.broadcast %360 : vector<1x4x32x8xbf16> to vector<2x4x32x8xbf16>
    %362 = vector.shape_cast %361 : vector<2x4x32x8xbf16> to vector<8x32x8xbf16>
    "tpu.trace_start"() <{level = 10 : i32, message = "nsh,nhd->nsd"}> : () -> ()
    %cst_165 = arith.constant dense<0.000000e+00> : vector<8x8x8xf32>
    %363 = tpu.matmul %348, %362, %cst_165 {dimension_numbers = #tpu.dot_dimension_numbers<[2], [1], [1], [2], [0, 0, 0, 1, 1, 2], [0], [0]>} : vector<8x8x32xbf16>, vector<8x32x8xbf16>, vector<8x8x8xf32> -> vector<8x8x8xf32>
    "tpu.trace_stop"() : () -> ()
    %364 = arith.truncf %353 : vector<8x8x8xf32> to vector<8x8x8xbf16>
    %365 = arith.truncf %358 : vector<8x8x8xf32> to vector<8x8x8xbf16>
    "tpu.trace_start"() <{level = 10 : i32, message = "nqd,nkd->nqk"}> : () -> ()
    %cst_166 = arith.constant dense<0.000000e+00> : vector<8x8x8xf32>
    %366 = tpu.matmul %364, %365, %cst_166 {dimension_numbers = #tpu.dot_dimension_numbers<[2], [2], [1], [1], [0, 0, 0, 1, 1, 1], [0], [0]>} : vector<8x8x8xbf16>, vector<8x8x8xbf16>, vector<8x8x8xf32> -> vector<8x8x8xf32>
    "tpu.trace_stop"() : () -> ()
    %cst_167 = arith.constant 0.353553385 : f32
    %367 = vector.broadcast %cst_167 : f32 to vector<8x8x8xf32>
    %368 = arith.mulf %366, %367 : vector<8x8x8xf32>
    %369 = vector.broadcast %1 : vector<8x1x8xf32> to vector<8x8x8xf32>
    %370 = arith.addf %368, %369 : vector<8x8x8xf32>
    %cst_168 = arith.constant dense<0xFF800000> : vector<8x8xf32>
    %371 = vector.multi_reduction <maximumf>, %370, %cst_168 [2] : vector<8x8x8xf32> to vector<8x8xf32>
    %372 = vector.shape_cast %371 : vector<8x8xf32> to vector<8x8x1xf32>
    %373 = vector.broadcast %372 : vector<8x8x1xf32> to vector<8x8x8xf32>
    %374 = arith.subf %370, %373 : vector<8x8x8xf32>
    %375 = math.exp %374 : vector<8x8x8xf32>
    %cst_169 = arith.constant dense<0.000000e+00> : vector<8x8xf32>
    %376 = vector.multi_reduction <add>, %375, %cst_169 [2] : vector<8x8x8xf32> to vector<8x8xf32>
    %377 = vector.shape_cast %376 : vector<8x8xf32> to vector<8x8x1xf32>
    %378 = tpu.reciprocal %377 {approx = true} : vector<8x8x1xf32> -> vector<8x8x1xf32>
    %379 = vector.broadcast %378 : vector<8x8x1xf32> to vector<8x8x8xf32>
    %380 = arith.mulf %375, %379 : vector<8x8x8xf32>
    %381 = arith.truncf %380 : vector<8x8x8xf32> to vector<8x8x8xbf16>
    %382 = arith.truncf %363 : vector<8x8x8xf32> to vector<8x8x8xbf16>
    "tpu.trace_start"() <{level = 10 : i32, message = "nqk,nkd->nqd"}> : () -> ()
    %cst_170 = arith.constant dense<0.000000e+00> : vector<8x8x8xf32>
    %383 = tpu.matmul %381, %382, %cst_170 {dimension_numbers = #tpu.dot_dimension_numbers<[2], [1], [1], [2], [0, 0, 0, 1, 1, 2], [0], [0]>} : vector<8x8x8xbf16>, vector<8x8x8xbf16>, vector<8x8x8xf32> -> vector<8x8x8xf32>
    "tpu.trace_stop"() : () -> ()
    %384 = arith.truncf %383 : vector<8x8x8xf32> to vector<8x8x8xbf16>
    %385 = vector.shape_cast %327 : vector<4x8x32xbf16> to vector<1x4x8x32xbf16>
    %386 = vector.shape_cast %385 : vector<1x4x8x32xbf16> to vector<1x4x8x32xbf16>
    %387 = vector.broadcast %386 : vector<1x4x8x32xbf16> to vector<2x4x8x32xbf16>
    %388 = vector.shape_cast %387 : vector<2x4x8x32xbf16> to vector<8x8x32xbf16>
    "tpu.trace_start"() <{level = 10 : i32, message = "nsd,ndh->nsh"}> : () -> ()
    %cst_171 = arith.constant dense<0.000000e+00> : vector<8x8x32xf32>
    %389 = tpu.matmul %384, %388, %cst_171 {dimension_numbers = #tpu.dot_dimension_numbers<[2], [1], [1], [2], [0, 0, 0, 1, 1, 2], [0], [0]>} : vector<8x8x8xbf16>, vector<8x8x32xbf16>, vector<8x8x32xf32> -> vector<8x8x32xf32>
    "tpu.trace_stop"() : () -> ()
    %390 = vector.shape_cast %389 : vector<8x8x32xf32> to vector<2x4x8x32xf32>
    %391 = vector.extract_strided_slice %390 {offsets = [0, 0, 0, 0], sizes = [2, 1, 8, 32], strides = [1, 1, 1, 1]} : vector<2x4x8x32xf32> to vector<2x1x8x32xf32>
    %392 = vector.shape_cast %391 : vector<2x1x8x32xf32> to vector<2x8x32xf32>
    %393 = vector.extract_strided_slice %390 {offsets = [0, 1, 0, 0], sizes = [2, 1, 8, 32], strides = [1, 1, 1, 1]} : vector<2x4x8x32xf32> to vector<2x1x8x32xf32>
    %394 = vector.shape_cast %393 : vector<2x1x8x32xf32> to vector<2x8x32xf32>
    %395 = arith.addf %392, %394 : vector<2x8x32xf32>
    %396 = vector.extract_strided_slice %390 {offsets = [0, 2, 0, 0], sizes = [2, 1, 8, 32], strides = [1, 1, 1, 1]} : vector<2x4x8x32xf32> to vector<2x1x8x32xf32>
    %397 = vector.shape_cast %396 : vector<2x1x8x32xf32> to vector<2x8x32xf32>
    %398 = arith.addf %395, %397 : vector<2x8x32xf32>
    %399 = vector.extract_strided_slice %390 {offsets = [0, 3, 0, 0], sizes = [2, 1, 8, 32], strides = [1, 1, 1, 1]} : vector<2x4x8x32xf32> to vector<2x1x8x32xf32>
    %400 = vector.shape_cast %399 : vector<2x1x8x32xf32> to vector<2x8x32xf32>
    %401 = arith.addf %398, %400 : vector<2x8x32xf32>
    %402 = arith.addf %317, %401 : vector<2x8x32xf32>
    %cst_172 = arith.constant dense<0.000000e+00> : vector<2x8xf32>
    %403 = vector.multi_reduction <add>, %402, %cst_172 [2] : vector<2x8x32xf32> to vector<2x8xf32>
    %404 = vector.shape_cast %403 : vector<2x8xf32> to vector<2x8x1xf32>
    %cst_173 = arith.constant 3.200000e+01 : f32
    %405 = vector.broadcast %cst_173 : f32 to vector<2x8x1xf32>
    %406 = arith.divf %404, %405 : vector<2x8x1xf32>
    %407 = vector.broadcast %406 : vector<2x8x1xf32> to vector<2x8x32xf32>
    %408 = arith.subf %402, %407 : vector<2x8x32xf32>
    %409 = vector.broadcast %406 : vector<2x8x1xf32> to vector<2x8x32xf32>
    %410 = arith.subf %402, %409 : vector<2x8x32xf32>
    %411 = arith.mulf %408, %410 : vector<2x8x32xf32>
    %cst_174 = arith.constant dense<0.000000e+00> : vector<2x8xf32>
    %412 = vector.multi_reduction <add>, %411, %cst_174 [2] : vector<2x8x32xf32> to vector<2x8xf32>
    %413 = vector.shape_cast %412 : vector<2x8xf32> to vector<2x8x1xf32>
    %cst_175 = arith.constant 3.200000e+01 : f32
    %414 = vector.broadcast %cst_175 : f32 to vector<2x8x1xf32>
    %415 = arith.divf %413, %414 : vector<2x8x1xf32>
    %416 = vector.broadcast %406 : vector<2x8x1xf32> to vector<2x8x32xf32>
    %417 = arith.subf %402, %416 : vector<2x8x32xf32>
    %cst_176 = arith.constant 9.99999974E-6 : f32
    %418 = vector.broadcast %cst_176 : f32 to vector<2x8x1xf32>
    %419 = arith.addf %415, %418 : vector<2x8x1xf32>
    %420 = math.rsqrt %419 : vector<2x8x1xf32>
    %421 = vector.broadcast %420 : vector<2x8x1xf32> to vector<2x8x32xf32>
    %422 = arith.mulf %417, %421 : vector<2x8x32xf32>
    %423 = vector.shape_cast %337 : vector<1x32xf32> to vector<1x1x32xf32>
    %424 = vector.broadcast %423 : vector<1x1x32xf32> to vector<2x8x32xf32>
    %425 = arith.mulf %422, %424 : vector<2x8x32xf32>
    %426 = vector.shape_cast %339 : vector<1x32xf32> to vector<1x1x32xf32>
    %427 = vector.broadcast %426 : vector<1x1x32xf32> to vector<2x8x32xf32>
    %428 = arith.addf %425, %427 : vector<2x8x32xf32>
    %429 = vector.shape_cast %428 : vector<2x8x32xf32> to vector<16x32xf32>
    %430 = arith.truncf %429 : vector<16x32xf32> to vector<16x32xbf16>
    %cst_177 = arith.constant dense<0.000000e+00> : vector<16x64xf32>
    %431 = tpu.matmul %430, %329, %cst_177 {dimension_numbers = #tpu.dot_dimension_numbers<[1], [0], [0], [1], [0, 0, 1, 1], [], []>} : vector<16x32xbf16>, vector<32x64xbf16>, vector<16x64xf32> -> vector<16x64xf32>
    %432 = vector.broadcast %331 : vector<1x64xf32> to vector<16x64xf32>
    %433 = arith.addf %431, %432 : vector<16x64xf32>
    %cst_178 = arith.constant 5.000000e-01 : f32
    %434 = vector.broadcast %cst_178 : f32 to vector<16x64xf32>
    %435 = arith.mulf %434, %433 : vector<16x64xf32>
    %cst_179 = arith.constant 4.471500e-02 : f32
    %436 = vector.broadcast %cst_179 : f32 to vector<16x64xf32>
    %437 = arith.mulf %436, %433 : vector<16x64xf32>
    %438 = arith.mulf %437, %433 : vector<16x64xf32>
    %439 = arith.mulf %438, %433 : vector<16x64xf32>
    %440 = arith.addf %433, %439 : vector<16x64xf32>
    %cst_180 = arith.constant 0.797884583 : f32
    %441 = vector.broadcast %cst_180 : f32 to vector<16x64xf32>
    %442 = arith.mulf %441, %440 : vector<16x64xf32>
    %443 = math.tanh %442 : vector<16x64xf32>
    %cst_181 = arith.constant 1.000000e+00 : f32
    %444 = vector.broadcast %cst_181 : f32 to vector<16x64xf32>
    %445 = arith.addf %444, %443 : vector<16x64xf32>
    %446 = arith.mulf %435, %445 : vector<16x64xf32>
    %447 = arith.truncf %446 : vector<16x64xf32> to vector<16x64xbf16>
    %cst_182 = arith.constant dense<0.000000e+00> : vector<16x32xf32>
    %448 = tpu.matmul %447, %333, %cst_182 {dimension_numbers = #tpu.dot_dimension_numbers<[1], [0], [0], [1], [0, 0, 1, 1], [], []>} : vector<16x64xbf16>, vector<64x32xbf16>, vector<16x32xf32> -> vector<16x32xf32>
    %449 = vector.broadcast %335 : vector<1x32xf32> to vector<16x32xf32>
    %450 = arith.addf %448, %449 : vector<16x32xf32>
    %451 = arith.addf %429, %450 : vector<16x32xf32>
    %cst_183 = arith.constant dense<0.000000e+00> : vector<16xf32>
    %452 = vector.multi_reduction <add>, %451, %cst_183 [1] : vector<16x32xf32> to vector<16xf32>
    %453 = vector.shape_cast %452 : vector<16xf32> to vector<16x1xf32>
    %cst_184 = arith.constant 3.200000e+01 : f32
    %454 = vector.broadcast %cst_184 : f32 to vector<16x1xf32>
    %455 = arith.divf %453, %454 : vector<16x1xf32>
    %456 = vector.broadcast %455 : vector<16x1xf32> to vector<16x32xf32>
    %457 = arith.subf %451, %456 : vector<16x32xf32>
    %458 = vector.broadcast %455 : vector<16x1xf32> to vector<16x32xf32>
    %459 = arith.subf %451, %458 : vector<16x32xf32>
    %460 = arith.mulf %457, %459 : vector<16x32xf32>
    %cst_185 = arith.constant dense<0.000000e+00> : vector<16xf32>
    %461 = vector.multi_reduction <add>, %460, %cst_185 [1] : vector<16x32xf32> to vector<16xf32>
    %462 = vector.shape_cast %461 : vector<16xf32> to vector<16x1xf32>
    %cst_186 = arith.constant 3.200000e+01 : f32
    %463 = vector.broadcast %cst_186 : f32 to vector<16x1xf32>
    %464 = arith.divf %462, %463 : vector<16x1xf32>
    %465 = vector.broadcast %455 : vector<16x1xf32> to vector<16x32xf32>
    %466 = arith.subf %451, %465 : vector<16x32xf32>
    %cst_187 = arith.constant 9.99999974E-6 : f32
    %467 = vector.broadcast %cst_187 : f32 to vector<16x1xf32>
    %468 = arith.addf %464, %467 : vector<16x1xf32>
    %469 = math.rsqrt %468 : vector<16x1xf32>
    %470 = vector.broadcast %469 : vector<16x1xf32> to vector<16x32xf32>
    %471 = arith.mulf %466, %470 : vector<16x32xf32>
    %472 = vector.broadcast %341 : vector<1x32xf32> to vector<16x32xf32>
    %473 = arith.mulf %471, %472 : vector<16x32xf32>
    %474 = vector.broadcast %343 : vector<1x32xf32> to vector<16x32xf32>
    %475 = arith.addf %473, %474 : vector<16x32xf32>
    %476 = vector.shape_cast %475 : vector<16x32xf32> to vector<2x8x32xf32>
    %477 = vector.extract_strided_slice %476 {offsets = [0, 0, 0], sizes = [2, 1, 32], strides = [1, 1, 1]} : vector<2x8x32xf32> to vector<2x1x32xf32>
    %478 = vector.shape_cast %477 : vector<2x1x32xf32> to vector<2x32xf32>
    %c9_188 = arith.constant 9 : index
    %c0_189 = arith.constant 0 : index
    %c0_190 = arith.constant 0 : index
    %c0_191 = arith.constant 0 : index
    %479 = vector.load %arg3[%c9_188, %c0_189, %c0_190, %c0_191] : memref<12x4x32x8xbf16, #tpu.memory_space<vmem>>, vector<1x4x32x8xbf16>
    %480 = vector.shape_cast %479 : vector<1x4x32x8xbf16> to vector<4x32x8xbf16>
    %c10_192 = arith.constant 10 : index
    %c0_193 = arith.constant 0 : index
    %c0_194 = arith.constant 0 : index
    %c0_195 = arith.constant 0 : index
    %481 = vector.load %arg3[%c10_192, %c0_193, %c0_194, %c0_195] : memref<12x4x32x8xbf16, #tpu.memory_space<vmem>>, vector<1x4x32x8xbf16>
    %482 = vector.shape_cast %481 : vector<1x4x32x8xbf16> to vector<4x32x8xbf16>
    %c11_196 = arith.constant 11 : index
    %c0_197 = arith.constant 0 : index
    %c0_198 = arith.constant 0 : index
    %c0_199 = arith.constant 0 : index
    %483 = vector.load %arg3[%c11_196, %c0_197, %c0_198, %c0_199] : memref<12x4x32x8xbf16, #tpu.memory_space<vmem>>, vector<1x4x32x8xbf16>
    %484 = vector.shape_cast %483 : vector<1x4x32x8xbf16> to vector<4x32x8xbf16>
    %c3_200 = arith.constant 3 : index
    %c0_201 = arith.constant 0 : index
    %c0_202 = arith.constant 0 : index
    %c0_203 = arith.constant 0 : index
    %485 = vector.load %arg4[%c3_200, %c0_201, %c0_202, %c0_203] : memref<4x4x8x32xbf16, #tpu.memory_space<vmem>>, vector<1x4x8x32xbf16>
    %486 = vector.shape_cast %485 : vector<1x4x8x32xbf16> to vector<4x8x32xbf16>
    %c3_204 = arith.constant 3 : index
    %c0_205 = arith.constant 0 : index
    %c0_206 = arith.constant 0 : index
    %487 = vector.load %arg5[%c3_204, %c0_205, %c0_206] : memref<4x32x64xbf16, #tpu.memory_space<vmem>>, vector<1x32x64xbf16>
    %488 = vector.shape_cast %487 : vector<1x32x64xbf16> to vector<32x64xbf16>
    %c3_207 = arith.constant 3 : index
    %c0_208 = arith.constant 0 : index
    %c0_209 = arith.constant 0 : index
    %489 = vector.load %arg6[%c3_207, %c0_208, %c0_209] : memref<4x1x64xf32, #tpu.memory_space<vmem>>, vector<1x1x64xf32>
    %490 = vector.shape_cast %489 : vector<1x1x64xf32> to vector<1x64xf32>
    %c3_210 = arith.constant 3 : index
    %c0_211 = arith.constant 0 : index
    %c0_212 = arith.constant 0 : index
    %491 = vector.load %arg7[%c3_210, %c0_211, %c0_212] : memref<4x64x32xbf16, #tpu.memory_space<vmem>>, vector<1x64x32xbf16>
    %492 = vector.shape_cast %491 : vector<1x64x32xbf16> to vector<64x32xbf16>
    %c3_213 = arith.constant 3 : index
    %c0_214 = arith.constant 0 : index
    %c0_215 = arith.constant 0 : index
    %493 = vector.load %arg8[%c3_213, %c0_214, %c0_215] : memref<4x1x32xf32, #tpu.memory_space<vmem>>, vector<1x1x32xf32>
    %494 = vector.shape_cast %493 : vector<1x1x32xf32> to vector<1x32xf32>
    %c12 = arith.constant 12 : index
    %c0_216 = arith.constant 0 : index
    %c0_217 = arith.constant 0 : index
    %495 = vector.load %arg9[%c12, %c0_216, %c0_217] : memref<16x1x32xf32, #tpu.memory_space<vmem>>, vector<1x1x32xf32>
    %496 = vector.shape_cast %495 : vector<1x1x32xf32> to vector<1x32xf32>
    %c13 = arith.constant 13 : index
    %c0_218 = arith.constant 0 : index
    %c0_219 = arith.constant 0 : index
    %497 = vector.load %arg9[%c13, %c0_218, %c0_219] : memref<16x1x32xf32, #tpu.memory_space<vmem>>, vector<1x1x32xf32>
    %498 = vector.shape_cast %497 : vector<1x1x32xf32> to vector<1x32xf32>
    %c14 = arith.constant 14 : index
    %c0_220 = arith.constant 0 : index
    %c0_221 = arith.constant 0 : index
    %499 = vector.load %arg9[%c14, %c0_220, %c0_221] : memref<16x1x32xf32, #tpu.memory_space<vmem>>, vector<1x1x32xf32>
    %500 = vector.shape_cast %499 : vector<1x1x32xf32> to vector<1x32xf32>
    %c15 = arith.constant 15 : index
    %c0_222 = arith.constant 0 : index
    %c0_223 = arith.constant 0 : index
    %501 = vector.load %arg9[%c15, %c0_222, %c0_223] : memref<16x1x32xf32, #tpu.memory_space<vmem>>, vector<1x1x32xf32>
    %502 = vector.shape_cast %501 : vector<1x1x32xf32> to vector<1x32xf32>
    %503 = arith.truncf %476 : vector<2x8x32xf32> to vector<2x8x32xbf16>
    %504 = vector.shape_cast %503 : vector<2x8x32xbf16> to vector<2x1x8x32xbf16>
    %505 = vector.shape_cast %504 : vector<2x1x8x32xbf16> to vector<2x1x8x32xbf16>
    %506 = vector.broadcast %505 : vector<2x1x8x32xbf16> to vector<2x4x8x32xbf16>
    %507 = vector.shape_cast %506 : vector<2x4x8x32xbf16> to vector<8x8x32xbf16>
    %508 = vector.shape_cast %480 : vector<4x32x8xbf16> to vector<1x4x32x8xbf16>
    %509 = vector.shape_cast %508 : vector<1x4x32x8xbf16> to vector<1x4x32x8xbf16>
    %510 = vector.broadcast %509 : vector<1x4x32x8xbf16> to vector<2x4x32x8xbf16>
    %511 = vector.shape_cast %510 : vector<2x4x32x8xbf16> to vector<8x32x8xbf16>
    "tpu.trace_start"() <{level = 10 : i32, message = "nsh,nhd->nsd"}> : () -> ()
    %cst_224 = arith.constant dense<0.000000e+00> : vector<8x8x8xf32>
    %512 = tpu.matmul %507, %511, %cst_224 {dimension_numbers = #tpu.dot_dimension_numbers<[2], [1], [1], [2], [0, 0, 0, 1, 1, 2], [0], [0]>} : vector<8x8x32xbf16>, vector<8x32x8xbf16>, vector<8x8x8xf32> -> vector<8x8x8xf32>
    "tpu.trace_stop"() : () -> ()
    %513 = vector.shape_cast %482 : vector<4x32x8xbf16> to vector<1x4x32x8xbf16>
    %514 = vector.shape_cast %513 : vector<1x4x32x8xbf16> to vector<1x4x32x8xbf16>
    %515 = vector.broadcast %514 : vector<1x4x32x8xbf16> to vector<2x4x32x8xbf16>
    %516 = vector.shape_cast %515 : vector<2x4x32x8xbf16> to vector<8x32x8xbf16>
    "tpu.trace_start"() <{level = 10 : i32, message = "nsh,nhd->nsd"}> : () -> ()
    %cst_225 = arith.constant dense<0.000000e+00> : vector<8x8x8xf32>
    %517 = tpu.matmul %507, %516, %cst_225 {dimension_numbers = #tpu.dot_dimension_numbers<[2], [1], [1], [2], [0, 0, 0, 1, 1, 2], [0], [0]>} : vector<8x8x32xbf16>, vector<8x32x8xbf16>, vector<8x8x8xf32> -> vector<8x8x8xf32>
    "tpu.trace_stop"() : () -> ()
    %518 = vector.shape_cast %484 : vector<4x32x8xbf16> to vector<1x4x32x8xbf16>
    %519 = vector.shape_cast %518 : vector<1x4x32x8xbf16> to vector<1x4x32x8xbf16>
    %520 = vector.broadcast %519 : vector<1x4x32x8xbf16> to vector<2x4x32x8xbf16>
    %521 = vector.shape_cast %520 : vector<2x4x32x8xbf16> to vector<8x32x8xbf16>
    "tpu.trace_start"() <{level = 10 : i32, message = "nsh,nhd->nsd"}> : () -> ()
    %cst_226 = arith.constant dense<0.000000e+00> : vector<8x8x8xf32>
    %522 = tpu.matmul %507, %521, %cst_226 {dimension_numbers = #tpu.dot_dimension_numbers<[2], [1], [1], [2], [0, 0, 0, 1, 1, 2], [0], [0]>} : vector<8x8x32xbf16>, vector<8x32x8xbf16>, vector<8x8x8xf32> -> vector<8x8x8xf32>
    "tpu.trace_stop"() : () -> ()
    %523 = arith.truncf %512 : vector<8x8x8xf32> to vector<8x8x8xbf16>
    %524 = arith.truncf %517 : vector<8x8x8xf32> to vector<8x8x8xbf16>
    "tpu.trace_start"() <{level = 10 : i32, message = "nqd,nkd->nqk"}> : () -> ()
    %cst_227 = arith.constant dense<0.000000e+00> : vector<8x8x8xf32>
    %525 = tpu.matmul %523, %524, %cst_227 {dimension_numbers = #tpu.dot_dimension_numbers<[2], [2], [1], [1], [0, 0, 0, 1, 1, 1], [0], [0]>} : vector<8x8x8xbf16>, vector<8x8x8xbf16>, vector<8x8x8xf32> -> vector<8x8x8xf32>
    "tpu.trace_stop"() : () -> ()
    %cst_228 = arith.constant 0.353553385 : f32
    %526 = vector.broadcast %cst_228 : f32 to vector<8x8x8xf32>
    %527 = arith.mulf %525, %526 : vector<8x8x8xf32>
    %528 = vector.broadcast %1 : vector<8x1x8xf32> to vector<8x8x8xf32>
    %529 = arith.addf %527, %528 : vector<8x8x8xf32>
    %cst_229 = arith.constant dense<0xFF800000> : vector<8x8xf32>
    %530 = vector.multi_reduction <maximumf>, %529, %cst_229 [2] : vector<8x8x8xf32> to vector<8x8xf32>
    %531 = vector.shape_cast %530 : vector<8x8xf32> to vector<8x8x1xf32>
    %532 = vector.broadcast %531 : vector<8x8x1xf32> to vector<8x8x8xf32>
    %533 = arith.subf %529, %532 : vector<8x8x8xf32>
    %534 = math.exp %533 : vector<8x8x8xf32>
    %cst_230 = arith.constant dense<0.000000e+00> : vector<8x8xf32>
    %535 = vector.multi_reduction <add>, %534, %cst_230 [2] : vector<8x8x8xf32> to vector<8x8xf32>
    %536 = vector.shape_cast %535 : vector<8x8xf32> to vector<8x8x1xf32>
    %537 = tpu.reciprocal %536 {approx = true} : vector<8x8x1xf32> -> vector<8x8x1xf32>
    %538 = vector.broadcast %537 : vector<8x8x1xf32> to vector<8x8x8xf32>
    %539 = arith.mulf %534, %538 : vector<8x8x8xf32>
    %540 = arith.truncf %539 : vector<8x8x8xf32> to vector<8x8x8xbf16>
    %541 = arith.truncf %522 : vector<8x8x8xf32> to vector<8x8x8xbf16>
    "tpu.trace_start"() <{level = 10 : i32, message = "nqk,nkd->nqd"}> : () -> ()
    %cst_231 = arith.constant dense<0.000000e+00> : vector<8x8x8xf32>
    %542 = tpu.matmul %540, %541, %cst_231 {dimension_numbers = #tpu.dot_dimension_numbers<[2], [1], [1], [2], [0, 0, 0, 1, 1, 2], [0], [0]>} : vector<8x8x8xbf16>, vector<8x8x8xbf16>, vector<8x8x8xf32> -> vector<8x8x8xf32>
    "tpu.trace_stop"() : () -> ()
    %543 = arith.truncf %542 : vector<8x8x8xf32> to vector<8x8x8xbf16>
    %544 = vector.shape_cast %486 : vector<4x8x32xbf16> to vector<1x4x8x32xbf16>
    %545 = vector.shape_cast %544 : vector<1x4x8x32xbf16> to vector<1x4x8x32xbf16>
    %546 = vector.broadcast %545 : vector<1x4x8x32xbf16> to vector<2x4x8x32xbf16>
    %547 = vector.shape_cast %546 : vector<2x4x8x32xbf16> to vector<8x8x32xbf16>
    "tpu.trace_start"() <{level = 10 : i32, message = "nsd,ndh->nsh"}> : () -> ()
    %cst_232 = arith.constant dense<0.000000e+00> : vector<8x8x32xf32>
    %548 = tpu.matmul %543, %547, %cst_232 {dimension_numbers = #tpu.dot_dimension_numbers<[2], [1], [1], [2], [0, 0, 0, 1, 1, 2], [0], [0]>} : vector<8x8x8xbf16>, vector<8x8x32xbf16>, vector<8x8x32xf32> -> vector<8x8x32xf32>
    "tpu.trace_stop"() : () -> ()
    %549 = vector.shape_cast %548 : vector<8x8x32xf32> to vector<2x4x8x32xf32>
    %550 = vector.extract_strided_slice %549 {offsets = [0, 0, 0, 0], sizes = [2, 1, 8, 32], strides = [1, 1, 1, 1]} : vector<2x4x8x32xf32> to vector<2x1x8x32xf32>
    %551 = vector.shape_cast %550 : vector<2x1x8x32xf32> to vector<2x8x32xf32>
    %552 = vector.extract_strided_slice %549 {offsets = [0, 1, 0, 0], sizes = [2, 1, 8, 32], strides = [1, 1, 1, 1]} : vector<2x4x8x32xf32> to vector<2x1x8x32xf32>
    %553 = vector.shape_cast %552 : vector<2x1x8x32xf32> to vector<2x8x32xf32>
    %554 = arith.addf %551, %553 : vector<2x8x32xf32>
    %555 = vector.extract_strided_slice %549 {offsets = [0, 2, 0, 0], sizes = [2, 1, 8, 32], strides = [1, 1, 1, 1]} : vector<2x4x8x32xf32> to vector<2x1x8x32xf32>
    %556 = vector.shape_cast %555 : vector<2x1x8x32xf32> to vector<2x8x32xf32>
    %557 = arith.addf %554, %556 : vector<2x8x32xf32>
    %558 = vector.extract_strided_slice %549 {offsets = [0, 3, 0, 0], sizes = [2, 1, 8, 32], strides = [1, 1, 1, 1]} : vector<2x4x8x32xf32> to vector<2x1x8x32xf32>
    %559 = vector.shape_cast %558 : vector<2x1x8x32xf32> to vector<2x8x32xf32>
    %560 = arith.addf %557, %559 : vector<2x8x32xf32>
    %561 = arith.addf %476, %560 : vector<2x8x32xf32>
    %cst_233 = arith.constant dense<0.000000e+00> : vector<2x8xf32>
    %562 = vector.multi_reduction <add>, %561, %cst_233 [2] : vector<2x8x32xf32> to vector<2x8xf32>
    %563 = vector.shape_cast %562 : vector<2x8xf32> to vector<2x8x1xf32>
    %cst_234 = arith.constant 3.200000e+01 : f32
    %564 = vector.broadcast %cst_234 : f32 to vector<2x8x1xf32>
    %565 = arith.divf %563, %564 : vector<2x8x1xf32>
    %566 = vector.broadcast %565 : vector<2x8x1xf32> to vector<2x8x32xf32>
    %567 = arith.subf %561, %566 : vector<2x8x32xf32>
    %568 = vector.broadcast %565 : vector<2x8x1xf32> to vector<2x8x32xf32>
    %569 = arith.subf %561, %568 : vector<2x8x32xf32>
    %570 = arith.mulf %567, %569 : vector<2x8x32xf32>
    %cst_235 = arith.constant dense<0.000000e+00> : vector<2x8xf32>
    %571 = vector.multi_reduction <add>, %570, %cst_235 [2] : vector<2x8x32xf32> to vector<2x8xf32>
    %572 = vector.shape_cast %571 : vector<2x8xf32> to vector<2x8x1xf32>
    %cst_236 = arith.constant 3.200000e+01 : f32
    %573 = vector.broadcast %cst_236 : f32 to vector<2x8x1xf32>
    %574 = arith.divf %572, %573 : vector<2x8x1xf32>
    %575 = vector.broadcast %565 : vector<2x8x1xf32> to vector<2x8x32xf32>
    %576 = arith.subf %561, %575 : vector<2x8x32xf32>
    %cst_237 = arith.constant 9.99999974E-6 : f32
    %577 = vector.broadcast %cst_237 : f32 to vector<2x8x1xf32>
    %578 = arith.addf %574, %577 : vector<2x8x1xf32>
    %579 = math.rsqrt %578 : vector<2x8x1xf32>
    %580 = vector.broadcast %579 : vector<2x8x1xf32> to vector<2x8x32xf32>
    %581 = arith.mulf %576, %580 : vector<2x8x32xf32>
    %582 = vector.shape_cast %496 : vector<1x32xf32> to vector<1x1x32xf32>
    %583 = vector.broadcast %582 : vector<1x1x32xf32> to vector<2x8x32xf32>
    %584 = arith.mulf %581, %583 : vector<2x8x32xf32>
    %585 = vector.shape_cast %498 : vector<1x32xf32> to vector<1x1x32xf32>
    %586 = vector.broadcast %585 : vector<1x1x32xf32> to vector<2x8x32xf32>
    %587 = arith.addf %584, %586 : vector<2x8x32xf32>
    %588 = vector.shape_cast %587 : vector<2x8x32xf32> to vector<16x32xf32>
    %589 = arith.truncf %588 : vector<16x32xf32> to vector<16x32xbf16>
    %cst_238 = arith.constant dense<0.000000e+00> : vector<16x64xf32>
    %590 = tpu.matmul %589, %488, %cst_238 {dimension_numbers = #tpu.dot_dimension_numbers<[1], [0], [0], [1], [0, 0, 1, 1], [], []>} : vector<16x32xbf16>, vector<32x64xbf16>, vector<16x64xf32> -> vector<16x64xf32>
    %591 = vector.broadcast %490 : vector<1x64xf32> to vector<16x64xf32>
    %592 = arith.addf %590, %591 : vector<16x64xf32>
    %cst_239 = arith.constant 5.000000e-01 : f32
    %593 = vector.broadcast %cst_239 : f32 to vector<16x64xf32>
    %594 = arith.mulf %593, %592 : vector<16x64xf32>
    %cst_240 = arith.constant 4.471500e-02 : f32
    %595 = vector.broadcast %cst_240 : f32 to vector<16x64xf32>
    %596 = arith.mulf %595, %592 : vector<16x64xf32>
    %597 = arith.mulf %596, %592 : vector<16x64xf32>
    %598 = arith.mulf %597, %592 : vector<16x64xf32>
    %599 = arith.addf %592, %598 : vector<16x64xf32>
    %cst_241 = arith.constant 0.797884583 : f32
    %600 = vector.broadcast %cst_241 : f32 to vector<16x64xf32>
    %601 = arith.mulf %600, %599 : vector<16x64xf32>
    %602 = math.tanh %601 : vector<16x64xf32>
    %cst_242 = arith.constant 1.000000e+00 : f32
    %603 = vector.broadcast %cst_242 : f32 to vector<16x64xf32>
    %604 = arith.addf %603, %602 : vector<16x64xf32>
    %605 = arith.mulf %594, %604 : vector<16x64xf32>
    %606 = arith.truncf %605 : vector<16x64xf32> to vector<16x64xbf16>
    %cst_243 = arith.constant dense<0.000000e+00> : vector<16x32xf32>
    %607 = tpu.matmul %606, %492, %cst_243 {dimension_numbers = #tpu.dot_dimension_numbers<[1], [0], [0], [1], [0, 0, 1, 1], [], []>} : vector<16x64xbf16>, vector<64x32xbf16>, vector<16x32xf32> -> vector<16x32xf32>
    %608 = vector.broadcast %494 : vector<1x32xf32> to vector<16x32xf32>
    %609 = arith.addf %607, %608 : vector<16x32xf32>
    %610 = arith.addf %588, %609 : vector<16x32xf32>
    %cst_244 = arith.constant dense<0.000000e+00> : vector<16xf32>
    %611 = vector.multi_reduction <add>, %610, %cst_244 [1] : vector<16x32xf32> to vector<16xf32>
    %612 = vector.shape_cast %611 : vector<16xf32> to vector<16x1xf32>
    %cst_245 = arith.constant 3.200000e+01 : f32
    %613 = vector.broadcast %cst_245 : f32 to vector<16x1xf32>
    %614 = arith.divf %612, %613 : vector<16x1xf32>
    %615 = vector.broadcast %614 : vector<16x1xf32> to vector<16x32xf32>
    %616 = arith.subf %610, %615 : vector<16x32xf32>
    %617 = vector.broadcast %614 : vector<16x1xf32> to vector<16x32xf32>
    %618 = arith.subf %610, %617 : vector<16x32xf32>
    %619 = arith.mulf %616, %618 : vector<16x32xf32>
    %cst_246 = arith.constant dense<0.000000e+00> : vector<16xf32>
    %620 = vector.multi_reduction <add>, %619, %cst_246 [1] : vector<16x32xf32> to vector<16xf32>
    %621 = vector.shape_cast %620 : vector<16xf32> to vector<16x1xf32>
    %cst_247 = arith.constant 3.200000e+01 : f32
    %622 = vector.broadcast %cst_247 : f32 to vector<16x1xf32>
    %623 = arith.divf %621, %622 : vector<16x1xf32>
    %624 = vector.broadcast %614 : vector<16x1xf32> to vector<16x32xf32>
    %625 = arith.subf %610, %624 : vector<16x32xf32>
    %cst_248 = arith.constant 9.99999974E-6 : f32
    %626 = vector.broadcast %cst_248 : f32 to vector<16x1xf32>
    %627 = arith.addf %623, %626 : vector<16x1xf32>
    %628 = math.rsqrt %627 : vector<16x1xf32>
    %629 = vector.broadcast %628 : vector<16x1xf32> to vector<16x32xf32>
    %630 = arith.mulf %625, %629 : vector<16x32xf32>
    %631 = vector.broadcast %500 : vector<1x32xf32> to vector<16x32xf32>
    %632 = arith.mulf %630, %631 : vector<16x32xf32>
    %633 = vector.broadcast %502 : vector<1x32xf32> to vector<16x32xf32>
    %634 = arith.addf %632, %633 : vector<16x32xf32>
    %635 = vector.shape_cast %634 : vector<16x32xf32> to vector<2x8x32xf32>
    %636 = vector.extract_strided_slice %635 {offsets = [0, 0, 0], sizes = [2, 1, 32], strides = [1, 1, 1]} : vector<2x8x32xf32> to vector<2x1x32xf32>
    %637 = vector.shape_cast %636 : vector<2x1x32xf32> to vector<2x32xf32>
    %638 = tpu.concatenate %637, %478, %319, %160 in 1 : vector<2x32xf32>, vector<2x32xf32>, vector<2x32xf32>, vector<2x32xf32> -> vector<2x128xf32>
    %639 = arith.truncf %638 : vector<2x128xf32> to vector<2x128xbf16>
    %c0_249 = arith.constant 0 : index
    %c0_250 = arith.constant 0 : index
    %640 = vector.load %arg10[%c0_249, %c0_250] : memref<128x128xbf16, #tpu.memory_space<vmem>>, vector<128x128xbf16>
    %cst_251 = arith.constant dense<0.000000e+00> : vector<2x128xf32>
    %641 = tpu.matmul %639, %640, %cst_251 {dimension_numbers = #tpu.dot_dimension_numbers<[1], [0], [0], [1], [0, 0, 1, 1], [], []>} : vector<2x128xbf16>, vector<128x128xbf16>, vector<2x128xf32> -> vector<2x128xf32>
    %c0_252 = arith.constant 0 : index
    %c0_253 = arith.constant 0 : index
    %642 = vector.load %arg11[%c0_252, %c0_253] : memref<2x128xf32, #tpu.memory_space<vmem>>, vector<2x128xf32>
    tpu.vector_store %arg11[%c0_252, %c0_253], %641 {strides = array<i32>} : memref<2x128xf32, #tpu.memory_space<vmem>>, vector<2x128xf32>,
    return
  }
  func.func @transform_0(%arg0: i32) -> (i32, i32, i32) {
    %c0_i32 = arith.constant 0 : i32
    %c0_i32_0 = arith.constant 0 : i32
    %c0_i32_1 = arith.constant 0 : i32
    %c0_i32_2 = arith.constant 0 : i32
    return %c0_i32, %c0_i32_0, %c0_i32_1 : i32, i32, i32
  }
  func.func @transform_1(%arg0: i32) -> (i32, i32, i32) {
    %c0_i32 = arith.constant 0 : i32
    %c0_i32_0 = arith.constant 0 : i32
    %c0_i32_1 = arith.constant 0 : i32
    %c0_i32_2 = arith.constant 0 : i32
    return %c0_i32, %c0_i32_0, %c0_i32_1 : i32, i32, i32
  }
  func.func @transform_2(%arg0: i32) -> (i32, i32, i32, i32) {
    %c0_i32 = arith.constant 0 : i32
    %c0_i32_0 = arith.constant 0 : i32
    %c0_i32_1 = arith.constant 0 : i32
    %c0_i32_2 = arith.constant 0 : i32
    %c0_i32_3 = arith.constant 0 : i32
    return %c0_i32, %c0_i32_0, %c0_i32_1, %c0_i32_2 : i32, i32, i32, i32
  }
  func.func @transform_3(%arg0: i32) -> (i32, i32, i32, i32) {
    %c0_i32 = arith.constant 0 : i32
    %c0_i32_0 = arith.constant 0 : i32
    %c0_i32_1 = arith.constant 0 : i32
    %c0_i32_2 = arith.constant 0 : i32
    %c0_i32_3 = arith.constant 0 : i32
    return %c0_i32, %c0_i32_0, %c0_i32_1, %c0_i32_2 : i32, i32, i32, i32
  }
  func.func @transform_4(%arg0: i32) -> (i32, i32, i32) {
    %c0_i32 = arith.constant 0 : i32
    %c0_i32_0 = arith.constant 0 : i32
    %c0_i32_1 = arith.constant 0 : i32
    %c0_i32_2 = arith.constant 0 : i32
    return %c0_i32, %c0_i32_0, %c0_i32_1 : i32, i32, i32
  }
  func.func @transform_5(%arg0: i32) -> (i32, i32, i32) {
    %c0_i32 = arith.constant 0 : i32
    %c0_i32_0 = arith.constant 0 : i32
    %c0_i32_1 = arith.constant 0 : i32
    %c0_i32_2 = arith.constant 0 : i32
    return %c0_i32, %c0_i32_0, %c0_i32_1 : i32, i32, i32
  }
  func.func @transform_6(%arg0: i32) -> (i32, i32, i32) {
    %c0_i32 = arith.constant 0 : i32
    %c0_i32_0 = arith.constant 0 : i32
    %c0_i32_1 = arith.constant 0 : i32
    %c0_i32_2 = arith.constant 0 : i32
    return %c0_i32, %c0_i32_0, %c0_i32_1 : i32, i32, i32
  }
  func.func @transform_7(%arg0: i32) -> (i32, i32, i32) {
    %c0_i32 = arith.constant 0 : i32
    %c0_i32_0 = arith.constant 0 : i32
    %c0_i32_1 = arith.constant 0 : i32
    %c0_i32_2 = arith.constant 0 : i32
    return %c0_i32, %c0_i32_0, %c0_i32_1 : i32, i32, i32
  }
  func.func @transform_8(%arg0: i32) -> (i32, i32, i32) {
    %c0_i32 = arith.constant 0 : i32
    %c0_i32_0 = arith.constant 0 : i32
    %c0_i32_1 = arith.constant 0 : i32
    %c0_i32_2 = arith.constant 0 : i32
    return %c0_i32, %c0_i32_0, %c0_i32_1 : i32, i32, i32
  }
  func.func @transform_9(%arg0: i32) -> (i32, i32) {
    %c0_i32 = arith.constant 0 : i32
    %c0_i32_0 = arith.constant 0 : i32
    %c0_i32_1 = arith.constant 0 : i32
    return %c0_i32, %c0_i32_0 : i32, i32
  }
  func.func @transform_10(%arg0: i32) -> (i32, i32) {
    %c0_i32 = arith.constant 0 : i32
    %c0_i32_0 = arith.constant 0 : i32
    %c0_i32_1 = arith.constant 0 : i32
    return %c0_i32, %c0_i32_0 : i32, i32
  }
}

</mosaic_0001>

<llo_original>
// kernel: my_model_forward.1
$region0: #{my_model_forward.1}
  #allocation0 [shape = 'u32[]', space=smem, size = 0x4, offset = 0x4, fixed_abs, tag = 'smem constant byte address 0x4 - core index']
  #allocation1 [shape = 'u32[144,128]{1,0:T(1,128)}', space=vmem, size = 0x12000, scoped, tag = 'internal scratch']
  %s0 = inlined_call_operand.vmem [shape: f32[2,8,32], index: 0, kind: input, shape index: {}]
  %s1 = inlined_call_operand.vmem [shape: f32[8,1,8], index: 1, kind: input, shape index: {}]
  %s2 = inlined_call_operand.vmem [shape: bf16[12,4,32,8], index: 2, kind: input, shape index: {}]
  %s3 = inlined_call_operand.vmem [shape: bf16[4,4,8,32], index: 3, kind: input, shape index: {}]
  %s4 = inlined_call_operand.vmem [shape: bf16[4,32,64], index: 4, kind: input, shape index: {}]
  %s5 = inlined_call_operand.vmem [shape: f32[4,1,64], index: 5, kind: input, shape index: {}]
  %s6 = inlined_call_operand.vmem [shape: bf16[4,64,32], index: 6, kind: input, shape index: {}]
  %s7 = inlined_call_operand.vmem [shape: f32[4,1,32], index: 7, kind: input, shape index: {}]
  %s8 = inlined_call_operand.vmem [shape: f32[16,1,32], index: 8, kind: input, shape index: {}]
  %s9 = inlined_call_operand.vmem [shape: bf16[128,128], index: 9, kind: input, shape index: {}]
  %s10 = inlined_call_operand.hbm [shape: f32[2,128], index: 10, kind: output, shape index: {}]
  %s11 = sld [smem:[#allocation0]]
  $region50: #{my_model_forward.1} parent=0
    _
  %s13 = ssub.s32 1, %s11
  %s14 = scalar_select 0, %s13, %s11
  $region1: #{my_model_forward.1} parent=0
    #allocation2 [shape = 'u8[1024]{0}', space=vmem, size = 0x400, scoped, tag = 'output window, operand 0, single buffered']
    #allocation3 [shape = 's32[1]{0}', space=sflag, size = 0x4, scoped, tag = 'scoped memory for my_model_forward.1']
    %15 = vsyncpa [#allocation3], 0
    // Predicated region
    $region2: #{my_model_forward.1} parent=1 // pred_check
      _
    $region3: #{my_model_forward.1} parent=1 // pred_check_branch
      %17 = sbr.rel (0) target = $region5
    $region4: #{my_model_forward.1} parent=1 // pred_region
      _
    $region5: #{my_model_forward.1} parent=1 // pred_fallthru
      _
    // Predicated region
    $region6: #{my_model_forward.1} parent=1 // pred_check
      _
    $region7: #{my_model_forward.1} parent=1 // pred_check_branch
      %19 = sbr.rel (0) target = $region9
    $region8: #{my_model_forward.1} parent=1 // pred_region
      _
    $region9: #{my_model_forward.1} parent=1 // pred_fallthru
      _
    // Predicated region
    $region10: #{my_model_forward.1} parent=1 // pred_check
      _
    $region11: #{my_model_forward.1} parent=1 // pred_check_branch
      %21 = sbr.rel (0) target = $region13
    $region12: #{my_model_forward.1} parent=1 // pred_region
      _
    $region13: #{my_model_forward.1} parent=1 // pred_fallthru
      _
    // Predicated region
    $region14: #{my_model_forward.1} parent=1 // pred_check
      _
    $region15: #{my_model_forward.1} parent=1 // pred_check_branch
      %23 = sbr.rel (0) target = $region17
    $region16: #{my_model_forward.1} parent=1 // pred_region
      _
    $region17: #{my_model_forward.1} parent=1 // pred_fallthru
      _
    // Predicated region
    $region18: #{my_model_forward.1} parent=1 // pred_check
      _
    $region19: #{my_model_forward.1} parent=1 // pred_check_branch
      %25 = sbr.rel (0) target = $region21
    $region20: #{my_model_forward.1} parent=1 // pred_region
      _
    $region21: #{my_model_forward.1} parent=1 // pred_fallthru
      _
    // Predicated region
    $region22: #{my_model_forward.1} parent=1 // pred_check
      _
    $region23: #{my_model_forward.1} parent=1 // pred_check_branch
      %27 = sbr.rel (0) target = $region25
    $region24: #{my_model_forward.1} parent=1 // pred_region
      _
    $region25: #{my_model_forward.1} parent=1 // pred_fallthru
      _
    // Predicated region
    $region26: #{my_model_forward.1} parent=1 // pred_check
      _
    $region27: #{my_model_forward.1} parent=1 // pred_check_branch
      %29 = sbr.rel (0) target = $region29
    $region28: #{my_model_forward.1} parent=1 // pred_region
      _
    $region29: #{my_model_forward.1} parent=1 // pred_fallthru
      _
    // Predicated region
    $region30: #{my_model_forward.1} parent=1 // pred_check
      _
    $region31: #{my_model_forward.1} parent=1 // pred_check_branch
      %31 = sbr.rel (0) target = $region33
    $region32: #{my_model_forward.1} parent=1 // pred_region
      _
    $region33: #{my_model_forward.1} parent=1 // pred_fallthru
      _
    // Predicated region
    $region34: #{my_model_forward.1} parent=1 // pred_check
      _
    $region35: #{my_model_forward.1} parent=1 // pred_check_branch
      %33 = sbr.rel (0) target = $region37
    $region36: #{my_model_forward.1} parent=1 // pred_region
      _
    $region37: #{my_model_forward.1} parent=1 // pred_fallthru
      _
    // Predicated region
    $region38: #{my_model_forward.1} parent=1 // pred_check
      _
    $region39: #{my_model_forward.1} parent=1 // pred_check_branch
      %35 = sbr.rel (0) target = $region41
    $region40: #{my_model_forward.1} parent=1 // pred_region
      _
    $region41: #{my_model_forward.1} parent=1 // pred_fallthru
      _
    %v37 = vld [vmem:[%s0] sm:$0xff]
    %v38 = vld [vmem:[%s0 + $0x8] sm:$0xff]
    %v39 = vld [vmem:[%s1] sm:$0x1]
    %v40 = vld [vmem:[%s1 + $0x1] sm:$0x1]
    %v41 = vld [vmem:[%s1 + $0x2] sm:$0x1]
    %v42 = vld [vmem:[%s1 + $0x3] sm:$0x1]
    %v43 = vld [vmem:[%s1 + $0x4] sm:$0x1]
    %v44 = vld [vmem:[%s1 + $0x5] sm:$0x1]
    %v45 = vld [vmem:[%s1 + $0x6] sm:$0x1]
    %v46 = vld [vmem:[%s1 + $0x7] sm:$0x1]
    %v47 = vld [vmem:[%s2] sm:$0xf]
    %v48 = vld [vmem:[%s2 + $0x4] sm:$0xf]
    %v49 = vld [vmem:[%s2 + $0x8] sm:$0xf]
    %v50 = vld [vmem:[%s2 + $0xc] sm:$0xf]
    %v51 = vld [vmem:[%s2 + $0x10] sm:$0xf]
    %v52 = vld [vmem:[%s2 + $0x14] sm:$0xf]
    %v53 = vld [vmem:[%s2 + $0x18] sm:$0xf]
    %v54 = vld [vmem:[%s2 + $0x1c] sm:$0xf]
    %v55 = vld [vmem:[%s2 + $0x20] sm:$0xf]
    %v56 = vld [vmem:[%s2 + $0x24] sm:$0xf]
    %v57 = vld [vmem:[%s2 + $0x28] sm:$0xf]
    %v58 = vld [vmem:[%s2 + $0x2c] sm:$0xf]
    %v59 = vld [vmem:[%s2 + $0x30] sm:$0xf]
    %v60 = vld [vmem:[%s2 + $0x34] sm:$0xf]
    %v61 = vld [vmem:[%s2 + $0x38] sm:$0xf]
    %v62 = vld [vmem:[%s2 + $0x3c] sm:$0xf]
    %s63 = scalar_lea.vmem %s2, 64
    %v64 = vld [vmem:[%s63] sm:$0xf]
    %v65 = vld [vmem:[%s63 + $0x4] sm:$0xf]
    %v66 = vld [vmem:[%s63 + $0x8] sm:$0xf]
    %v67 = vld [vmem:[%s63 + $0xc] sm:$0xf]
    %v68 = vld [vmem:[%s63 + $0x10] sm:$0xf]
    %v69 = vld [vmem:[%s63 + $0x14] sm:$0xf]
    %v70 = vld [vmem:[%s63 + $0x18] sm:$0xf]
    %v71 = vld [vmem:[%s63 + $0x1c] sm:$0xf]
    %v72 = vld [vmem:[%s63 + $0x20] sm:$0xf]
    %v73 = vld [vmem:[%s63 + $0x24] sm:$0xf]
    %v74 = vld [vmem:[%s63 + $0x28] sm:$0xf]
    %v75 = vld [vmem:[%s63 + $0x2c] sm:$0xf]
    %v76 = vld [vmem:[%s63 + $0x30] sm:$0xf]
    %v77 = vld [vmem:[%s63 + $0x34] sm:$0xf]
    %v78 = vld [vmem:[%s63 + $0x38] sm:$0xf]
    %v79 = vld [vmem:[%s63 + $0x3c] sm:$0xf]
    %s80 = scalar_lea.vmem %s2, 128
    %v81 = vld [vmem:[%s80] sm:$0xf]
    %v82 = vld [vmem:[%s80 + $0x4] sm:$0xf]
    %v83 = vld [vmem:[%s80 + $0x8] sm:$0xf]
    %v84 = vld [vmem:[%s80 + $0xc] sm:$0xf]
    %v85 = vld [vmem:[%s80 + $0x10] sm:$0xf]
    %v86 = vld [vmem:[%s80 + $0x14] sm:$0xf]
    %v87 = vld [vmem:[%s80 + $0x18] sm:$0xf]
    %v88 = vld [vmem:[%s80 + $0x1c] sm:$0xf]
    %v89 = vld [vmem:[%s80 + $0x20] sm:$0xf]
    %v90 = vld [vmem:[%s80 + $0x24] sm:$0xf]
    %v91 = vld [vmem:[%s80 + $0x28] sm:$0xf]
    %v92 = vld [vmem:[%s80 + $0x2c] sm:$0xf]
    %v93 = vld [vmem:[%s80 + $0x30] sm:$0xf]
    %v94 = vld [vmem:[%s80 + $0x34] sm:$0xf]
    %v95 = vld [vmem:[%s80 + $0x38] sm:$0xf]
    %v96 = vld [vmem:[%s80 + $0x3c] sm:$0xf]
    %v97 = vld [vmem:[%s3] sm:$0xf]
    %v98 = vld [vmem:[%s3 + $0x4] sm:$0xf]
    %v99 = vld [vmem:[%s3 + $0x8] sm:$0xf]
    %v100 = vld [vmem:[%s3 + $0xc] sm:$0xf]
    %v101 = vld [vmem:[%s4] sm:$0xf]
    %v102 = vld [vmem:[%s4 + $0x4] sm:$0xf]
    %v103 = vld [vmem:[%s4 + $0x8] sm:$0xf]
    %v104 = vld [vmem:[%s4 + $0xc] sm:$0xf]
    %v105 = vld [vmem:[%s5] sm:$0x1]
    %v106 = vld [vmem:[%s6] sm:$0xf]
    %v107 = vld [vmem:[%s6 + $0x4] sm:$0xf]
    %v108 = vld [vmem:[%s6 + $0x8] sm:$0xf]
    %v109 = vld [vmem:[%s6 + $0xc] sm:$0xf]
    %v110 = vld [vmem:[%s6 + $0x10] sm:$0xf]
    %v111 = vld [vmem:[%s6 + $0x14] sm:$0xf]
    %v112 = vld [vmem:[%s6 + $0x18] sm:$0xf]
    %v113 = vld [vmem:[%s6 + $0x1c] sm:$0xf]
    %v114 = vld [vmem:[%s7] sm:$0x1]
    %v115 = vld [vmem:[%s8] sm:$0x1]
    %s116 = scalar_lea.vmem %s8, 1
    %v117 = vld [vmem:[%s116] sm:$0x1]
    %s118 = scalar_lea.vmem %s8, 2
    %v119 = vld [vmem:[%s118] sm:$0x1]
    %s120 = scalar_lea.vmem %s8, 3
    %v121 = vld [vmem:[%s120] sm:$0x1]
    %v122 = vpack.c.bf16 %v37, %v37
    %v123 = vpack.c.bf16 %v38, %v38
    %v128 = vunpack.c.l.b16 %v47
    %v129 = vunpack.c.l.b16 %v48
    %v130 = vunpack.c.l.b16 %v49
    %v131 = vunpack.c.l.b16 %v50
    %v132 = vpack.c.b16 %v129, %v128
    %v133 = vpack.c.b16 %v131, %v130
    %vm136 = vcmask 261120
    %v138 = vsel %vm136, %v122, 0
    %140 = vmatprep.subr.bf16.mxu0 0
    %141 = vmatpush1.bf16.msra.mxu0 %v132
    %142 = vmatprep.subr.bf16.mxu0 0
    %143 = vmatpush1.bf16.msra.mxu0 %v133
    %144 = vmatprep.subr.bf16.mxu0 0
    %145 = vmatpush1.bf16.msra.mxu0 0
    %146 = vmatprep.subr.bf16.mxu0 0
    %147 = vmatpush1.bf16.msra.mxu0 0
    %148 = vmatprep.subr.bf16.mxu0 0
    %149 = vmatpush1.bf16.msra.mxu0 0
    %150 = vmatprep.subr.bf16.mxu0 0
    %151 = vmatpush1.bf16.msra.mxu0 0
    %152 = vmatprep.subr.bf16.mxu0 0
    %153 = vmatpush1.bf16.msra.mxu0 0
    %154 = vmatprep.subr.bf16.mxu0 0
    %155 = vmatpush1.bf16.msra.mxu0 0
    %156 = vmatprep.subr.bf16.mxu0 0
    %157 = vmatpush1.bf16.msra.mxu0 0
    %158 = vmatprep.subr.bf16.mxu0 0
    %159 = vmatpush1.bf16.msra.mxu0 0
    %160 = vmatprep.subr.bf16.mxu0 0
    %161 = vmatpush1.bf16.msra.mxu0 0
    %162 = vmatprep.subr.bf16.mxu0 0
    %163 = vmatpush1.bf16.msra.mxu0 0
    %164 = vmatprep.subr.bf16.mxu0 0
    %165 = vmatpush1.bf16.msra.mxu0 0
    %166 = vmatprep.subr.bf16.mxu0 0
    %167 = vmatpush1.bf16.msra.mxu0 0
    %168 = vmatprep.subr.bf16.mxu0 0
    %169 = vmatpush1.bf16.msra.mxu0 0
    %170 = vmatprep.subr.bf16.mxu0 0
    %171 = vmatpush1.bf16.msra.mxu0 0
    %172 = vmatprep.mubr.bf16.mxu0 0
    %173 = vmatmul.mubr.bf16.gmra.mrb[0].mxu0 %v138
    %v174 = vpop.f32.mrb[0].mxu0
    %v175 = vadd.f32 0.0, %v174
    %v176 = vpop.f32.mrb[0].mxu0
    %v177 = vpop.f32.mrb[0].mxu0
    %v178 = vpop.f32.mrb[0].mxu0
    %179 = vdwg.mxu0
    %v184 = vunpack.c.l.b16 %v51
    %v185 = vunpack.c.l.b16 %v52
    %v186 = vunpack.c.l.b16 %v53
    %v187 = vunpack.c.l.b16 %v54
    %v188 = vpack.c.b16 %v185, %v184
    %v189 = vpack.c.b16 %v187, %v186
    %192 = vmatprep.subr.bf16.mxu0 0
    %193 = vmatpush1.bf16.msra.mxu0 %v188
    %194 = vmatprep.subr.bf16.mxu0 0
    %195 = vmatpush1.bf16.msra.mxu0 %v189
    %196 = vmatprep.subr.bf16.mxu0 0
    %197 = vmatpush1.bf16.msra.mxu0 0
    %198 = vmatprep.subr.bf16.mxu0 0
    %199 = vmatpush1.bf16.msra.mxu0 0
    %200 = vmatprep.subr.bf16.mxu0 0
    %201 = vmatpush1.bf16.msra.mxu0 0
    %202 = vmatprep.subr.bf16.mxu0 0
    %203 = vmatpush1.bf16.msra.mxu0 0
    %204 = vmatprep.subr.bf16.mxu0 0
    %205 = vmatpush1.bf16.msra.mxu0 0
    %206 = vmatprep.subr.bf16.mxu0 0
    %207 = vmatpush1.bf16.msra.mxu0 0
    %208 = vmatprep.subr.bf16.mxu0 0
    %209 = vmatpush1.bf16.msra.mxu0 0
    %210 = vmatprep.subr.bf16.mxu0 0
    %211 = vmatpush1.bf16.msra.mxu0 0
    %212 = vmatprep.subr.bf16.mxu0 0
    %213 = vmatpush1.bf16.msra.mxu0 0
    %214 = vmatprep.subr.bf16.mxu0 0
    %215 = vmatpush1.bf16.msra.mxu0 0
    %216 = vmatprep.subr.bf16.mxu0 0
    %217 = vmatpush1.bf16.msra.mxu0 0
    %218 = vmatprep.subr.bf16.mxu0 0
    %219 = vmatpush1.bf16.msra.mxu0 0
    %220 = vmatprep.subr.bf16.mxu0 0
    %221 = vmatpush1.bf16.msra.mxu0 0
    %222 = vmatprep.subr.bf16.mxu0 0
    %223 = vmatpush1.bf16.msra.mxu0 0
    %224 = vmatprep.mubr.bf16.mxu0 0
    %225 = vmatmul.mubr.bf16.gmra.mrb[0].mxu0 %v138
    %v226 = vpop.f32.mrb[0].mxu0
    %v227 = vadd.f32 0.0, %v226
    %v228 = vpop.f32.mrb[0].mxu0
    %v229 = vpop.f32.mrb[0].mxu0
    %v230 = vpop.f32.mrb[0].mxu0
    %231 = vdwg.mxu0
    %v236 = vunpack.c.l.b16 %v55
    %v237 = vunpack.c.l.b16 %v56
    %v238 = vunpack.c.l.b16 %v57
    %v239 = vunpack.c.l.b16 %v58
    %v240 = vpack.c.b16 %v237, %v236
    %v241 = vpack.c.b16 %v239, %v238
    %244 = vmatprep.subr.bf16.mxu0 0
    %245 = vmatpush1.bf16.msra.mxu0 %v240
    %246 = vmatprep.subr.bf16.mxu0 0
    %247 = vmatpush1.bf16.msra.mxu0 %v241
    %248 = vmatprep.subr.bf16.mxu0 0
    %249 = vmatpush1.bf16.msra.mxu0 0
    %250 = vmatprep.subr.bf16.mxu0 0
    %251 = vmatpush1.bf16.msra.mxu0 0
    %252 = vmatprep.subr.bf16.mxu0 0
    %253 = vmatpush1.bf16.msra.mxu0 0
    %254 = vmatprep.subr.bf16.mxu0 0
    %255 = vmatpush1.bf16.msra.mxu0 0
    %256 = vmatprep.subr.bf16.mxu0 0
    %257 = vmatpush1.bf16.msra.mxu0 0
    %258 = vmatprep.subr.bf16.mxu0 0
    %259 = vmatpush1.bf16.msra.mxu0 0
    %260 = vmatprep.subr.bf16.mxu0 0
    %261 = vmatpush1.bf16.msra.mxu0 0
    %262 = vmatprep.subr.bf16.mxu0 0
    %263 = vmatpush1.bf16.msra.mxu0 0
    %264 = vmatprep.subr.bf16.mxu0 0
    %265 = vmatpush1.bf16.msra.mxu0 0
    %266 = vmatprep.subr.bf16.mxu0 0
    %267 = vmatpush1.bf16.msra.mxu0 0
    %268 = vmatprep.subr.bf16.mxu0 0
    %269 = vmatpush1.bf16.msra.mxu0 0
    %270 = vmatprep.subr.bf16.mxu0 0
    %271 = vmatpush1.bf16.msra.mxu0 0
    %272 = vmatprep.subr.bf16.mxu0 0
    %273 = vmatpush1.bf16.msra.mxu0 0
    %274 = vmatprep.subr.bf16.mxu0 0
    %275 = vmatpush1.bf16.msra.mxu0 0
    %276 = vmatprep.mubr.bf16.mxu0 0
    %277 = vmatmul.mubr.bf16.gmra.mrb[0].mxu0 %v138
    %v278 = vpop.f32.mrb[0].mxu0
    %v279 = vadd.f32 0.0, %v278
    %v280 = vpop.f32.mrb[0].mxu0
    %v281 = vpop.f32.mrb[0].mxu0
    %v282 = vpop.f32.mrb[0].mxu0
    %283 = vdwg.mxu0
    %v288 = vunpack.c.l.b16 %v59
    %v289 = vunpack.c.l.b16 %v60
    %v290 = vunpack.c.l.b16 %v61
    %v291 = vunpack.c.l.b16 %v62
    %v292 = vpack.c.b16 %v289, %v288
    %v293 = vpack.c.b16 %v291, %v290
    %296 = vmatprep.subr.bf16.mxu0 0
    %297 = vmatpush1.bf16.msra.mxu0 %v292
    %298 = vmatprep.subr.bf16.mxu0 0
    %299 = vmatpush1.bf16.msra.mxu0 %v293
    %300 = vmatprep.subr.bf16.mxu0 0
    %301 = vmatpush1.bf16.msra.mxu0 0
    %302 = vmatprep.subr.bf16.mxu0 0
    %303 = vmatpush1.bf16.msra.mxu0 0
    %304 = vmatprep.subr.bf16.mxu0 0
    %305 = vmatpush1.bf16.msra.mxu0 0
    %306 = vmatprep.subr.bf16.mxu0 0
    %307 = vmatpush1.bf16.msra.mxu0 0
    %308 = vmatprep.subr.bf16.mxu0 0
    %309 = vmatpush1.bf16.msra.mxu0 0
    %310 = vmatprep.subr.bf16.mxu0 0
    %311 = vmatpush1.bf16.msra.mxu0 0
    %312 = vmatprep.subr.bf16.mxu0 0
    %313 = vmatpush1.bf16.msra.mxu0 0
    %314 = vmatprep.subr.bf16.mxu0 0
    %315 = vmatpush1.bf16.msra.mxu0 0
    %316 = vmatprep.subr.bf16.mxu0 0
    %317 = vmatpush1.bf16.msra.mxu0 0
    %318 = vmatprep.subr.bf16.mxu0 0
    %319 = vmatpush1.bf16.msra.mxu0 0
    %320 = vmatprep.subr.bf16.mxu0 0
    %321 = vmatpush1.bf16.msra.mxu0 0
    %322 = vmatprep.subr.bf16.mxu0 0
    %323 = vmatpush1.bf16.msra.mxu0 0
    %324 = vmatprep.subr.bf16.mxu0 0
    %325 = vmatpush1.bf16.msra.mxu0 0
    %326 = vmatprep.subr.bf16.mxu0 0
    %327 = vmatpush1.bf16.msra.mxu0 0
    %328 = vmatprep.mubr.bf16.mxu0 0
    %329 = vmatmul.mubr.bf16.gmra.mrb[0].mxu0 %v138
    %v330 = vpop.f32.mrb[0].mxu0
    %v331 = vadd.f32 0.0, %v330
    %v332 = vpop.f32.mrb[0].mxu0
    %v333 = vpop.f32.mrb[0].mxu0
    %v334 = vpop.f32.mrb[0].mxu0
    %335 = vdwg.mxu0
    %v337 = vsel %vm136, %v123, 0
    %339 = vmatprep.subr.bf16.mxu0 0
    %340 = vmatpush1.bf16.msra.mxu0 %v132
    %341 = vmatprep.subr.bf16.mxu0 0
    %342 = vmatpush1.bf16.msra.mxu0 %v133
    %343 = vmatprep.subr.bf16.mxu0 0
    %344 = vmatpush1.bf16.msra.mxu0 0
    %345 = vmatprep.subr.bf16.mxu0 0
    %346 = vmatpush1.bf16.msra.mxu0 0
    %347 = vmatprep.subr.bf16.mxu0 0
    %348 = vmatpush1.bf16.msra.mxu0 0
    %349 = vmatprep.subr.bf16.mxu0 0
    %350 = vmatpush1.bf16.msra.mxu0 0
    %351 = vmatprep.subr.bf16.mxu0 0
    %352 = vmatpush1.bf16.msra.mxu0 0
    %353 = vmatprep.subr.bf16.mxu0 0
    %354 = vmatpush1.bf16.msra.mxu0 0
    %355 = vmatprep.subr.bf16.mxu0 0
    %356 = vmatpush1.bf16.msra.mxu0 0
    %357 = vmatprep.subr.bf16.mxu0 0
    %358 = vmatpush1.bf16.msra.mxu0 0
    %359 = vmatprep.subr.bf16.mxu0 0
    %360 = vmatpush1.bf16.msra.mxu0 0
    %361 = vmatprep.subr.bf16.mxu0 0
    %362 = vmatpush1.bf16.msra.mxu0 0
    %363 = vmatprep.subr.bf16.mxu0 0
    %364 = vmatpush1.bf16.msra.mxu0 0
    %365 = vmatprep.subr.bf16.mxu0 0
    %366 = vmatpush1.bf16.msra.mxu0 0
    %367 = vmatprep.subr.bf16.mxu0 0
    %368 = vmatpush1.bf16.msra.mxu0 0
    %369 = vmatprep.subr.bf16.mxu0 0
    %370 = vmatpush1.bf16.msra.mxu0 0
    %371 = vmatprep.mubr.bf16.mxu0 0
    %372 = vmatmul.mubr.bf16.gmra.mrb[0].mxu0 %v337
    %v373 = vpop.f32.mrb[0].mxu0
    %v374 = vadd.f32 0.0, %v373
    %v375 = vpop.f32.mrb[0].mxu0
    %v376 = vpop.f32.mrb[0].mxu0
    %v377 = vpop.f32.mrb[0].mxu0
    %378 = vdwg.mxu0
    %379 = vmatprep.subr.bf16.mxu0 0
    %380 = vmatpush1.bf16.msra.mxu0 %v188
    %381 = vmatprep.subr.bf16.mxu0 0
    %382 = vmatpush1.bf16.msra.mxu0 %v189
    %383 = vmatprep.subr.bf16.mxu0 0
    %384 = vmatpush1.bf16.msra.mxu0 0
    %385 = vmatprep.subr.bf16.mxu0 0
    %386 = vmatpush1.bf16.msra.mxu0 0
    %387 = vmatprep.subr.bf16.mxu0 0
    %388 = vmatpush1.bf16.msra.mxu0 0
    %389 = vmatprep.subr.bf16.mxu0 0
    %390 = vmatpush1.bf16.msra.mxu0 0
    %391 = vmatprep.subr.bf16.mxu0 0
    %392 = vmatpush1.bf16.msra.mxu0 0
    %393 = vmatprep.subr.bf16.mxu0 0
    %394 = vmatpush1.bf16.msra.mxu0 0
    %395 = vmatprep.subr.bf16.mxu0 0
    %396 = vmatpush1.bf16.msra.mxu0 0
    %397 = vmatprep.subr.bf16.mxu0 0
    %398 = vmatpush1.bf16.msra.mxu0 0
    %399 = vmatprep.subr.bf16.mxu0 0
    %400 = vmatpush1.bf16.msra.mxu0 0
    %401 = vmatprep.subr.bf16.mxu0 0
    %402 = vmatpush1.bf16.msra.mxu0 0
    %403 = vmatprep.subr.bf16.mxu0 0
    %404 = vmatpush1.bf16.msra.mxu0 0
    %405 = vmatprep.subr.bf16.mxu0 0
    %406 = vmatpush1.bf16.msra.mxu0 0
    %407 = vmatprep.subr.bf16.mxu0 0
    %408 = vmatpush1.bf16.msra.mxu0 0
    %409 = vmatprep.subr.bf16.mxu0 0
    %410 = vmatpush1.bf16.msra.mxu0 0
    %411 = vmatprep.mubr.bf16.mxu0 0
    %412 = vmatmul.mubr.bf16.gmra.mrb[0].mxu0 %v337
    %v413 = vpop.f32.mrb[0].mxu0
    %v414 = vadd.f32 0.0, %v413
    %v415 = vpop.f32.mrb[0].mxu0
    %v416 = vpop.f32.mrb[0].mxu0
    %v417 = vpop.f32.mrb[0].mxu0
    %418 = vdwg.mxu0
    %419 = vmatprep.subr.bf16.mxu0 0
    %420 = vmatpush1.bf16.msra.mxu0 %v240
    %421 = vmatprep.subr.bf16.mxu0 0
    %422 = vmatpush1.bf16.msra.mxu0 %v241
    %423 = vmatprep.subr.bf16.mxu0 0
    %424 = vmatpush1.bf16.msra.mxu0 0
    %425 = vmatprep.subr.bf16.mxu0 0
    %426 = vmatpush1.bf16.msra.mxu0 0
    %427 = vmatprep.subr.bf16.mxu0 0
    %428 = vmatpush1.bf16.msra.mxu0 0
    %429 = vmatprep.subr.bf16.mxu0 0
    %430 = vmatpush1.bf16.msra.mxu0 0
    %431 = vmatprep.subr.bf16.mxu0 0
    %432 = vmatpush1.bf16.msra.mxu0 0
    %433 = vmatprep.subr.bf16.mxu0 0
    %434 = vmatpush1.bf16.msra.mxu0 0
    %435 = vmatprep.subr.bf16.mxu0 0
    %436 = vmatpush1.bf16.msra.mxu0 0
    %437 = vmatprep.subr.bf16.mxu0 0
    %438 = vmatpush1.bf16.msra.mxu0 0
    %439 = vmatprep.subr.bf16.mxu0 0
    %440 = vmatpush1.bf16.msra.mxu0 0
    %441 = vmatprep.subr.bf16.mxu0 0
    %442 = vmatpush1.bf16.msra.mxu0 0
    %443 = vmatprep.subr.bf16.mxu0 0
    %444 = vmatpush1.bf16.msra.mxu0 0
    %445 = vmatprep.subr.bf16.mxu0 0
    %446 = vmatpush1.bf16.msra.mxu0 0
    %447 = vmatprep.subr.bf16.mxu0 0
    %448 = vmatpush1.bf16.msra.mxu0 0
    %449 = vmatprep.subr.bf16.mxu0 0
    %450 = vmatpush1.bf16.msra.mxu0 0
    %451 = vmatprep.mubr.bf16.mxu0 0
    %452 = vmatmul.mubr.bf16.gmra.mrb[0].mxu0 %v337
    %v453 = vpop.f32.mrb[0].mxu0
    %v454 = vadd.f32 0.0, %v453
    %v455 = vpop.f32.mrb[0].mxu0
    %v456 = vpop.f32.mrb[0].mxu0
    %v457 = vpop.f32.mrb[0].mxu0
    %458 = vdwg.mxu0
    %459 = vmatprep.subr.bf16.mxu0 0
    %460 = vmatpush1.bf16.msra.mxu0 %v292
    %461 = vmatprep.subr.bf16.mxu0 0
    %462 = vmatpush1.bf16.msra.mxu0 %v293
    %463 = vmatprep.subr.bf16.mxu0 0
    %464 = vmatpush1.bf16.msra.mxu0 0
    %465 = vmatprep.subr.bf16.mxu0 0
    %466 = vmatpush1.bf16.msra.mxu0 0
    %467 = vmatprep.subr.bf16.mxu0 0
    %468 = vmatpush1.bf16.msra.mxu0 0
    %469 = vmatprep.subr.bf16.mxu0 0
    %470 = vmatpush1.bf16.msra.mxu0 0
    %471 = vmatprep.subr.bf16.mxu0 0
    %472 = vmatpush1.bf16.msra.mxu0 0
    %473 = vmatprep.subr.bf16.mxu0 0
    %474 = vmatpush1.bf16.msra.mxu0 0
    %475 = vmatprep.subr.bf16.mxu0 0
    %476 = vmatpush1.bf16.msra.mxu0 0
    %477 = vmatprep.subr.bf16.mxu0 0
    %478 = vmatpush1.bf16.msra.mxu0 0
    %479 = vmatprep.subr.bf16.mxu0 0
    %480 = vmatpush1.bf16.msra.mxu0 0
    %481 = vmatprep.subr.bf16.mxu0 0
    %482 = vmatpush1.bf16.msra.mxu0 0
    %483 = vmatprep.subr.bf16.mxu0 0
    %484 = vmatpush1.bf16.msra.mxu0 0
    %485 = vmatprep.subr.bf16.mxu0 0
    %486 = vmatpush1.bf16.msra.mxu0 0
    %487 = vmatprep.subr.bf16.mxu0 0
    %488 = vmatpush1.bf16.msra.mxu0 0
    %489 = vmatprep.subr.bf16.mxu0 0
    %490 = vmatpush1.bf16.msra.mxu0 0
    %491 = vmatprep.mubr.bf16.mxu0 0
    %492 = vmatmul.mubr.bf16.gmra.mrb[0].mxu0 %v337
    %v493 = vpop.f32.mrb[0].mxu0
    %v494 = vadd.f32 0.0, %v493
    %v495 = vpop.f32.mrb[0].mxu0
    %v496 = vpop.f32.mrb[0].mxu0
    %v497 = vpop.f32.mrb[0].mxu0
    %498 = vdwg.mxu0
    %v503 = vunpack.c.l.b16 %v64
    %v504 = vunpack.c.l.b16 %v65
    %v505 = vunpack.c.l.b16 %v66
    %v506 = vunpack.c.l.b16 %v67
    %v507 = vpack.c.b16 %v504, %v503
    %v508 = vpack.c.b16 %v506, %v505
    %511 = vmatprep.subr.bf16.mxu0 0
    %512 = vmatpush1.bf16.msra.mxu0 %v507
    %513 = vmatprep.subr.bf16.mxu0 0
    %514 = vmatpush1.bf16.msra.mxu0 %v508
    %515 = vmatprep.subr.bf16.mxu0 0
    %516 = vmatpush1.bf16.msra.mxu0 0
    %517 = vmatprep.subr.bf16.mxu0 0
    %518 = vmatpush1.bf16.msra.mxu0 0
    %519 = vmatprep.subr.bf16.mxu0 0
    %520 = vmatpush1.bf16.msra.mxu0 0
    %521 = vmatprep.subr.bf16.mxu0 0
    %522 = vmatpush1.bf16.msra.mxu0 0
    %523 = vmatprep.subr.bf16.mxu0 0
    %524 = vmatpush1.bf16.msra.mxu0 0
    %525 = vmatprep.subr.bf16.mxu0 0
    %526 = vmatpush1.bf16.msra.mxu0 0
    %527 = vmatprep.subr.bf16.mxu0 0
    %528 = vmatpush1.bf16.msra.mxu0 0
    %529 = vmatprep.subr.bf16.mxu0 0
    %530 = vmatpush1.bf16.msra.mxu0 0
    %531 = vmatprep.subr.bf16.mxu0 0
    %532 = vmatpush1.bf16.msra.mxu0 0
    %533 = vmatprep.subr.bf16.mxu0 0
    %534 = vmatpush1.bf16.msra.mxu0 0
    %535 = vmatprep.subr.bf16.mxu0 0
    %536 = vmatpush1.bf16.msra.mxu0 0
    %537 = vmatprep.subr.bf16.mxu0 0
    %538 = vmatpush1.bf16.msra.mxu0 0
    %539 = vmatprep.subr.bf16.mxu0 0
    %540 = vmatpush1.bf16.msra.mxu0 0
    %541 = vmatprep.subr.bf16.mxu0 0
    %542 = vmatpush1.bf16.msra.mxu0 0
    %543 = vmatprep.mubr.bf16.mxu0 0
    %544 = vmatmul.mubr.bf16.gmra.mrb[0].mxu0 %v138
    %v545 = vpop.f32.mrb[0].mxu0
    %v546 = vadd.f32 0.0, %v545
    %v547 = vpop.f32.mrb[0].mxu0
    %v548 = vpop.f32.mrb[0].mxu0
    %v549 = vpop.f32.mrb[0].mxu0
    %550 = vdwg.mxu0
    %v555 = vunpack.c.l.b16 %v68
    %v556 = vunpack.c.l.b16 %v69
    %v557 = vunpack.c.l.b16 %v70
    %v558 = vunpack.c.l.b16 %v71
    %v559 = vpack.c.b16 %v556, %v555
    %v560 = vpack.c.b16 %v558, %v557
    %563 = vmatprep.subr.bf16.mxu0 0
    %564 = vmatpush1.bf16.msra.mxu0 %v559
    %565 = vmatprep.subr.bf16.mxu0 0
    %566 = vmatpush1.bf16.msra.mxu0 %v560
    %567 = vmatprep.subr.bf16.mxu0 0
    %568 = vmatpush1.bf16.msra.mxu0 0
    %569 = vmatprep.subr.bf16.mxu0 0
    %570 = vmatpush1.bf16.msra.mxu0 0
    %571 = vmatprep.subr.bf16.mxu0 0
    %572 = vmatpush1.bf16.msra.mxu0 0
    %573 = vmatprep.subr.bf16.mxu0 0
    %574 = vmatpush1.bf16.msra.mxu0 0
    %575 = vmatprep.subr.bf16.mxu0 0
    %576 = vmatpush1.bf16.msra.mxu0 0
    %577 = vmatprep.subr.bf16.mxu0 0
    %578 = vmatpush1.bf16.msra.mxu0 0
    %579 = vmatprep.subr.bf16.mxu0 0
    %580 = vmatpush1.bf16.msra.mxu0 0
    %581 = vmatprep.subr.bf16.mxu0 0
    %582 = vmatpush1.bf16.msra.mxu0 0
    %583 = vmatprep.subr.bf16.mxu0 0
    %584 = vmatpush1.bf16.msra.mxu0 0
    %585 = vmatprep.subr.bf16.mxu0 0
    %586 = vmatpush1.bf16.msra.mxu0 0
    %587 = vmatprep.subr.bf16.mxu0 0
    %588 = vmatpush1.bf16.msra.mxu0 0
    %589 = vmatprep.subr.bf16.mxu0 0
    %590 = vmatpush1.bf16.msra.mxu0 0
    %591 = vmatprep.subr.bf16.mxu0 0
    %592 = vmatpush1.bf16.msra.mxu0 0
    %593 = vmatprep.subr.bf16.mxu0 0
    %594 = vmatpush1.bf16.msra.mxu0 0
    %595 = vmatprep.mubr.bf16.mxu0 0
    %596 = vmatmul.mubr.bf16.gmra.mrb[0].mxu0 %v138
    %v597 = vpop.f32.mrb[0].mxu0
    %v598 = vadd.f32 0.0, %v597
    %v599 = vpop.f32.mrb[0].mxu0
    %v600 = vpop.f32.mrb[0].mxu0
    %v601 = vpop.f32.mrb[0].mxu0
    %602 = vdwg.mxu0
    %v607 = vunpack.c.l.b16 %v72
    %v608 = vunpack.c.l.b16 %v73
    %v609 = vunpack.c.l.b16 %v74
    %v610 = vunpack.c.l.b16 %v75
    %v611 = vpack.c.b16 %v608, %v607
    %v612 = vpack.c.b16 %v610, %v609
    %615 = vmatprep.subr.bf16.mxu0 0
    %616 = vmatpush1.bf16.msra.mxu0 %v611
    %617 = vmatprep.subr.bf16.mxu0 0
    %618 = vmatpush1.bf16.msra.mxu0 %v612
    %619 = vmatprep.subr.bf16.mxu0 0
    %620 = vmatpush1.bf16.msra.mxu0 0
    %621 = vmatprep.subr.bf16.mxu0 0
    %622 = vmatpush1.bf16.msra.mxu0 0
    %623 = vmatprep.subr.bf16.mxu0 0
    %624 = vmatpush1.bf16.msra.mxu0 0
    %625 = vmatprep.subr.bf16.mxu0 0
    %626 = vmatpush1.bf16.msra.mxu0 0
    %627 = vmatprep.subr.bf16.mxu0 0
    %628 = vmatpush1.bf16.msra.mxu0 0
    %629 = vmatprep.subr.bf16.mxu0 0
    %630 = vmatpush1.bf16.msra.mxu0 0
    %631 = vmatprep.subr.bf16.mxu0 0
    %632 = vmatpush1.bf16.msra.mxu0 0
    %633 = vmatprep.subr.bf16.mxu0 0
    %634 = vmatpush1.bf16.msra.mxu0 0
    %635 = vmatprep.subr.bf16.mxu0 0
    %636 = vmatpush1.bf16.msra.mxu0 0
    %637 = vmatprep.subr.bf16.mxu0 0
    %638 = vmatpush1.bf16.msra.mxu0 0
    %639 = vmatprep.subr.bf16.mxu0 0
    %640 = vmatpush1.bf16.msra.mxu0 0
    %641 = vmatprep.subr.bf16.mxu0 0
    %642 = vmatpush1.bf16.msra.mxu0 0
    %643 = vmatprep.subr.bf16.mxu0 0
    %644 = vmatpush1.bf16.msra.mxu0 0
    %645 = vmatprep.subr.bf16.mxu0 0
    %646 = vmatpush1.bf16.msra.mxu0 0
    %647 = vmatprep.mubr.bf16.mxu0 0
    %648 = vmatmul.mubr.bf16.gmra.mrb[0].mxu0 %v138
    %v649 = vpop.f32.mrb[0].mxu0
    %v650 = vadd.f32 0.0, %v649
    %v651 = vpop.f32.mrb[0].mxu0
    %v652 = vpop.f32.mrb[0].mxu0
    %v653 = vpop.f32.mrb[0].mxu0
    %654 = vdwg.mxu0
    %v659 = vunpack.c.l.b16 %v76
    %v660 = vunpack.c.l.b16 %v77
    %v661 = vunpack.c.l.b16 %v78
    %v662 = vunpack.c.l.b16 %v79
    %v663 = vpack.c.b16 %v660, %v659
    %v664 = vpack.c.b16 %v662, %v661
    %667 = vmatprep.subr.bf16.mxu0 0
    %668 = vmatpush1.bf16.msra.mxu0 %v663
    %669 = vmatprep.subr.bf16.mxu0 0
    %670 = vmatpush1.bf16.msra.mxu0 %v664
    %671 = vmatprep.subr.bf16.mxu0 0
    %672 = vmatpush1.bf16.msra.mxu0 0
    %673 = vmatprep.subr.bf16.mxu0 0
    %674 = vmatpush1.bf16.msra.mxu0 0
    %675 = vmatprep.subr.bf16.mxu0 0
    %676 = vmatpush1.bf16.msra.mxu0 0
    %677 = vmatprep.subr.bf16.mxu0 0
    %678 = vmatpush1.bf16.msra.mxu0 0
    %679 = vmatprep.subr.bf16.mxu0 0
    %680 = vmatpush1.bf16.msra.mxu0 0
    %681 = vmatprep.subr.bf16.mxu0 0
    %682 = vmatpush1.bf16.msra.mxu0 0
    %683 = vmatprep.subr.bf16.mxu0 0
    %684 = vmatpush1.bf16.msra.mxu0 0
    %685 = vmatprep.subr.bf16.mxu0 0
    %686 = vmatpush1.bf16.msra.mxu0 0
    %687 = vmatprep.subr.bf16.mxu0 0
    %688 = vmatpush1.bf16.msra.mxu0 0
    %689 = vmatprep.subr.bf16.mxu0 0
    %690 = vmatpush1.bf16.msra.mxu0 0
    %691 = vmatprep.subr.bf16.mxu0 0
    %692 = vmatpush1.bf16.msra.mxu0 0
    %693 = vmatprep.subr.bf16.mxu0 0
    %694 = vmatpush1.bf16.msra.mxu0 0
    %695 = vmatprep.subr.bf16.mxu0 0
    %696 = vmatpush1.bf16.msra.mxu0 0
    %697 = vmatprep.subr.bf16.mxu0 0
    %698 = vmatpush1.bf16.msra.mxu0 0
    %699 = vmatprep.mubr.bf16.mxu0 0
    %700 = vmatmul.mubr.bf16.gmra.mrb[0].mxu0 %v138
    %v701 = vpop.f32.mrb[0].mxu0
    %v702 = vadd.f32 0.0, %v701
    %v703 = vpop.f32.mrb[0].mxu0
    %v704 = vpop.f32.mrb[0].mxu0
    %v705 = vpop.f32.mrb[0].mxu0
    %706 = vdwg.mxu0
    %707 = vmatprep.subr.bf16.mxu0 0
    %708 = vmatpush1.bf16.msra.mxu0 %v507
    %709 = vmatprep.subr.bf16.mxu0 0
    %710 = vmatpush1.bf16.msra.mxu0 %v508
    %711 = vmatprep.subr.bf16.mxu0 0
    %712 = vmatpush1.bf16.msra.mxu0 0
    %713 = vmatprep.subr.bf16.mxu0 0
    %714 = vmatpush1.bf16.msra.mxu0 0
    %715 = vmatprep.subr.bf16.mxu0 0
    %716 = vmatpush1.bf16.msra.mxu0 0
    %717 = vmatprep.subr.bf16.mxu0 0
    %718 = vmatpush1.bf16.msra.mxu0 0
    %719 = vmatprep.subr.bf16.mxu0 0
    %720 = vmatpush1.bf16.msra.mxu0 0
    %721 = vmatprep.subr.bf16.mxu0 0
    %722 = vmatpush1.bf16.msra.mxu0 0
    %723 = vmatprep.subr.bf16.mxu0 0
    %724 = vmatpush1.bf16.msra.mxu0 0
    %725 = vmatprep.subr.bf16.mxu0 0
    %726 = vmatpush1.bf16.msra.mxu0 0
    %727 = vmatprep.subr.bf16.mxu0 0
    %728 = vmatpush1.bf16.msra.mxu0 0
    %729 = vmatprep.subr.bf16.mxu0 0
    %730 = vmatpush1.bf16.msra.mxu0 0
    %731 = vmatprep.subr.bf16.mxu0 0
    %732 = vmatpush1.bf16.msra.mxu0 0
    %733 = vmatprep.subr.bf16.mxu0 0
    %734 = vmatpush1.bf16.msra.mxu0 0
    %735 = vmatprep.subr.bf16.mxu0 0
    %736 = vmatpush1.bf16.msra.mxu0 0
    %737 = vmatprep.subr.bf16.mxu0 0
    %738 = vmatpush1.bf16.msra.mxu0 0
    %739 = vmatprep.mubr.bf16.mxu0 0
    %740 = vmatmul.mubr.bf16.gmra.mrb[0].mxu0 %v337
    %v741 = vpop.f32.mrb[0].mxu0
    %v742 = vadd.f32 0.0, %v741
    %v743 = vpop.f32.mrb[0].mxu0
    %v744 = vpop.f32.mrb[0].mxu0
    %v745 = vpop.f32.mrb[0].mxu0
    %746 = vdwg.mxu0
    %747 = vmatprep.subr.bf16.mxu0 0
    %748 = vmatpush1.bf16.msra.mxu0 %v559
    %749 = vmatprep.subr.bf16.mxu0 0
    %750 = vmatpush1.bf16.msra.mxu0 %v560
    %751 = vmatprep.subr.bf16.mxu0 0
    %752 = vmatpush1.bf16.msra.mxu0 0
    %753 = vmatprep.subr.bf16.mxu0 0
    %754 = vmatpush1.bf16.msra.mxu0 0
    %755 = vmatprep.subr.bf16.mxu0 0
    %756 = vmatpush1.bf16.msra.mxu0 0
    %757 = vmatprep.subr.bf16.mxu0 0
    %758 = vmatpush1.bf16.msra.mxu0 0
    %759 = vmatprep.subr.bf16.mxu0 0
    %760 = vmatpush1.bf16.msra.mxu0 0
    %761 = vmatprep.subr.bf16.mxu0 0
    %762 = vmatpush1.bf16.msra.mxu0 0
    %763 = vmatprep.subr.bf16.mxu0 0
    %764 = vmatpush1.bf16.msra.mxu0 0
    %765 = vmatprep.subr.bf16.mxu0 0
    %766 = vmatpush1.bf16.msra.mxu0 0
    %767 = vmatprep.subr.bf16.mxu0 0
    %768 = vmatpush1.bf16.msra.mxu0 0
    %769 = vmatprep.subr.bf16.mxu0 0
    %770 = vmatpush1.bf16.msra.mxu0 0
    %771 = vmatprep.subr.bf16.mxu0 0
    %772 = vmatpush1.bf16.msra.mxu0 0
    %773 = vmatprep.subr.bf16.mxu0 0
    %774 = vmatpush1.bf16.msra.mxu0 0
    %775 = vmatprep.subr.bf16.mxu0 0
    %776 = vmatpush1.bf16.msra.mxu0 0
    %777 = vmatprep.subr.bf16.mxu0 0
    %778 = vmatpush1.bf16.msra.mxu0 0
    %779 = vmatprep.mubr.bf16.mxu0 0
    %780 = vmatmul.mubr.bf16.gmra.mrb[0].mxu0 %v337
    %v781 = vpop.f32.mrb[0].mxu0
    %v782 = vadd.f32 0.0, %v781
    %v783 = vpop.f32.mrb[0].mxu0
    %v784 = vpop.f32.mrb[0].mxu0
    %v785 = vpop.f32.mrb[0].mxu0
    %786 = vdwg.mxu0
    %787 = vmatprep.subr.bf16.mxu0 0
    %788 = vmatpush1.bf16.msra.mxu0 %v611
    %789 = vmatprep.subr.bf16.mxu0 0
    %790 = vmatpush1.bf16.msra.mxu0 %v612
    %791 = vmatprep.subr.bf16.mxu0 0
    %792 = vmatpush1.bf16.msra.mxu0 0
    %793 = vmatprep.subr.bf16.mxu0 0
    %794 = vmatpush1.bf16.msra.mxu0 0
    %795 = vmatprep.subr.bf16.mxu0 0
    %796 = vmatpush1.bf16.msra.mxu0 0
    %797 = vmatprep.subr.bf16.mxu0 0
    %798 = vmatpush1.bf16.msra.mxu0 0
    %799 = vmatprep.subr.bf16.mxu0 0
    %800 = vmatpush1.bf16.msra.mxu0 0
    %801 = vmatprep.subr.bf16.mxu0 0
    %802 = vmatpush1.bf16.msra.mxu0 0
    %803 = vmatprep.subr.bf16.mxu0 0
    %804 = vmatpush1.bf16.msra.mxu0 0
    %805 = vmatprep.subr.bf16.mxu0 0
    %806 = vmatpush1.bf16.msra.mxu0 0
    %807 = vmatprep.subr.bf16.mxu0 0
    %808 = vmatpush1.bf16.msra.mxu0 0
    %809 = vmatprep.subr.bf16.mxu0 0
    %810 = vmatpush1.bf16.msra.mxu0 0
    %811 = vmatprep.subr.bf16.mxu0 0
    %812 = vmatpush1.bf16.msra.mxu0 0
    %813 = vmatprep.subr.bf16.mxu0 0
    %814 = vmatpush1.bf16.msra.mxu0 0
    %815 = vmatprep.subr.bf16.mxu0 0
    %816 = vmatpush1.bf16.msra.mxu0 0
    %817 = vmatprep.subr.bf16.mxu0 0
    %818 = vmatpush1.bf16.msra.mxu0 0
    %819 = vmatprep.mubr.bf16.mxu0 0
    %820 = vmatmul.mubr.bf16.gmra.mrb[0].mxu0 %v337
    %v821 = vpop.f32.mrb[0].mxu0
    %v822 = vadd.f32 0.0, %v821
    %v823 = vpop.f32.mrb[0].mxu0
    %v824 = vpop.f32.mrb[0].mxu0
    %v825 = vpop.f32.mrb[0].mxu0
    %826 = vdwg.mxu0
    %827 = vmatprep.subr.bf16.mxu0 0
    %828 = vmatpush1.bf16.msra.mxu0 %v663
    %829 = vmatprep.subr.bf16.mxu0 0
    %830 = vmatpush1.bf16.msra.mxu0 %v664
    %831 = vmatprep.subr.bf16.mxu0 0
    %832 = vmatpush1.bf16.msra.mxu0 0
    %833 = vmatprep.subr.bf16.mxu0 0
    %834 = vmatpush1.bf16.msra.mxu0 0
    %835 = vmatprep.subr.bf16.mxu0 0
    %836 = vmatpush1.bf16.msra.mxu0 0
    %837 = vmatprep.subr.bf16.mxu0 0
    %838 = vmatpush1.bf16.msra.mxu0 0
    %839 = vmatprep.subr.bf16.mxu0 0
    %840 = vmatpush1.bf16.msra.mxu0 0
    %841 = vmatprep.subr.bf16.mxu0 0
    %842 = vmatpush1.bf16.msra.mxu0 0
    %843 = vmatprep.subr.bf16.mxu0 0
    %844 = vmatpush1.bf16.msra.mxu0 0
    %845 = vmatprep.subr.bf16.mxu0 0
    %846 = vmatpush1.bf16.msra.mxu0 0
    %847 = vmatprep.subr.bf16.mxu0 0
    %848 = vmatpush1.bf16.msra.mxu0 0
    %849 = vmatprep.subr.bf16.mxu0 0
    %850 = vmatpush1.bf16.msra.mxu0 0
    %851 = vmatprep.subr.bf16.mxu0 0
    %852 = vmatpush1.bf16.msra.mxu0 0
    %853 = vmatprep.subr.bf16.mxu0 0
    %854 = vmatpush1.bf16.msra.mxu0 0
    %855 = vmatprep.subr.bf16.mxu0 0
    %856 = vmatpush1.bf16.msra.mxu0 0
    %857 = vmatprep.subr.bf16.mxu0 0
    %858 = vmatpush1.bf16.msra.mxu0 0
    %859 = vmatprep.mubr.bf16.mxu0 0
    %860 = vmatmul.mubr.bf16.gmra.mrb[0].mxu0 %v337
    %v861 = vpop.f32.mrb[0].mxu0
    %v862 = vadd.f32 0.0, %v861
    %v863 = vpop.f32.mrb[0].mxu0
    %v864 = vpop.f32.mrb[0].mxu0
    %v865 = vpop.f32.mrb[0].mxu0
    %866 = vdwg.mxu0
    %v871 = vunpack.c.l.b16 %v81
    %v872 = vunpack.c.l.b16 %v82
    %v873 = vunpack.c.l.b16 %v83
    %v874 = vunpack.c.l.b16 %v84
    %v875 = vpack.c.b16 %v872, %v871
    %v876 = vpack.c.b16 %v874, %v873
    %879 = vmatprep.subr.bf16.mxu0 0
    %880 = vmatpush1.bf16.msra.mxu0 %v875
    %881 = vmatprep.subr.bf16.mxu0 0
    %882 = vmatpush1.bf16.msra.mxu0 %v876
    %883 = vmatprep.subr.bf16.mxu0 0
    %884 = vmatpush1.bf16.msra.mxu0 0
    %885 = vmatprep.subr.bf16.mxu0 0
    %886 = vmatpush1.bf16.msra.mxu0 0
    %887 = vmatprep.subr.bf16.mxu0 0
    %888 = vmatpush1.bf16.msra.mxu0 0
    %889 = vmatprep.subr.bf16.mxu0 0
    %890 = vmatpush1.bf16.msra.mxu0 0
    %891 = vmatprep.subr.bf16.mxu0 0
    %892 = vmatpush1.bf16.msra.mxu0 0
    %893 = vmatprep.subr.bf16.mxu0 0
    %894 = vmatpush1.bf16.msra.mxu0 0
    %895 = vmatprep.subr.bf16.mxu0 0
    %896 = vmatpush1.bf16.msra.mxu0 0
    %897 = vmatprep.subr.bf16.mxu0 0
    %898 = vmatpush1.bf16.msra.mxu0 0
    %899 = vmatprep.subr.bf16.mxu0 0
    %900 = vmatpush1.bf16.msra.mxu0 0
    %901 = vmatprep.subr.bf16.mxu0 0
    %902 = vmatpush1.bf16.msra.mxu0 0
    %903 = vmatprep.subr.bf16.mxu0 0
    %904 = vmatpush1.bf16.msra.mxu0 0
    %905 = vmatprep.subr.bf16.mxu0 0
    %906 = vmatpush1.bf16.msra.mxu0 0
    %907 = vmatprep.subr.bf16.mxu0 0
    %908 = vmatpush1.bf16.msra.mxu0 0
    %909 = vmatprep.subr.bf16.mxu0 0
    %910 = vmatpush1.bf16.msra.mxu0 0
    %911 = vmatprep.mubr.bf16.mxu0 0
    %912 = vmatmul.mubr.bf16.gmra.mrb[0].mxu0 %v138
    %v913 = vpop.f32.mrb[0].mxu0
    %v914 = vadd.f32 0.0, %v913
    %v915 = vpop.f32.mrb[0].mxu0
    %v916 = vpop.f32.mrb[0].mxu0
    %v917 = vpop.f32.mrb[0].mxu0
    %918 = vdwg.mxu0
    %v923 = vunpack.c.l.b16 %v85
    %v924 = vunpack.c.l.b16 %v86
    %v925 = vunpack.c.l.b16 %v87
    %v926 = vunpack.c.l.b16 %v88
    %v927 = vpack.c.b16 %v924, %v923
    %v928 = vpack.c.b16 %v926, %v925
    %931 = vmatprep.subr.bf16.mxu0 0
    %932 = vmatpush1.bf16.msra.mxu0 %v927
    %933 = vmatprep.subr.bf16.mxu0 0
    %934 = vmatpush1.bf16.msra.mxu0 %v928
    %935 = vmatprep.subr.bf16.mxu0 0
    %936 = vmatpush1.bf16.msra.mxu0 0
    %937 = vmatprep.subr.bf16.mxu0 0
    %938 = vmatpush1.bf16.msra.mxu0 0
    %939 = vmatprep.subr.bf16.mxu0 0
    %940 = vmatpush1.bf16.msra.mxu0 0
    %941 = vmatprep.subr.bf16.mxu0 0
    %942 = vmatpush1.bf16.msra.mxu0 0
    %943 = vmatprep.subr.bf16.mxu0 0
    %944 = vmatpush1.bf16.msra.mxu0 0
    %945 = vmatprep.subr.bf16.mxu0 0
    %946 = vmatpush1.bf16.msra.mxu0 0
    %947 = vmatprep.subr.bf16.mxu0 0
    %948 = vmatpush1.bf16.msra.mxu0 0
    %949 = vmatprep.subr.bf16.mxu0 0
    %950 = vmatpush1.bf16.msra.mxu0 0
    %951 = vmatprep.subr.bf16.mxu0 0
    %952 = vmatpush1.bf16.msra.mxu0 0
    %953 = vmatprep.subr.bf16.mxu0 0
    %954 = vmatpush1.bf16.msra.mxu0 0
    %955 = vmatprep.subr.bf16.mxu0 0
    %956 = vmatpush1.bf16.msra.mxu0 0
    %957 = vmatprep.subr.bf16.mxu0 0
    %958 = vmatpush1.bf16.msra.mxu0 0
    %959 = vmatprep.subr.bf16.mxu0 0
    %960 = vmatpush1.bf16.msra.mxu0 0
    %961 = vmatprep.subr.bf16.mxu0 0
    %962 = vmatpush1.bf16.msra.mxu0 0
    %963 = vmatprep.mubr.bf16.mxu0 0
    %964 = vmatmul.mubr.bf16.gmra.mrb[0].mxu0 %v138
    %v965 = vpop.f32.mrb[0].mxu0
    %v966 = vadd.f32 0.0, %v965
    %v967 = vpop.f32.mrb[0].mxu0
    %v968 = vpop.f32.mrb[0].mxu0
    %v969 = vpop.f32.mrb[0].mxu0
    %970 = vdwg.mxu0
    %v975 = vunpack.c.l.b16 %v89
    %v976 = vunpack.c.l.b16 %v90
    %v977 = vunpack.c.l.b16 %v91
    %v978 = vunpack.c.l.b16 %v92
    %v979 = vpack.c.b16 %v976, %v975
    %v980 = vpack.c.b16 %v978, %v977
    %983 = vmatprep.subr.bf16.mxu0 0
    %984 = vmatpush1.bf16.msra.mxu0 %v979
    %985 = vmatprep.subr.bf16.mxu0 0
    %986 = vmatpush1.bf16.msra.mxu0 %v980
    %987 = vmatprep.subr.bf16.mxu0 0
    %988 = vmatpush1.bf16.msra.mxu0 0
    %989 = vmatprep.subr.bf16.mxu0 0
    %990 = vmatpush1.bf16.msra.mxu0 0
    %991 = vmatprep.subr.bf16.mxu0 0
    %992 = vmatpush1.bf16.msra.mxu0 0
    %993 = vmatprep.subr.bf16.mxu0 0
    %994 = vmatpush1.bf16.msra.mxu0 0
    %995 = vmatprep.subr.bf16.mxu0 0
    %996 = vmatpush1.bf16.msra.mxu0 0
    %997 = vmatprep.subr.bf16.mxu0 0
    %998 = vmatpush1.bf16.msra.mxu0 0
    %999 = vmatprep.subr.bf16.mxu0 0
    %1000 = vmatpush1.bf16.msra.mxu0 0
    %1001 = vmatprep.subr.bf16.mxu0 0
    %1002 = vmatpush1.bf16.msra.mxu0 0
    %1003 = vmatprep.subr.bf16.mxu0 0
    %1004 = vmatpush1.bf16.msra.mxu0 0
    %1005 = vmatprep.subr.bf16.mxu0 0
    %1006 = vmatpush1.bf16.msra.mxu0 0
    %1007 = vmatprep.subr.bf16.mxu0 0
    %1008 = vmatpush1.bf16.msra.mxu0 0
    %1009 = vmatprep.subr.bf16.mxu0 0
    %1010 = vmatpush1.bf16.msra.mxu0 0
    %1011 = vmatprep.subr.bf16.mxu0 0
    %1012 = vmatpush1.bf16.msra.mxu0 0
    %1013 = vmatprep.subr.bf16.mxu0 0
    %1014 = vmatpush1.bf16.msra.mxu0 0
    %1015 = vmatprep.mubr.bf16.mxu0 0
    %1016 = vmatmul.mubr.bf16.gmra.mrb[0].mxu0 %v138
    %v1017 = vpop.f32.mrb[0].mxu0
    %v1018 = vadd.f32 0.0, %v1017
    %v1019 = vpop.f32.mrb[0].mxu0
    %v1020 = vpop.f32.mrb[0].mxu0
    %v1021 = vpop.f32.mrb[0].mxu0
    %1022 = vdwg.mxu0
    %v1027 = vunpack.c.l.b16 %v93
    %v1028 = vunpack.c.l.b16 %v94
    %v1029 = vunpack.c.l.b16 %v95
    %v1030 = vunpack.c.l.b16 %v96
    %v1031 = vpack.c.b16 %v1028, %v1027
    %v1032 = vpack.c.b16 %v1030, %v1029
    %1035 = vmatprep.subr.bf16.mxu0 0
    %1036 = vmatpush1.bf16.msra.mxu0 %v1031
    %1037 = vmatprep.subr.bf16.mxu0 0
    %1038 = vmatpush1.bf16.msra.mxu0 %v1032
    %1039 = vmatprep.subr.bf16.mxu0 0
    %1040 = vmatpush1.bf16.msra.mxu0 0
    %1041 = vmatprep.subr.bf16.mxu0 0
    %1042 = vmatpush1.bf16.msra.mxu0 0
    %1043 = vmatprep.subr.bf16.mxu0 0
    %1044 = vmatpush1.bf16.msra.mxu0 0
    %1045 = vmatprep.subr.bf16.mxu0 0
    %1046 = vmatpush1.bf16.msra.mxu0 0
    %1047 = vmatprep.subr.bf16.mxu0 0
    %1048 = vmatpush1.bf16.msra.mxu0 0
    %1049 = vmatprep.subr.bf16.mxu0 0
    %1050 = vmatpush1.bf16.msra.mxu0 0
    %1051 = vmatprep.subr.bf16.mxu0 0
    %1052 = vmatpush1.bf16.msra.mxu0 0
    %1053 = vmatprep.subr.bf16.mxu0 0
    %1054 = vmatpush1.bf16.msra.mxu0 0
    %1055 = vmatprep.subr.bf16.mxu0 0
    %1056 = vmatpush1.bf16.msra.mxu0 0
    %1057 = vmatprep.subr.bf16.mxu0 0
    %1058 = vmatpush1.bf16.msra.mxu0 0
    %1059 = vmatprep.subr.bf16.mxu0 0
    %1060 = vmatpush1.bf16.msra.mxu0 0
    %1061 = vmatprep.subr.bf16.mxu0 0
    %1062 = vmatpush1.bf16.msra.mxu0 0
    %1063 = vmatprep.subr.bf16.mxu0 0
    %1064 = vmatpush1.bf16.msra.mxu0 0
    %1065 = vmatprep.subr.bf16.mxu0 0
    %1066 = vmatpush1.bf16.msra.mxu0 0
    %1067 = vmatprep.mubr.bf16.mxu0 0
    %1068 = vmatmul.mubr.bf16.gmra.mrb[0].mxu0 %v138
    %v1069 = vpop.f32.mrb[0].mxu0
    %v1070 = vadd.f32 0.0, %v1069
    %v1071 = vpop.f32.mrb[0].mxu0
    %v1072 = vpop.f32.mrb[0].mxu0
    %v1073 = vpop.f32.mrb[0].mxu0
    %1074 = vdwg.mxu0
    %1075 = vmatprep.subr.bf16.mxu0 0
    %1076 = vmatpush1.bf16.msra.mxu0 %v875
    %1077 = vmatprep.subr.bf16.mxu0 0
    %1078 = vmatpush1.bf16.msra.mxu0 %v876
    %1079 = vmatprep.subr.bf16.mxu0 0
    %1080 = vmatpush1.bf16.msra.mxu0 0
    %1081 = vmatprep.subr.bf16.mxu0 0
    %1082 = vmatpush1.bf16.msra.mxu0 0
    %1083 = vmatprep.subr.bf16.mxu0 0
    %1084 = vmatpush1.bf16.msra.mxu0 0
    %1085 = vmatprep.subr.bf16.mxu0 0
    %1086 = vmatpush1.bf16.msra.mxu0 0
    %1087 = vmatprep.subr.bf16.mxu0 0
    %1088 = vmatpush1.bf16.msra.mxu0 0
    %1089 = vmatprep.subr.bf16.mxu0 0
    %1090 = vmatpush1.bf16.msra.mxu0 0
    %1091 = vmatprep.subr.bf16.mxu0 0
    %1092 = vmatpush1.bf16.msra.mxu0 0
    %1093 = vmatprep.subr.bf16.mxu0 0
    %1094 = vmatpush1.bf16.msra.mxu0 0
    %1095 = vmatprep.subr.bf16.mxu0 0
    %1096 = vmatpush1.bf16.msra.mxu0 0
    %1097 = vmatprep.subr.bf16.mxu0 0
    %1098 = vmatpush1.bf16.msra.mxu0 0
    %1099 = vmatprep.subr.bf16.mxu0 0
    %1100 = vmatpush1.bf16.msra.mxu0 0
    %1101 = vmatprep.subr.bf16.mxu0 0
    %1102 = vmatpush1.bf16.msra.mxu0 0
    %1103 = vmatprep.subr.bf16.mxu0 0
    %1104 = vmatpush1.bf16.msra.mxu0 0
    %1105 = vmatprep.subr.bf16.mxu0 0
    %1106 = vmatpush1.bf16.msra.mxu0 0
    %1107 = vmatprep.mubr.bf16.mxu0 0
    %1108 = vmatmul.mubr.bf16.gmra.mrb[0].mxu0 %v337
    %v1109 = vpop.f32.mrb[0].mxu0
    %v1110 = vadd.f32 0.0, %v1109
    %v1111 = vpop.f32.mrb[0].mxu0
    %v1112 = vpop.f32.mrb[0].mxu0
    %v1113 = vpop.f32.mrb[0].mxu0
    %1114 = vdwg.mxu0
    %1115 = vmatprep.subr.bf16.mxu0 0
    %1116 = vmatpush1.bf16.msra.mxu0 %v927
    %1117 = vmatprep.subr.bf16.mxu0 0
    %1118 = vmatpush1.bf16.msra.mxu0 %v928
    %1119 = vmatprep.subr.bf16.mxu0 0
    %1120 = vmatpush1.bf16.msra.mxu0 0
    %1121 = vmatprep.subr.bf16.mxu0 0
    %1122 = vmatpush1.bf16.msra.mxu0 0
    %1123 = vmatprep.subr.bf16.mxu0 0
    %1124 = vmatpush1.bf16.msra.mxu0 0
    %1125 = vmatprep.subr.bf16.mxu0 0
    %1126 = vmatpush1.bf16.msra.mxu0 0
    %1127 = vmatprep.subr.bf16.mxu0 0
    %1128 = vmatpush1.bf16.msra.mxu0 0
    %1129 = vmatprep.subr.bf16.mxu0 0
    %1130 = vmatpush1.bf16.msra.mxu0 0
    %1131 = vmatprep.subr.bf16.mxu0 0
    %1132 = vmatpush1.bf16.msra.mxu0 0
    %1133 = vmatprep.subr.bf16.mxu0 0
    %1134 = vmatpush1.bf16.msra.mxu0 0
    %1135 = vmatprep.subr.bf16.mxu0 0
    %1136 = vmatpush1.bf16.msra.mxu0 0
    %1137 = vmatprep.subr.bf16.mxu0 0
    %1138 = vmatpush1.bf16.msra.mxu0 0
    %1139 = vmatprep.subr.bf16.mxu0 0
    %1140 = vmatpush1.bf16.msra.mxu0 0
    %1141 = vmatprep.subr.bf16.mxu0 0
    %1142 = vmatpush1.bf16.msra.mxu0 0
    %1143 = vmatprep.subr.bf16.mxu0 0
    %1144 = vmatpush1.bf16.msra.mxu0 0
    %1145 = vmatprep.subr.bf16.mxu0 0
    %1146 = vmatpush1.bf16.msra.mxu0 0
    %1147 = vmatprep.mubr.bf16.mxu0 0
    %1148 = vmatmul.mubr.bf16.gmra.mrb[0].mxu0 %v337
    %v1149 = vpop.f32.mrb[0].mxu0
    %v1150 = vadd.f32 0.0, %v1149
    %v1151 = vpop.f32.mrb[0].mxu0
    %v1152 = vpop.f32.mrb[0].mxu0
    %v1153 = vpop.f32.mrb[0].mxu0
    %1154 = vdwg.mxu0
    %1155 = vmatprep.subr.bf16.mxu0 0
    %1156 = vmatpush1.bf16.msra.mxu0 %v979
    %1157 = vmatprep.subr.bf16.mxu0 0
    %1158 = vmatpush1.bf16.msra.mxu0 %v980
    %1159 = vmatprep.subr.bf16.mxu0 0
    %1160 = vmatpush1.bf16.msra.mxu0 0
    %1161 = vmatprep.subr.bf16.mxu0 0
    %1162 = vmatpush1.bf16.msra.mxu0 0
    %1163 = vmatprep.subr.bf16.mxu0 0
    %1164 = vmatpush1.bf16.msra.mxu0 0
    %1165 = vmatprep.subr.bf16.mxu0 0
    %1166 = vmatpush1.bf16.msra.mxu0 0
    %1167 = vmatprep.subr.bf16.mxu0 0
    %1168 = vmatpush1.bf16.msra.mxu0 0
    %1169 = vmatprep.subr.bf16.mxu0 0
    %1170 = vmatpush1.bf16.msra.mxu0 0
    %1171 = vmatprep.subr.bf16.mxu0 0
    %1172 = vmatpush1.bf16.msra.mxu0 0
    %1173 = vmatprep.subr.bf16.mxu0 0
    %1174 = vmatpush1.bf16.msra.mxu0 0
    %1175 = vmatprep.subr.bf16.mxu0 0
    %1176 = vmatpush1.bf16.msra.mxu0 0
    %1177 = vmatprep.subr.bf16.mxu0 0
    %1178 = vmatpush1.bf16.msra.mxu0 0
    %1179 = vmatprep.subr.bf16.mxu0 0
    %1180 = vmatpush1.bf16.msra.mxu0 0
    %1181 = vmatprep.subr.bf16.mxu0 0
    %1182 = vmatpush1.bf16.msra.mxu0 0
    %1183 = vmatprep.subr.bf16.mxu0 0
    %1184 = vmatpush1.bf16.msra.mxu0 0
    %1185 = vmatprep.subr.bf16.mxu0 0
    %1186 = vmatpush1.bf16.msra.mxu0 0
    %1187 = vmatprep.mubr.bf16.mxu0 0
    %1188 = vmatmul.mubr.bf16.gmra.mrb[0].mxu0 %v337
    %v1189 = vpop.f32.mrb[0].mxu0
    %v1190 = vadd.f32 0.0, %v1189
    %v1191 = vpop.f32.mrb[0].mxu0
    %v1192 = vpop.f32.mrb[0].mxu0
    %v1193 = vpop.f32.mrb[0].mxu0
    %1194 = vdwg.mxu0
    %1195 = vmatprep.subr.bf16.mxu0 0
    %1196 = vmatpush1.bf16.msra.mxu0 %v1031
    %1197 = vmatprep.subr.bf16.mxu0 0
    %1198 = vmatpush1.bf16.msra.mxu0 %v1032
    %1199 = vmatprep.subr.bf16.mxu0 0
    %1200 = vmatpush1.bf16.msra.mxu0 0
    %1201 = vmatprep.subr.bf16.mxu0 0
    %1202 = vmatpush1.bf16.msra.mxu0 0
    %1203 = vmatprep.subr.bf16.mxu0 0
    %1204 = vmatpush1.bf16.msra.mxu0 0
    %1205 = vmatprep.subr.bf16.mxu0 0
    %1206 = vmatpush1.bf16.msra.mxu0 0
    %1207 = vmatprep.subr.bf16.mxu0 0
    %1208 = vmatpush1.bf16.msra.mxu0 0
    %1209 = vmatprep.subr.bf16.mxu0 0
    %1210 = vmatpush1.bf16.msra.mxu0 0
    %1211 = vmatprep.subr.bf16.mxu0 0
    %1212 = vmatpush1.bf16.msra.mxu0 0
    %1213 = vmatprep.subr.bf16.mxu0 0
    %1214 = vmatpush1.bf16.msra.mxu0 0
    %1215 = vmatprep.subr.bf16.mxu0 0
    %1216 = vmatpush1.bf16.msra.mxu0 0
    %1217 = vmatprep.subr.bf16.mxu0 0
    %1218 = vmatpush1.bf16.msra.mxu0 0
    %1219 = vmatprep.subr.bf16.mxu0 0
    %1220 = vmatpush1.bf16.msra.mxu0 0
    %1221 = vmatprep.subr.bf16.mxu0 0
    %1222 = vmatpush1.bf16.msra.mxu0 0
    %1223 = vmatprep.subr.bf16.mxu0 0
    %1224 = vmatpush1.bf16.msra.mxu0 0
    %1225 = vmatprep.subr.bf16.mxu0 0
    %1226 = vmatpush1.bf16.msra.mxu0 0
    %1227 = vmatprep.mubr.bf16.mxu0 0
    %1228 = vmatmul.mubr.bf16.gmra.mrb[0].mxu0 %v337
    %v1229 = vpop.f32.mrb[0].mxu0
    %v1230 = vadd.f32 0.0, %v1229
    %v1231 = vpop.f32.mrb[0].mxu0
    %v1232 = vpop.f32.mrb[0].mxu0
    %v1233 = vpop.f32.mrb[0].mxu0
    %1234 = vdwg.mxu0
    %v1235 = vpack.c.bf16 %v175, %v175
    %v1236 = vpack.c.bf16 %v227, %v227
    %v1237 = vpack.c.bf16 %v279, %v279
    %v1238 = vpack.c.bf16 %v331, %v331
    %v1239 = vpack.c.bf16 %v374, %v374
    %v1240 = vpack.c.bf16 %v414, %v414
    %v1241 = vpack.c.bf16 %v454, %v454
    %v1242 = vpack.c.bf16 %v494, %v494
    %v1243 = vpack.c.bf16 %v546, %v546
    %v1244 = vpack.c.bf16 %v598, %v598
    %v1245 = vpack.c.bf16 %v650, %v650
    %v1246 = vpack.c.bf16 %v702, %v702
    %v1247 = vpack.c.bf16 %v742, %v742
    %v1248 = vpack.c.bf16 %v782, %v782
    %v1249 = vpack.c.bf16 %v822, %v822
    %v1250 = vpack.c.bf16 %v862, %v862
    %vm1251 = vcmask 64512
    %v1253 = vsel %vm1251, %v1235, 0
    %v1256 = vsel %vm1251, %v1243, 0
    %1258 = vmatprep.subr.bf16.mxu0 0
    %1259 = vmatpush1.bf16.xpose.msra.mxu0 %v1256
    %1260 = vmatprep.subr.bf16.mxu0 0
    %1261 = vmatpush1.bf16.xpose.msra.mxu0 0
    %1262 = vmatprep.subr.bf16.mxu0 0
    %1263 = vmatpush1.bf16.xpose.msra.mxu0 0
    %1264 = vmatprep.subr.bf16.mxu0 0
    %1265 = vmatpush1.bf16.xpose.msra.mxu0 0
    %1266 = vmatprep.subr.bf16.mxu0 0
    %1267 = vmatpush1.bf16.xpose.msra.mxu0 0
    %1268 = vmatprep.subr.bf16.mxu0 0
    %1269 = vmatpush1.bf16.xpose.msra.mxu0 0
    %1270 = vmatprep.subr.bf16.mxu0 0
    %1271 = vmatpush1.bf16.xpose.msra.mxu0 0
    %1272 = vmatprep.subr.bf16.mxu0 0
    %1273 = vmatpush1.bf16.xpose.msra.mxu0 0
    %1274 = vmatprep.subr.bf16.mxu0 0
    %1275 = vmatpush1.bf16.xpose.msra.mxu0 0
    %1276 = vmatprep.subr.bf16.mxu0 0
    %1277 = vmatpush1.bf16.xpose.msra.mxu0 0
    %1278 = vmatprep.subr.bf16.mxu0 0
    %1279 = vmatpush1.bf16.xpose.msra.mxu0 0
    %1280 = vmatprep.subr.bf16.mxu0 0
    %1281 = vmatpush1.bf16.xpose.msra.mxu0 0
    %1282 = vmatprep.subr.bf16.mxu0 0
    %1283 = vmatpush1.bf16.xpose.msra.mxu0 0
    %1284 = vmatprep.subr.bf16.mxu0 0
    %1285 = vmatpush1.bf16.xpose.msra.mxu0 0
    %1286 = vmatprep.subr.bf16.mxu0 0
    %1287 = vmatpush1.bf16.xpose.msra.mxu0 0
    %1288 = vmatprep.subr.bf16.mxu0 0
    %1289 = vmatpush1.bf16.xpose.msra.mxu0 0
    %1290 = vmatprep.mubr.bf16.mxu0 0
    %1291 = vmatmul.mubr.bf16.gmra.mrb[0].mxu0 %v1253
    %v1292 = vpop.f32.mrb[0].mxu0
    %v1293 = vadd.f32 0.0, %v1292
    %v1294 = vpop.f32.mrb[0].mxu0
    %v1295 = vpop.f32.mrb[0].mxu0
    %v1296 = vpop.f32.mrb[0].mxu0
    %1297 = vdwg.mxu0
    %v1299 = vsel %vm1251, %v1236, 0
    %v1302 = vsel %vm1251, %v1244, 0
    %1304 = vmatprep.subr.bf16.mxu0 0
    %1305 = vmatpush1.bf16.xpose.msra.mxu0 %v1302
    %1306 = vmatprep.subr.bf16.mxu0 0
    %1307 = vmatpush1.bf16.xpose.msra.mxu0 0
    %1308 = vmatprep.subr.bf16.mxu0 0
    %1309 = vmatpush1.bf16.xpose.msra.mxu0 0
    %1310 = vmatprep.subr.bf16.mxu0 0
    %1311 = vmatpush1.bf16.xpose.msra.mxu0 0
    %1312 = vmatprep.subr.bf16.mxu0 0
    %1313 = vmatpush1.bf16.xpose.msra.mxu0 0
    %1314 = vmatprep.subr.bf16.mxu0 0
    %1315 = vmatpush1.bf16.xpose.msra.mxu0 0
    %1316 = vmatprep.subr.bf16.mxu0 0
    %1317 = vmatpush1.bf16.xpose.msra.mxu0 0
    %1318 = vmatprep.subr.bf16.mxu0 0
    %1319 = vmatpush1.bf16.xpose.msra.mxu0 0
    %1320 = vmatprep.subr.bf16.mxu0 0
    %1321 = vmatpush1.bf16.xpose.msra.mxu0 0
    %1322 = vmatprep.subr.bf16.mxu0 0
    %1323 = vmatpush1.bf16.xpose.msra.mxu0 0
    %1324 = vmatprep.subr.bf16.mxu0 0
    %1325 = vmatpush1.bf16.xpose.msra.mxu0 0
    %1326 = vmatprep.subr.bf16.mxu0 0
    %1327 = vmatpush1.bf16.xpose.msra.mxu0 0
    %1328 = vmatprep.subr.bf16.mxu0 0
    %1329 = vmatpush1.bf16.xpose.msra.mxu0 0
    %1330 = vmatprep.subr.bf16.mxu0 0
    %1331 = vmatpush1.bf16.xpose.msra.mxu0 0
    %1332 = vmatprep.subr.bf16.mxu0 0
    %1333 = vmatpush1.bf16.xpose.msra.mxu0 0
    %1334 = vmatprep.subr.bf16.mxu0 0
    %1335 = vmatpush1.bf16.xpose.msra.mxu0 0
    %1336 = vmatprep.mubr.bf16.mxu0 0
    %1337 = vmatmul.mubr.bf16.gmra.mrb[0].mxu0 %v1299
    %v1338 = vpop.f32.mrb[0].mxu0
    %v1339 = vadd.f32 0.0, %v1338
    %v1340 = vpop.f32.mrb[0].mxu0
    %v1341 = vpop.f32.mrb[0].mxu0
    %v1342 = vpop.f32.mrb[0].mxu0
    %1343 = vdwg.mxu0
    %v1345 = vsel %vm1251, %v1237, 0
    %v1348 = vsel %vm1251, %v1245, 0
    %1350 = vmatprep.subr.bf16.mxu0 0
    %1351 = vmatpush1.bf16.xpose.msra.mxu0 %v1348
    %1352 = vmatprep.subr.bf16.mxu0 0
    %1353 = vmatpush1.bf16.xpose.msra.mxu0 0
    %1354 = vmatprep.subr.bf16.mxu0 0
    %1355 = vmatpush1.bf16.xpose.msra.mxu0 0
    %1356 = vmatprep.subr.bf16.mxu0 0
    %1357 = vmatpush1.bf16.xpose.msra.mxu0 0
    %1358 = vmatprep.subr.bf16.mxu0 0
    %1359 = vmatpush1.bf16.xpose.msra.mxu0 0
    %1360 = vmatprep.subr.bf16.mxu0 0
    %1361 = vmatpush1.bf16.xpose.msra.mxu0 0
    %1362 = vmatprep.subr.bf16.mxu0 0
    %1363 = vmatpush1.bf16.xpose.msra.mxu0 0
    %1364 = vmatprep.subr.bf16.mxu0 0
    %1365 = vmatpush1.bf16.xpose.msra.mxu0 0
    %1366 = vmatprep.subr.bf16.mxu0 0
    %1367 = vmatpush1.bf16.xpose.msra.mxu0 0
    %1368 = vmatprep.subr.bf16.mxu0 0
    %1369 = vmatpush1.bf16.xpose.msra.mxu0 0
    %1370 = vmatprep.subr.bf16.mxu0 0
    %1371 = vmatpush1.bf16.xpose.msra.mxu0 0
    %1372 = vmatprep.subr.bf16.mxu0 0
    %1373 = vmatpush1.bf16.xpose.msra.mxu0 0
    %1374 = vmatprep.subr.bf16.mxu0 0
    %1375 = vmatpush1.bf16.xpose.msra.mxu0 0
    %1376 = vmatprep.subr.bf16.mxu0 0
    %1377 = vmatpush1.bf16.xpose.msra.mxu0 0
    %1378 = vmatprep.subr.bf16.mxu0 0
    %1379 = vmatpush1.bf16.xpose.msra.mxu0 0
    %1380 = vmatprep.subr.bf16.mxu0 0
    %1381 = vmatpush1.bf16.xpose.msra.mxu0 0
    %1382 = vmatprep.mubr.bf16.mxu0 0
    %1383 = vmatmul.mubr.bf16.gmra.mrb[0].mxu0 %v1345
    %v1384 = vpop.f32.mrb[0].mxu0
    %v1385 = vadd.f32 0.0, %v1384
    %v1386 = vpop.f32.mrb[0].mxu0
    %v1387 = vpop.f32.mrb[0].mxu0
    %v1388 = vpop.f32.mrb[0].mxu0
    %1389 = vdwg.mxu0
    %v1391 = vsel %vm1251, %v1238, 0
    %v1394 = vsel %vm1251, %v1246, 0
    %1396 = vmatprep.subr.bf16.mxu0 0
    %1397 = vmatpush1.bf16.xpose.msra.mxu0 %v1394
    %1398 = vmatprep.subr.bf16.mxu0 0
    %1399 = vmatpush1.bf16.xpose.msra.mxu0 0
    %1400 = vmatprep.subr.bf16.mxu0 0
    %1401 = vmatpush1.bf16.xpose.msra.mxu0 0
    %1402 = vmatprep.subr.bf16.mxu0 0
    %1403 = vmatpush1.bf16.xpose.msra.mxu0 0
    %1404 = vmatprep.subr.bf16.mxu0 0
    %1405 = vmatpush1.bf16.xpose.msra.mxu0 0
    %1406 = vmatprep.subr.bf16.mxu0 0
    %1407 = vmatpush1.bf16.xpose.msra.mxu0 0
    %1408 = vmatprep.subr.bf16.mxu0 0
    %1409 = vmatpush1.bf16.xpose.msra.mxu0 0
    %1410 = vmatprep.subr.bf16.mxu0 0
    %1411 = vmatpush1.bf16.xpose.msra.mxu0 0
    %1412 = vmatprep.subr.bf16.mxu0 0
    %1413 = vmatpush1.bf16.xpose.msra.mxu0 0
    %1414 = vmatprep.subr.bf16.mxu0 0
    %1415 = vmatpush1.bf16.xpose.msra.mxu0 0
    %1416 = vmatprep.subr.bf16.mxu0 0
    %1417 = vmatpush1.bf16.xpose.msra.mxu0 0
    %1418 = vmatprep.subr.bf16.mxu0 0
    %1419 = vmatpush1.bf16.xpose.msra.mxu0 0
    %1420 = vmatprep.subr.bf16.mxu0 0
    %1421 = vmatpush1.bf16.xpose.msra.mxu0 0
    %1422 = vmatprep.subr.bf16.mxu0 0
    %1423 = vmatpush1.bf16.xpose.msra.mxu0 0
    %1424 = vmatprep.subr.bf16.mxu0 0
    %1425 = vmatpush1.bf16.xpose.msra.mxu0 0
    %1426 = vmatprep.subr.bf16.mxu0 0
    %1427 = vmatpush1.bf16.xpose.msra.mxu0 0
    %1428 = vmatprep.mubr.bf16.mxu0 0
    %1429 = vmatmul.mubr.bf16.gmra.mrb[0].mxu0 %v1391
    %v1430 = vpop.f32.mrb[0].mxu0
    %v1431 = vadd.f32 0.0, %v1430
    %v1432 = vpop.f32.mrb[0].mxu0
    %v1433 = vpop.f32.mrb[0].mxu0
    %v1434 = vpop.f32.mrb[0].mxu0
    %1435 = vdwg.mxu0
    %v1437 = vsel %vm1251, %v1239, 0
    %v1440 = vsel %vm1251, %v1247, 0
    %1442 = vmatprep.subr.bf16.mxu0 0
    %1443 = vmatpush1.bf16.xpose.msra.mxu0 %v1440
    %1444 = vmatprep.subr.bf16.mxu0 0
    %1445 = vmatpush1.bf16.xpose.msra.mxu0 0
    %1446 = vmatprep.subr.bf16.mxu0 0
    %1447 = vmatpush1.bf16.xpose.msra.mxu0 0
    %1448 = vmatprep.subr.bf16.mxu0 0
    %1449 = vmatpush1.bf16.xpose.msra.mxu0 0
    %1450 = vmatprep.subr.bf16.mxu0 0
    %1451 = vmatpush1.bf16.xpose.msra.mxu0 0
    %1452 = vmatprep.subr.bf16.mxu0 0
    %1453 = vmatpush1.bf16.xpose.msra.mxu0 0
    %1454 = vmatprep.subr.bf16.mxu0 0
    %1455 = vmatpush1.bf16.xpose.msra.mxu0 0
    %1456 = vmatprep.subr.bf16.mxu0 0
    %1457 = vmatpush1.bf16.xpose.msra.mxu0 0
    %1458 = vmatprep.subr.bf16.mxu0 0
    %1459 = vmatpush1.bf16.xpose.msra.mxu0 0
    %1460 = vmatprep.subr.bf16.mxu0 0
    %1461 = vmatpush1.bf16.xpose.msra.mxu0 0
    %1462 = vmatprep.subr.bf16.mxu0 0
    %1463 = vmatpush1.bf16.xpose.msra.mxu0 0
    %1464 = vmatprep.subr.bf16.mxu0 0
    %1465 = vmatpush1.bf16.xpose.msra.mxu0 0
    %1466 = vmatprep.subr.bf16.mxu0 0
    %1467 = vmatpush1.bf16.xpose.msra.mxu0 0
    %1468 = vmatprep.subr.bf16.mxu0 0
    %1469 = vmatpush1.bf16.xpose.msra.mxu0 0
    %1470 = vmatprep.subr.bf16.mxu0 0
    %1471 = vmatpush1.bf16.xpose.msra.mxu0 0
    %1472 = vmatprep.subr.bf16.mxu0 0
    %1473 = vmatpush1.bf16.xpose.msra.mxu0 0
    %1474 = vmatprep.mubr.bf16.mxu0 0
    %1475 = vmatmul.mubr.bf16.gmra.mrb[0].mxu0 %v1437
    %v1476 = vpop.f32.mrb[0].mxu0
    %v1477 = vadd.f32 0.0, %v1476
    %v1478 = vpop.f32.mrb[0].mxu0
    %v1479 = vpop.f32.mrb[0].mxu0
    %v1480 = vpop.f32.mrb[0].mxu0
    %1481 = vdwg.mxu0
    %v1483 = vsel %vm1251, %v1240, 0
    %v1486 = vsel %vm1251, %v1248, 0
    %1488 = vmatprep.subr.bf16.mxu0 0
    %1489 = vmatpush1.bf16.xpose.msra.mxu0 %v1486
    %1490 = vmatprep.subr.bf16.mxu0 0
    %1491 = vmatpush1.bf16.xpose.msra.mxu0 0
    %1492 = vmatprep.subr.bf16.mxu0 0
    %1493 = vmatpush1.bf16.xpose.msra.mxu0 0
    %1494 = vmatprep.subr.bf16.mxu0 0
    %1495 = vmatpush1.bf16.xpose.msra.mxu0 0
    %1496 = vmatprep.subr.bf16.mxu0 0
    %1497 = vmatpush1.bf16.xpose.msra.mxu0 0
    %1498 = vmatprep.subr.bf16.mxu0 0
    %1499 = vmatpush1.bf16.xpose.msra.mxu0 0
    %1500 = vmatprep.subr.bf16.mxu0 0
    %1501 = vmatpush1.bf16.xpose.msra.mxu0 0
    %1502 = vmatprep.subr.bf16.mxu0 0
    %1503 = vmatpush1.bf16.xpose.msra.mxu0 0
    %1504 = vmatprep.subr.bf16.mxu0 0
    %1505 = vmatpush1.bf16.xpose.msra.mxu0 0
    %1506 = vmatprep.subr.bf16.mxu0 0
    %1507 = vmatpush1.bf16.xpose.msra.mxu0 0
    %1508 = vmatprep.subr.bf16.mxu0 0
    %1509 = vmatpush1.bf16.xpose.msra.mxu0 0
    %1510 = vmatprep.subr.bf16.mxu0 0
    %1511 = vmatpush1.bf16.xpose.msra.mxu0 0
    %1512 = vmatprep.subr.bf16.mxu0 0
    %1513 = vmatpush1.bf16.xpose.msra.mxu0 0
    %1514 = vmatprep.subr.bf16.mxu0 0
    %1515 = vmatpush1.bf16.xpose.msra.mxu0 0
    %1516 = vmatprep.subr.bf16.mxu0 0
    %1517 = vmatpush1.bf16.xpose.msra.mxu0 0
    %1518 = vmatprep.subr.bf16.mxu0 0
    %1519 = vmatpush1.bf16.xpose.msra.mxu0 0
    %1520 = vmatprep.mubr.bf16.mxu0 0
    %1521 = vmatmul.mubr.bf16.gmra.mrb[0].mxu0 %v1483
    %v1522 = vpop.f32.mrb[0].mxu0
    %v1523 = vadd.f32 0.0, %v1522
    %v1524 = vpop.f32.mrb[0].mxu0
    %v1525 = vpop.f32.mrb[0].mxu0
    %v1526 = vpop.f32.mrb[0].mxu0
    %1527 = vdwg.mxu0
    %v1529 = vsel %vm1251, %v1241, 0
    %v1532 = vsel %vm1251, %v1249, 0
    %1534 = vmatprep.subr.bf16.mxu0 0
    %1535 = vmatpush1.bf16.xpose.msra.mxu0 %v1532
    %1536 = vmatprep.subr.bf16.mxu0 0
    %1537 = vmatpush1.bf16.xpose.msra.mxu0 0
    %1538 = vmatprep.subr.bf16.mxu0 0
    %1539 = vmatpush1.bf16.xpose.msra.mxu0 0
    %1540 = vmatprep.subr.bf16.mxu0 0
    %1541 = vmatpush1.bf16.xpose.msra.mxu0 0
    %1542 = vmatprep.subr.bf16.mxu0 0
    %1543 = vmatpush1.bf16.xpose.msra.mxu0 0
    %1544 = vmatprep.subr.bf16.mxu0 0
    %1545 = vmatpush1.bf16.xpose.msra.mxu0 0
    %1546 = vmatprep.subr.bf16.mxu0 0
    %1547 = vmatpush1.bf16.xpose.msra.mxu0 0
    %1548 = vmatprep.subr.bf16.mxu0 0
    %1549 = vmatpush1.bf16.xpose.msra.mxu0 0
    %1550 = vmatprep.subr.bf16.mxu0 0
    %1551 = vmatpush1.bf16.xpose.msra.mxu0 0
    %1552 = vmatprep.subr.bf16.mxu0 0
    %1553 = vmatpush1.bf16.xpose.msra.mxu0 0
    %1554 = vmatprep.subr.bf16.mxu0 0
    %1555 = vmatpush1.bf16.xpose.msra.mxu0 0
    %1556 = vmatprep.subr.bf16.mxu0 0
    %1557 = vmatpush1.bf16.xpose.msra.mxu0 0
    %1558 = vmatprep.subr.bf16.mxu0 0
    %1559 = vmatpush1.bf16.xpose.msra.mxu0 0
    %1560 = vmatprep.subr.bf16.mxu0 0
    %1561 = vmatpush1.bf16.xpose.msra.mxu0 0
    %1562 = vmatprep.subr.bf16.mxu0 0
    %1563 = vmatpush1.bf16.xpose.msra.mxu0 0
    %1564 = vmatprep.subr.bf16.mxu0 0
    %1565 = vmatpush1.bf16.xpose.msra.mxu0 0
    %1566 = vmatprep.mubr.bf16.mxu0 0
    %1567 = vmatmul.mubr.bf16.gmra.mrb[0].mxu0 %v1529
    %v1568 = vpop.f32.mrb[0].mxu0
    %v1569 = vadd.f32 0.0, %v1568
    %v1570 = vpop.f32.mrb[0].mxu0
    %v1571 = vpop.f32.mrb[0].mxu0
    %v1572 = vpop.f32.mrb[0].mxu0
    %1573 = vdwg.mxu0
    %v1575 = vsel %vm1251, %v1242, 0
    %v1578 = vsel %vm1251, %v1250, 0
    %1580 = vmatprep.subr.bf16.mxu0 0
    %1581 = vmatpush1.bf16.xpose.msra.mxu0 %v1578
    %1582 = vmatprep.subr.bf16.mxu0 0
    %1583 = vmatpush1.bf16.xpose.msra.mxu0 0
    %1584 = vmatprep.subr.bf16.mxu0 0
    %1585 = vmatpush1.bf16.xpose.msra.mxu0 0
    %1586 = vmatprep.subr.bf16.mxu0 0
    %1587 = vmatpush1.bf16.xpose.msra.mxu0 0
    %1588 = vmatprep.subr.bf16.mxu0 0
    %1589 = vmatpush1.bf16.xpose.msra.mxu0 0
    %1590 = vmatprep.subr.bf16.mxu0 0
    %1591 = vmatpush1.bf16.xpose.msra.mxu0 0
    %1592 = vmatprep.subr.bf16.mxu0 0
    %1593 = vmatpush1.bf16.xpose.msra.mxu0 0
    %1594 = vmatprep.subr.bf16.mxu0 0
    %1595 = vmatpush1.bf16.xpose.msra.mxu0 0
    %1596 = vmatprep.subr.bf16.mxu0 0
    %1597 = vmatpush1.bf16.xpose.msra.mxu0 0
    %1598 = vmatprep.subr.bf16.mxu0 0
    %1599 = vmatpush1.bf16.xpose.msra.mxu0 0
    %1600 = vmatprep.subr.bf16.mxu0 0
    %1601 = vmatpush1.bf16.xpose.msra.mxu0 0
    %1602 = vmatprep.subr.bf16.mxu0 0
    %1603 = vmatpush1.bf16.xpose.msra.mxu0 0
    %1604 = vmatprep.subr.bf16.mxu0 0
    %1605 = vmatpush1.bf16.xpose.msra.mxu0 0
    %1606 = vmatprep.subr.bf16.mxu0 0
    %1607 = vmatpush1.bf16.xpose.msra.mxu0 0
    %1608 = vmatprep.subr.bf16.mxu0 0
    %1609 = vmatpush1.bf16.xpose.msra.mxu0 0
    %1610 = vmatprep.subr.bf16.mxu0 0
    %1611 = vmatpush1.bf16.xpose.msra.mxu0 0
    %1612 = vmatprep.mubr.bf16.mxu0 0
    %1613 = vmatmul.mubr.bf16.gmra.mrb[0].mxu0 %v1575
    %v1614 = vpop.f32.mrb[0].mxu0
    %v1615 = vadd.f32 0.0, %v1614
    %v1616 = vpop.f32.mrb[0].mxu0
    %v1617 = vpop.f32.mrb[0].mxu0
    %v1618 = vpop.f32.mrb[0].mxu0
    %1619 = vdwg.mxu0
    %v1620 = vmul.f32 %v1293, 0.35355338
    %v1621 = vmul.f32 %v1339, 0.35355338
    %v1622 = vmul.f32 %v1385, 0.35355338
    %v1623 = vmul.f32 %v1431, 0.35355338
    %v1624 = vmul.f32 %v1477, 0.35355338
    %v1625 = vmul.f32 %v1523, 0.35355338
    %v1626 = vmul.f32 %v1569, 0.35355338
    %v1627 = vmul.f32 %v1615, 0.35355338
    %v1636 = vlaneseq
    %v1637 = vshrl.u32 %v1636, 7
    %v1638 = vsub.s32 0, %v1637
    %v1639 = vrot.slane %v39, %v1638
    %v1640 = vlaneseq
    %v1641 = vshrl.u32 %v1640, 7
    %v1642 = vsub.s32 0, %v1641
    %v1643 = vrot.slane %v40, %v1642
    %v1644 = vlaneseq
    %v1645 = vshrl.u32 %v1644, 7
    %v1646 = vsub.s32 0, %v1645
    %v1647 = vrot.slane %v41, %v1646
    %v1648 = vlaneseq
    %v1649 = vshrl.u32 %v1648, 7
    %v1650 = vsub.s32 0, %v1649
    %v1651 = vrot.slane %v42, %v1650
    %v1652 = vlaneseq
    %v1653 = vshrl.u32 %v1652, 7
    %v1654 = vsub.s32 0, %v1653
    %v1655 = vrot.slane %v43, %v1654
    %v1656 = vlaneseq
    %v1657 = vshrl.u32 %v1656, 7
    %v1658 = vsub.s32 0, %v1657
    %v1659 = vrot.slane %v44, %v1658
    %v1660 = vlaneseq
    %v1661 = vshrl.u32 %v1660, 7
    %v1662 = vsub.s32 0, %v1661
    %v1663 = vrot.slane %v45, %v1662
    %v1664 = vlaneseq
    %v1665 = vshrl.u32 %v1664, 7
    %v1666 = vsub.s32 0, %v1665
    %v1667 = vrot.slane %v46, %v1666
    %v1676 = vadd.f32 %v1620, %v1639
    %v1677 = vadd.f32 %v1621, %v1643
    %v1678 = vadd.f32 %v1622, %v1647
    %v1679 = vadd.f32 %v1623, %v1651
    %v1680 = vadd.f32 %v1624, %v1655
    %v1681 = vadd.f32 %v1625, %v1659
    %v1682 = vadd.f32 %v1626, %v1663
    %v1683 = vadd.f32 %v1627, %v1667
    %v1684 = vsel %vm1251, %v1676, -inf
    %1685 = vmax.xlane.f32.xlu0 %v1684
    %v1686 = vpop.xlane.xlu0 %1685
    %v1687 = vsel %vm1251, %v1677, -inf
    %1688 = vmax.xlane.f32.xlu0 %v1687
    %v1689 = vpop.xlane.xlu0 %1688
    %v1690 = vsel %vm1251, %v1678, -inf
    %1691 = vmax.xlane.f32.xlu0 %v1690
    %v1692 = vpop.xlane.xlu0 %1691
    %v1693 = vsel %vm1251, %v1679, -inf
    %1694 = vmax.xlane.f32.xlu0 %v1693
    %v1695 = vpop.xlane.xlu0 %1694
    %v1696 = vsel %vm1251, %v1680, -inf
    %1697 = vmax.xlane.f32.xlu0 %v1696
    %v1698 = vpop.xlane.xlu0 %1697
    %v1699 = vsel %vm1251, %v1681, -inf
    %1700 = vmax.xlane.f32.xlu0 %v1699
    %v1701 = vpop.xlane.xlu0 %1700
    %v1702 = vsel %vm1251, %v1682, -inf
    %1703 = vmax.xlane.f32.xlu0 %v1702
    %v1704 = vpop.xlane.xlu0 %1703
    %v1705 = vsel %vm1251, %v1683, -inf
    %1706 = vmax.xlane.f32.xlu0 %v1705
    %v1707 = vpop.xlane.xlu0 %1706
    %v1708 = vsub.f32 %v1676, %v1686
    %v1709 = vsub.f32 %v1677, %v1689
    %v1710 = vsub.f32 %v1678, %v1692
    %v1711 = vsub.f32 %v1679, %v1695
    %v1712 = vsub.f32 %v1680, %v1698
    %v1713 = vsub.f32 %v1681, %v1701
    %v1714 = vsub.f32 %v1682, %v1704
    %v1715 = vsub.f32 %v1683, %v1707
    %v1716 = vmul.f32 %v1708, 1.442695
    %v1717 = vpow.pop %v1716
    %v1718 = vmul.f32 %v1709, 1.442695
    %v1719 = vpow.pop %v1718
    %v1720 = vmul.f32 %v1710, 1.442695
    %v1721 = vpow.pop %v1720
    %v1722 = vmul.f32 %v1711, 1.442695
    %v1723 = vpow.pop %v1722
    %v1724 = vmul.f32 %v1712, 1.442695
    %v1725 = vpow.pop %v1724
    %v1726 = vmul.f32 %v1713, 1.442695
    %v1727 = vpow.pop %v1726
    %v1728 = vmul.f32 %v1714, 1.442695
    %v1729 = vpow.pop %v1728
    %v1730 = vmul.f32 %v1715, 1.442695
    %v1731 = vpow.pop %v1730
    %v1732 = vsel %vm1251, %v1717, 0.0
    %1733 = vadd.xlane.f32.xlu0 %v1732
    %v1734 = vpop.xlane.xlu0 %1733
    %v1735 = vsel %vm1251, %v1719, 0.0
    %1736 = vadd.xlane.f32.xlu0 %v1735
    %v1737 = vpop.xlane.xlu0 %1736
    %v1738 = vsel %vm1251, %v1721, 0.0
    %1739 = vadd.xlane.f32.xlu0 %v1738
    %v1740 = vpop.xlane.xlu0 %1739
    %v1741 = vsel %vm1251, %v1723, 0.0
    %1742 = vadd.xlane.f32.xlu0 %v1741
    %v1743 = vpop.xlane.xlu0 %1742
    %v1744 = vsel %vm1251, %v1725, 0.0
    %1745 = vadd.xlane.f32.xlu0 %v1744
    %v1746 = vpop.xlane.xlu0 %1745
    %v1747 = vsel %vm1251, %v1727, 0.0
    %1748 = vadd.xlane.f32.xlu0 %v1747
    %v1749 = vpop.xlane.xlu0 %1748
    %v1750 = vsel %vm1251, %v1729, 0.0
    %1751 = vadd.xlane.f32.xlu0 %v1750
    %v1752 = vpop.xlane.xlu0 %1751
    %v1753 = vsel %vm1251, %v1731, 0.0
    %1754 = vadd.xlane.f32.xlu0 %v1753
    %v1755 = vpop.xlane.xlu0 %1754
    %v1756 = vrcp.pop %v1734
    %v1757 = vrcp.pop %v1737
    %v1758 = vrcp.pop %v1740
    %v1759 = vrcp.pop %v1743
    %v1760 = vrcp.pop %v1746
    %v1761 = vrcp.pop %v1749
    %v1762 = vrcp.pop %v1752
    %v1763 = vrcp.pop %v1755
    %v1764 = vmul.f32 %v1717, %v1756
    %v1765 = vmul.f32 %v1719, %v1757
    %v1766 = vmul.f32 %v1721, %v1758
    %v1767 = vmul.f32 %v1723, %v1759
    %v1768 = vmul.f32 %v1725, %v1760
    %v1769 = vmul.f32 %v1727, %v1761
    %v1770 = vmul.f32 %v1729, %v1762
    %v1771 = vmul.f32 %v1731, %v1763
    %v1772 = vpack.c.bf16 %v1764, %v1764
    %v1773 = vpack.c.bf16 %v1765, %v1765
    %v1774 = vpack.c.bf16 %v1766, %v1766
    %v1775 = vpack.c.bf16 %v1767, %v1767
    %v1776 = vpack.c.bf16 %v1768, %v1768
    %v1777 = vpack.c.bf16 %v1769, %v1769
    %v1778 = vpack.c.bf16 %v1770, %v1770
    %v1779 = vpack.c.bf16 %v1771, %v1771
    %v1780 = vpack.c.bf16 %v914, %v914
    %v1781 = vpack.c.bf16 %v966, %v966
    %v1782 = vpack.c.bf16 %v1018, %v1018
    %v1783 = vpack.c.bf16 %v1070, %v1070
    %v1784 = vpack.c.bf16 %v1110, %v1110
    %v1785 = vpack.c.bf16 %v1150, %v1150
    %v1786 = vpack.c.bf16 %v1190, %v1190
    %v1787 = vpack.c.bf16 %v1230, %v1230
    %v1789 = vsel %vm1251, %v1772, 0
    %vm1791 = vcmask 1043456
    %v1793 = vsel %vm1791, %v1780, 0
    %1795 = vmatprep.subr.bf16.mxu0 0
    %1796 = vmatpush1.bf16.msra.mxu0 %v1793
    %1797 = vmatprep.subr.bf16.mxu0 0
    %1798 = vmatpush1.bf16.msra.mxu0 0
    %1799 = vmatprep.subr.bf16.mxu0 0
    %1800 = vmatpush1.bf16.msra.mxu0 0
    %1801 = vmatprep.subr.bf16.mxu0 0
    %1802 = vmatpush1.bf16.msra.mxu0 0
    %1803 = vmatprep.subr.bf16.mxu0 0
    %1804 = vmatpush1.bf16.msra.mxu0 0
    %1805 = vmatprep.subr.bf16.mxu0 0
    %1806 = vmatpush1.bf16.msra.mxu0 0
    %1807 = vmatprep.subr.bf16.mxu0 0
    %1808 = vmatpush1.bf16.msra.mxu0 0
    %1809 = vmatprep.subr.bf16.mxu0 0
    %1810 = vmatpush1.bf16.msra.mxu0 0
    %1811 = vmatprep.subr.bf16.mxu0 0
    %1812 = vmatpush1.bf16.msra.mxu0 0
    %1813 = vmatprep.subr.bf16.mxu0 0
    %1814 = vmatpush1.bf16.msra.mxu0 0
    %1815 = vmatprep.subr.bf16.mxu0 0
    %1816 = vmatpush1.bf16.msra.mxu0 0
    %1817 = vmatprep.subr.bf16.mxu0 0
    %1818 = vmatpush1.bf16.msra.mxu0 0
    %1819 = vmatprep.subr.bf16.mxu0 0
    %1820 = vmatpush1.bf16.msra.mxu0 0
    %1821 = vmatprep.subr.bf16.mxu0 0
    %1822 = vmatpush1.bf16.msra.mxu0 0
    %1823 = vmatprep.subr.bf16.mxu0 0
    %1824 = vmatpush1.bf16.msra.mxu0 0
    %1825 = vmatprep.subr.bf16.mxu0 0
    %1826 = vmatpush1.bf16.msra.mxu0 0
    %1827 = vmatprep.mubr.bf16.mxu0 0
    %1828 = vmatmul.mubr.bf16.gmra.mrb[0].mxu0 %v1789
    %v1829 = vpop.f32.mrb[0].mxu0
    %v1830 = vadd.f32 0.0, %v1829
    %v1831 = vpop.f32.mrb[0].mxu0
    %v1832 = vpop.f32.mrb[0].mxu0
    %v1833 = vpop.f32.mrb[0].mxu0
    %1834 = vdwg.mxu0
    %v1836 = vsel %vm1251, %v1773, 0
    %v1839 = vsel %vm1791, %v1781, 0
    %1841 = vmatprep.subr.bf16.mxu0 0
    %1842 = vmatpush1.bf16.msra.mxu0 %v1839
    %1843 = vmatprep.subr.bf16.mxu0 0
    %1844 = vmatpush1.bf16.msra.mxu0 0
    %1845 = vmatprep.subr.bf16.mxu0 0
    %1846 = vmatpush1.bf16.msra.mxu0 0
    %1847 = vmatprep.subr.bf16.mxu0 0
    %1848 = vmatpush1.bf16.msra.mxu0 0
    %1849 = vmatprep.subr.bf16.mxu0 0
    %1850 = vmatpush1.bf16.msra.mxu0 0
    %1851 = vmatprep.subr.bf16.mxu0 0
    %1852 = vmatpush1.bf16.msra.mxu0 0
    %1853 = vmatprep.subr.bf16.mxu0 0
    %1854 = vmatpush1.bf16.msra.mxu0 0
    %1855 = vmatprep.subr.bf16.mxu0 0
    %1856 = vmatpush1.bf16.msra.mxu0 0
    %1857 = vmatprep.subr.bf16.mxu0 0
    %1858 = vmatpush1.bf16.msra.mxu0 0
    %1859 = vmatprep.subr.bf16.mxu0 0
    %1860 = vmatpush1.bf16.msra.mxu0 0
    %1861 = vmatprep.subr.bf16.mxu0 0
    %1862 = vmatpush1.bf16.msra.mxu0 0
    %1863 = vmatprep.subr.bf16.mxu0 0
    %1864 = vmatpush1.bf16.msra.mxu0 0
    %1865 = vmatprep.subr.bf16.mxu0 0
    %1866 = vmatpush1.bf16.msra.mxu0 0
    %1867 = vmatprep.subr.bf16.mxu0 0
    %1868 = vmatpush1.bf16.msra.mxu0 0
    %1869 = vmatprep.subr.bf16.mxu0 0
    %1870 = vmatpush1.bf16.msra.mxu0 0
    %1871 = vmatprep.subr.bf16.mxu0 0
    %1872 = vmatpush1.bf16.msra.mxu0 0
    %1873 = vmatprep.mubr.bf16.mxu0 0
    %1874 = vmatmul.mubr.bf16.gmra.mrb[0].mxu0 %v1836
    %v1875 = vpop.f32.mrb[0].mxu0
    %v1876 = vadd.f32 0.0, %v1875
    %v1877 = vpop.f32.mrb[0].mxu0
    %v1878 = vpop.f32.mrb[0].mxu0
    %v1879 = vpop.f32.mrb[0].mxu0
    %1880 = vdwg.mxu0
    %v1882 = vsel %vm1251, %v1774, 0
    %v1885 = vsel %vm1791, %v1782, 0
    %1887 = vmatprep.subr.bf16.mxu0 0
    %1888 = vmatpush1.bf16.msra.mxu0 %v1885
    %1889 = vmatprep.subr.bf16.mxu0 0
    %1890 = vmatpush1.bf16.msra.mxu0 0
    %1891 = vmatprep.subr.bf16.mxu0 0
    %1892 = vmatpush1.bf16.msra.mxu0 0
    %1893 = vmatprep.subr.bf16.mxu0 0
    %1894 = vmatpush1.bf16.msra.mxu0 0
    %1895 = vmatprep.subr.bf16.mxu0 0
    %1896 = vmatpush1.bf16.msra.mxu0 0
    %1897 = vmatprep.subr.bf16.mxu0 0
    %1898 = vmatpush1.bf16.msra.mxu0 0
    %1899 = vmatprep.subr.bf16.mxu0 0
    %1900 = vmatpush1.bf16.msra.mxu0 0
    %1901 = vmatprep.subr.bf16.mxu0 0
    %1902 = vmatpush1.bf16.msra.mxu0 0
    %1903 = vmatprep.subr.bf16.mxu0 0
    %1904 = vmatpush1.bf16.msra.mxu0 0
    %1905 = vmatprep.subr.bf16.mxu0 0
    %1906 = vmatpush1.bf16.msra.mxu0 0
    %1907 = vmatprep.subr.bf16.mxu0 0
    %1908 = vmatpush1.bf16.msra.mxu0 0
    %1909 = vmatprep.subr.bf16.mxu0 0
    %1910 = vmatpush1.bf16.msra.mxu0 0
    %1911 = vmatprep.subr.bf16.mxu0 0
    %1912 = vmatpush1.bf16.msra.mxu0 0
    %1913 = vmatprep.subr.bf16.mxu0 0
    %1914 = vmatpush1.bf16.msra.mxu0 0
    %1915 = vmatprep.subr.bf16.mxu0 0
    %1916 = vmatpush1.bf16.msra.mxu0 0
    %1917 = vmatprep.subr.bf16.mxu0 0
    %1918 = vmatpush1.bf16.msra.mxu0 0
    %1919 = vmatprep.mubr.bf16.mxu0 0
    %1920 = vmatmul.mubr.bf16.gmra.mrb[0].mxu0 %v1882
    %v1921 = vpop.f32.mrb[0].mxu0
    %v1922 = vadd.f32 0.0, %v1921
    %v1923 = vpop.f32.mrb[0].mxu0
    %v1924 = vpop.f32.mrb[0].mxu0
    %v1925 = vpop.f32.mrb[0].mxu0
    %1926 = vdwg.mxu0
    %v1928 = vsel %vm1251, %v1775, 0
    %v1931 = vsel %vm1791, %v1783, 0
    %1933 = vmatprep.subr.bf16.mxu0 0
    %1934 = vmatpush1.bf16.msra.mxu0 %v1931
    %1935 = vmatprep.subr.bf16.mxu0 0
    %1936 = vmatpush1.bf16.msra.mxu0 0
    %1937 = vmatprep.subr.bf16.mxu0 0
    %1938 = vmatpush1.bf16.msra.mxu0 0
    %1939 = vmatprep.subr.bf16.mxu0 0
    %1940 = vmatpush1.bf16.msra.mxu0 0
    %1941 = vmatprep.subr.bf16.mxu0 0
    %1942 = vmatpush1.bf16.msra.mxu0 0
    %1943 = vmatprep.subr.bf16.mxu0 0
    %1944 = vmatpush1.bf16.msra.mxu0 0
    %1945 = vmatprep.subr.bf16.mxu0 0
    %1946 = vmatpush1.bf16.msra.mxu0 0
    %1947 = vmatprep.subr.bf16.mxu0 0
    %1948 = vmatpush1.bf16.msra.mxu0 0
    %1949 = vmatprep.subr.bf16.mxu0 0
    %1950 = vmatpush1.bf16.msra.mxu0 0
    %1951 = vmatprep.subr.bf16.mxu0 0
    %1952 = vmatpush1.bf16.msra.mxu0 0
    %1953 = vmatprep.subr.bf16.mxu0 0
    %1954 = vmatpush1.bf16.msra.mxu0 0
    %1955 = vmatprep.subr.bf16.mxu0 0
    %1956 = vmatpush1.bf16.msra.mxu0 0
    %1957 = vmatprep.subr.bf16.mxu0 0
    %1958 = vmatpush1.bf16.msra.mxu0 0
    %1959 = vmatprep.subr.bf16.mxu0 0
    %1960 = vmatpush1.bf16.msra.mxu0 0
    %1961 = vmatprep.subr.bf16.mxu0 0
    %1962 = vmatpush1.bf16.msra.mxu0 0
    %1963 = vmatprep.subr.bf16.mxu0 0
    %1964 = vmatpush1.bf16.msra.mxu0 0
    %1965 = vmatprep.mubr.bf16.mxu0 0
    %1966 = vmatmul.mubr.bf16.gmra.mrb[0].mxu0 %v1928
    %v1967 = vpop.f32.mrb[0].mxu0
    %v1968 = vadd.f32 0.0, %v1967
    %v1969 = vpop.f32.mrb[0].mxu0
    %v1970 = vpop.f32.mrb[0].mxu0
    %v1971 = vpop.f32.mrb[0].mxu0
    %1972 = vdwg.mxu0
    %v1974 = vsel %vm1251, %v1776, 0
    %v1977 = vsel %vm1791, %v1784, 0
    %1979 = vmatprep.subr.bf16.mxu0 0
    %1980 = vmatpush1.bf16.msra.mxu0 %v1977
    %1981 = vmatprep.subr.bf16.mxu0 0
    %1982 = vmatpush1.bf16.msra.mxu0 0
    %1983 = vmatprep.subr.bf16.mxu0 0
    %1984 = vmatpush1.bf16.msra.mxu0 0
    %1985 = vmatprep.subr.bf16.mxu0 0
    %1986 = vmatpush1.bf16.msra.mxu0 0
    %1987 = vmatprep.subr.bf16.mxu0 0
    %1988 = vmatpush1.bf16.msra.mxu0 0
    %1989 = vmatprep.subr.bf16.mxu0 0
    %1990 = vmatpush1.bf16.msra.mxu0 0
    %1991 = vmatprep.subr.bf16.mxu0 0
    %1992 = vmatpush1.bf16.msra.mxu0 0
    %1993 = vmatprep.subr.bf16.mxu0 0
    %1994 = vmatpush1.bf16.msra.mxu0 0
    %1995 = vmatprep.subr.bf16.mxu0 0
    %1996 = vmatpush1.bf16.msra.mxu0 0
    %1997 = vmatprep.subr.bf16.mxu0 0
    %1998 = vmatpush1.bf16.msra.mxu0 0
    %1999 = vmatprep.subr.bf16.mxu0 0
    %2000 = vmatpush1.bf16.msra.mxu0 0
    %2001 = vmatprep.subr.bf16.mxu0 0
    %2002 = vmatpush1.bf16.msra.mxu0 0
    %2003 = vmatprep.subr.bf16.mxu0 0
    %2004 = vmatpush1.bf16.msra.mxu0 0
    %2005 = vmatprep.subr.bf16.mxu0 0
    %2006 = vmatpush1.bf16.msra.mxu0 0
    %2007 = vmatprep.subr.bf16.mxu0 0
    %2008 = vmatpush1.bf16.msra.mxu0 0
    %2009 = vmatprep.subr.bf16.mxu0 0
    %2010 = vmatpush1.bf16.msra.mxu0 0
    %2011 = vmatprep.mubr.bf16.mxu0 0
    %2012 = vmatmul.mubr.bf16.gmra.mrb[0].mxu0 %v1974
    %v2013 = vpop.f32.mrb[0].mxu0
    %v2014 = vadd.f32 0.0, %v2013
    %v2015 = vpop.f32.mrb[0].mxu0
    %v2016 = vpop.f32.mrb[0].mxu0
    %v2017 = vpop.f32.mrb[0].mxu0
    %2018 = vdwg.mxu0
    %v2020 = vsel %vm1251, %v1777, 0
    %v2023 = vsel %vm1791, %v1785, 0
    %2025 = vmatprep.subr.bf16.mxu0 0
    %2026 = vmatpush1.bf16.msra.mxu0 %v2023
    %2027 = vmatprep.subr.bf16.mxu0 0
    %2028 = vmatpush1.bf16.msra.mxu0 0
    %2029 = vmatprep.subr.bf16.mxu0 0
    %2030 = vmatpush1.bf16.msra.mxu0 0
    %2031 = vmatprep.subr.bf16.mxu0 0
    %2032 = vmatpush1.bf16.msra.mxu0 0
    %2033 = vmatprep.subr.bf16.mxu0 0
    %2034 = vmatpush1.bf16.msra.mxu0 0
    %2035 = vmatprep.subr.bf16.mxu0 0
    %2036 = vmatpush1.bf16.msra.mxu0 0
    %2037 = vmatprep.subr.bf16.mxu0 0
    %2038 = vmatpush1.bf16.msra.mxu0 0
    %2039 = vmatprep.subr.bf16.mxu0 0
    %2040 = vmatpush1.bf16.msra.mxu0 0
    %2041 = vmatprep.subr.bf16.mxu0 0
    %2042 = vmatpush1.bf16.msra.mxu0 0
    %2043 = vmatprep.subr.bf16.mxu0 0
    %2044 = vmatpush1.bf16.msra.mxu0 0
    %2045 = vmatprep.subr.bf16.mxu0 0
    %2046 = vmatpush1.bf16.msra.mxu0 0
    %2047 = vmatprep.subr.bf16.mxu0 0
    %2048 = vmatpush1.bf16.msra.mxu0 0
    %2049 = vmatprep.subr.bf16.mxu0 0
    %2050 = vmatpush1.bf16.msra.mxu0 0
    %2051 = vmatprep.subr.bf16.mxu0 0
    %2052 = vmatpush1.bf16.msra.mxu0 0
    %2053 = vmatprep.subr.bf16.mxu0 0
    %2054 = vmatpush1.bf16.msra.mxu0 0
    %2055 = vmatprep.subr.bf16.mxu0 0
    %2056 = vmatpush1.bf16.msra.mxu0 0
    %2057 = vmatprep.mubr.bf16.mxu0 0
    %2058 = vmatmul.mubr.bf16.gmra.mrb[0].mxu0 %v2020
    %v2059 = vpop.f32.mrb[0].mxu0
    %v2060 = vadd.f32 0.0, %v2059
    %v2061 = vpop.f32.mrb[0].mxu0
    %v2062 = vpop.f32.mrb[0].mxu0
    %v2063 = vpop.f32.mrb[0].mxu0
    %2064 = vdwg.mxu0
    %v2066 = vsel %vm1251, %v1778, 0
    %v2069 = vsel %vm1791, %v1786, 0
    %2071 = vmatprep.subr.bf16.mxu0 0
    %2072 = vmatpush1.bf16.msra.mxu0 %v2069
    %2073 = vmatprep.subr.bf16.mxu0 0
    %2074 = vmatpush1.bf16.msra.mxu0 0
    %2075 = vmatprep.subr.bf16.mxu0 0
    %2076 = vmatpush1.bf16.msra.mxu0 0
    %2077 = vmatprep.subr.bf16.mxu0 0
    %2078 = vmatpush1.bf16.msra.mxu0 0
    %2079 = vmatprep.subr.bf16.mxu0 0
    %2080 = vmatpush1.bf16.msra.mxu0 0
    %2081 = vmatprep.subr.bf16.mxu0 0
    %2082 = vmatpush1.bf16.msra.mxu0 0
    %2083 = vmatprep.subr.bf16.mxu0 0
    %2084 = vmatpush1.bf16.msra.mxu0 0
    %2085 = vmatprep.subr.bf16.mxu0 0
    %2086 = vmatpush1.bf16.msra.mxu0 0
    %2087 = vmatprep.subr.bf16.mxu0 0
    %2088 = vmatpush1.bf16.msra.mxu0 0
    %2089 = vmatprep.subr.bf16.mxu0 0
    %2090 = vmatpush1.bf16.msra.mxu0 0
    %2091 = vmatprep.subr.bf16.mxu0 0
    %2092 = vmatpush1.bf16.msra.mxu0 0
    %2093 = vmatprep.subr.bf16.mxu0 0
    %2094 = vmatpush1.bf16.msra.mxu0 0
    %2095 = vmatprep.subr.bf16.mxu0 0
    %2096 = vmatpush1.bf16.msra.mxu0 0
    %2097 = vmatprep.subr.bf16.mxu0 0
    %2098 = vmatpush1.bf16.msra.mxu0 0
    %2099 = vmatprep.subr.bf16.mxu0 0
    %2100 = vmatpush1.bf16.msra.mxu0 0
    %2101 = vmatprep.subr.bf16.mxu0 0
    %2102 = vmatpush1.bf16.msra.mxu0 0
    %2103 = vmatprep.mubr.bf16.mxu0 0
    %2104 = vmatmul.mubr.bf16.gmra.mrb[0].mxu0 %v2066
    %v2105 = vpop.f32.mrb[0].mxu0
    %v2106 = vadd.f32 0.0, %v2105
    %v2107 = vpop.f32.mrb[0].mxu0
    %v2108 = vpop.f32.mrb[0].mxu0
    %v2109 = vpop.f32.mrb[0].mxu0
    %2110 = vdwg.mxu0
    %v2112 = vsel %vm1251, %v1779, 0
    %v2115 = vsel %vm1791, %v1787, 0
    %2117 = vmatprep.subr.bf16.mxu0 0
    %2118 = vmatpush1.bf16.msra.mxu0 %v2115
    %2119 = vmatprep.subr.bf16.mxu0 0
    %2120 = vmatpush1.bf16.msra.mxu0 0
    %2121 = vmatprep.subr.bf16.mxu0 0
    %2122 = vmatpush1.bf16.msra.mxu0 0
    %2123 = vmatprep.subr.bf16.mxu0 0
    %2124 = vmatpush1.bf16.msra.mxu0 0
    %2125 = vmatprep.subr.bf16.mxu0 0
    %2126 = vmatpush1.bf16.msra.mxu0 0
    %2127 = vmatprep.subr.bf16.mxu0 0
    %2128 = vmatpush1.bf16.msra.mxu0 0
    %2129 = vmatprep.subr.bf16.mxu0 0
    %2130 = vmatpush1.bf16.msra.mxu0 0
    %2131 = vmatprep.subr.bf16.mxu0 0
    %2132 = vmatpush1.bf16.msra.mxu0 0
    %2133 = vmatprep.subr.bf16.mxu0 0
    %2134 = vmatpush1.bf16.msra.mxu0 0
    %2135 = vmatprep.subr.bf16.mxu0 0
    %2136 = vmatpush1.bf16.msra.mxu0 0
    %2137 = vmatprep.subr.bf16.mxu0 0
    %2138 = vmatpush1.bf16.msra.mxu0 0
    %2139 = vmatprep.subr.bf16.mxu0 0
    %2140 = vmatpush1.bf16.msra.mxu0 0
    %2141 = vmatprep.subr.bf16.mxu0 0
    %2142 = vmatpush1.bf16.msra.mxu0 0
    %2143 = vmatprep.subr.bf16.mxu0 0
    %2144 = vmatpush1.bf16.msra.mxu0 0
    %2145 = vmatprep.subr.bf16.mxu0 0
    %2146 = vmatpush1.bf16.msra.mxu0 0
    %2147 = vmatprep.subr.bf16.mxu0 0
    %2148 = vmatpush1.bf16.msra.mxu0 0
    %2149 = vmatprep.mubr.bf16.mxu0 0
    %2150 = vmatmul.mubr.bf16.gmra.mrb[0].mxu0 %v2112
    %v2151 = vpop.f32.mrb[0].mxu0
    %v2152 = vadd.f32 0.0, %v2151
    %v2153 = vpop.f32.mrb[0].mxu0
    %v2154 = vpop.f32.mrb[0].mxu0
    %v2155 = vpop.f32.mrb[0].mxu0
    %2156 = vdwg.mxu0
    %v2157 = vpack.c.bf16 %v1830, %v1830
    %v2158 = vpack.c.bf16 %v1876, %v1876
    %v2159 = vpack.c.bf16 %v1922, %v1922
    %v2160 = vpack.c.bf16 %v1968, %v1968
    %v2161 = vpack.c.bf16 %v2014, %v2014
    %v2162 = vpack.c.bf16 %v2060, %v2060
    %v2163 = vpack.c.bf16 %v2106, %v2106
    %v2164 = vpack.c.bf16 %v2152, %v2152
    %v2166 = vsel %vm1251, %v2157, 0
    %v2169 = vsel %vm1791, %v97, 0
    %2171 = vmatprep.subr.bf16.mxu0 0
    %2172 = vmatpush1.bf16.msra.mxu0 %v2169
    %2173 = vmatprep.subr.bf16.mxu0 0
    %2174 = vmatpush1.bf16.msra.mxu0 0
    %2175 = vmatprep.subr.bf16.mxu0 0
    %2176 = vmatpush1.bf16.msra.mxu0 0
    %2177 = vmatprep.subr.bf16.mxu0 0
    %2178 = vmatpush1.bf16.msra.mxu0 0
    %2179 = vmatprep.subr.bf16.mxu0 0
    %2180 = vmatpush1.bf16.msra.mxu0 0
    %2181 = vmatprep.subr.bf16.mxu0 0
    %2182 = vmatpush1.bf16.msra.mxu0 0
    %2183 = vmatprep.subr.bf16.mxu0 0
    %2184 = vmatpush1.bf16.msra.mxu0 0
    %2185 = vmatprep.subr.bf16.mxu0 0
    %2186 = vmatpush1.bf16.msra.mxu0 0
    %2187 = vmatprep.subr.bf16.mxu0 0
    %2188 = vmatpush1.bf16.msra.mxu0 0
    %2189 = vmatprep.subr.bf16.mxu0 0
    %2190 = vmatpush1.bf16.msra.mxu0 0
    %2191 = vmatprep.subr.bf16.mxu0 0
    %2192 = vmatpush1.bf16.msra.mxu0 0
    %2193 = vmatprep.subr.bf16.mxu0 0
    %2194 = vmatpush1.bf16.msra.mxu0 0
    %2195 = vmatprep.subr.bf16.mxu0 0
    %2196 = vmatpush1.bf16.msra.mxu0 0
    %2197 = vmatprep.subr.bf16.mxu0 0
    %2198 = vmatpush1.bf16.msra.mxu0 0
    %2199 = vmatprep.subr.bf16.mxu0 0
    %2200 = vmatpush1.bf16.msra.mxu0 0
    %2201 = vmatprep.subr.bf16.mxu0 0
    %2202 = vmatpush1.bf16.msra.mxu0 0
    %2203 = vmatprep.mubr.bf16.mxu0 0
    %2204 = vmatmul.mubr.bf16.gmra.mrb[0].mxu0 %v2166
    %v2205 = vpop.f32.mrb[0].mxu0
    %v2206 = vadd.f32 0.0, %v2205
    %v2207 = vpop.f32.mrb[0].mxu0
    %v2208 = vpop.f32.mrb[0].mxu0
    %v2209 = vpop.f32.mrb[0].mxu0
    %2210 = vdwg.mxu0
    %v2212 = vsel %vm1251, %v2158, 0
    %v2215 = vsel %vm1791, %v98, 0
    %2217 = vmatprep.subr.bf16.mxu0 0
    %2218 = vmatpush1.bf16.msra.mxu0 %v2215
    %2219 = vmatprep.subr.bf16.mxu0 0
    %2220 = vmatpush1.bf16.msra.mxu0 0
    %2221 = vmatprep.subr.bf16.mxu0 0
    %2222 = vmatpush1.bf16.msra.mxu0 0
    %2223 = vmatprep.subr.bf16.mxu0 0
    %2224 = vmatpush1.bf16.msra.mxu0 0
    %2225 = vmatprep.subr.bf16.mxu0 0
    %2226 = vmatpush1.bf16.msra.mxu0 0
    %2227 = vmatprep.subr.bf16.mxu0 0
    %2228 = vmatpush1.bf16.msra.mxu0 0
    %2229 = vmatprep.subr.bf16.mxu0 0
    %2230 = vmatpush1.bf16.msra.mxu0 0
    %2231 = vmatprep.subr.bf16.mxu0 0
    %2232 = vmatpush1.bf16.msra.mxu0 0
    %2233 = vmatprep.subr.bf16.mxu0 0
    %2234 = vmatpush1.bf16.msra.mxu0 0
    %2235 = vmatprep.subr.bf16.mxu0 0
    %2236 = vmatpush1.bf16.msra.mxu0 0
    %2237 = vmatprep.subr.bf16.mxu0 0
    %2238 = vmatpush1.bf16.msra.mxu0 0
    %2239 = vmatprep.subr.bf16.mxu0 0
    %2240 = vmatpush1.bf16.msra.mxu0 0
    %2241 = vmatprep.subr.bf16.mxu0 0
    %2242 = vmatpush1.bf16.msra.mxu0 0
    %2243 = vmatprep.subr.bf16.mxu0 0
    %2244 = vmatpush1.bf16.msra.mxu0 0
    %2245 = vmatprep.subr.bf16.mxu0 0
    %2246 = vmatpush1.bf16.msra.mxu0 0
    %2247 = vmatprep.subr.bf16.mxu0 0
    %2248 = vmatpush1.bf16.msra.mxu0 0
    %2249 = vmatprep.mubr.bf16.mxu0 0
    %2250 = vmatmul.mubr.bf16.gmra.mrb[0].mxu0 %v2212
    %v2251 = vpop.f32.mrb[0].mxu0
    %v2252 = vadd.f32 0.0, %v2251
    %v2253 = vpop.f32.mrb[0].mxu0
    %v2254 = vpop.f32.mrb[0].mxu0
    %v2255 = vpop.f32.mrb[0].mxu0
    %2256 = vdwg.mxu0
    %v2258 = vsel %vm1251, %v2159, 0
    %v2261 = vsel %vm1791, %v99, 0
    %2263 = vmatprep.subr.bf16.mxu0 0
    %2264 = vmatpush1.bf16.msra.mxu0 %v2261
    %2265 = vmatprep.subr.bf16.mxu0 0
    %2266 = vmatpush1.bf16.msra.mxu0 0
    %2267 = vmatprep.subr.bf16.mxu0 0
    %2268 = vmatpush1.bf16.msra.mxu0 0
    %2269 = vmatprep.subr.bf16.mxu0 0
    %2270 = vmatpush1.bf16.msra.mxu0 0
    %2271 = vmatprep.subr.bf16.mxu0 0
    %2272 = vmatpush1.bf16.msra.mxu0 0
    %2273 = vmatprep.subr.bf16.mxu0 0
    %2274 = vmatpush1.bf16.msra.mxu0 0
    %2275 = vmatprep.subr.bf16.mxu0 0
    %2276 = vmatpush1.bf16.msra.mxu0 0
    %2277 = vmatprep.subr.bf16.mxu0 0
    %2278 = vmatpush1.bf16.msra.mxu0 0
    %2279 = vmatprep.subr.bf16.mxu0 0
    %2280 = vmatpush1.bf16.msra.mxu0 0
    %2281 = vmatprep.subr.bf16.mxu0 0
    %2282 = vmatpush1.bf16.msra.mxu0 0
    %2283 = vmatprep.subr.bf16.mxu0 0
    %2284 = vmatpush1.bf16.msra.mxu0 0
    %2285 = vmatprep.subr.bf16.mxu0 0
    %2286 = vmatpush1.bf16.msra.mxu0 0
    %2287 = vmatprep.subr.bf16.mxu0 0
    %2288 = vmatpush1.bf16.msra.mxu0 0
    %2289 = vmatprep.subr.bf16.mxu0 0
    %2290 = vmatpush1.bf16.msra.mxu0 0
    %2291 = vmatprep.subr.bf16.mxu0 0
    %2292 = vmatpush1.bf16.msra.mxu0 0
    %2293 = vmatprep.subr.bf16.mxu0 0
    %2294 = vmatpush1.bf16.msra.mxu0 0
    %2295 = vmatprep.mubr.bf16.mxu0 0
    %2296 = vmatmul.mubr.bf16.gmra.mrb[0].mxu0 %v2258
    %v2297 = vpop.f32.mrb[0].mxu0
    %v2298 = vadd.f32 0.0, %v2297
    %v2299 = vpop.f32.mrb[0].mxu0
    %v2300 = vpop.f32.mrb[0].mxu0
    %v2301 = vpop.f32.mrb[0].mxu0
    %2302 = vdwg.mxu0
    %v2304 = vsel %vm1251, %v2160, 0
    %v2307 = vsel %vm1791, %v100, 0
    %2309 = vmatprep.subr.bf16.mxu0 0
    %2310 = vmatpush1.bf16.msra.mxu0 %v2307
    %2311 = vmatprep.subr.bf16.mxu0 0
    %2312 = vmatpush1.bf16.msra.mxu0 0
    %2313 = vmatprep.subr.bf16.mxu0 0
    %2314 = vmatpush1.bf16.msra.mxu0 0
    %2315 = vmatprep.subr.bf16.mxu0 0
    %2316 = vmatpush1.bf16.msra.mxu0 0
    %2317 = vmatprep.subr.bf16.mxu0 0
    %2318 = vmatpush1.bf16.msra.mxu0 0
    %2319 = vmatprep.subr.bf16.mxu0 0
    %2320 = vmatpush1.bf16.msra.mxu0 0
    %2321 = vmatprep.subr.bf16.mxu0 0
    %2322 = vmatpush1.bf16.msra.mxu0 0
    %2323 = vmatprep.subr.bf16.mxu0 0
    %2324 = vmatpush1.bf16.msra.mxu0 0
    %2325 = vmatprep.subr.bf16.mxu0 0
    %2326 = vmatpush1.bf16.msra.mxu0 0
    %2327 = vmatprep.subr.bf16.mxu0 0
    %2328 = vmatpush1.bf16.msra.mxu0 0
    %2329 = vmatprep.subr.bf16.mxu0 0
    %2330 = vmatpush1.bf16.msra.mxu0 0
    %2331 = vmatprep.subr.bf16.mxu0 0
    %2332 = vmatpush1.bf16.msra.mxu0 0
    %2333 = vmatprep.subr.bf16.mxu0 0
    %2334 = vmatpush1.bf16.msra.mxu0 0
    %2335 = vmatprep.subr.bf16.mxu0 0
    %2336 = vmatpush1.bf16.msra.mxu0 0
    %2337 = vmatprep.subr.bf16.mxu0 0
    %2338 = vmatpush1.bf16.msra.mxu0 0
    %2339 = vmatprep.subr.bf16.mxu0 0
    %2340 = vmatpush1.bf16.msra.mxu0 0
    %2341 = vmatprep.mubr.bf16.mxu0 0
    %2342 = vmatmul.mubr.bf16.gmra.mrb[0].mxu0 %v2304
    %v2343 = vpop.f32.mrb[0].mxu0
    %v2344 = vadd.f32 0.0, %v2343
    %v2345 = vpop.f32.mrb[0].mxu0
    %v2346 = vpop.f32.mrb[0].mxu0
    %v2347 = vpop.f32.mrb[0].mxu0
    %2348 = vdwg.mxu0
    %v2350 = vsel %vm1251, %v2161, 0
    %2352 = vmatprep.subr.bf16.mxu0 0
    %2353 = vmatpush1.bf16.msra.mxu0 %v2169
    %2354 = vmatprep.subr.bf16.mxu0 0
    %2355 = vmatpush1.bf16.msra.mxu0 0
    %2356 = vmatprep.subr.bf16.mxu0 0
    %2357 = vmatpush1.bf16.msra.mxu0 0
    %2358 = vmatprep.subr.bf16.mxu0 0
    %2359 = vmatpush1.bf16.msra.mxu0 0
    %2360 = vmatprep.subr.bf16.mxu0 0
    %2361 = vmatpush1.bf16.msra.mxu0 0
    %2362 = vmatprep.subr.bf16.mxu0 0
    %2363 = vmatpush1.bf16.msra.mxu0 0
    %2364 = vmatprep.subr.bf16.mxu0 0
    %2365 = vmatpush1.bf16.msra.mxu0 0
    %2366 = vmatprep.subr.bf16.mxu0 0
    %2367 = vmatpush1.bf16.msra.mxu0 0
    %2368 = vmatprep.subr.bf16.mxu0 0
    %2369 = vmatpush1.bf16.msra.mxu0 0
    %2370 = vmatprep.subr.bf16.mxu0 0
    %2371 = vmatpush1.bf16.msra.mxu0 0
    %2372 = vmatprep.subr.bf16.mxu0 0
    %2373 = vmatpush1.bf16.msra.mxu0 0
    %2374 = vmatprep.subr.bf16.mxu0 0
    %2375 = vmatpush1.bf16.msra.mxu0 0
    %2376 = vmatprep.subr.bf16.mxu0 0
    %2377 = vmatpush1.bf16.msra.mxu0 0
    %2378 = vmatprep.subr.bf16.mxu0 0
    %2379 = vmatpush1.bf16.msra.mxu0 0
    %2380 = vmatprep.subr.bf16.mxu0 0
    %2381 = vmatpush1.bf16.msra.mxu0 0
    %2382 = vmatprep.subr.bf16.mxu0 0
    %2383 = vmatpush1.bf16.msra.mxu0 0
    %2384 = vmatprep.mubr.bf16.mxu0 0
    %2385 = vmatmul.mubr.bf16.gmra.mrb[0].mxu0 %v2350
    %v2386 = vpop.f32.mrb[0].mxu0
    %v2387 = vadd.f32 0.0, %v2386
    %v2388 = vpop.f32.mrb[0].mxu0
    %v2389 = vpop.f32.mrb[0].mxu0
    %v2390 = vpop.f32.mrb[0].mxu0
    %2391 = vdwg.mxu0
    %v2393 = vsel %vm1251, %v2162, 0
    %2395 = vmatprep.subr.bf16.mxu0 0
    %2396 = vmatpush1.bf16.msra.mxu0 %v2215
    %2397 = vmatprep.subr.bf16.mxu0 0
    %2398 = vmatpush1.bf16.msra.mxu0 0
    %2399 = vmatprep.subr.bf16.mxu0 0
    %2400 = vmatpush1.bf16.msra.mxu0 0
    %2401 = vmatprep.subr.bf16.mxu0 0
    %2402 = vmatpush1.bf16.msra.mxu0 0
    %2403 = vmatprep.subr.bf16.mxu0 0
    %2404 = vmatpush1.bf16.msra.mxu0 0
    %2405 = vmatprep.subr.bf16.mxu0 0
    %2406 = vmatpush1.bf16.msra.mxu0 0
    %2407 = vmatprep.subr.bf16.mxu0 0
    %2408 = vmatpush1.bf16.msra.mxu0 0
    %2409 = vmatprep.subr.bf16.mxu0 0
    %2410 = vmatpush1.bf16.msra.mxu0 0
    %2411 = vmatprep.subr.bf16.mxu0 0
    %2412 = vmatpush1.bf16.msra.mxu0 0
    %2413 = vmatprep.subr.bf16.mxu0 0
    %2414 = vmatpush1.bf16.msra.mxu0 0
    %2415 = vmatprep.subr.bf16.mxu0 0
    %2416 = vmatpush1.bf16.msra.mxu0 0
    %2417 = vmatprep.subr.bf16.mxu0 0
    %2418 = vmatpush1.bf16.msra.mxu0 0
    %2419 = vmatprep.subr.bf16.mxu0 0
    %2420 = vmatpush1.bf16.msra.mxu0 0
    %2421 = vmatprep.subr.bf16.mxu0 0
    %2422 = vmatpush1.bf16.msra.mxu0 0
    %2423 = vmatprep.subr.bf16.mxu0 0
    %2424 = vmatpush1.bf16.msra.mxu0 0
    %2425 = vmatprep.subr.bf16.mxu0 0
    %2426 = vmatpush1.bf16.msra.mxu0 0
    %2427 = vmatprep.mubr.bf16.mxu0 0
    %2428 = vmatmul.mubr.bf16.gmra.mrb[0].mxu0 %v2393
    %v2429 = vpop.f32.mrb[0].mxu0
    %v2430 = vadd.f32 0.0, %v2429
    %v2431 = vpop.f32.mrb[0].mxu0
    %v2432 = vpop.f32.mrb[0].mxu0
    %v2433 = vpop.f32.mrb[0].mxu0
    %2434 = vdwg.mxu0
    %v2436 = vsel %vm1251, %v2163, 0
    %2438 = vmatprep.subr.bf16.mxu0 0
    %2439 = vmatpush1.bf16.msra.mxu0 %v2261
    %2440 = vmatprep.subr.bf16.mxu0 0
    %2441 = vmatpush1.bf16.msra.mxu0 0
    %2442 = vmatprep.subr.bf16.mxu0 0
    %2443 = vmatpush1.bf16.msra.mxu0 0
    %2444 = vmatprep.subr.bf16.mxu0 0
    %2445 = vmatpush1.bf16.msra.mxu0 0
    %2446 = vmatprep.subr.bf16.mxu0 0
    %2447 = vmatpush1.bf16.msra.mxu0 0
    %2448 = vmatprep.subr.bf16.mxu0 0
    %2449 = vmatpush1.bf16.msra.mxu0 0
    %2450 = vmatprep.subr.bf16.mxu0 0
    %2451 = vmatpush1.bf16.msra.mxu0 0
    %2452 = vmatprep.subr.bf16.mxu0 0
    %2453 = vmatpush1.bf16.msra.mxu0 0
    %2454 = vmatprep.subr.bf16.mxu0 0
    %2455 = vmatpush1.bf16.msra.mxu0 0
    %2456 = vmatprep.subr.bf16.mxu0 0
    %2457 = vmatpush1.bf16.msra.mxu0 0
    %2458 = vmatprep.subr.bf16.mxu0 0
    %2459 = vmatpush1.bf16.msra.mxu0 0
    %2460 = vmatprep.subr.bf16.mxu0 0
    %2461 = vmatpush1.bf16.msra.mxu0 0
    %2462 = vmatprep.subr.bf16.mxu0 0
    %2463 = vmatpush1.bf16.msra.mxu0 0
    %2464 = vmatprep.subr.bf16.mxu0 0
    %2465 = vmatpush1.bf16.msra.mxu0 0
    %2466 = vmatprep.subr.bf16.mxu0 0
    %2467 = vmatpush1.bf16.msra.mxu0 0
    %2468 = vmatprep.subr.bf16.mxu0 0
    %2469 = vmatpush1.bf16.msra.mxu0 0
    %2470 = vmatprep.mubr.bf16.mxu0 0
    %2471 = vmatmul.mubr.bf16.gmra.mrb[0].mxu0 %v2436
    %v2472 = vpop.f32.mrb[0].mxu0
    %v2473 = vadd.f32 0.0, %v2472
    %v2474 = vpop.f32.mrb[0].mxu0
    %v2475 = vpop.f32.mrb[0].mxu0
    %v2476 = vpop.f32.mrb[0].mxu0
    %2477 = vdwg.mxu0
    %v2479 = vsel %vm1251, %v2164, 0
    %2481 = vmatprep.subr.bf16.mxu0 0
    %2482 = vmatpush1.bf16.msra.mxu0 %v2307
    %2483 = vmatprep.subr.bf16.mxu0 0
    %2484 = vmatpush1.bf16.msra.mxu0 0
    %2485 = vmatprep.subr.bf16.mxu0 0
    %2486 = vmatpush1.bf16.msra.mxu0 0
    %2487 = vmatprep.subr.bf16.mxu0 0
    %2488 = vmatpush1.bf16.msra.mxu0 0
    %2489 = vmatprep.subr.bf16.mxu0 0
    %2490 = vmatpush1.bf16.msra.mxu0 0
    %2491 = vmatprep.subr.bf16.mxu0 0
    %2492 = vmatpush1.bf16.msra.mxu0 0
    %2493 = vmatprep.subr.bf16.mxu0 0
    %2494 = vmatpush1.bf16.msra.mxu0 0
    %2495 = vmatprep.subr.bf16.mxu0 0
    %2496 = vmatpush1.bf16.msra.mxu0 0
    %2497 = vmatprep.subr.bf16.mxu0 0
    %2498 = vmatpush1.bf16.msra.mxu0 0
    %2499 = vmatprep.subr.bf16.mxu0 0
    %2500 = vmatpush1.bf16.msra.mxu0 0
    %2501 = vmatprep.subr.bf16.mxu0 0
    %2502 = vmatpush1.bf16.msra.mxu0 0
    %2503 = vmatprep.subr.bf16.mxu0 0
    %2504 = vmatpush1.bf16.msra.mxu0 0
    %2505 = vmatprep.subr.bf16.mxu0 0
    %2506 = vmatpush1.bf16.msra.mxu0 0
    %2507 = vmatprep.subr.bf16.mxu0 0
    %2508 = vmatpush1.bf16.msra.mxu0 0
    %2509 = vmatprep.subr.bf16.mxu0 0
    %2510 = vmatpush1.bf16.msra.mxu0 0
    %2511 = vmatprep.subr.bf16.mxu0 0
    %2512 = vmatpush1.bf16.msra.mxu0 0
    %2513 = vmatprep.mubr.bf16.mxu0 0
    %2514 = vmatmul.mubr.bf16.gmra.mrb[0].mxu0 %v2479
    %v2515 = vpop.f32.mrb[0].mxu0
    %v2516 = vadd.f32 0.0, %v2515
    %v2517 = vpop.f32.mrb[0].mxu0
    %v2518 = vpop.f32.mrb[0].mxu0
    %v2519 = vpop.f32.mrb[0].mxu0
    %2520 = vdwg.mxu0
    %v2521 = vadd.f32 %v2206, %v2252
    %v2522 = vadd.f32 %v2387, %v2430
    %v2523 = vadd.f32 %v2521, %v2298
    %v2524 = vadd.f32 %v2522, %v2473
    %v2525 = vadd.f32 %v2523, %v2344
    %v2526 = vadd.f32 %v2524, %v2516
    %v2527 = vadd.f32 %v37, %v2525
    %v2528 = vadd.f32 %v38, %v2526
    %v2529 = vsel %vm136, %v2527, 0.0
    %2530 = vadd.xlane.f32.xlu0 %v2529
    %v2531 = vpop.xlane.xlu0 %2530
    %v2532 = vsel %vm136, %v2528, 0.0
    %2533 = vadd.xlane.f32.xlu0 %v2532
    %v2534 = vpop.xlane.xlu0 %2533
    %v2535 = vrcp.pop 32.0
    %v2536 = vmul.f32 %v2531, %v2535
    %v2537 = vmul.f32 %v2534, %v2535
    %v2538 = vsub.f32 %v2527, %v2536
    %v2539 = vsub.f32 %v2528, %v2537
    %v2540 = vmul.f32 %v2538, %v2538
    %v2541 = vmul.f32 %v2539, %v2539
    %v2542 = vsel %vm136, %v2540, 0.0
    %2543 = vadd.xlane.f32.xlu0 %v2542
    %v2544 = vpop.xlane.xlu0 %2543
    %v2545 = vsel %vm136, %v2541, 0.0
    %2546 = vadd.xlane.f32.xlu0 %v2545
    %v2547 = vpop.xlane.xlu0 %2546
    %v2548 = vmul.f32 %v2544, %v2535
    %v2549 = vmul.f32 %v2547, %v2535
    %v2550 = vadd.f32 %v2548, 1e-05
    %v2551 = vadd.f32 %v2549, 1e-05
    %v2552 = vrsqrt.pop %v2550
    %v2553 = vrsqrt.pop %v2551
    %v2554 = vmul.f32 %v2538, %v2552
    %v2555 = vmul.f32 %v2539, %v2553
    %v2557 = vlaneseq
    %v2558 = vshrl.u32 %v2557, 7
    %v2559 = vsub.s32 0, %v2558
    %v2560 = vrot.slane %v115, %v2559
    %v2562 = vmul.f32 %v2554, %v2560
    %v2563 = vmul.f32 %v2555, %v2560
    %v2565 = vlaneseq
    %v2566 = vshrl.u32 %v2565, 7
    %v2567 = vsub.s32 0, %v2566
    %v2568 = vrot.slane %v117, %v2567
    %v2570 = vadd.f32 %v2562, %v2568
    %v2571 = vadd.f32 %v2563, %v2568
    %v2572 = vpack.c.bf16 %v2571, %v2570
    %v2574 = vlaneseq
    %v2575 = vshrl.u32 %v2574, 7
    %v2576 = vsub.s32 0, %v2575
    %v2577 = vrot.slane %v105, %v2576
    %v2583 = vunpack.c.l.b16 %v101
    %v2584 = vunpack.c.l.b16 %v102
    %v2585 = vunpack.c.l.b16 %v103
    %v2586 = vunpack.c.l.b16 %v104
    %v2587 = vpack.c.b16 %v2584, %v2583
    %v2588 = vpack.c.b16 %v2586, %v2585
    %v2592 = vsel %vm136, %v2572, 0
    %2594 = vmatprep.subr.bf16.mxu0 0
    %2595 = vmatpush1.bf16.msra.mxu0 %v2587
    %2596 = vmatprep.subr.bf16.mxu0 0
    %2597 = vmatpush1.bf16.msra.mxu0 %v2588
    %2598 = vmatprep.subr.bf16.mxu0 0
    %2599 = vmatpush1.bf16.msra.mxu0 0
    %2600 = vmatprep.subr.bf16.mxu0 0
    %2601 = vmatpush1.bf16.msra.mxu0 0
    %2602 = vmatprep.subr.bf16.mxu0 0
    %2603 = vmatpush1.bf16.msra.mxu0 0
    %2604 = vmatprep.subr.bf16.mxu0 0
    %2605 = vmatpush1.bf16.msra.mxu0 0
    %2606 = vmatprep.subr.bf16.mxu0 0
    %2607 = vmatpush1.bf16.msra.mxu0 0
    %2608 = vmatprep.subr.bf16.mxu0 0
    %2609 = vmatpush1.bf16.msra.mxu0 0
    %2610 = vmatprep.subr.bf16.mxu0 0
    %2611 = vmatpush1.bf16.msra.mxu0 0
    %2612 = vmatprep.subr.bf16.mxu0 0
    %2613 = vmatpush1.bf16.msra.mxu0 0
    %2614 = vmatprep.subr.bf16.mxu0 0
    %2615 = vmatpush1.bf16.msra.mxu0 0
    %2616 = vmatprep.subr.bf16.mxu0 0
    %2617 = vmatpush1.bf16.msra.mxu0 0
    %2618 = vmatprep.subr.bf16.mxu0 0
    %2619 = vmatpush1.bf16.msra.mxu0 0
    %2620 = vmatprep.subr.bf16.mxu0 0
    %2621 = vmatpush1.bf16.msra.mxu0 0
    %2622 = vmatprep.subr.bf16.mxu0 0
    %2623 = vmatpush1.bf16.msra.mxu0 0
    %2624 = vmatprep.subr.bf16.mxu0 0
    %2625 = vmatpush1.bf16.msra.mxu0 0
    %2626 = vmatprep.mubr.bf16.mxu0 0
    %2627 = vmatmul.mubr.bf16.gmra.mrb[0].mxu0 %v2592
    %v2628 = vpop.f32.mrb[0].mxu0
    %v2629 = vadd.f32 %v2577, %v2628
    %v2630 = vpop.f32.mrb[0].mxu0
    %v2631 = vpop.f32.mrb[0].mxu0
    %v2632 = vadd.f32 %v2577, %v2631
    %v2633 = vpop.f32.mrb[0].mxu0
    %2634 = vdwg.mxu0
    %v2635 = vmul.f32 %v2629, 0.5
    %v2636 = vmul.f32 %v2632, 0.5
    %v2637 = vmul.f32 %v2629, 0.044715
    %v2638 = vmul.f32 %v2632, 0.044715
    %v2639 = vmul.f32 %v2637, %v2629
    %v2640 = vmul.f32 %v2638, %v2632
    %v2641 = vmul.f32 %v2639, %v2629
    %v2642 = vmul.f32 %v2640, %v2632
    %v2643 = vadd.f32 %v2629, %v2641
    %v2644 = vadd.f32 %v2632, %v2642
    %v2645 = vmul.f32 %v2643, 0.7978846
    %v2646 = vmul.f32 %v2644, 0.7978846
    %v2647 = vtanh.pop %v2645
    %v2648 = vtanh.pop %v2646
    %v2649 = vadd.f32 %v2647, 1.0
    %v2650 = vadd.f32 %v2648, 1.0
    %v2651 = vmul.f32 %v2635, %v2649
    %v2652 = vmul.f32 %v2636, %v2650
    %v2653 = vpack.c.bf16 %v2652, %v2651
    %v2655 = vlaneseq
    %v2656 = vshrl.u32 %v2655, 7
    %v2657 = vsub.s32 0, %v2656
    %v2658 = vrot.slane %v114, %v2657
    %v2668 = vunpack.c.l.b16 %v106
    %v2669 = vunpack.c.l.b16 %v107
    %v2670 = vunpack.c.l.b16 %v108
    %v2671 = vunpack.c.l.b16 %v109
    %v2672 = vunpack.c.l.b16 %v110
    %v2673 = vunpack.c.l.b16 %v111
    %v2674 = vunpack.c.l.b16 %v112
    %v2675 = vunpack.c.l.b16 %v113
    %v2676 = vpack.c.b16 %v2669, %v2668
    %v2677 = vpack.c.b16 %v2671, %v2670
    %v2678 = vpack.c.b16 %v2673, %v2672
    %v2679 = vpack.c.b16 %v2675, %v2674
    %vm2684 = vcmask 523264
    %v2686 = vsel %vm2684, %v2653, 0
    %2688 = vmatprep.subr.bf16.mxu0 0
    %2689 = vmatpush1.bf16.msra.mxu0 %v2676
    %2690 = vmatprep.subr.bf16.mxu0 0
    %2691 = vmatpush1.bf16.msra.mxu0 %v2677
    %2692 = vmatprep.subr.bf16.mxu0 0
    %2693 = vmatpush1.bf16.msra.mxu0 %v2678
    %2694 = vmatprep.subr.bf16.mxu0 0
    %2695 = vmatpush1.bf16.msra.mxu0 %v2679
    %2696 = vmatprep.subr.bf16.mxu0 0
    %2697 = vmatpush1.bf16.msra.mxu0 0
    %2698 = vmatprep.subr.bf16.mxu0 0
    %2699 = vmatpush1.bf16.msra.mxu0 0
    %2700 = vmatprep.subr.bf16.mxu0 0
    %2701 = vmatpush1.bf16.msra.mxu0 0
    %2702 = vmatprep.subr.bf16.mxu0 0
    %2703 = vmatpush1.bf16.msra.mxu0 0
    %2704 = vmatprep.subr.bf16.mxu0 0
    %2705 = vmatpush1.bf16.msra.mxu0 0
    %2706 = vmatprep.subr.bf16.mxu0 0
    %2707 = vmatpush1.bf16.msra.mxu0 0
    %2708 = vmatprep.subr.bf16.mxu0 0
    %2709 = vmatpush1.bf16.msra.mxu0 0
    %2710 = vmatprep.subr.bf16.mxu0 0
    %2711 = vmatpush1.bf16.msra.mxu0 0
    %2712 = vmatprep.subr.bf16.mxu0 0
    %2713 = vmatpush1.bf16.msra.mxu0 0
    %2714 = vmatprep.subr.bf16.mxu0 0
    %2715 = vmatpush1.bf16.msra.mxu0 0
    %2716 = vmatprep.subr.bf16.mxu0 0
    %2717 = vmatpush1.bf16.msra.mxu0 0
    %2718 = vmatprep.subr.bf16.mxu0 0
    %2719 = vmatpush1.bf16.msra.mxu0 0
    %2720 = vmatprep.mubr.bf16.mxu0 0
    %2721 = vmatmul.mubr.bf16.gmra.mrb[0].mxu0 %v2686
    %v2722 = vpop.f32.mrb[0].mxu0
    %v2723 = vadd.f32 %v2658, %v2722
    %v2724 = vpop.f32.mrb[0].mxu0
    %v2725 = vpop.f32.mrb[0].mxu0
    %v2726 = vadd.f32 %v2658, %v2725
    %v2727 = vpop.f32.mrb[0].mxu0
    %2728 = vdwg.mxu0
    %v2729 = vadd.f32 %v2570, %v2723
    %v2730 = vadd.f32 %v2571, %v2726
    %v2731 = vsel %vm136, %v2729, 0.0
    %2732 = vadd.xlane.f32.xlu0 %v2731
    %v2733 = vpop.xlane.xlu0 %2732
    %v2734 = vsel %vm136, %v2730, 0.0
    %2735 = vadd.xlane.f32.xlu0 %v2734
    %v2736 = vpop.xlane.xlu0 %2735
    %v2737 = vmul.f32 %v2733, %v2535
    %v2738 = vmul.f32 %v2736, %v2535
    %v2739 = vsub.f32 %v2729, %v2737
    %v2740 = vsub.f32 %v2730, %v2738
    %v2741 = vmul.f32 %v2739, %v2739
    %v2742 = vmul.f32 %v2740, %v2740
    %v2743 = vsel %vm136, %v2741, 0.0
    %2744 = vadd.xlane.f32.xlu0 %v2743
    %v2745 = vpop.xlane.xlu0 %2744
    %v2746 = vsel %vm136, %v2742, 0.0
    %2747 = vadd.xlane.f32.xlu0 %v2746
    %v2748 = vpop.xlane.xlu0 %2747
    %v2749 = vmul.f32 %v2745, %v2535
    %v2750 = vmul.f32 %v2748, %v2535
    %v2751 = vadd.f32 %v2749, 1e-05
    %v2752 = vadd.f32 %v2750, 1e-05
    %v2753 = vrsqrt.pop %v2751
    %v2754 = vrsqrt.pop %v2752
    %v2755 = vmul.f32 %v2739, %v2753
    %v2756 = vmul.f32 %v2740, %v2754
    %v2758 = vlaneseq
    %v2759 = vshrl.u32 %v2758, 7
    %v2760 = vsub.s32 0, %v2759
    %v2761 = vrot.slane %v119, %v2760
    %v2763 = vmul.f32 %v2755, %v2761
    %v2764 = vmul.f32 %v2756, %v2761
    %v2766 = vlaneseq
    %v2767 = vshrl.u32 %v2766, 7
    %v2768 = vsub.s32 0, %v2767
    %v2769 = vrot.slane %v121, %v2768
    %v2771 = vadd.f32 %v2763, %v2769
    %v2772 = vadd.f32 %v2764, %v2769
    %s2773 = scalar_lea.vmem %s2, 192
    %v2774 = vld [vmem:[%s2773] sm:$0xf]
    %v2775 = vld [vmem:[%s2773 + $0x4] sm:$0xf]
    %v2776 = vld [vmem:[%s2773 + $0x8] sm:$0xf]
    %v2777 = vld [vmem:[%s2773 + $0xc] sm:$0xf]
    %v2778 = vld [vmem:[%s2773 + $0x10] sm:$0xf]
    %v2779 = vld [vmem:[%s2773 + $0x14] sm:$0xf]
    %v2780 = vld [vmem:[%s2773 + $0x18] sm:$0xf]
    %v2781 = vld [vmem:[%s2773 + $0x1c] sm:$0xf]
    %v2782 = vld [vmem:[%s2773 + $0x20] sm:$0xf]
    %v2783 = vld [vmem:[%s2773 + $0x24] sm:$0xf]
    %v2784 = vld [vmem:[%s2773 + $0x28] sm:$0xf]
    %v2785 = vld [vmem:[%s2773 + $0x2c] sm:$0xf]
    %v2786 = vld [vmem:[%s2773 + $0x30] sm:$0xf]
    %v2787 = vld [vmem:[%s2773 + $0x34] sm:$0xf]
    %v2788 = vld [vmem:[%s2773 + $0x38] sm:$0xf]
    %v2789 = vld [vmem:[%s2773 + $0x3c] sm:$0xf]
    %s2790 = scalar_lea.vmem %s2, 256
    %v2791 = vld [vmem:[%s2790] sm:$0xf]
    %v2792 = vld [vmem:[%s2790 + $0x4] sm:$0xf]
    %v2793 = vld [vmem:[%s2790 + $0x8] sm:$0xf]
    %v2794 = vld [vmem:[%s2790 + $0xc] sm:$0xf]
    %v2795 = vld [vmem:[%s2790 + $0x10] sm:$0xf]
    %v2796 = vld [vmem:[%s2790 + $0x14] sm:$0xf]
    %v2797 = vld [vmem:[%s2790 + $0x18] sm:$0xf]
    %v2798 = vld [vmem:[%s2790 + $0x1c] sm:$0xf]
    %v2799 = vld [vmem:[%s2790 + $0x20] sm:$0xf]
    %v2800 = vld [vmem:[%s2790 + $0x24] sm:$0xf]
    %v2801 = vld [vmem:[%s2790 + $0x28] sm:$0xf]
    %v2802 = vld [vmem:[%s2790 + $0x2c] sm:$0xf]
    %v2803 = vld [vmem:[%s2790 + $0x30] sm:$0xf]
    %v2804 = vld [vmem:[%s2790 + $0x34] sm:$0xf]
    %v2805 = vld [vmem:[%s2790 + $0x38] sm:$0xf]
    %v2806 = vld [vmem:[%s2790 + $0x3c] sm:$0xf]
    %s2807 = scalar_lea.vmem %s2, 320
    %v2808 = vld [vmem:[%s2807] sm:$0xf]
    %v2809 = vld [vmem:[%s2807 + $0x4] sm:$0xf]
    %v2810 = vld [vmem:[%s2807 + $0x8] sm:$0xf]
    %v2811 = vld [vmem:[%s2807 + $0xc] sm:$0xf]
    %v2812 = vld [vmem:[%s2807 + $0x10] sm:$0xf]
    %v2813 = vld [vmem:[%s2807 + $0x14] sm:$0xf]
    %v2814 = vld [vmem:[%s2807 + $0x18] sm:$0xf]
    %v2815 = vld [vmem:[%s2807 + $0x1c] sm:$0xf]
    %v2816 = vld [vmem:[%s2807 + $0x20] sm:$0xf]
    %v2817 = vld [vmem:[%s2807 + $0x24] sm:$0xf]
    %v2818 = vld [vmem:[%s2807 + $0x28] sm:$0xf]
    %v2819 = vld [vmem:[%s2807 + $0x2c] sm:$0xf]
    %v2820 = vld [vmem:[%s2807 + $0x30] sm:$0xf]
    %v2821 = vld [vmem:[%s2807 + $0x34] sm:$0xf]
    %v2822 = vld [vmem:[%s2807 + $0x38] sm:$0xf]
    %v2823 = vld [vmem:[%s2807 + $0x3c] sm:$0xf]
    %s2824 = scalar_lea.vmem %s3, 16
    %v2825 = vld [vmem:[%s2824] sm:$0xf]
    %v2826 = vld [vmem:[%s2824 + $0x4] sm:$0xf]
    %v2827 = vld [vmem:[%s2824 + $0x8] sm:$0xf]
    %v2828 = vld [vmem:[%s2824 + $0xc] sm:$0xf]
    %s2829 = scalar_lea.vmem %s4, 16
    %v2830 = vld [vmem:[%s2829] sm:$0xf]
    %v2831 = vld [vmem:[%s2829 + $0x4] sm:$0xf]
    %v2832 = vld [vmem:[%s2829 + $0x8] sm:$0xf]
    %v2833 = vld [vmem:[%s2829 + $0xc] sm:$0xf]
    %s2834 = scalar_lea.vmem %s5, 1
    %v2835 = vld [vmem:[%s2834] sm:$0x1]
    %s2836 = scalar_lea.vmem %s6, 32
    %v2837 = vld [vmem:[%s2836] sm:$0xf]
    %v2838 = vld [vmem:[%s2836 + $0x4] sm:$0xf]
    %v2839 = vld [vmem:[%s2836 + $0x8] sm:$0xf]
    %v2840 = vld [vmem:[%s2836 + $0xc] sm:$0xf]
    %v2841 = vld [vmem:[%s2836 + $0x10] sm:$0xf]
    %v2842 = vld [vmem:[%s2836 + $0x14] sm:$0xf]
    %v2843 = vld [vmem:[%s2836 + $0x18] sm:$0xf]
    %v2844 = vld [vmem:[%s2836 + $0x1c] sm:$0xf]
    %s2845 = scalar_lea.vmem %s7, 1
    %v2846 = vld [vmem:[%s2845] sm:$0x1]
    %s2847 = scalar_lea.vmem %s8, 4
    %v2848 = vld [vmem:[%s2847] sm:$0x1]
    %s2849 = scalar_lea.vmem %s8, 5
    %v2850 = vld [vmem:[%s2849] sm:$0x1]
    %s2851 = scalar_lea.vmem %s8, 6
    %v2852 = vld [vmem:[%s2851] sm:$0x1]
    %s2853 = scalar_lea.vmem %s8, 7
    %v2854 = vld [vmem:[%s2853] sm:$0x1]
    %v2855 = vpack.c.bf16 %v2771, %v2771
    %v2856 = vpack.c.bf16 %v2772, %v2772
    %v2861 = vunpack.c.l.b16 %v2774
    %v2862 = vunpack.c.l.b16 %v2775
    %v2863 = vunpack.c.l.b16 %v2776
    %v2864 = vunpack.c.l.b16 %v2777
    %v2865 = vpack.c.b16 %v2862, %v2861
    %v2866 = vpack.c.b16 %v2864, %v2863
    %v2870 = vsel %vm136, %v2855, 0
    %2872 = vmatprep.subr.bf16.mxu0 0
    %2873 = vmatpush1.bf16.msra.mxu0 %v2865
    %2874 = vmatprep.subr.bf16.mxu0 0
    %2875 = vmatpush1.bf16.msra.mxu0 %v2866
    %2876 = vmatprep.subr.bf16.mxu0 0
    %2877 = vmatpush1.bf16.msra.mxu0 0
    %2878 = vmatprep.subr.bf16.mxu0 0
    %2879 = vmatpush1.bf16.msra.mxu0 0
    %2880 = vmatprep.subr.bf16.mxu0 0
    %2881 = vmatpush1.bf16.msra.mxu0 0
    %2882 = vmatprep.subr.bf16.mxu0 0
    %2883 = vmatpush1.bf16.msra.mxu0 0
    %2884 = vmatprep.subr.bf16.mxu0 0
    %2885 = vmatpush1.bf16.msra.mxu0 0
    %2886 = vmatprep.subr.bf16.mxu0 0
    %2887 = vmatpush1.bf16.msra.mxu0 0
    %2888 = vmatprep.subr.bf16.mxu0 0
    %2889 = vmatpush1.bf16.msra.mxu0 0
    %2890 = vmatprep.subr.bf16.mxu0 0
    %2891 = vmatpush1.bf16.msra.mxu0 0
    %2892 = vmatprep.subr.bf16.mxu0 0
    %2893 = vmatpush1.bf16.msra.mxu0 0
    %2894 = vmatprep.subr.bf16.mxu0 0
    %2895 = vmatpush1.bf16.msra.mxu0 0
    %2896 = vmatprep.subr.bf16.mxu0 0
    %2897 = vmatpush1.bf16.msra.mxu0 0
    %2898 = vmatprep.subr.bf16.mxu0 0
    %2899 = vmatpush1.bf16.msra.mxu0 0
    %2900 = vmatprep.subr.bf16.mxu0 0
    %2901 = vmatpush1.bf16.msra.mxu0 0
    %2902 = vmatprep.subr.bf16.mxu0 0
    %2903 = vmatpush1.bf16.msra.mxu0 0
    %2904 = vmatprep.mubr.bf16.mxu0 0
    %2905 = vmatmul.mubr.bf16.gmra.mrb[0].mxu0 %v2870
    %v2906 = vpop.f32.mrb[0].mxu0
    %v2907 = vadd.f32 0.0, %v2906
    %v2908 = vpop.f32.mrb[0].mxu0
    %v2909 = vpop.f32.mrb[0].mxu0
    %v2910 = vpop.f32.mrb[0].mxu0
    %2911 = vdwg.mxu0
    %v2916 = vunpack.c.l.b16 %v2778
    %v2917 = vunpack.c.l.b16 %v2779
    %v2918 = vunpack.c.l.b16 %v2780
    %v2919 = vunpack.c.l.b16 %v2781
    %v2920 = vpack.c.b16 %v2917, %v2916
    %v2921 = vpack.c.b16 %v2919, %v2918
    %2924 = vmatprep.subr.bf16.mxu0 0
    %2925 = vmatpush1.bf16.msra.mxu0 %v2920
    %2926 = vmatprep.subr.bf16.mxu0 0
    %2927 = vmatpush1.bf16.msra.mxu0 %v2921
    %2928 = vmatprep.subr.bf16.mxu0 0
    %2929 = vmatpush1.bf16.msra.mxu0 0
    %2930 = vmatprep.subr.bf16.mxu0 0
    %2931 = vmatpush1.bf16.msra.mxu0 0
    %2932 = vmatprep.subr.bf16.mxu0 0
    %2933 = vmatpush1.bf16.msra.mxu0 0
    %2934 = vmatprep.subr.bf16.mxu0 0
    %2935 = vmatpush1.bf16.msra.mxu0 0
    %2936 = vmatprep.subr.bf16.mxu0 0
    %2937 = vmatpush1.bf16.msra.mxu0 0
    %2938 = vmatprep.subr.bf16.mxu0 0
    %2939 = vmatpush1.bf16.msra.mxu0 0
    %2940 = vmatprep.subr.bf16.mxu0 0
    %2941 = vmatpush1.bf16.msra.mxu0 0
    %2942 = vmatprep.subr.bf16.mxu0 0
    %2943 = vmatpush1.bf16.msra.mxu0 0
    %2944 = vmatprep.subr.bf16.mxu0 0
    %2945 = vmatpush1.bf16.msra.mxu0 0
    %2946 = vmatprep.subr.bf16.mxu0 0
    %2947 = vmatpush1.bf16.msra.mxu0 0
    %2948 = vmatprep.subr.bf16.mxu0 0
    %2949 = vmatpush1.bf16.msra.mxu0 0
    %2950 = vmatprep.subr.bf16.mxu0 0
    %2951 = vmatpush1.bf16.msra.mxu0 0
    %2952 = vmatprep.subr.bf16.mxu0 0
    %2953 = vmatpush1.bf16.msra.mxu0 0
    %2954 = vmatprep.subr.bf16.mxu0 0
    %2955 = vmatpush1.bf16.msra.mxu0 0
    %2956 = vmatprep.mubr.bf16.mxu0 0
    %2957 = vmatmul.mubr.bf16.gmra.mrb[0].mxu0 %v2870
    %v2958 = vpop.f32.mrb[0].mxu0
    %v2959 = vadd.f32 0.0, %v2958
    %v2960 = vpop.f32.mrb[0].mxu0
    %v2961 = vpop.f32.mrb[0].mxu0
    %v2962 = vpop.f32.mrb[0].mxu0
    %2963 = vdwg.mxu0
    %v2968 = vunpack.c.l.b16 %v2782
    %v2969 = vunpack.c.l.b16 %v2783
    %v2970 = vunpack.c.l.b16 %v2784
    %v2971 = vunpack.c.l.b16 %v2785
    %v2972 = vpack.c.b16 %v2969, %v2968
    %v2973 = vpack.c.b16 %v2971, %v2970
    %2976 = vmatprep.subr.bf16.mxu0 0
    %2977 = vmatpush1.bf16.msra.mxu0 %v2972
    %2978 = vmatprep.subr.bf16.mxu0 0
    %2979 = vmatpush1.bf16.msra.mxu0 %v2973
    %2980 = vmatprep.subr.bf16.mxu0 0
    %2981 = vmatpush1.bf16.msra.mxu0 0
    %2982 = vmatprep.subr.bf16.mxu0 0
    %2983 = vmatpush1.bf16.msra.mxu0 0
    %2984 = vmatprep.subr.bf16.mxu0 0
    %2985 = vmatpush1.bf16.msra.mxu0 0
    %2986 = vmatprep.subr.bf16.mxu0 0
    %2987 = vmatpush1.bf16.msra.mxu0 0
    %2988 = vmatprep.subr.bf16.mxu0 0
    %2989 = vmatpush1.bf16.msra.mxu0 0
    %2990 = vmatprep.subr.bf16.mxu0 0
    %2991 = vmatpush1.bf16.msra.mxu0 0
    %2992 = vmatprep.subr.bf16.mxu0 0
    %2993 = vmatpush1.bf16.msra.mxu0 0
    %2994 = vmatprep.subr.bf16.mxu0 0
    %2995 = vmatpush1.bf16.msra.mxu0 0
    %2996 = vmatprep.subr.bf16.mxu0 0
    %2997 = vmatpush1.bf16.msra.mxu0 0
    %2998 = vmatprep.subr.bf16.mxu0 0
    %2999 = vmatpush1.bf16.msra.mxu0 0
    %3000 = vmatprep.subr.bf16.mxu0 0
    %3001 = vmatpush1.bf16.msra.mxu0 0
    %3002 = vmatprep.subr.bf16.mxu0 0
    %3003 = vmatpush1.bf16.msra.mxu0 0
    %3004 = vmatprep.subr.bf16.mxu0 0
    %3005 = vmatpush1.bf16.msra.mxu0 0
    %3006 = vmatprep.subr.bf16.mxu0 0
    %3007 = vmatpush1.bf16.msra.mxu0 0
    %3008 = vmatprep.mubr.bf16.mxu0 0
    %3009 = vmatmul.mubr.bf16.gmra.mrb[0].mxu0 %v2870
    %v3010 = vpop.f32.mrb[0].mxu0
    %v3011 = vadd.f32 0.0, %v3010
    %v3012 = vpop.f32.mrb[0].mxu0
    %v3013 = vpop.f32.mrb[0].mxu0
    %v3014 = vpop.f32.mrb[0].mxu0
    %3015 = vdwg.mxu0
    %v3020 = vunpack.c.l.b16 %v2786
    %v3021 = vunpack.c.l.b16 %v2787
    %v3022 = vunpack.c.l.b16 %v2788
    %v3023 = vunpack.c.l.b16 %v2789
    %v3024 = vpack.c.b16 %v3021, %v3020
    %v3025 = vpack.c.b16 %v3023, %v3022
    %3028 = vmatprep.subr.bf16.mxu0 0
    %3029 = vmatpush1.bf16.msra.mxu0 %v3024
    %3030 = vmatprep.subr.bf16.mxu0 0
    %3031 = vmatpush1.bf16.msra.mxu0 %v3025
    %3032 = vmatprep.subr.bf16.mxu0 0
    %3033 = vmatpush1.bf16.msra.mxu0 0
    %3034 = vmatprep.subr.bf16.mxu0 0
    %3035 = vmatpush1.bf16.msra.mxu0 0
    %3036 = vmatprep.subr.bf16.mxu0 0
    %3037 = vmatpush1.bf16.msra.mxu0 0
    %3038 = vmatprep.subr.bf16.mxu0 0
    %3039 = vmatpush1.bf16.msra.mxu0 0
    %3040 = vmatprep.subr.bf16.mxu0 0
    %3041 = vmatpush1.bf16.msra.mxu0 0
    %3042 = vmatprep.subr.bf16.mxu0 0
    %3043 = vmatpush1.bf16.msra.mxu0 0
    %3044 = vmatprep.subr.bf16.mxu0 0
    %3045 = vmatpush1.bf16.msra.mxu0 0
    %3046 = vmatprep.subr.bf16.mxu0 0
    %3047 = vmatpush1.bf16.msra.mxu0 0
    %3048 = vmatprep.subr.bf16.mxu0 0
    %3049 = vmatpush1.bf16.msra.mxu0 0
    %3050 = vmatprep.subr.bf16.mxu0 0
    %3051 = vmatpush1.bf16.msra.mxu0 0
    %3052 = vmatprep.subr.bf16.mxu0 0
    %3053 = vmatpush1.bf16.msra.mxu0 0
    %3054 = vmatprep.subr.bf16.mxu0 0
    %3055 = vmatpush1.bf16.msra.mxu0 0
    %3056 = vmatprep.subr.bf16.mxu0 0
    %3057 = vmatpush1.bf16.msra.mxu0 0
    %3058 = vmatprep.subr.bf16.mxu0 0
    %3059 = vmatpush1.bf16.msra.mxu0 0
    %3060 = vmatprep.mubr.bf16.mxu0 0
    %3061 = vmatmul.mubr.bf16.gmra.mrb[0].mxu0 %v2870
    %v3062 = vpop.f32.mrb[0].mxu0
    %v3063 = vadd.f32 0.0, %v3062
    %v3064 = vpop.f32.mrb[0].mxu0
    %v3065 = vpop.f32.mrb[0].mxu0
    %v3066 = vpop.f32.mrb[0].mxu0
    %3067 = vdwg.mxu0
    %v3069 = vsel %vm136, %v2856, 0
    %3071 = vmatprep.subr.bf16.mxu0 0
    %3072 = vmatpush1.bf16.msra.mxu0 %v2865
    %3073 = vmatprep.subr.bf16.mxu0 0
    %3074 = vmatpush1.bf16.msra.mxu0 %v2866
    %3075 = vmatprep.subr.bf16.mxu0 0
    %3076 = vmatpush1.bf16.msra.mxu0 0
    %3077 = vmatprep.subr.bf16.mxu0 0
    %3078 = vmatpush1.bf16.msra.mxu0 0
    %3079 = vmatprep.subr.bf16.mxu0 0
    %3080 = vmatpush1.bf16.msra.mxu0 0
    %3081 = vmatprep.subr.bf16.mxu0 0
    %3082 = vmatpush1.bf16.msra.mxu0 0
    %3083 = vmatprep.subr.bf16.mxu0 0
    %3084 = vmatpush1.bf16.msra.mxu0 0
    %3085 = vmatprep.subr.bf16.mxu0 0
    %3086 = vmatpush1.bf16.msra.mxu0 0
    %3087 = vmatprep.subr.bf16.mxu0 0
    %3088 = vmatpush1.bf16.msra.mxu0 0
    %3089 = vmatprep.subr.bf16.mxu0 0
    %3090 = vmatpush1.bf16.msra.mxu0 0
    %3091 = vmatprep.subr.bf16.mxu0 0
    %3092 = vmatpush1.bf16.msra.mxu0 0
    %3093 = vmatprep.subr.bf16.mxu0 0
    %3094 = vmatpush1.bf16.msra.mxu0 0
    %3095 = vmatprep.subr.bf16.mxu0 0
    %3096 = vmatpush1.bf16.msra.mxu0 0
    %3097 = vmatprep.subr.bf16.mxu0 0
    %3098 = vmatpush1.bf16.msra.mxu0 0
    %3099 = vmatprep.subr.bf16.mxu0 0
    %3100 = vmatpush1.bf16.msra.mxu0 0
    %3101 = vmatprep.subr.bf16.mxu0 0
    %3102 = vmatpush1.bf16.msra.mxu0 0
    %3103 = vmatprep.mubr.bf16.mxu0 0
    %3104 = vmatmul.mubr.bf16.gmra.mrb[0].mxu0 %v3069
    %v3105 = vpop.f32.mrb[0].mxu0
    %v3106 = vadd.f32 0.0, %v3105
    %v3107 = vpop.f32.mrb[0].mxu0
    %v3108 = vpop.f32.mrb[0].mxu0
    %v3109 = vpop.f32.mrb[0].mxu0
    %3110 = vdwg.mxu0
    %3111 = vmatprep.subr.bf16.mxu0 0
    %3112 = vmatpush1.bf16.msra.mxu0 %v2920
    %3113 = vmatprep.subr.bf16.mxu0 0
    %3114 = vmatpush1.bf16.msra.mxu0 %v2921
    %3115 = vmatprep.subr.bf16.mxu0 0
    %3116 = vmatpush1.bf16.msra.mxu0 0
    %3117 = vmatprep.subr.bf16.mxu0 0
    %3118 = vmatpush1.bf16.msra.mxu0 0
    %3119 = vmatprep.subr.bf16.mxu0 0
    %3120 = vmatpush1.bf16.msra.mxu0 0
    %3121 = vmatprep.subr.bf16.mxu0 0
    %3122 = vmatpush1.bf16.msra.mxu0 0
    %3123 = vmatprep.subr.bf16.mxu0 0
    %3124 = vmatpush1.bf16.msra.mxu0 0
    %3125 = vmatprep.subr.bf16.mxu0 0
    %3126 = vmatpush1.bf16.msra.mxu0 0
    %3127 = vmatprep.subr.bf16.mxu0 0
    %3128 = vmatpush1.bf16.msra.mxu0 0
    %3129 = vmatprep.subr.bf16.mxu0 0
    %3130 = vmatpush1.bf16.msra.mxu0 0
    %3131 = vmatprep.subr.bf16.mxu0 0
    %3132 = vmatpush1.bf16.msra.mxu0 0
    %3133 = vmatprep.subr.bf16.mxu0 0
    %3134 = vmatpush1.bf16.msra.mxu0 0
    %3135 = vmatprep.subr.bf16.mxu0 0
    %3136 = vmatpush1.bf16.msra.mxu0 0
    %3137 = vmatprep.subr.bf16.mxu0 0
    %3138 = vmatpush1.bf16.msra.mxu0 0
    %3139 = vmatprep.subr.bf16.mxu0 0
    %3140 = vmatpush1.bf16.msra.mxu0 0
    %3141 = vmatprep.subr.bf16.mxu0 0
    %3142 = vmatpush1.bf16.msra.mxu0 0
    %3143 = vmatprep.mubr.bf16.mxu0 0
    %3144 = vmatmul.mubr.bf16.gmra.mrb[0].mxu0 %v3069
    %v3145 = vpop.f32.mrb[0].mxu0
    %v3146 = vadd.f32 0.0, %v3145
    %v3147 = vpop.f32.mrb[0].mxu0
    %v3148 = vpop.f32.mrb[0].mxu0
    %v3149 = vpop.f32.mrb[0].mxu0
    %3150 = vdwg.mxu0
    %3151 = vmatprep.subr.bf16.mxu0 0
    %3152 = vmatpush1.bf16.msra.mxu0 %v2972
    %3153 = vmatprep.subr.bf16.mxu0 0
    %3154 = vmatpush1.bf16.msra.mxu0 %v2973
    %3155 = vmatprep.subr.bf16.mxu0 0
    %3156 = vmatpush1.bf16.msra.mxu0 0
    %3157 = vmatprep.subr.bf16.mxu0 0
    %3158 = vmatpush1.bf16.msra.mxu0 0
    %3159 = vmatprep.subr.bf16.mxu0 0
    %3160 = vmatpush1.bf16.msra.mxu0 0
    %3161 = vmatprep.subr.bf16.mxu0 0
    %3162 = vmatpush1.bf16.msra.mxu0 0
    %3163 = vmatprep.subr.bf16.mxu0 0
    %3164 = vmatpush1.bf16.msra.mxu0 0
    %3165 = vmatprep.subr.bf16.mxu0 0
    %3166 = vmatpush1.bf16.msra.mxu0 0
    %3167 = vmatprep.subr.bf16.mxu0 0
    %3168 = vmatpush1.bf16.msra.mxu0 0
    %3169 = vmatprep.subr.bf16.mxu0 0
    %3170 = vmatpush1.bf16.msra.mxu0 0
    %3171 = vmatprep.subr.bf16.mxu0 0
    %3172 = vmatpush1.bf16.msra.mxu0 0
    %3173 = vmatprep.subr.bf16.mxu0 0
    %3174 = vmatpush1.bf16.msra.mxu0 0
    %3175 = vmatprep.subr.bf16.mxu0 0
    %3176 = vmatpush1.bf16.msra.mxu0 0
    %3177 = vmatprep.subr.bf16.mxu0 0
    %3178 = vmatpush1.bf16.msra.mxu0 0
    %3179 = vmatprep.subr.bf16.mxu0 0
    %3180 = vmatpush1.bf16.msra.mxu0 0
    %3181 = vmatprep.subr.bf16.mxu0 0
    %3182 = vmatpush1.bf16.msra.mxu0 0
    %3183 = vmatprep.mubr.bf16.mxu0 0
    %3184 = vmatmul.mubr.bf16.gmra.mrb[0].mxu0 %v3069
    %v3185 = vpop.f32.mrb[0].mxu0
    %v3186 = vadd.f32 0.0, %v3185
    %v3187 = vpop.f32.mrb[0].mxu0
    %v3188 = vpop.f32.mrb[0].mxu0
    %v3189 = vpop.f32.mrb[0].mxu0
    %3190 = vdwg.mxu0
    %3191 = vmatprep.subr.bf16.mxu0 0
    %3192 = vmatpush1.bf16.msra.mxu0 %v3024
    %3193 = vmatprep.subr.bf16.mxu0 0
    %3194 = vmatpush1.bf16.msra.mxu0 %v3025
    %3195 = vmatprep.subr.bf16.mxu0 0
    %3196 = vmatpush1.bf16.msra.mxu0 0
    %3197 = vmatprep.subr.bf16.mxu0 0
    %3198 = vmatpush1.bf16.msra.mxu0 0
    %3199 = vmatprep.subr.bf16.mxu0 0
    %3200 = vmatpush1.bf16.msra.mxu0 0
    %3201 = vmatprep.subr.bf16.mxu0 0
    %3202 = vmatpush1.bf16.msra.mxu0 0
    %3203 = vmatprep.subr.bf16.mxu0 0
    %3204 = vmatpush1.bf16.msra.mxu0 0
    %3205 = vmatprep.subr.bf16.mxu0 0
    %3206 = vmatpush1.bf16.msra.mxu0 0
    %3207 = vmatprep.subr.bf16.mxu0 0
    %3208 = vmatpush1.bf16.msra.mxu0 0
    %3209 = vmatprep.subr.bf16.mxu0 0
    %3210 = vmatpush1.bf16.msra.mxu0 0
    %3211 = vmatprep.subr.bf16.mxu0 0
    %3212 = vmatpush1.bf16.msra.mxu0 0
    %3213 = vmatprep.subr.bf16.mxu0 0
    %3214 = vmatpush1.bf16.msra.mxu0 0
    %3215 = vmatprep.subr.bf16.mxu0 0
    %3216 = vmatpush1.bf16.msra.mxu0 0
    %3217 = vmatprep.subr.bf16.mxu0 0
    %3218 = vmatpush1.bf16.msra.mxu0 0
    %3219 = vmatprep.subr.bf16.mxu0 0
    %3220 = vmatpush1.bf16.msra.mxu0 0
    %3221 = vmatprep.subr.bf16.mxu0 0
    %3222 = vmatpush1.bf16.msra.mxu0 0
    %3223 = vmatprep.mubr.bf16.mxu0 0
    %3224 = vmatmul.mubr.bf16.gmra.mrb[0].mxu0 %v3069
    %v3225 = vpop.f32.mrb[0].mxu0
    %v3226 = vadd.f32 0.0, %v3225
    %v3227 = vpop.f32.mrb[0].mxu0
    %v3228 = vpop.f32.mrb[0].mxu0
    %v3229 = vpop.f32.mrb[0].mxu0
    %3230 = vdwg.mxu0
    %v3235 = vunpack.c.l.b16 %v2791
    %v3236 = vunpack.c.l.b16 %v2792
    %v3237 = vunpack.c.l.b16 %v2793
    %v3238 = vunpack.c.l.b16 %v2794
    %v3239 = vpack.c.b16 %v3236, %v3235
    %v3240 = vpack.c.b16 %v3238, %v3237
    %3243 = vmatprep.subr.bf16.mxu0 0
    %3244 = vmatpush1.bf16.msra.mxu0 %v3239
    %3245 = vmatprep.subr.bf16.mxu0 0
    %3246 = vmatpush1.bf16.msra.mxu0 %v3240
    %3247 = vmatprep.subr.bf16.mxu0 0
    %3248 = vmatpush1.bf16.msra.mxu0 0
    %3249 = vmatprep.subr.bf16.mxu0 0
    %3250 = vmatpush1.bf16.msra.mxu0 0
    %3251 = vmatprep.subr.bf16.mxu0 0
    %3252 = vmatpush1.bf16.msra.mxu0 0
    %3253 = vmatprep.subr.bf16.mxu0 0
    %3254 = vmatpush1.bf16.msra.mxu0 0
    %3255 = vmatprep.subr.bf16.mxu0 0
    %3256 = vmatpush1.bf16.msra.mxu0 0
    %3257 = vmatprep.subr.bf16.mxu0 0
    %3258 = vmatpush1.bf16.msra.mxu0 0
    %3259 = vmatprep.subr.bf16.mxu0 0
    %3260 = vmatpush1.bf16.msra.mxu0 0
    %3261 = vmatprep.subr.bf16.mxu0 0
    %3262 = vmatpush1.bf16.msra.mxu0 0
    %3263 = vmatprep.subr.bf16.mxu0 0
    %3264 = vmatpush1.bf16.msra.mxu0 0
    %3265 = vmatprep.subr.bf16.mxu0 0
    %3266 = vmatpush1.bf16.msra.mxu0 0
    %3267 = vmatprep.subr.bf16.mxu0 0
    %3268 = vmatpush1.bf16.msra.mxu0 0
    %3269 = vmatprep.subr.bf16.mxu0 0
    %3270 = vmatpush1.bf16.msra.mxu0 0
    %3271 = vmatprep.subr.bf16.mxu0 0
    %3272 = vmatpush1.bf16.msra.mxu0 0
    %3273 = vmatprep.subr.bf16.mxu0 0
    %3274 = vmatpush1.bf16.msra.mxu0 0
    %3275 = vmatprep.mubr.bf16.mxu0 0
    %3276 = vmatmul.mubr.bf16.gmra.mrb[0].mxu0 %v2870
    %v3277 = vpop.f32.mrb[0].mxu0
    %v3278 = vadd.f32 0.0, %v3277
    %v3279 = vpop.f32.mrb[0].mxu0
    %v3280 = vpop.f32.mrb[0].mxu0
    %v3281 = vpop.f32.mrb[0].mxu0
    %3282 = vdwg.mxu0
    %v3287 = vunpack.c.l.b16 %v2795
    %v3288 = vunpack.c.l.b16 %v2796
    %v3289 = vunpack.c.l.b16 %v2797
    %v3290 = vunpack.c.l.b16 %v2798
    %v3291 = vpack.c.b16 %v3288, %v3287
    %v3292 = vpack.c.b16 %v3290, %v3289
    %3295 = vmatprep.subr.bf16.mxu0 0
    %3296 = vmatpush1.bf16.msra.mxu0 %v3291
    %3297 = vmatprep.subr.bf16.mxu0 0
    %3298 = vmatpush1.bf16.msra.mxu0 %v3292
    %3299 = vmatprep.subr.bf16.mxu0 0
    %3300 = vmatpush1.bf16.msra.mxu0 0
    %3301 = vmatprep.subr.bf16.mxu0 0
    %3302 = vmatpush1.bf16.msra.mxu0 0
    %3303 = vmatprep.subr.bf16.mxu0 0
    %3304 = vmatpush1.bf16.msra.mxu0 0
    %3305 = vmatprep.subr.bf16.mxu0 0
    %3306 = vmatpush1.bf16.msra.mxu0 0
    %3307 = vmatprep.subr.bf16.mxu0 0
    %3308 = vmatpush1.bf16.msra.mxu0 0
    %3309 = vmatprep.subr.bf16.mxu0 0
    %3310 = vmatpush1.bf16.msra.mxu0 0
    %3311 = vmatprep.subr.bf16.mxu0 0
    %3312 = vmatpush1.bf16.msra.mxu0 0
    %3313 = vmatprep.subr.bf16.mxu0 0
    %3314 = vmatpush1.bf16.msra.mxu0 0
    %3315 = vmatprep.subr.bf16.mxu0 0
    %3316 = vmatpush1.bf16.msra.mxu0 0
    %3317 = vmatprep.subr.bf16.mxu0 0
    %3318 = vmatpush1.bf16.msra.mxu0 0
    %3319 = vmatprep.subr.bf16.mxu0 0
    %3320 = vmatpush1.bf16.msra.mxu0 0
    %3321 = vmatprep.subr.bf16.mxu0 0
    %3322 = vmatpush1.bf16.msra.mxu0 0
    %3323 = vmatprep.subr.bf16.mxu0 0
    %3324 = vmatpush1.bf16.msra.mxu0 0
    %3325 = vmatprep.subr.bf16.mxu0 0
    %3326 = vmatpush1.bf16.msra.mxu0 0
    %3327 = vmatprep.mubr.bf16.mxu0 0
    %3328 = vmatmul.mubr.bf16.gmra.mrb[0].mxu0 %v2870
    %v3329 = vpop.f32.mrb[0].mxu0
    %v3330 = vadd.f32 0.0, %v3329
    %v3331 = vpop.f32.mrb[0].mxu0
    %v3332 = vpop.f32.mrb[0].mxu0
    %v3333 = vpop.f32.mrb[0].mxu0
    %3334 = vdwg.mxu0
    %v3339 = vunpack.c.l.b16 %v2799
    %v3340 = vunpack.c.l.b16 %v2800
    %v3341 = vunpack.c.l.b16 %v2801
    %v3342 = vunpack.c.l.b16 %v2802
    %v3343 = vpack.c.b16 %v3340, %v3339
    %v3344 = vpack.c.b16 %v3342, %v3341
    %3347 = vmatprep.subr.bf16.mxu0 0
    %3348 = vmatpush1.bf16.msra.mxu0 %v3343
    %3349 = vmatprep.subr.bf16.mxu0 0
    %3350 = vmatpush1.bf16.msra.mxu0 %v3344
    %3351 = vmatprep.subr.bf16.mxu0 0
    %3352 = vmatpush1.bf16.msra.mxu0 0
    %3353 = vmatprep.subr.bf16.mxu0 0
    %3354 = vmatpush1.bf16.msra.mxu0 0
    %3355 = vmatprep.subr.bf16.mxu0 0
    %3356 = vmatpush1.bf16.msra.mxu0 0
    %3357 = vmatprep.subr.bf16.mxu0 0
    %3358 = vmatpush1.bf16.msra.mxu0 0
    %3359 = vmatprep.subr.bf16.mxu0 0
    %3360 = vmatpush1.bf16.msra.mxu0 0
    %3361 = vmatprep.subr.bf16.mxu0 0
    %3362 = vmatpush1.bf16.msra.mxu0 0
    %3363 = vmatprep.subr.bf16.mxu0 0
    %3364 = vmatpush1.bf16.msra.mxu0 0
    %3365 = vmatprep.subr.bf16.mxu0 0
    %3366 = vmatpush1.bf16.msra.mxu0 0
    %3367 = vmatprep.subr.bf16.mxu0 0
    %3368 = vmatpush1.bf16.msra.mxu0 0
    %3369 = vmatprep.subr.bf16.mxu0 0
    %3370 = vmatpush1.bf16.msra.mxu0 0
    %3371 = vmatprep.subr.bf16.mxu0 0
    %3372 = vmatpush1.bf16.msra.mxu0 0
    %3373 = vmatprep.subr.bf16.mxu0 0
    %3374 = vmatpush1.bf16.msra.mxu0 0
    %3375 = vmatprep.subr.bf16.mxu0 0
    %3376 = vmatpush1.bf16.msra.mxu0 0
    %3377 = vmatprep.subr.bf16.mxu0 0
    %3378 = vmatpush1.bf16.msra.mxu0 0
    %3379 = vmatprep.mubr.bf16.mxu0 0
    %3380 = vmatmul.mubr.bf16.gmra.mrb[0].mxu0 %v2870
    %v3381 = vpop.f32.mrb[0].mxu0
    %v3382 = vadd.f32 0.0, %v3381
    %v3383 = vpop.f32.mrb[0].mxu0
    %v3384 = vpop.f32.mrb[0].mxu0
    %v3385 = vpop.f32.mrb[0].mxu0
    %3386 = vdwg.mxu0
    %v3391 = vunpack.c.l.b16 %v2803
    %v3392 = vunpack.c.l.b16 %v2804
    %v3393 = vunpack.c.l.b16 %v2805
    %v3394 = vunpack.c.l.b16 %v2806
    %v3395 = vpack.c.b16 %v3392, %v3391
    %v3396 = vpack.c.b16 %v3394, %v3393
    %3399 = vmatprep.subr.bf16.mxu0 0
    %3400 = vmatpush1.bf16.msra.mxu0 %v3395
    %3401 = vmatprep.subr.bf16.mxu0 0
    %3402 = vmatpush1.bf16.msra.mxu0 %v3396
    %3403 = vmatprep.subr.bf16.mxu0 0
    %3404 = vmatpush1.bf16.msra.mxu0 0
    %3405 = vmatprep.subr.bf16.mxu0 0
    %3406 = vmatpush1.bf16.msra.mxu0 0
    %3407 = vmatprep.subr.bf16.mxu0 0
    %3408 = vmatpush1.bf16.msra.mxu0 0
    %3409 = vmatprep.subr.bf16.mxu0 0
    %3410 = vmatpush1.bf16.msra.mxu0 0
    %3411 = vmatprep.subr.bf16.mxu0 0
    %3412 = vmatpush1.bf16.msra.mxu0 0
    %3413 = vmatprep.subr.bf16.mxu0 0
    %3414 = vmatpush1.bf16.msra.mxu0 0
    %3415 = vmatprep.subr.bf16.mxu0 0
    %3416 = vmatpush1.bf16.msra.mxu0 0
    %3417 = vmatprep.subr.bf16.mxu0 0
    %3418 = vmatpush1.bf16.msra.mxu0 0
    %3419 = vmatprep.subr.bf16.mxu0 0
    %3420 = vmatpush1.bf16.msra.mxu0 0
    %3421 = vmatprep.subr.bf16.mxu0 0
    %3422 = vmatpush1.bf16.msra.mxu0 0
    %3423 = vmatprep.subr.bf16.mxu0 0
    %3424 = vmatpush1.bf16.msra.mxu0 0
    %3425 = vmatprep.subr.bf16.mxu0 0
    %3426 = vmatpush1.bf16.msra.mxu0 0
    %3427 = vmatprep.subr.bf16.mxu0 0
    %3428 = vmatpush1.bf16.msra.mxu0 0
    %3429 = vmatprep.subr.bf16.mxu0 0
    %3430 = vmatpush1.bf16.msra.mxu0 0
    %3431 = vmatprep.mubr.bf16.mxu0 0
    %3432 = vmatmul.mubr.bf16.gmra.mrb[0].mxu0 %v2870
    %v3433 = vpop.f32.mrb[0].mxu0
    %v3434 = vadd.f32 0.0, %v3433
    %v3435 = vpop.f32.mrb[0].mxu0
    %v3436 = vpop.f32.mrb[0].mxu0
    %v3437 = vpop.f32.mrb[0].mxu0
    %3438 = vdwg.mxu0
    %3439 = vmatprep.subr.bf16.mxu0 0
    %3440 = vmatpush1.bf16.msra.mxu0 %v3239
    %3441 = vmatprep.subr.bf16.mxu0 0
    %3442 = vmatpush1.bf16.msra.mxu0 %v3240
    %3443 = vmatprep.subr.bf16.mxu0 0
    %3444 = vmatpush1.bf16.msra.mxu0 0
    %3445 = vmatprep.subr.bf16.mxu0 0
    %3446 = vmatpush1.bf16.msra.mxu0 0
    %3447 = vmatprep.subr.bf16.mxu0 0
    %3448 = vmatpush1.bf16.msra.mxu0 0
    %3449 = vmatprep.subr.bf16.mxu0 0
    %3450 = vmatpush1.bf16.msra.mxu0 0
    %3451 = vmatprep.subr.bf16.mxu0 0
    %3452 = vmatpush1.bf16.msra.mxu0 0
    %3453 = vmatprep.subr.bf16.mxu0 0
    %3454 = vmatpush1.bf16.msra.mxu0 0
    %3455 = vmatprep.subr.bf16.mxu0 0
    %3456 = vmatpush1.bf16.msra.mxu0 0
    %3457 = vmatprep.subr.bf16.mxu0 0
    %3458 = vmatpush1.bf16.msra.mxu0 0
    %3459 = vmatprep.subr.bf16.mxu0 0
    %3460 = vmatpush1.bf16.msra.mxu0 0
    %3461 = vmatprep.subr.bf16.mxu0 0
    %3462 = vmatpush1.bf16.msra.mxu0 0
    %3463 = vmatprep.subr.bf16.mxu0 0
    %3464 = vmatpush1.bf16.msra.mxu0 0
    %3465 = vmatprep.subr.bf16.mxu0 0
    %3466 = vmatpush1.bf16.msra.mxu0 0
    %3467 = vmatprep.subr.bf16.mxu0 0
    %3468 = vmatpush1.bf16.msra.mxu0 0
    %3469 = vmatprep.subr.bf16.mxu0 0
    %3470 = vmatpush1.bf16.msra.mxu0 0
    %3471 = vmatprep.mubr.bf16.mxu0 0
    %3472 = vmatmul.mubr.bf16.gmra.mrb[0].mxu0 %v3069
    %v3473 = vpop.f32.mrb[0].mxu0
    %v3474 = vadd.f32 0.0, %v3473
    %v3475 = vpop.f32.mrb[0].mxu0
    %v3476 = vpop.f32.mrb[0].mxu0
    %v3477 = vpop.f32.mrb[0].mxu0
    %3478 = vdwg.mxu0
    %3479 = vmatprep.subr.bf16.mxu0 0
    %3480 = vmatpush1.bf16.msra.mxu0 %v3291
    %3481 = vmatprep.subr.bf16.mxu0 0
    %3482 = vmatpush1.bf16.msra.mxu0 %v3292
    %3483 = vmatprep.subr.bf16.mxu0 0
    %3484 = vmatpush1.bf16.msra.mxu0 0
    %3485 = vmatprep.subr.bf16.mxu0 0
    %3486 = vmatpush1.bf16.msra.mxu0 0
    %3487 = vmatprep.subr.bf16.mxu0 0
    %3488 = vmatpush1.bf16.msra.mxu0 0
    %3489 = vmatprep.subr.bf16.mxu0 0
    %3490 = vmatpush1.bf16.msra.mxu0 0
    %3491 = vmatprep.subr.bf16.mxu0 0
    %3492 = vmatpush1.bf16.msra.mxu0 0
    %3493 = vmatprep.subr.bf16.mxu0 0
    %3494 = vmatpush1.bf16.msra.mxu0 0
    %3495 = vmatprep.subr.bf16.mxu0 0
    %3496 = vmatpush1.bf16.msra.mxu0 0
    %3497 = vmatprep.subr.bf16.mxu0 0
    %3498 = vmatpush1.bf16.msra.mxu0 0
    %3499 = vmatprep.subr.bf16.mxu0 0
    %3500 = vmatpush1.bf16.msra.mxu0 0
    %3501 = vmatprep.subr.bf16.mxu0 0
    %3502 = vmatpush1.bf16.msra.mxu0 0
    %3503 = vmatprep.subr.bf16.mxu0 0
    %3504 = vmatpush1.bf16.msra.mxu0 0
    %3505 = vmatprep.subr.bf16.mxu0 0
    %3506 = vmatpush1.bf16.msra.mxu0 0
    %3507 = vmatprep.subr.bf16.mxu0 0
    %3508 = vmatpush1.bf16.msra.mxu0 0
    %3509 = vmatprep.subr.bf16.mxu0 0
    %3510 = vmatpush1.bf16.msra.mxu0 0
    %3511 = vmatprep.mubr.bf16.mxu0 0
    %3512 = vmatmul.mubr.bf16.gmra.mrb[0].mxu0 %v3069
    %v3513 = vpop.f32.mrb[0].mxu0
    %v3514 = vadd.f32 0.0, %v3513
    %v3515 = vpop.f32.mrb[0].mxu0
    %v3516 = vpop.f32.mrb[0].mxu0
    %v3517 = vpop.f32.mrb[0].mxu0
    %3518 = vdwg.mxu0
    %3519 = vmatprep.subr.bf16.mxu0 0
    %3520 = vmatpush1.bf16.msra.mxu0 %v3343
    %3521 = vmatprep.subr.bf16.mxu0 0
    %3522 = vmatpush1.bf16.msra.mxu0 %v3344
    %3523 = vmatprep.subr.bf16.mxu0 0
    %3524 = vmatpush1.bf16.msra.mxu0 0
    %3525 = vmatprep.subr.bf16.mxu0 0
    %3526 = vmatpush1.bf16.msra.mxu0 0
    %3527 = vmatprep.subr.bf16.mxu0 0
    %3528 = vmatpush1.bf16.msra.mxu0 0
    %3529 = vmatprep.subr.bf16.mxu0 0
    %3530 = vmatpush1.bf16.msra.mxu0 0
    %3531 = vmatprep.subr.bf16.mxu0 0
    %3532 = vmatpush1.bf16.msra.mxu0 0
    %3533 = vmatprep.subr.bf16.mxu0 0
    %3534 = vmatpush1.bf16.msra.mxu0 0
    %3535 = vmatprep.subr.bf16.mxu0 0
    %3536 = vmatpush1.bf16.msra.mxu0 0
    %3537 = vmatprep.subr.bf16.mxu0 0
    %3538 = vmatpush1.bf16.msra.mxu0 0
    %3539 = vmatprep.subr.bf16.mxu0 0
    %3540 = vmatpush1.bf16.msra.mxu0 0
    %3541 = vmatprep.subr.bf16.mxu0 0
    %3542 = vmatpush1.bf16.msra.mxu0 0
    %3543 = vmatprep.subr.bf16.mxu0 0
    %3544 = vmatpush1.bf16.msra.mxu0 0
    %3545 = vmatprep.subr.bf16.mxu0 0
    %3546 = vmatpush1.bf16.msra.mxu0 0
    %3547 = vmatprep.subr.bf16.mxu0 0
    %3548 = vmatpush1.bf16.msra.mxu0 0
    %3549 = vmatprep.subr.bf16.mxu0 0
    %3550 = vmatpush1.bf16.msra.mxu0 0
    %3551 = vmatprep.mubr.bf16.mxu0 0
    %3552 = vmatmul.mubr.bf16.gmra.mrb[0].mxu0 %v3069
    %v3553 = vpop.f32.mrb[0].mxu0
    %v3554 = vadd.f32 0.0, %v3553
    %v3555 = vpop.f32.mrb[0].mxu0
    %v3556 = vpop.f32.mrb[0].mxu0
    %v3557 = vpop.f32.mrb[0].mxu0
    %3558 = vdwg.mxu0
    %3559 = vmatprep.subr.bf16.mxu0 0
    %3560 = vmatpush1.bf16.msra.mxu0 %v3395
    %3561 = vmatprep.subr.bf16.mxu0 0
    %3562 = vmatpush1.bf16.msra.mxu0 %v3396
    %3563 = vmatprep.subr.bf16.mxu0 0
    %3564 = vmatpush1.bf16.msra.mxu0 0
    %3565 = vmatprep.subr.bf16.mxu0 0
    %3566 = vmatpush1.bf16.msra.mxu0 0
    %3567 = vmatprep.subr.bf16.mxu0 0
    %3568 = vmatpush1.bf16.msra.mxu0 0
    %3569 = vmatprep.subr.bf16.mxu0 0
    %3570 = vmatpush1.bf16.msra.mxu0 0
    %3571 = vmatprep.subr.bf16.mxu0 0
    %3572 = vmatpush1.bf16.msra.mxu0 0
    %3573 = vmatprep.subr.bf16.mxu0 0
    %3574 = vmatpush1.bf16.msra.mxu0 0
    %3575 = vmatprep.subr.bf16.mxu0 0
    %3576 = vmatpush1.bf16.msra.mxu0 0
    %3577 = vmatprep.subr.bf16.mxu0 0
    %3578 = vmatpush1.bf16.msra.mxu0 0
    %3579 = vmatprep.subr.bf16.mxu0 0
    %3580 = vmatpush1.bf16.msra.mxu0 0
    %3581 = vmatprep.subr.bf16.mxu0 0
    %3582 = vmatpush1.bf16.msra.mxu0 0
    %3583 = vmatprep.subr.bf16.mxu0 0
    %3584 = vmatpush1.bf16.msra.mxu0 0
    %3585 = vmatprep.subr.bf16.mxu0 0
    %3586 = vmatpush1.bf16.msra.mxu0 0
    %3587 = vmatprep.subr.bf16.mxu0 0
    %3588 = vmatpush1.bf16.msra.mxu0 0
    %3589 = vmatprep.subr.bf16.mxu0 0
    %3590 = vmatpush1.bf16.msra.mxu0 0
    %3591 = vmatprep.mubr.bf16.mxu0 0
    %3592 = vmatmul.mubr.bf16.gmra.mrb[0].mxu0 %v3069
    %v3593 = vpop.f32.mrb[0].mxu0
    %v3594 = vadd.f32 0.0, %v3593
    %v3595 = vpop.f32.mrb[0].mxu0
    %v3596 = vpop.f32.mrb[0].mxu0
    %v3597 = vpop.f32.mrb[0].mxu0
    %3598 = vdwg.mxu0
    %v3603 = vunpack.c.l.b16 %v2808
    %v3604 = vunpack.c.l.b16 %v2809
    %v3605 = vunpack.c.l.b16 %v2810
    %v3606 = vunpack.c.l.b16 %v2811
    %v3607 = vpack.c.b16 %v3604, %v3603
    %v3608 = vpack.c.b16 %v3606, %v3605
    %3611 = vmatprep.subr.bf16.mxu0 0
    %3612 = vmatpush1.bf16.msra.mxu0 %v3607
    %3613 = vmatprep.subr.bf16.mxu0 0
    %3614 = vmatpush1.bf16.msra.mxu0 %v3608
    %3615 = vmatprep.subr.bf16.mxu0 0
    %3616 = vmatpush1.bf16.msra.mxu0 0
    %3617 = vmatprep.subr.bf16.mxu0 0
    %3618 = vmatpush1.bf16.msra.mxu0 0
    %3619 = vmatprep.subr.bf16.mxu0 0
    %3620 = vmatpush1.bf16.msra.mxu0 0
    %3621 = vmatprep.subr.bf16.mxu0 0
    %3622 = vmatpush1.bf16.msra.mxu0 0
    %3623 = vmatprep.subr.bf16.mxu0 0
    %3624 = vmatpush1.bf16.msra.mxu0 0
    %3625 = vmatprep.subr.bf16.mxu0 0
    %3626 = vmatpush1.bf16.msra.mxu0 0
    %3627 = vmatprep.subr.bf16.mxu0 0
    %3628 = vmatpush1.bf16.msra.mxu0 0
    %3629 = vmatprep.subr.bf16.mxu0 0
    %3630 = vmatpush1.bf16.msra.mxu0 0
    %3631 = vmatprep.subr.bf16.mxu0 0
    %3632 = vmatpush1.bf16.msra.mxu0 0
    %3633 = vmatprep.subr.bf16.mxu0 0
    %3634 = vmatpush1.bf16.msra.mxu0 0
    %3635 = vmatprep.subr.bf16.mxu0 0
    %3636 = vmatpush1.bf16.msra.mxu0 0
    %3637 = vmatprep.subr.bf16.mxu0 0
    %3638 = vmatpush1.bf16.msra.mxu0 0
    %3639 = vmatprep.subr.bf16.mxu0 0
    %3640 = vmatpush1.bf16.msra.mxu0 0
    %3641 = vmatprep.subr.bf16.mxu0 0
    %3642 = vmatpush1.bf16.msra.mxu0 0
    %3643 = vmatprep.mubr.bf16.mxu0 0
    %3644 = vmatmul.mubr.bf16.gmra.mrb[0].mxu0 %v2870
    %v3645 = vpop.f32.mrb[0].mxu0
    %v3646 = vadd.f32 0.0, %v3645
    %v3647 = vpop.f32.mrb[0].mxu0
    %v3648 = vpop.f32.mrb[0].mxu0
    %v3649 = vpop.f32.mrb[0].mxu0
    %3650 = vdwg.mxu0
    %v3655 = vunpack.c.l.b16 %v2812
    %v3656 = vunpack.c.l.b16 %v2813
    %v3657 = vunpack.c.l.b16 %v2814
    %v3658 = vunpack.c.l.b16 %v2815
    %v3659 = vpack.c.b16 %v3656, %v3655
    %v3660 = vpack.c.b16 %v3658, %v3657
    %3663 = vmatprep.subr.bf16.mxu0 0
    %3664 = vmatpush1.bf16.msra.mxu0 %v3659
    %3665 = vmatprep.subr.bf16.mxu0 0
    %3666 = vmatpush1.bf16.msra.mxu0 %v3660
    %3667 = vmatprep.subr.bf16.mxu0 0
    %3668 = vmatpush1.bf16.msra.mxu0 0
    %3669 = vmatprep.subr.bf16.mxu0 0
    %3670 = vmatpush1.bf16.msra.mxu0 0
    %3671 = vmatprep.subr.bf16.mxu0 0
    %3672 = vmatpush1.bf16.msra.mxu0 0
    %3673 = vmatprep.subr.bf16.mxu0 0
    %3674 = vmatpush1.bf16.msra.mxu0 0
    %3675 = vmatprep.subr.bf16.mxu0 0
    %3676 = vmatpush1.bf16.msra.mxu0 0
    %3677 = vmatprep.subr.bf16.mxu0 0
    %3678 = vmatpush1.bf16.msra.mxu0 0
    %3679 = vmatprep.subr.bf16.mxu0 0
    %3680 = vmatpush1.bf16.msra.mxu0 0
    %3681 = vmatprep.subr.bf16.mxu0 0
    %3682 = vmatpush1.bf16.msra.mxu0 0
    %3683 = vmatprep.subr.bf16.mxu0 0
    %3684 = vmatpush1.bf16.msra.mxu0 0
    %3685 = vmatprep.subr.bf16.mxu0 0
    %3686 = vmatpush1.bf16.msra.mxu0 0
    %3687 = vmatprep.subr.bf16.mxu0 0
    %3688 = vmatpush1.bf16.msra.mxu0 0
    %3689 = vmatprep.subr.bf16.mxu0 0
    %3690 = vmatpush1.bf16.msra.mxu0 0
    %3691 = vmatprep.subr.bf16.mxu0 0
    %3692 = vmatpush1.bf16.msra.mxu0 0
    %3693 = vmatprep.subr.bf16.mxu0 0
    %3694 = vmatpush1.bf16.msra.mxu0 0
    %3695 = vmatprep.mubr.bf16.mxu0 0
    %3696 = vmatmul.mubr.bf16.gmra.mrb[0].mxu0 %v2870
    %v3697 = vpop.f32.mrb[0].mxu0
    %v3698 = vadd.f32 0.0, %v3697
    %v3699 = vpop.f32.mrb[0].mxu0
    %v3700 = vpop.f32.mrb[0].mxu0
    %v3701 = vpop.f32.mrb[0].mxu0
    %3702 = vdwg.mxu0
    %v3707 = vunpack.c.l.b16 %v2816
    %v3708 = vunpack.c.l.b16 %v2817
    %v3709 = vunpack.c.l.b16 %v2818
    %v3710 = vunpack.c.l.b16 %v2819
    %v3711 = vpack.c.b16 %v3708, %v3707
    %v3712 = vpack.c.b16 %v3710, %v3709
    %3715 = vmatprep.subr.bf16.mxu0 0
    %3716 = vmatpush1.bf16.msra.mxu0 %v3711
    %3717 = vmatprep.subr.bf16.mxu0 0
    %3718 = vmatpush1.bf16.msra.mxu0 %v3712
    %3719 = vmatprep.subr.bf16.mxu0 0
    %3720 = vmatpush1.bf16.msra.mxu0 0
    %3721 = vmatprep.subr.bf16.mxu0 0
    %3722 = vmatpush1.bf16.msra.mxu0 0
    %3723 = vmatprep.subr.bf16.mxu0 0
    %3724 = vmatpush1.bf16.msra.mxu0 0
    %3725 = vmatprep.subr.bf16.mxu0 0
    %3726 = vmatpush1.bf16.msra.mxu0 0
    %3727 = vmatprep.subr.bf16.mxu0 0
    %3728 = vmatpush1.bf16.msra.mxu0 0
    %3729 = vmatprep.subr.bf16.mxu0 0
    %3730 = vmatpush1.bf16.msra.mxu0 0
    %3731 = vmatprep.subr.bf16.mxu0 0
    %3732 = vmatpush1.bf16.msra.mxu0 0
    %3733 = vmatprep.subr.bf16.mxu0 0
    %3734 = vmatpush1.bf16.msra.mxu0 0
    %3735 = vmatprep.subr.bf16.mxu0 0
    %3736 = vmatpush1.bf16.msra.mxu0 0
    %3737 = vmatprep.subr.bf16.mxu0 0
    %3738 = vmatpush1.bf16.msra.mxu0 0
    %3739 = vmatprep.subr.bf16.mxu0 0
    %3740 = vmatpush1.bf16.msra.mxu0 0
    %3741 = vmatprep.subr.bf16.mxu0 0
    %3742 = vmatpush1.bf16.msra.mxu0 0
    %3743 = vmatprep.subr.bf16.mxu0 0
    %3744 = vmatpush1.bf16.msra.mxu0 0
    %3745 = vmatprep.subr.bf16.mxu0 0
    %3746 = vmatpush1.bf16.msra.mxu0 0
    %3747 = vmatprep.mubr.bf16.mxu0 0
    %3748 = vmatmul.mubr.bf16.gmra.mrb[0].mxu0 %v2870
    %v3749 = vpop.f32.mrb[0].mxu0
    %v3750 = vadd.f32 0.0, %v3749
    %v3751 = vpop.f32.mrb[0].mxu0
    %v3752 = vpop.f32.mrb[0].mxu0
    %v3753 = vpop.f32.mrb[0].mxu0
    %3754 = vdwg.mxu0
    %v3759 = vunpack.c.l.b16 %v2820
    %v3760 = vunpack.c.l.b16 %v2821
    %v3761 = vunpack.c.l.b16 %v2822
    %v3762 = vunpack.c.l.b16 %v2823
    %v3763 = vpack.c.b16 %v3760, %v3759
    %v3764 = vpack.c.b16 %v3762, %v3761
    %3767 = vmatprep.subr.bf16.mxu0 0
    %3768 = vmatpush1.bf16.msra.mxu0 %v3763
    %3769 = vmatprep.subr.bf16.mxu0 0
    %3770 = vmatpush1.bf16.msra.mxu0 %v3764
    %3771 = vmatprep.subr.bf16.mxu0 0
    %3772 = vmatpush1.bf16.msra.mxu0 0
    %3773 = vmatprep.subr.bf16.mxu0 0
    %3774 = vmatpush1.bf16.msra.mxu0 0
    %3775 = vmatprep.subr.bf16.mxu0 0
    %3776 = vmatpush1.bf16.msra.mxu0 0
    %3777 = vmatprep.subr.bf16.mxu0 0
    %3778 = vmatpush1.bf16.msra.mxu0 0
    %3779 = vmatprep.subr.bf16.mxu0 0
    %3780 = vmatpush1.bf16.msra.mxu0 0
    %3781 = vmatprep.subr.bf16.mxu0 0
    %3782 = vmatpush1.bf16.msra.mxu0 0
    %3783 = vmatprep.subr.bf16.mxu0 0
    %3784 = vmatpush1.bf16.msra.mxu0 0
    %3785 = vmatprep.subr.bf16.mxu0 0
    %3786 = vmatpush1.bf16.msra.mxu0 0
    %3787 = vmatprep.subr.bf16.mxu0 0
    %3788 = vmatpush1.bf16.msra.mxu0 0
    %3789 = vmatprep.subr.bf16.mxu0 0
    %3790 = vmatpush1.bf16.msra.mxu0 0
    %3791 = vmatprep.subr.bf16.mxu0 0
    %3792 = vmatpush1.bf16.msra.mxu0 0
    %3793 = vmatprep.subr.bf16.mxu0 0
    %3794 = vmatpush1.bf16.msra.mxu0 0
    %3795 = vmatprep.subr.bf16.mxu0 0
    %3796 = vmatpush1.bf16.msra.mxu0 0
    %3797 = vmatprep.subr.bf16.mxu0 0
    %3798 = vmatpush1.bf16.msra.mxu0 0
    %3799 = vmatprep.mubr.bf16.mxu0 0
    %3800 = vmatmul.mubr.bf16.gmra.mrb[0].mxu0 %v2870
    %v3801 = vpop.f32.mrb[0].mxu0
    %v3802 = vadd.f32 0.0, %v3801
    %v3803 = vpop.f32.mrb[0].mxu0
    %v3804 = vpop.f32.mrb[0].mxu0
    %v3805 = vpop.f32.mrb[0].mxu0
    %3806 = vdwg.mxu0
    %3807 = vmatprep.subr.bf16.mxu0 0
    %3808 = vmatpush1.bf16.msra.mxu0 %v3607
    %3809 = vmatprep.subr.bf16.mxu0 0
    %3810 = vmatpush1.bf16.msra.mxu0 %v3608
    %3811 = vmatprep.subr.bf16.mxu0 0
    %3812 = vmatpush1.bf16.msra.mxu0 0
    %3813 = vmatprep.subr.bf16.mxu0 0
    %3814 = vmatpush1.bf16.msra.mxu0 0
    %3815 = vmatprep.subr.bf16.mxu0 0
    %3816 = vmatpush1.bf16.msra.mxu0 0
    %3817 = vmatprep.subr.bf16.mxu0 0
    %3818 = vmatpush1.bf16.msra.mxu0 0
    %3819 = vmatprep.subr.bf16.mxu0 0
    %3820 = vmatpush1.bf16.msra.mxu0 0
    %3821 = vmatprep.subr.bf16.mxu0 0
    %3822 = vmatpush1.bf16.msra.mxu0 0
    %3823 = vmatprep.subr.bf16.mxu0 0
    %3824 = vmatpush1.bf16.msra.mxu0 0
    %3825 = vmatprep.subr.bf16.mxu0 0
    %3826 = vmatpush1.bf16.msra.mxu0 0
    %3827 = vmatprep.subr.bf16.mxu0 0
    %3828 = vmatpush1.bf16.msra.mxu0 0
    %3829 = vmatprep.subr.bf16.mxu0 0
    %3830 = vmatpush1.bf16.msra.mxu0 0
    %3831 = vmatprep.subr.bf16.mxu0 0
    %3832 = vmatpush1.bf16.msra.mxu0 0
    %3833 = vmatprep.subr.bf16.mxu0 0
    %3834 = vmatpush1.bf16.msra.mxu0 0
    %3835 = vmatprep.subr.bf16.mxu0 0
    %3836 = vmatpush1.bf16.msra.mxu0 0
    %3837 = vmatprep.subr.bf16.mxu0 0
    %3838 = vmatpush1.bf16.msra.mxu0 0
    %3839 = vmatprep.mubr.bf16.mxu0 0
    %3840 = vmatmul.mubr.bf16.gmra.mrb[0].mxu0 %v3069
    %v3841 = vpop.f32.mrb[0].mxu0
    %v3842 = vadd.f32 0.0, %v3841
    %v3843 = vpop.f32.mrb[0].mxu0
    %v3844 = vpop.f32.mrb[0].mxu0
    %v3845 = vpop.f32.mrb[0].mxu0
    %3846 = vdwg.mxu0
    %3847 = vmatprep.subr.bf16.mxu0 0
    %3848 = vmatpush1.bf16.msra.mxu0 %v3659
    %3849 = vmatprep.subr.bf16.mxu0 0
    %3850 = vmatpush1.bf16.msra.mxu0 %v3660
    %3851 = vmatprep.subr.bf16.mxu0 0
    %3852 = vmatpush1.bf16.msra.mxu0 0
    %3853 = vmatprep.subr.bf16.mxu0 0
    %3854 = vmatpush1.bf16.msra.mxu0 0
    %3855 = vmatprep.subr.bf16.mxu0 0
    %3856 = vmatpush1.bf16.msra.mxu0 0
    %3857 = vmatprep.subr.bf16.mxu0 0
    %3858 = vmatpush1.bf16.msra.mxu0 0
    %3859 = vmatprep.subr.bf16.mxu0 0
    %3860 = vmatpush1.bf16.msra.mxu0 0
    %3861 = vmatprep.subr.bf16.mxu0 0
    %3862 = vmatpush1.bf16.msra.mxu0 0
    %3863 = vmatprep.subr.bf16.mxu0 0
    %3864 = vmatpush1.bf16.msra.mxu0 0
    %3865 = vmatprep.subr.bf16.mxu0 0
    %3866 = vmatpush1.bf16.msra.mxu0 0
    %3867 = vmatprep.subr.bf16.mxu0 0
    %3868 = vmatpush1.bf16.msra.mxu0 0
    %3869 = vmatprep.subr.bf16.mxu0 0
    %3870 = vmatpush1.bf16.msra.mxu0 0
    %3871 = vmatprep.subr.bf16.mxu0 0
    %3872 = vmatpush1.bf16.msra.mxu0 0
    %3873 = vmatprep.subr.bf16.mxu0 0
    %3874 = vmatpush1.bf16.msra.mxu0 0
    %3875 = vmatprep.subr.bf16.mxu0 0
    %3876 = vmatpush1.bf16.msra.mxu0 0
    %3877 = vmatprep.subr.bf16.mxu0 0
    %3878 = vmatpush1.bf16.msra.mxu0 0
    %3879 = vmatprep.mubr.bf16.mxu0 0
    %3880 = vmatmul.mubr.bf16.gmra.mrb[0].mxu0 %v3069
    %v3881 = vpop.f32.mrb[0].mxu0
    %v3882 = vadd.f32 0.0, %v3881
    %v3883 = vpop.f32.mrb[0].mxu0
    %v3884 = vpop.f32.mrb[0].mxu0
    %v3885 = vpop.f32.mrb[0].mxu0
    %3886 = vdwg.mxu0
    %3887 = vmatprep.subr.bf16.mxu0 0
    %3888 = vmatpush1.bf16.msra.mxu0 %v3711
    %3889 = vmatprep.subr.bf16.mxu0 0
    %3890 = vmatpush1.bf16.msra.mxu0 %v3712
    %3891 = vmatprep.subr.bf16.mxu0 0
    %3892 = vmatpush1.bf16.msra.mxu0 0
    %3893 = vmatprep.subr.bf16.mxu0 0
    %3894 = vmatpush1.bf16.msra.mxu0 0
    %3895 = vmatprep.subr.bf16.mxu0 0
    %3896 = vmatpush1.bf16.msra.mxu0 0
    %3897 = vmatprep.subr.bf16.mxu0 0
    %3898 = vmatpush1.bf16.msra.mxu0 0
    %3899 = vmatprep.subr.bf16.mxu0 0
    %3900 = vmatpush1.bf16.msra.mxu0 0
    %3901 = vmatprep.subr.bf16.mxu0 0
    %3902 = vmatpush1.bf16.msra.mxu0 0
    %3903 = vmatprep.subr.bf16.mxu0 0
    %3904 = vmatpush1.bf16.msra.mxu0 0
    %3905 = vmatprep.subr.bf16.mxu0 0
    %3906 = vmatpush1.bf16.msra.mxu0 0
    %3907 = vmatprep.subr.bf16.mxu0 0
    %3908 = vmatpush1.bf16.msra.mxu0 0
    %3909 = vmatprep.subr.bf16.mxu0 0
    %3910 = vmatpush1.bf16.msra.mxu0 0
    %3911 = vmatprep.subr.bf16.mxu0 0
    %3912 = vmatpush1.bf16.msra.mxu0 0
    %3913 = vmatprep.subr.bf16.mxu0 0
    %3914 = vmatpush1.bf16.msra.mxu0 0
    %3915 = vmatprep.subr.bf16.mxu0 0
    %3916 = vmatpush1.bf16.msra.mxu0 0
    %3917 = vmatprep.subr.bf16.mxu0 0
    %3918 = vmatpush1.bf16.msra.mxu0 0
    %3919 = vmatprep.mubr.bf16.mxu0 0
    %3920 = vmatmul.mubr.bf16.gmra.mrb[0].mxu0 %v3069
    %v3921 = vpop.f32.mrb[0].mxu0
    %v3922 = vadd.f32 0.0, %v3921
    %v3923 = vpop.f32.mrb[0].mxu0
    %v3924 = vpop.f32.mrb[0].mxu0
    %v3925 = vpop.f32.mrb[0].mxu0
    %3926 = vdwg.mxu0
    %3927 = vmatprep.subr.bf16.mxu0 0
    %3928 = vmatpush1.bf16.msra.mxu0 %v3763
    %3929 = vmatprep.subr.bf16.mxu0 0
    %3930 = vmatpush1.bf16.msra.mxu0 %v3764
    %3931 = vmatprep.subr.bf16.mxu0 0
    %3932 = vmatpush1.bf16.msra.mxu0 0
    %3933 = vmatprep.subr.bf16.mxu0 0
    %3934 = vmatpush1.bf16.msra.mxu0 0
    %3935 = vmatprep.subr.bf16.mxu0 0
    %3936 = vmatpush1.bf16.msra.mxu0 0
    %3937 = vmatprep.subr.bf16.mxu0 0
    %3938 = vmatpush1.bf16.msra.mxu0 0
    %3939 = vmatprep.subr.bf16.mxu0 0
    %3940 = vmatpush1.bf16.msra.mxu0 0
    %3941 = vmatprep.subr.bf16.mxu0 0
    %3942 = vmatpush1.bf16.msra.mxu0 0
    %3943 = vmatprep.subr.bf16.mxu0 0
    %3944 = vmatpush1.bf16.msra.mxu0 0
    %3945 = vmatprep.subr.bf16.mxu0 0
    %3946 = vmatpush1.bf16.msra.mxu0 0
    %3947 = vmatprep.subr.bf16.mxu0 0
    %3948 = vmatpush1.bf16.msra.mxu0 0
    %3949 = vmatprep.subr.bf16.mxu0 0
    %3950 = vmatpush1.bf16.msra.mxu0 0
    %3951 = vmatprep.subr.bf16.mxu0 0
    %3952 = vmatpush1.bf16.msra.mxu0 0
    %3953 = vmatprep.subr.bf16.mxu0 0
    %3954 = vmatpush1.bf16.msra.mxu0 0
    %3955 = vmatprep.subr.bf16.mxu0 0
    %3956 = vmatpush1.bf16.msra.mxu0 0
    %3957 = vmatprep.subr.bf16.mxu0 0
    %3958 = vmatpush1.bf16.msra.mxu0 0
    %3959 = vmatprep.mubr.bf16.mxu0 0
    %3960 = vmatmul.mubr.bf16.gmra.mrb[0].mxu0 %v3069
    %v3961 = vpop.f32.mrb[0].mxu0
    %v3962 = vadd.f32 0.0, %v3961
    %v3963 = vpop.f32.mrb[0].mxu0
    %v3964 = vpop.f32.mrb[0].mxu0
    %v3965 = vpop.f32.mrb[0].mxu0
    %3966 = vdwg.mxu0
    %v3967 = vpack.c.bf16 %v2907, %v2907
    %v3968 = vpack.c.bf16 %v2959, %v2959
    %v3969 = vpack.c.bf16 %v3011, %v3011
    %v3970 = vpack.c.bf16 %v3063, %v3063
    %v3971 = vpack.c.bf16 %v3106, %v3106
    %v3972 = vpack.c.bf16 %v3146, %v3146
    %v3973 = vpack.c.bf16 %v3186, %v3186
    %v3974 = vpack.c.bf16 %v3226, %v3226
    %v3975 = vpack.c.bf16 %v3278, %v3278
    %v3976 = vpack.c.bf16 %v3330, %v3330
    %v3977 = vpack.c.bf16 %v3382, %v3382
    %v3978 = vpack.c.bf16 %v3434, %v3434
    %v3979 = vpack.c.bf16 %v3474, %v3474
    %v3980 = vpack.c.bf16 %v3514, %v3514
    %v3981 = vpack.c.bf16 %v3554, %v3554
    %v3982 = vpack.c.bf16 %v3594, %v3594
    %v3984 = vsel %vm1251, %v3967, 0
    %v3987 = vsel %vm1251, %v3975, 0
    %3989 = vmatprep.subr.bf16.mxu0 0
    %3990 = vmatpush1.bf16.xpose.msra.mxu0 %v3987
    %3991 = vmatprep.subr.bf16.mxu0 0
    %3992 = vmatpush1.bf16.xpose.msra.mxu0 0
    %3993 = vmatprep.subr.bf16.mxu0 0
    %3994 = vmatpush1.bf16.xpose.msra.mxu0 0
    %3995 = vmatprep.subr.bf16.mxu0 0
    %3996 = vmatpush1.bf16.xpose.msra.mxu0 0
    %3997 = vmatprep.subr.bf16.mxu0 0
    %3998 = vmatpush1.bf16.xpose.msra.mxu0 0
    %3999 = vmatprep.subr.bf16.mxu0 0
    %4000 = vmatpush1.bf16.xpose.msra.mxu0 0
    %4001 = vmatprep.subr.bf16.mxu0 0
    %4002 = vmatpush1.bf16.xpose.msra.mxu0 0
    %4003 = vmatprep.subr.bf16.mxu0 0
    %4004 = vmatpush1.bf16.xpose.msra.mxu0 0
    %4005 = vmatprep.subr.bf16.mxu0 0
    %4006 = vmatpush1.bf16.xpose.msra.mxu0 0
    %4007 = vmatprep.subr.bf16.mxu0 0
    %4008 = vmatpush1.bf16.xpose.msra.mxu0 0
    %4009 = vmatprep.subr.bf16.mxu0 0
    %4010 = vmatpush1.bf16.xpose.msra.mxu0 0
    %4011 = vmatprep.subr.bf16.mxu0 0
    %4012 = vmatpush1.bf16.xpose.msra.mxu0 0
    %4013 = vmatprep.subr.bf16.mxu0 0
    %4014 = vmatpush1.bf16.xpose.msra.mxu0 0
    %4015 = vmatprep.subr.bf16.mxu0 0
    %4016 = vmatpush1.bf16.xpose.msra.mxu0 0
    %4017 = vmatprep.subr.bf16.mxu0 0
    %4018 = vmatpush1.bf16.xpose.msra.mxu0 0
    %4019 = vmatprep.subr.bf16.mxu0 0
    %4020 = vmatpush1.bf16.xpose.msra.mxu0 0
    %4021 = vmatprep.mubr.bf16.mxu0 0
    %4022 = vmatmul.mubr.bf16.gmra.mrb[0].mxu0 %v3984
    %v4023 = vpop.f32.mrb[0].mxu0
    %v4024 = vadd.f32 0.0, %v4023
    %v4025 = vpop.f32.mrb[0].mxu0
    %v4026 = vpop.f32.mrb[0].mxu0
    %v4027 = vpop.f32.mrb[0].mxu0
    %4028 = vdwg.mxu0
    %v4030 = vsel %vm1251, %v3968, 0
    %v4033 = vsel %vm1251, %v3976, 0
    %4035 = vmatprep.subr.bf16.mxu0 0
    %4036 = vmatpush1.bf16.xpose.msra.mxu0 %v4033
    %4037 = vmatprep.subr.bf16.mxu0 0
    %4038 = vmatpush1.bf16.xpose.msra.mxu0 0
    %4039 = vmatprep.subr.bf16.mxu0 0
    %4040 = vmatpush1.bf16.xpose.msra.mxu0 0
    %4041 = vmatprep.subr.bf16.mxu0 0
    %4042 = vmatpush1.bf16.xpose.msra.mxu0 0
    %4043 = vmatprep.subr.bf16.mxu0 0
    %4044 = vmatpush1.bf16.xpose.msra.mxu0 0
    %4045 = vmatprep.subr.bf16.mxu0 0
    %4046 = vmatpush1.bf16.xpose.msra.mxu0 0
    %4047 = vmatprep.subr.bf16.mxu0 0
    %4048 = vmatpush1.bf16.xpose.msra.mxu0 0
    %4049 = vmatprep.subr.bf16.mxu0 0
    %4050 = vmatpush1.bf16.xpose.msra.mxu0 0
    %4051 = vmatprep.subr.bf16.mxu0 0
    %4052 = vmatpush1.bf16.xpose.msra.mxu0 0
    %4053 = vmatprep.subr.bf16.mxu0 0
    %4054 = vmatpush1.bf16.xpose.msra.mxu0 0
    %4055 = vmatprep.subr.bf16.mxu0 0
    %4056 = vmatpush1.bf16.xpose.msra.mxu0 0
    %4057 = vmatprep.subr.bf16.mxu0 0
    %4058 = vmatpush1.bf16.xpose.msra.mxu0 0
    %4059 = vmatprep.subr.bf16.mxu0 0
    %4060 = vmatpush1.bf16.xpose.msra.mxu0 0
    %4061 = vmatprep.subr.bf16.mxu0 0
    %4062 = vmatpush1.bf16.xpose.msra.mxu0 0
    %4063 = vmatprep.subr.bf16.mxu0 0
    %4064 = vmatpush1.bf16.xpose.msra.mxu0 0
    %4065 = vmatprep.subr.bf16.mxu0 0
    %4066 = vmatpush1.bf16.xpose.msra.mxu0 0
    %4067 = vmatprep.mubr.bf16.mxu0 0
    %4068 = vmatmul.mubr.bf16.gmra.mrb[0].mxu0 %v4030
    %v4069 = vpop.f32.mrb[0].mxu0
    %v4070 = vadd.f32 0.0, %v4069
    %v4071 = vpop.f32.mrb[0].mxu0
    %v4072 = vpop.f32.mrb[0].mxu0
    %v4073 = vpop.f32.mrb[0].mxu0
    %4074 = vdwg.mxu0
    %v4076 = vsel %vm1251, %v3969, 0
    %v4079 = vsel %vm1251, %v3977, 0
    %4081 = vmatprep.subr.bf16.mxu0 0
    %4082 = vmatpush1.bf16.xpose.msra.mxu0 %v4079
    %4083 = vmatprep.subr.bf16.mxu0 0
    %4084 = vmatpush1.bf16.xpose.msra.mxu0 0
    %4085 = vmatprep.subr.bf16.mxu0 0
    %4086 = vmatpush1.bf16.xpose.msra.mxu0 0
    %4087 = vmatprep.subr.bf16.mxu0 0
    %4088 = vmatpush1.bf16.xpose.msra.mxu0 0
    %4089 = vmatprep.subr.bf16.mxu0 0
    %4090 = vmatpush1.bf16.xpose.msra.mxu0 0
    %4091 = vmatprep.subr.bf16.mxu0 0
    %4092 = vmatpush1.bf16.xpose.msra.mxu0 0
    %4093 = vmatprep.subr.bf16.mxu0 0
    %4094 = vmatpush1.bf16.xpose.msra.mxu0 0
    %4095 = vmatprep.subr.bf16.mxu0 0
    %4096 = vmatpush1.bf16.xpose.msra.mxu0 0
    %4097 = vmatprep.subr.bf16.mxu0 0
    %4098 = vmatpush1.bf16.xpose.msra.mxu0 0
    %4099 = vmatprep.subr.bf16.mxu0 0
    %4100 = vmatpush1.bf16.xpose.msra.mxu0 0
    %4101 = vmatprep.subr.bf16.mxu0 0
    %4102 = vmatpush1.bf16.xpose.msra.mxu0 0
    %4103 = vmatprep.subr.bf16.mxu0 0
    %4104 = vmatpush1.bf16.xpose.msra.mxu0 0
    %4105 = vmatprep.subr.bf16.mxu0 0
    %4106 = vmatpush1.bf16.xpose.msra.mxu0 0
    %4107 = vmatprep.subr.bf16.mxu0 0
    %4108 = vmatpush1.bf16.xpose.msra.mxu0 0
    %4109 = vmatprep.subr.bf16.mxu0 0
    %4110 = vmatpush1.bf16.xpose.msra.mxu0 0
    %4111 = vmatprep.subr.bf16.mxu0 0
    %4112 = vmatpush1.bf16.xpose.msra.mxu0 0
    %4113 = vmatprep.mubr.bf16.mxu0 0
    %4114 = vmatmul.mubr.bf16.gmra.mrb[0].mxu0 %v4076
    %v4115 = vpop.f32.mrb[0].mxu0
    %v4116 = vadd.f32 0.0, %v4115
    %v4117 = vpop.f32.mrb[0].mxu0
    %v4118 = vpop.f32.mrb[0].mxu0
    %v4119 = vpop.f32.mrb[0].mxu0
    %4120 = vdwg.mxu0
    %v4122 = vsel %vm1251, %v3970, 0
    %v4125 = vsel %vm1251, %v3978, 0
    %4127 = vmatprep.subr.bf16.mxu0 0
    %4128 = vmatpush1.bf16.xpose.msra.mxu0 %v4125
    %4129 = vmatprep.subr.bf16.mxu0 0
    %4130 = vmatpush1.bf16.xpose.msra.mxu0 0
    %4131 = vmatprep.subr.bf16.mxu0 0
    %4132 = vmatpush1.bf16.xpose.msra.mxu0 0
    %4133 = vmatprep.subr.bf16.mxu0 0
    %4134 = vmatpush1.bf16.xpose.msra.mxu0 0
    %4135 = vmatprep.subr.bf16.mxu0 0
    %4136 = vmatpush1.bf16.xpose.msra.mxu0 0
    %4137 = vmatprep.subr.bf16.mxu0 0
    %4138 = vmatpush1.bf16.xpose.msra.mxu0 0
    %4139 = vmatprep.subr.bf16.mxu0 0
    %4140 = vmatpush1.bf16.xpose.msra.mxu0 0
    %4141 = vmatprep.subr.bf16.mxu0 0
    %4142 = vmatpush1.bf16.xpose.msra.mxu0 0
    %4143 = vmatprep.subr.bf16.mxu0 0
    %4144 = vmatpush1.bf16.xpose.msra.mxu0 0
    %4145 = vmatprep.subr.bf16.mxu0 0
    %4146 = vmatpush1.bf16.xpose.msra.mxu0 0
    %4147 = vmatprep.subr.bf16.mxu0 0
    %4148 = vmatpush1.bf16.xpose.msra.mxu0 0
    %4149 = vmatprep.subr.bf16.mxu0 0
    %4150 = vmatpush1.bf16.xpose.msra.mxu0 0
    %4151 = vmatprep.subr.bf16.mxu0 0
    %4152 = vmatpush1.bf16.xpose.msra.mxu0 0
    %4153 = vmatprep.subr.bf16.mxu0 0
    %4154 = vmatpush1.bf16.xpose.msra.mxu0 0
    %4155 = vmatprep.subr.bf16.mxu0 0
    %4156 = vmatpush1.bf16.xpose.msra.mxu0 0
    %4157 = vmatprep.subr.bf16.mxu0 0
    %4158 = vmatpush1.bf16.xpose.msra.mxu0 0
    %4159 = vmatprep.mubr.bf16.mxu0 0
    %4160 = vmatmul.mubr.bf16.gmra.mrb[0].mxu0 %v4122
    %v4161 = vpop.f32.mrb[0].mxu0
    %v4162 = vadd.f32 0.0, %v4161
    %v4163 = vpop.f32.mrb[0].mxu0
    %v4164 = vpop.f32.mrb[0].mxu0
    %v4165 = vpop.f32.mrb[0].mxu0
    %4166 = vdwg.mxu0
    %v4168 = vsel %vm1251, %v3971, 0
    %v4171 = vsel %vm1251, %v3979, 0
    %4173 = vmatprep.subr.bf16.mxu0 0
    %4174 = vmatpush1.bf16.xpose.msra.mxu0 %v4171
    %4175 = vmatprep.subr.bf16.mxu0 0
    %4176 = vmatpush1.bf16.xpose.msra.mxu0 0
    %4177 = vmatprep.subr.bf16.mxu0 0
    %4178 = vmatpush1.bf16.xpose.msra.mxu0 0
    %4179 = vmatprep.subr.bf16.mxu0 0
    %4180 = vmatpush1.bf16.xpose.msra.mxu0 0
    %4181 = vmatprep.subr.bf16.mxu0 0
    %4182 = vmatpush1.bf16.xpose.msra.mxu0 0
    %4183 = vmatprep.subr.bf16.mxu0 0
    %4184 = vmatpush1.bf16.xpose.msra.mxu0 0
    %4185 = vmatprep.subr.bf16.mxu0 0
    %4186 = vmatpush1.bf16.xpose.msra.mxu0 0
    %4187 = vmatprep.subr.bf16.mxu0 0
    %4188 = vmatpush1.bf16.xpose.msra.mxu0 0
    %4189 = vmatprep.subr.bf16.mxu0 0
    %4190 = vmatpush1.bf16.xpose.msra.mxu0 0
    %4191 = vmatprep.subr.bf16.mxu0 0
    %4192 = vmatpush1.bf16.xpose.msra.mxu0 0
    %4193 = vmatprep.subr.bf16.mxu0 0
    %4194 = vmatpush1.bf16.xpose.msra.mxu0 0
    %4195 = vmatprep.subr.bf16.mxu0 0
    %4196 = vmatpush1.bf16.xpose.msra.mxu0 0
    %4197 = vmatprep.subr.bf16.mxu0 0
    %4198 = vmatpush1.bf16.xpose.msra.mxu0 0
    %4199 = vmatprep.subr.bf16.mxu0 0
    %4200 = vmatpush1.bf16.xpose.msra.mxu0 0
    %4201 = vmatprep.subr.bf16.mxu0 0
    %4202 = vmatpush1.bf16.xpose.msra.mxu0 0
    %4203 = vmatprep.subr.bf16.mxu0 0
    %4204 = vmatpush1.bf16.xpose.msra.mxu0 0
    %4205 = vmatprep.mubr.bf16.mxu0 0
    %4206 = vmatmul.mubr.bf16.gmra.mrb[0].mxu0 %v4168
    %v4207 = vpop.f32.mrb[0].mxu0
    %v4208 = vadd.f32 0.0, %v4207
    %v4209 = vpop.f32.mrb[0].mxu0
    %v4210 = vpop.f32.mrb[0].mxu0
    %v4211 = vpop.f32.mrb[0].mxu0
    %4212 = vdwg.mxu0
    %v4214 = vsel %vm1251, %v3972, 0
    %v4217 = vsel %vm1251, %v3980, 0
    %4219 = vmatprep.subr.bf16.mxu0 0
    %4220 = vmatpush1.bf16.xpose.msra.mxu0 %v4217
    %4221 = vmatprep.subr.bf16.mxu0 0
    %4222 = vmatpush1.bf16.xpose.msra.mxu0 0
    %4223 = vmatprep.subr.bf16.mxu0 0
    %4224 = vmatpush1.bf16.xpose.msra.mxu0 0
    %4225 = vmatprep.subr.bf16.mxu0 0
    %4226 = vmatpush1.bf16.xpose.msra.mxu0 0
    %4227 = vmatprep.subr.bf16.mxu0 0
    %4228 = vmatpush1.bf16.xpose.msra.mxu0 0
    %4229 = vmatprep.subr.bf16.mxu0 0
    %4230 = vmatpush1.bf16.xpose.msra.mxu0 0
    %4231 = vmatprep.subr.bf16.mxu0 0
    %4232 = vmatpush1.bf16.xpose.msra.mxu0 0
    %4233 = vmatprep.subr.bf16.mxu0 0
    %4234 = vmatpush1.bf16.xpose.msra.mxu0 0
    %4235 = vmatprep.subr.bf16.mxu0 0
    %4236 = vmatpush1.bf16.xpose.msra.mxu0 0
    %4237 = vmatprep.subr.bf16.mxu0 0
    %4238 = vmatpush1.bf16.xpose.msra.mxu0 0
    %4239 = vmatprep.subr.bf16.mxu0 0
    %4240 = vmatpush1.bf16.xpose.msra.mxu0 0
    %4241 = vmatprep.subr.bf16.mxu0 0
    %4242 = vmatpush1.bf16.xpose.msra.mxu0 0
    %4243 = vmatprep.subr.bf16.mxu0 0
    %4244 = vmatpush1.bf16.xpose.msra.mxu0 0
    %4245 = vmatprep.subr.bf16.mxu0 0
    %4246 = vmatpush1.bf16.xpose.msra.mxu0 0
    %4247 = vmatprep.subr.bf16.mxu0 0
    %4248 = vmatpush1.bf16.xpose.msra.mxu0 0
    %4249 = vmatprep.subr.bf16.mxu0 0
    %4250 = vmatpush1.bf16.xpose.msra.mxu0 0
    %4251 = vmatprep.mubr.bf16.mxu0 0
    %4252 = vmatmul.mubr.bf16.gmra.mrb[0].mxu0 %v4214
    %v4253 = vpop.f32.mrb[0].mxu0
    %v4254 = vadd.f32 0.0, %v4253
    %v4255 = vpop.f32.mrb[0].mxu0
    %v4256 = vpop.f32.mrb[0].mxu0
    %v4257 = vpop.f32.mrb[0].mxu0
    %4258 = vdwg.mxu0
    %v4260 = vsel %vm1251, %v3973, 0
    %v4263 = vsel %vm1251, %v3981, 0
    %4265 = vmatprep.subr.bf16.mxu0 0
    %4266 = vmatpush1.bf16.xpose.msra.mxu0 %v4263
    %4267 = vmatprep.subr.bf16.mxu0 0
    %4268 = vmatpush1.bf16.xpose.msra.mxu0 0
    %4269 = vmatprep.subr.bf16.mxu0 0
    %4270 = vmatpush1.bf16.xpose.msra.mxu0 0
    %4271 = vmatprep.subr.bf16.mxu0 0
    %4272 = vmatpush1.bf16.xpose.msra.mxu0 0
    %4273 = vmatprep.subr.bf16.mxu0 0
    %4274 = vmatpush1.bf16.xpose.msra.mxu0 0
    %4275 = vmatprep.subr.bf16.mxu0 0
    %4276 = vmatpush1.bf16.xpose.msra.mxu0 0
    %4277 = vmatprep.subr.bf16.mxu0 0
    %4278 = vmatpush1.bf16.xpose.msra.mxu0 0
    %4279 = vmatprep.subr.bf16.mxu0 0
    %4280 = vmatpush1.bf16.xpose.msra.mxu0 0
    %4281 = vmatprep.subr.bf16.mxu0 0
    %4282 = vmatpush1.bf16.xpose.msra.mxu0 0
    %4283 = vmatprep.subr.bf16.mxu0 0
    %4284 = vmatpush1.bf16.xpose.msra.mxu0 0
    %4285 = vmatprep.subr.bf16.mxu0 0
    %4286 = vmatpush1.bf16.xpose.msra.mxu0 0
    %4287 = vmatprep.subr.bf16.mxu0 0
    %4288 = vmatpush1.bf16.xpose.msra.mxu0 0
    %4289 = vmatprep.subr.bf16.mxu0 0
    %4290 = vmatpush1.bf16.xpose.msra.mxu0 0
    %4291 = vmatprep.subr.bf16.mxu0 0
    %4292 = vmatpush1.bf16.xpose.msra.mxu0 0
    %4293 = vmatprep.subr.bf16.mxu0 0
    %4294 = vmatpush1.bf16.xpose.msra.mxu0 0
    %4295 = vmatprep.subr.bf16.mxu0 0
    %4296 = vmatpush1.bf16.xpose.msra.mxu0 0
    %4297 = vmatprep.mubr.bf16.mxu0 0
    %4298 = vmatmul.mubr.bf16.gmra.mrb[0].mxu0 %v4260
    %v4299 = vpop.f32.mrb[0].mxu0
    %v4300 = vadd.f32 0.0, %v4299
    %v4301 = vpop.f32.mrb[0].mxu0
    %v4302 = vpop.f32.mrb[0].mxu0
    %v4303 = vpop.f32.mrb[0].mxu0
    %4304 = vdwg.mxu0
    %v4306 = vsel %vm1251, %v3974, 0
    %v4309 = vsel %vm1251, %v3982, 0
    %4311 = vmatprep.subr.bf16.mxu0 0
    %4312 = vmatpush1.bf16.xpose.msra.mxu0 %v4309
    %4313 = vmatprep.subr.bf16.mxu0 0
    %4314 = vmatpush1.bf16.xpose.msra.mxu0 0
    %4315 = vmatprep.subr.bf16.mxu0 0
    %4316 = vmatpush1.bf16.xpose.msra.mxu0 0
    %4317 = vmatprep.subr.bf16.mxu0 0
    %4318 = vmatpush1.bf16.xpose.msra.mxu0 0
    %4319 = vmatprep.subr.bf16.mxu0 0
    %4320 = vmatpush1.bf16.xpose.msra.mxu0 0
    %4321 = vmatprep.subr.bf16.mxu0 0
    %4322 = vmatpush1.bf16.xpose.msra.mxu0 0
    %4323 = vmatprep.subr.bf16.mxu0 0
    %4324 = vmatpush1.bf16.xpose.msra.mxu0 0
    %4325 = vmatprep.subr.bf16.mxu0 0
    %4326 = vmatpush1.bf16.xpose.msra.mxu0 0
    %4327 = vmatprep.subr.bf16.mxu0 0
    %4328 = vmatpush1.bf16.xpose.msra.mxu0 0
    %4329 = vmatprep.subr.bf16.mxu0 0
    %4330 = vmatpush1.bf16.xpose.msra.mxu0 0
    %4331 = vmatprep.subr.bf16.mxu0 0
    %4332 = vmatpush1.bf16.xpose.msra.mxu0 0
    %4333 = vmatprep.subr.bf16.mxu0 0
    %4334 = vmatpush1.bf16.xpose.msra.mxu0 0
    %4335 = vmatprep.subr.bf16.mxu0 0
    %4336 = vmatpush1.bf16.xpose.msra.mxu0 0
    %4337 = vmatprep.subr.bf16.mxu0 0
    %4338 = vmatpush1.bf16.xpose.msra.mxu0 0
    %4339 = vmatprep.subr.bf16.mxu0 0
    %4340 = vmatpush1.bf16.xpose.msra.mxu0 0
    %4341 = vmatprep.subr.bf16.mxu0 0
    %4342 = vmatpush1.bf16.xpose.msra.mxu0 0
    %4343 = vmatprep.mubr.bf16.mxu0 0
    %4344 = vmatmul.mubr.bf16.gmra.mrb[0].mxu0 %v4306
    %v4345 = vpop.f32.mrb[0].mxu0
    %v4346 = vadd.f32 0.0, %v4345
    %v4347 = vpop.f32.mrb[0].mxu0
    %v4348 = vpop.f32.mrb[0].mxu0
    %v4349 = vpop.f32.mrb[0].mxu0
    %4350 = vdwg.mxu0
    %v4351 = vmul.f32 %v4024, 0.35355338
    %v4352 = vmul.f32 %v4070, 0.35355338
    %v4353 = vmul.f32 %v4116, 0.35355338
    %v4354 = vmul.f32 %v4162, 0.35355338
    %v4355 = vmul.f32 %v4208, 0.35355338
    %v4356 = vmul.f32 %v4254, 0.35355338
    %v4357 = vmul.f32 %v4300, 0.35355338
    %v4358 = vmul.f32 %v4346, 0.35355338
    %v4359 = vadd.f32 %v4351, %v1639
    %v4360 = vadd.f32 %v4352, %v1643
    %v4361 = vadd.f32 %v4353, %v1647
    %v4362 = vadd.f32 %v4354, %v1651
    %v4363 = vadd.f32 %v4355, %v1655
    %v4364 = vadd.f32 %v4356, %v1659
    %v4365 = vadd.f32 %v4357, %v1663
    %v4366 = vadd.f32 %v4358, %v1667
    %v4367 = vsel %vm1251, %v4359, -inf
    %4368 = vmax.xlane.f32.xlu0 %v4367
    %v4369 = vpop.xlane.xlu0 %4368
    %v4370 = vsel %vm1251, %v4360, -inf
    %4371 = vmax.xlane.f32.xlu0 %v4370
    %v4372 = vpop.xlane.xlu0 %4371
    %v4373 = vsel %vm1251, %v4361, -inf
    %4374 = vmax.xlane.f32.xlu0 %v4373
    %v4375 = vpop.xlane.xlu0 %4374
    %v4376 = vsel %vm1251, %v4362, -inf
    %4377 = vmax.xlane.f32.xlu0 %v4376
    %v4378 = vpop.xlane.xlu0 %4377
    %v4379 = vsel %vm1251, %v4363, -inf
    %4380 = vmax.xlane.f32.xlu0 %v4379
    %v4381 = vpop.xlane.xlu0 %4380
    %v4382 = vsel %vm1251, %v4364, -inf
    %4383 = vmax.xlane.f32.xlu0 %v4382
    %v4384 = vpop.xlane.xlu0 %4383
    %v4385 = vsel %vm1251, %v4365, -inf
    %4386 = vmax.xlane.f32.xlu0 %v4385
    %v4387 = vpop.xlane.xlu0 %4386
    %v4388 = vsel %vm1251, %v4366, -inf
    %4389 = vmax.xlane.f32.xlu0 %v4388
    %v4390 = vpop.xlane.xlu0 %4389
    %v4391 = vsub.f32 %v4359, %v4369
    %v4392 = vsub.f32 %v4360, %v4372
    %v4393 = vsub.f32 %v4361, %v4375
    %v4394 = vsub.f32 %v4362, %v4378
    %v4395 = vsub.f32 %v4363, %v4381
    %v4396 = vsub.f32 %v4364, %v4384
    %v4397 = vsub.f32 %v4365, %v4387
    %v4398 = vsub.f32 %v4366, %v4390
    %v4399 = vmul.f32 %v4391, 1.442695
    %v4400 = vpow.pop %v4399
    %v4401 = vmul.f32 %v4392, 1.442695
    %v4402 = vpow.pop %v4401
    %v4403 = vmul.f32 %v4393, 1.442695
    %v4404 = vpow.pop %v4403
    %v4405 = vmul.f32 %v4394, 1.442695
    %v4406 = vpow.pop %v4405
    %v4407 = vmul.f32 %v4395, 1.442695
    %v4408 = vpow.pop %v4407
    %v4409 = vmul.f32 %v4396, 1.442695
    %v4410 = vpow.pop %v4409
    %v4411 = vmul.f32 %v4397, 1.442695
    %v4412 = vpow.pop %v4411
    %v4413 = vmul.f32 %v4398, 1.442695
    %v4414 = vpow.pop %v4413
    %v4415 = vsel %vm1251, %v4400, 0.0
    %4416 = vadd.xlane.f32.xlu0 %v4415
    %v4417 = vpop.xlane.xlu0 %4416
    %v4418 = vsel %vm1251, %v4402, 0.0
    %4419 = vadd.xlane.f32.xlu0 %v4418
    %v4420 = vpop.xlane.xlu0 %4419
    %v4421 = vsel %vm1251, %v4404, 0.0
    %4422 = vadd.xlane.f32.xlu0 %v4421
    %v4423 = vpop.xlane.xlu0 %4422
    %v4424 = vsel %vm1251, %v4406, 0.0
    %4425 = vadd.xlane.f32.xlu0 %v4424
    %v4426 = vpop.xlane.xlu0 %4425
    %v4427 = vsel %vm1251, %v4408, 0.0
    %4428 = vadd.xlane.f32.xlu0 %v4427
    %v4429 = vpop.xlane.xlu0 %4428
    %v4430 = vsel %vm1251, %v4410, 0.0
    %4431 = vadd.xlane.f32.xlu0 %v4430
    %v4432 = vpop.xlane.xlu0 %4431
    %v4433 = vsel %vm1251, %v4412, 0.0
    %4434 = vadd.xlane.f32.xlu0 %v4433
    %v4435 = vpop.xlane.xlu0 %4434
    %v4436 = vsel %vm1251, %v4414, 0.0
    %4437 = vadd.xlane.f32.xlu0 %v4436
    %v4438 = vpop.xlane.xlu0 %4437
    %v4439 = vrcp.pop %v4417
    %v4440 = vrcp.pop %v4420
    %v4441 = vrcp.pop %v4423
    %v4442 = vrcp.pop %v4426
    %v4443 = vrcp.pop %v4429
    %v4444 = vrcp.pop %v4432
    %v4445 = vrcp.pop %v4435
    %v4446 = vrcp.pop %v4438
    %v4447 = vmul.f32 %v4400, %v4439
    %v4448 = vmul.f32 %v4402, %v4440
    %v4449 = vmul.f32 %v4404, %v4441
    %v4450 = vmul.f32 %v4406, %v4442
    %v4451 = vmul.f32 %v4408, %v4443
    %v4452 = vmul.f32 %v4410, %v4444
    %v4453 = vmul.f32 %v4412, %v4445
    %v4454 = vmul.f32 %v4414, %v4446
    %v4455 = vpack.c.bf16 %v4447, %v4447
    %v4456 = vpack.c.bf16 %v4448, %v4448
    %v4457 = vpack.c.bf16 %v4449, %v4449
    %v4458 = vpack.c.bf16 %v4450, %v4450
    %v4459 = vpack.c.bf16 %v4451, %v4451
    %v4460 = vpack.c.bf16 %v4452, %v4452
    %v4461 = vpack.c.bf16 %v4453, %v4453
    %v4462 = vpack.c.bf16 %v4454, %v4454
    %v4463 = vpack.c.bf16 %v3646, %v3646
    %v4464 = vpack.c.bf16 %v3698, %v3698
    %v4465 = vpack.c.bf16 %v3750, %v3750
    %v4466 = vpack.c.bf16 %v3802, %v3802
    %v4467 = vpack.c.bf16 %v3842, %v3842
    %v4468 = vpack.c.bf16 %v3882, %v3882
    %v4469 = vpack.c.bf16 %v3922, %v3922
    %v4470 = vpack.c.bf16 %v3962, %v3962
    %v4472 = vsel %vm1251, %v4455, 0
    %v4475 = vsel %vm1791, %v4463, 0
    %4477 = vmatprep.subr.bf16.mxu0 0
    %4478 = vmatpush1.bf16.msra.mxu0 %v4475
    %4479 = vmatprep.subr.bf16.mxu0 0
    %4480 = vmatpush1.bf16.msra.mxu0 0
    %4481 = vmatprep.subr.bf16.mxu0 0
    %4482 = vmatpush1.bf16.msra.mxu0 0
    %4483 = vmatprep.subr.bf16.mxu0 0
    %4484 = vmatpush1.bf16.msra.mxu0 0
    %4485 = vmatprep.subr.bf16.mxu0 0
    %4486 = vmatpush1.bf16.msra.mxu0 0
    %4487 = vmatprep.subr.bf16.mxu0 0
    %4488 = vmatpush1.bf16.msra.mxu0 0
    %4489 = vmatprep.subr.bf16.mxu0 0
    %4490 = vmatpush1.bf16.msra.mxu0 0
    %4491 = vmatprep.subr.bf16.mxu0 0
    %4492 = vmatpush1.bf16.msra.mxu0 0
    %4493 = vmatprep.subr.bf16.mxu0 0
    %4494 = vmatpush1.bf16.msra.mxu0 0
    %4495 = vmatprep.subr.bf16.mxu0 0
    %4496 = vmatpush1.bf16.msra.mxu0 0
    %4497 = vmatprep.subr.bf16.mxu0 0
    %4498 = vmatpush1.bf16.msra.mxu0 0
    %4499 = vmatprep.subr.bf16.mxu0 0
    %4500 = vmatpush1.bf16.msra.mxu0 0
    %4501 = vmatprep.subr.bf16.mxu0 0
    %4502 = vmatpush1.bf16.msra.mxu0 0
    %4503 = vmatprep.subr.bf16.mxu0 0
    %4504 = vmatpush1.bf16.msra.mxu0 0
    %4505 = vmatprep.subr.bf16.mxu0 0
    %4506 = vmatpush1.bf16.msra.mxu0 0
    %4507 = vmatprep.subr.bf16.mxu0 0
    %4508 = vmatpush1.bf16.msra.mxu0 0
    %4509 = vmatprep.mubr.bf16.mxu0 0
    %4510 = vmatmul.mubr.bf16.gmra.mrb[0].mxu0 %v4472
    %v4511 = vpop.f32.mrb[0].mxu0
    %v4512 = vadd.f32 0.0, %v4511
    %v4513 = vpop.f32.mrb[0].mxu0
    %v4514 = vpop.f32.mrb[0].mxu0
    %v4515 = vpop.f32.mrb[0].mxu0
    %4516 = vdwg.mxu0
    %v4518 = vsel %vm1251, %v4456, 0
    %v4521 = vsel %vm1791, %v4464, 0
    %4523 = vmatprep.subr.bf16.mxu0 0
    %4524 = vmatpush1.bf16.msra.mxu0 %v4521
    %4525 = vmatprep.subr.bf16.mxu0 0
    %4526 = vmatpush1.bf16.msra.mxu0 0
    %4527 = vmatprep.subr.bf16.mxu0 0
    %4528 = vmatpush1.bf16.msra.mxu0 0
    %4529 = vmatprep.subr.bf16.mxu0 0
    %4530 = vmatpush1.bf16.msra.mxu0 0
    %4531 = vmatprep.subr.bf16.mxu0 0
    %4532 = vmatpush1.bf16.msra.mxu0 0
    %4533 = vmatprep.subr.bf16.mxu0 0
    %4534 = vmatpush1.bf16.msra.mxu0 0
    %4535 = vmatprep.subr.bf16.mxu0 0
    %4536 = vmatpush1.bf16.msra.mxu0 0
    %4537 = vmatprep.subr.bf16.mxu0 0
    %4538 = vmatpush1.bf16.msra.mxu0 0
    %4539 = vmatprep.subr.bf16.mxu0 0
    %4540 = vmatpush1.bf16.msra.mxu0 0
    %4541 = vmatprep.subr.bf16.mxu0 0
    %4542 = vmatpush1.bf16.msra.mxu0 0
    %4543 = vmatprep.subr.bf16.mxu0 0
    %4544 = vmatpush1.bf16.msra.mxu0 0
    %4545 = vmatprep.subr.bf16.mxu0 0
    %4546 = vmatpush1.bf16.msra.mxu0 0
    %4547 = vmatprep.subr.bf16.mxu0 0
    %4548 = vmatpush1.bf16.msra.mxu0 0
    %4549 = vmatprep.subr.bf16.mxu0 0
    %4550 = vmatpush1.bf16.msra.mxu0 0
    %4551 = vmatprep.subr.bf16.mxu0 0
    %4552 = vmatpush1.bf16.msra.mxu0 0
    %4553 = vmatprep.subr.bf16.mxu0 0
    %4554 = vmatpush1.bf16.msra.mxu0 0
    %4555 = vmatprep.mubr.bf16.mxu0 0
    %4556 = vmatmul.mubr.bf16.gmra.mrb[0].mxu0 %v4518
    %v4557 = vpop.f32.mrb[0].mxu0
    %v4558 = vadd.f32 0.0, %v4557
    %v4559 = vpop.f32.mrb[0].mxu0
    %v4560 = vpop.f32.mrb[0].mxu0
    %v4561 = vpop.f32.mrb[0].mxu0
    %4562 = vdwg.mxu0
    %v4564 = vsel %vm1251, %v4457, 0
    %v4567 = vsel %vm1791, %v4465, 0
    %4569 = vmatprep.subr.bf16.mxu0 0
    %4570 = vmatpush1.bf16.msra.mxu0 %v4567
    %4571 = vmatprep.subr.bf16.mxu0 0
    %4572 = vmatpush1.bf16.msra.mxu0 0
    %4573 = vmatprep.subr.bf16.mxu0 0
    %4574 = vmatpush1.bf16.msra.mxu0 0
    %4575 = vmatprep.subr.bf16.mxu0 0
    %4576 = vmatpush1.bf16.msra.mxu0 0
    %4577 = vmatprep.subr.bf16.mxu0 0
    %4578 = vmatpush1.bf16.msra.mxu0 0
    %4579 = vmatprep.subr.bf16.mxu0 0
    %4580 = vmatpush1.bf16.msra.mxu0 0
    %4581 = vmatprep.subr.bf16.mxu0 0
    %4582 = vmatpush1.bf16.msra.mxu0 0
    %4583 = vmatprep.subr.bf16.mxu0 0
    %4584 = vmatpush1.bf16.msra.mxu0 0
    %4585 = vmatprep.subr.bf16.mxu0 0
    %4586 = vmatpush1.bf16.msra.mxu0 0
    %4587 = vmatprep.subr.bf16.mxu0 0
    %4588 = vmatpush1.bf16.msra.mxu0 0
    %4589 = vmatprep.subr.bf16.mxu0 0
    %4590 = vmatpush1.bf16.msra.mxu0 0
    %4591 = vmatprep.subr.bf16.mxu0 0
    %4592 = vmatpush1.bf16.msra.mxu0 0
    %4593 = vmatprep.subr.bf16.mxu0 0
    %4594 = vmatpush1.bf16.msra.mxu0 0
    %4595 = vmatprep.subr.bf16.mxu0 0
    %4596 = vmatpush1.bf16.msra.mxu0 0
    %4597 = vmatprep.subr.bf16.mxu0 0
    %4598 = vmatpush1.bf16.msra.mxu0 0
    %4599 = vmatprep.subr.bf16.mxu0 0
    %4600 = vmatpush1.bf16.msra.mxu0 0
    %4601 = vmatprep.mubr.bf16.mxu0 0
    %4602 = vmatmul.mubr.bf16.gmra.mrb[0].mxu0 %v4564
    %v4603 = vpop.f32.mrb[0].mxu0
    %v4604 = vadd.f32 0.0, %v4603
    %v4605 = vpop.f32.mrb[0].mxu0
    %v4606 = vpop.f32.mrb[0].mxu0
    %v4607 = vpop.f32.mrb[0].mxu0
    %4608 = vdwg.mxu0
    %v4610 = vsel %vm1251, %v4458, 0
    %v4613 = vsel %vm1791, %v4466, 0
    %4615 = vmatprep.subr.bf16.mxu0 0
    %4616 = vmatpush1.bf16.msra.mxu0 %v4613
    %4617 = vmatprep.subr.bf16.mxu0 0
    %4618 = vmatpush1.bf16.msra.mxu0 0
    %4619 = vmatprep.subr.bf16.mxu0 0
    %4620 = vmatpush1.bf16.msra.mxu0 0
    %4621 = vmatprep.subr.bf16.mxu0 0
    %4622 = vmatpush1.bf16.msra.mxu0 0
    %4623 = vmatprep.subr.bf16.mxu0 0
    %4624 = vmatpush1.bf16.msra.mxu0 0
    %4625 = vmatprep.subr.bf16.mxu0 0
    %4626 = vmatpush1.bf16.msra.mxu0 0
    %4627 = vmatprep.subr.bf16.mxu0 0
    %4628 = vmatpush1.bf16.msra.mxu0 0
    %4629 = vmatprep.subr.bf16.mxu0 0
    %4630 = vmatpush1.bf16.msra.mxu0 0
    %4631 = vmatprep.subr.bf16.mxu0 0
    %4632 = vmatpush1.bf16.msra.mxu0 0
    %4633 = vmatprep.subr.bf16.mxu0 0
    %4634 = vmatpush1.bf16.msra.mxu0 0
    %4635 = vmatprep.subr.bf16.mxu0 0
    %4636 = vmatpush1.bf16.msra.mxu0 0
    %4637 = vmatprep.subr.bf16.mxu0 0
    %4638 = vmatpush1.bf16.msra.mxu0 0
    %4639 = vmatprep.subr.bf16.mxu0 0
    %4640 = vmatpush1.bf16.msra.mxu0 0
    %4641 = vmatprep.subr.bf16.mxu0 0
    %4642 = vmatpush1.bf16.msra.mxu0 0
    %4643 = vmatprep.subr.bf16.mxu0 0
    %4644 = vmatpush1.bf16.msra.mxu0 0
    %4645 = vmatprep.subr.bf16.mxu0 0
    %4646 = vmatpush1.bf16.msra.mxu0 0
    %4647 = vmatprep.mubr.bf16.mxu0 0
    %4648 = vmatmul.mubr.bf16.gmra.mrb[0].mxu0 %v4610
    %v4649 = vpop.f32.mrb[0].mxu0
    %v4650 = vadd.f32 0.0, %v4649
    %v4651 = vpop.f32.mrb[0].mxu0
    %v4652 = vpop.f32.mrb[0].mxu0
    %v4653 = vpop.f32.mrb[0].mxu0
    %4654 = vdwg.mxu0
    %v4656 = vsel %vm1251, %v4459, 0
    %v4659 = vsel %vm1791, %v4467, 0
    %4661 = vmatprep.subr.bf16.mxu0 0
    %4662 = vmatpush1.bf16.msra.mxu0 %v4659
    %4663 = vmatprep.subr.bf16.mxu0 0
    %4664 = vmatpush1.bf16.msra.mxu0 0
    %4665 = vmatprep.subr.bf16.mxu0 0
    %4666 = vmatpush1.bf16.msra.mxu0 0
    %4667 = vmatprep.subr.bf16.mxu0 0
    %4668 = vmatpush1.bf16.msra.mxu0 0
    %4669 = vmatprep.subr.bf16.mxu0 0
    %4670 = vmatpush1.bf16.msra.mxu0 0
    %4671 = vmatprep.subr.bf16.mxu0 0
    %4672 = vmatpush1.bf16.msra.mxu0 0
    %4673 = vmatprep.subr.bf16.mxu0 0
    %4674 = vmatpush1.bf16.msra.mxu0 0
    %4675 = vmatprep.subr.bf16.mxu0 0
    %4676 = vmatpush1.bf16.msra.mxu0 0
    %4677 = vmatprep.subr.bf16.mxu0 0
    %4678 = vmatpush1.bf16.msra.mxu0 0
    %4679 = vmatprep.subr.bf16.mxu0 0
    %4680 = vmatpush1.bf16.msra.mxu0 0
    %4681 = vmatprep.subr.bf16.mxu0 0
    %4682 = vmatpush1.bf16.msra.mxu0 0
    %4683 = vmatprep.subr.bf16.mxu0 0
    %4684 = vmatpush1.bf16.msra.mxu0 0
    %4685 = vmatprep.subr.bf16.mxu0 0
    %4686 = vmatpush1.bf16.msra.mxu0 0
    %4687 = vmatprep.subr.bf16.mxu0 0
    %4688 = vmatpush1.bf16.msra.mxu0 0
    %4689 = vmatprep.subr.bf16.mxu0 0
    %4690 = vmatpush1.bf16.msra.mxu0 0
    %4691 = vmatprep.subr.bf16.mxu0 0
    %4692 = vmatpush1.bf16.msra.mxu0 0
    %4693 = vmatprep.mubr.bf16.mxu0 0
    %4694 = vmatmul.mubr.bf16.gmra.mrb[0].mxu0 %v4656
    %v4695 = vpop.f32.mrb[0].mxu0
    %v4696 = vadd.f32 0.0, %v4695
    %v4697 = vpop.f32.mrb[0].mxu0
    %v4698 = vpop.f32.mrb[0].mxu0
    %v4699 = vpop.f32.mrb[0].mxu0
    %4700 = vdwg.mxu0
    %v4702 = vsel %vm1251, %v4460, 0
    %v4705 = vsel %vm1791, %v4468, 0
    %4707 = vmatprep.subr.bf16.mxu0 0
    %4708 = vmatpush1.bf16.msra.mxu0 %v4705
    %4709 = vmatprep.subr.bf16.mxu0 0
    %4710 = vmatpush1.bf16.msra.mxu0 0
    %4711 = vmatprep.subr.bf16.mxu0 0
    %4712 = vmatpush1.bf16.msra.mxu0 0
    %4713 = vmatprep.subr.bf16.mxu0 0
    %4714 = vmatpush1.bf16.msra.mxu0 0
    %4715 = vmatprep.subr.bf16.mxu0 0
    %4716 = vmatpush1.bf16.msra.mxu0 0
    %4717 = vmatprep.subr.bf16.mxu0 0
    %4718 = vmatpush1.bf16.msra.mxu0 0
    %4719 = vmatprep.subr.bf16.mxu0 0
    %4720 = vmatpush1.bf16.msra.mxu0 0
    %4721 = vmatprep.subr.bf16.mxu0 0
    %4722 = vmatpush1.bf16.msra.mxu0 0
    %4723 = vmatprep.subr.bf16.mxu0 0
    %4724 = vmatpush1.bf16.msra.mxu0 0
    %4725 = vmatprep.subr.bf16.mxu0 0
    %4726 = vmatpush1.bf16.msra.mxu0 0
    %4727 = vmatprep.subr.bf16.mxu0 0
    %4728 = vmatpush1.bf16.msra.mxu0 0
    %4729 = vmatprep.subr.bf16.mxu0 0
    %4730 = vmatpush1.bf16.msra.mxu0 0
    %4731 = vmatprep.subr.bf16.mxu0 0
    %4732 = vmatpush1.bf16.msra.mxu0 0
    %4733 = vmatprep.subr.bf16.mxu0 0
    %4734 = vmatpush1.bf16.msra.mxu0 0
    %4735 = vmatprep.subr.bf16.mxu0 0
    %4736 = vmatpush1.bf16.msra.mxu0 0
    %4737 = vmatprep.subr.bf16.mxu0 0
    %4738 = vmatpush1.bf16.msra.mxu0 0
    %4739 = vmatprep.mubr.bf16.mxu0 0
    %4740 = vmatmul.mubr.bf16.gmra.mrb[0].mxu0 %v4702
    %v4741 = vpop.f32.mrb[0].mxu0
    %v4742 = vadd.f32 0.0, %v4741
    %v4743 = vpop.f32.mrb[0].mxu0
    %v4744 = vpop.f32.mrb[0].mxu0
    %v4745 = vpop.f32.mrb[0].mxu0
    %4746 = vdwg.mxu0
    %v4748 = vsel %vm1251, %v4461, 0
    %v4751 = vsel %vm1791, %v4469, 0
    %4753 = vmatprep.subr.bf16.mxu0 0
    %4754 = vmatpush1.bf16.msra.mxu0 %v4751
    %4755 = vmatprep.subr.bf16.mxu0 0
    %4756 = vmatpush1.bf16.msra.mxu0 0
    %4757 = vmatprep.subr.bf16.mxu0 0
    %4758 = vmatpush1.bf16.msra.mxu0 0
    %4759 = vmatprep.subr.bf16.mxu0 0
    %4760 = vmatpush1.bf16.msra.mxu0 0
    %4761 = vmatprep.subr.bf16.mxu0 0
    %4762 = vmatpush1.bf16.msra.mxu0 0
    %4763 = vmatprep.subr.bf16.mxu0 0
    %4764 = vmatpush1.bf16.msra.mxu0 0
    %4765 = vmatprep.subr.bf16.mxu0 0
    %4766 = vmatpush1.bf16.msra.mxu0 0
    %4767 = vmatprep.subr.bf16.mxu0 0
    %4768 = vmatpush1.bf16.msra.mxu0 0
    %4769 = vmatprep.subr.bf16.mxu0 0
    %4770 = vmatpush1.bf16.msra.mxu0 0
    %4771 = vmatprep.subr.bf16.mxu0 0
    %4772 = vmatpush1.bf16.msra.mxu0 0
    %4773 = vmatprep.subr.bf16.mxu0 0
    %4774 = vmatpush1.bf16.msra.mxu0 0
    %4775 = vmatprep.subr.bf16.mxu0 0
    %4776 = vmatpush1.bf16.msra.mxu0 0
    %4777 = vmatprep.subr.bf16.mxu0 0
    %4778 = vmatpush1.bf16.msra.mxu0 0
    %4779 = vmatprep.subr.bf16.mxu0 0
    %4780 = vmatpush1.bf16.msra.mxu0 0
    %4781 = vmatprep.subr.bf16.mxu0 0
    %4782 = vmatpush1.bf16.msra.mxu0 0
    %4783 = vmatprep.subr.bf16.mxu0 0
    %4784 = vmatpush1.bf16.msra.mxu0 0
    %4785 = vmatprep.mubr.bf16.mxu0 0
    %4786 = vmatmul.mubr.bf16.gmra.mrb[0].mxu0 %v4748
    %v4787 = vpop.f32.mrb[0].mxu0
    %v4788 = vadd.f32 0.0, %v4787
    %v4789 = vpop.f32.mrb[0].mxu0
    %v4790 = vpop.f32.mrb[0].mxu0
    %v4791 = vpop.f32.mrb[0].mxu0
    %4792 = vdwg.mxu0
    %v4794 = vsel %vm1251, %v4462, 0
    %v4797 = vsel %vm1791, %v4470, 0
    %4799 = vmatprep.subr.bf16.mxu0 0
    %4800 = vmatpush1.bf16.msra.mxu0 %v4797
    %4801 = vmatprep.subr.bf16.mxu0 0
    %4802 = vmatpush1.bf16.msra.mxu0 0
    %4803 = vmatprep.subr.bf16.mxu0 0
    %4804 = vmatpush1.bf16.msra.mxu0 0
    %4805 = vmatprep.subr.bf16.mxu0 0
    %4806 = vmatpush1.bf16.msra.mxu0 0
    %4807 = vmatprep.subr.bf16.mxu0 0
    %4808 = vmatpush1.bf16.msra.mxu0 0
    %4809 = vmatprep.subr.bf16.mxu0 0
    %4810 = vmatpush1.bf16.msra.mxu0 0
    %4811 = vmatprep.subr.bf16.mxu0 0
    %4812 = vmatpush1.bf16.msra.mxu0 0
    %4813 = vmatprep.subr.bf16.mxu0 0
    %4814 = vmatpush1.bf16.msra.mxu0 0
    %4815 = vmatprep.subr.bf16.mxu0 0
    %4816 = vmatpush1.bf16.msra.mxu0 0
    %4817 = vmatprep.subr.bf16.mxu0 0
    %4818 = vmatpush1.bf16.msra.mxu0 0
    %4819 = vmatprep.subr.bf16.mxu0 0
    %4820 = vmatpush1.bf16.msra.mxu0 0
    %4821 = vmatprep.subr.bf16.mxu0 0
    %4822 = vmatpush1.bf16.msra.mxu0 0
    %4823 = vmatprep.subr.bf16.mxu0 0
    %4824 = vmatpush1.bf16.msra.mxu0 0
    %4825 = vmatprep.subr.bf16.mxu0 0
    %4826 = vmatpush1.bf16.msra.mxu0 0
    %4827 = vmatprep.subr.bf16.mxu0 0
    %4828 = vmatpush1.bf16.msra.mxu0 0
    %4829 = vmatprep.subr.bf16.mxu0 0
    %4830 = vmatpush1.bf16.msra.mxu0 0
    %4831 = vmatprep.mubr.bf16.mxu0 0
    %4832 = vmatmul.mubr.bf16.gmra.mrb[0].mxu0 %v4794
    %v4833 = vpop.f32.mrb[0].mxu0
    %v4834 = vadd.f32 0.0, %v4833
    %v4835 = vpop.f32.mrb[0].mxu0
    %v4836 = vpop.f32.mrb[0].mxu0
    %v4837 = vpop.f32.mrb[0].mxu0
    %4838 = vdwg.mxu0
    %v4839 = vpack.c.bf16 %v4512, %v4512
    %v4840 = vpack.c.bf16 %v4558, %v4558
    %v4841 = vpack.c.bf16 %v4604, %v4604
    %v4842 = vpack.c.bf16 %v4650, %v4650
    %v4843 = vpack.c.bf16 %v4696, %v4696
    %v4844 = vpack.c.bf16 %v4742, %v4742
    %v4845 = vpack.c.bf16 %v4788, %v4788
    %v4846 = vpack.c.bf16 %v4834, %v4834
    %v4848 = vsel %vm1251, %v4839, 0
    %v4851 = vsel %vm1791, %v2825, 0
    %4853 = vmatprep.subr.bf16.mxu0 0
    %4854 = vmatpush1.bf16.msra.mxu0 %v4851
    %4855 = vmatprep.subr.bf16.mxu0 0
    %4856 = vmatpush1.bf16.msra.mxu0 0
    %4857 = vmatprep.subr.bf16.mxu0 0
    %4858 = vmatpush1.bf16.msra.mxu0 0
    %4859 = vmatprep.subr.bf16.mxu0 0
    %4860 = vmatpush1.bf16.msra.mxu0 0
    %4861 = vmatprep.subr.bf16.mxu0 0
    %4862 = vmatpush1.bf16.msra.mxu0 0
    %4863 = vmatprep.subr.bf16.mxu0 0
    %4864 = vmatpush1.bf16.msra.mxu0 0
    %4865 = vmatprep.subr.bf16.mxu0 0
    %4866 = vmatpush1.bf16.msra.mxu0 0
    %4867 = vmatprep.subr.bf16.mxu0 0
    %4868 = vmatpush1.bf16.msra.mxu0 0
    %4869 = vmatprep.subr.bf16.mxu0 0
    %4870 = vmatpush1.bf16.msra.mxu0 0
    %4871 = vmatprep.subr.bf16.mxu0 0
    %4872 = vmatpush1.bf16.msra.mxu0 0
    %4873 = vmatprep.subr.bf16.mxu0 0
    %4874 = vmatpush1.bf16.msra.mxu0 0
    %4875 = vmatprep.subr.bf16.mxu0 0
    %4876 = vmatpush1.bf16.msra.mxu0 0
    %4877 = vmatprep.subr.bf16.mxu0 0
    %4878 = vmatpush1.bf16.msra.mxu0 0
    %4879 = vmatprep.subr.bf16.mxu0 0
    %4880 = vmatpush1.bf16.msra.mxu0 0
    %4881 = vmatprep.subr.bf16.mxu0 0
    %4882 = vmatpush1.bf16.msra.mxu0 0
    %4883 = vmatprep.subr.bf16.mxu0 0
    %4884 = vmatpush1.bf16.msra.mxu0 0
    %4885 = vmatprep.mubr.bf16.mxu0 0
    %4886 = vmatmul.mubr.bf16.gmra.mrb[0].mxu0 %v4848
    %v4887 = vpop.f32.mrb[0].mxu0
    %v4888 = vadd.f32 0.0, %v4887
    %v4889 = vpop.f32.mrb[0].mxu0
    %v4890 = vpop.f32.mrb[0].mxu0
    %v4891 = vpop.f32.mrb[0].mxu0
    %4892 = vdwg.mxu0
    %v4894 = vsel %vm1251, %v4840, 0
    %v4897 = vsel %vm1791, %v2826, 0
    %4899 = vmatprep.subr.bf16.mxu0 0
    %4900 = vmatpush1.bf16.msra.mxu0 %v4897
    %4901 = vmatprep.subr.bf16.mxu0 0
    %4902 = vmatpush1.bf16.msra.mxu0 0
    %4903 = vmatprep.subr.bf16.mxu0 0
    %4904 = vmatpush1.bf16.msra.mxu0 0
    %4905 = vmatprep.subr.bf16.mxu0 0
    %4906 = vmatpush1.bf16.msra.mxu0 0
    %4907 = vmatprep.subr.bf16.mxu0 0
    %4908 = vmatpush1.bf16.msra.mxu0 0
    %4909 = vmatprep.subr.bf16.mxu0 0
    %4910 = vmatpush1.bf16.msra.mxu0 0
    %4911 = vmatprep.subr.bf16.mxu0 0
    %4912 = vmatpush1.bf16.msra.mxu0 0
    %4913 = vmatprep.subr.bf16.mxu0 0
    %4914 = vmatpush1.bf16.msra.mxu0 0
    %4915 = vmatprep.subr.bf16.mxu0 0
    %4916 = vmatpush1.bf16.msra.mxu0 0
    %4917 = vmatprep.subr.bf16.mxu0 0
    %4918 = vmatpush1.bf16.msra.mxu0 0
    %4919 = vmatprep.subr.bf16.mxu0 0
    %4920 = vmatpush1.bf16.msra.mxu0 0
    %4921 = vmatprep.subr.bf16.mxu0 0
    %4922 = vmatpush1.bf16.msra.mxu0 0
    %4923 = vmatprep.subr.bf16.mxu0 0
    %4924 = vmatpush1.bf16.msra.mxu0 0
    %4925 = vmatprep.subr.bf16.mxu0 0
    %4926 = vmatpush1.bf16.msra.mxu0 0
    %4927 = vmatprep.subr.bf16.mxu0 0
    %4928 = vmatpush1.bf16.msra.mxu0 0
    %4929 = vmatprep.subr.bf16.mxu0 0
    %4930 = vmatpush1.bf16.msra.mxu0 0
    %4931 = vmatprep.mubr.bf16.mxu0 0
    %4932 = vmatmul.mubr.bf16.gmra.mrb[0].mxu0 %v4894
    %v4933 = vpop.f32.mrb[0].mxu0
    %v4934 = vadd.f32 0.0, %v4933
    %v4935 = vpop.f32.mrb[0].mxu0
    %v4936 = vpop.f32.mrb[0].mxu0
    %v4937 = vpop.f32.mrb[0].mxu0
    %4938 = vdwg.mxu0
    %v4940 = vsel %vm1251, %v4841, 0
    %v4943 = vsel %vm1791, %v2827, 0
    %4945 = vmatprep.subr.bf16.mxu0 0
    %4946 = vmatpush1.bf16.msra.mxu0 %v4943
    %4947 = vmatprep.subr.bf16.mxu0 0
    %4948 = vmatpush1.bf16.msra.mxu0 0
    %4949 = vmatprep.subr.bf16.mxu0 0
    %4950 = vmatpush1.bf16.msra.mxu0 0
    %4951 = vmatprep.subr.bf16.mxu0 0
    %4952 = vmatpush1.bf16.msra.mxu0 0
    %4953 = vmatprep.subr.bf16.mxu0 0
    %4954 = vmatpush1.bf16.msra.mxu0 0
    %4955 = vmatprep.subr.bf16.mxu0 0
    %4956 = vmatpush1.bf16.msra.mxu0 0
    %4957 = vmatprep.subr.bf16.mxu0 0
    %4958 = vmatpush1.bf16.msra.mxu0 0
    %4959 = vmatprep.subr.bf16.mxu0 0
    %4960 = vmatpush1.bf16.msra.mxu0 0
    %4961 = vmatprep.subr.bf16.mxu0 0
    %4962 = vmatpush1.bf16.msra.mxu0 0
    %4963 = vmatprep.subr.bf16.mxu0 0
    %4964 = vmatpush1.bf16.msra.mxu0 0
    %4965 = vmatprep.subr.bf16.mxu0 0
    %4966 = vmatpush1.bf16.msra.mxu0 0
    %4967 = vmatprep.subr.bf16.mxu0 0
    %4968 = vmatpush1.bf16.msra.mxu0 0
    %4969 = vmatprep.subr.bf16.mxu0 0
    %4970 = vmatpush1.bf16.msra.mxu0 0
    %4971 = vmatprep.subr.bf16.mxu0 0
    %4972 = vmatpush1.bf16.msra.mxu0 0
    %4973 = vmatprep.subr.bf16.mxu0 0
    %4974 = vmatpush1.bf16.msra.mxu0 0
    %4975 = vmatprep.subr.bf16.mxu0 0
    %4976 = vmatpush1.bf16.msra.mxu0 0
    %4977 = vmatprep.mubr.bf16.mxu0 0
    %4978 = vmatmul.mubr.bf16.gmra.mrb[0].mxu0 %v4940
    %v4979 = vpop.f32.mrb[0].mxu0
    %v4980 = vadd.f32 0.0, %v4979
    %v4981 = vpop.f32.mrb[0].mxu0
    %v4982 = vpop.f32.mrb[0].mxu0
    %v4983 = vpop.f32.mrb[0].mxu0
    %4984 = vdwg.mxu0
    %v4986 = vsel %vm1251, %v4842, 0
    %v4989 = vsel %vm1791, %v2828, 0
    %4991 = vmatprep.subr.bf16.mxu0 0
    %4992 = vmatpush1.bf16.msra.mxu0 %v4989
    %4993 = vmatprep.subr.bf16.mxu0 0
    %4994 = vmatpush1.bf16.msra.mxu0 0
    %4995 = vmatprep.subr.bf16.mxu0 0
    %4996 = vmatpush1.bf16.msra.mxu0 0
    %4997 = vmatprep.subr.bf16.mxu0 0
    %4998 = vmatpush1.bf16.msra.mxu0 0
    %4999 = vmatprep.subr.bf16.mxu0 0
    %5000 = vmatpush1.bf16.msra.mxu0 0
    %5001 = vmatprep.subr.bf16.mxu0 0
    %5002 = vmatpush1.bf16.msra.mxu0 0
    %5003 = vmatprep.subr.bf16.mxu0 0
    %5004 = vmatpush1.bf16.msra.mxu0 0
    %5005 = vmatprep.subr.bf16.mxu0 0
    %5006 = vmatpush1.bf16.msra.mxu0 0
    %5007 = vmatprep.subr.bf16.mxu0 0
    %5008 = vmatpush1.bf16.msra.mxu0 0
    %5009 = vmatprep.subr.bf16.mxu0 0
    %5010 = vmatpush1.bf16.msra.mxu0 0
    %5011 = vmatprep.subr.bf16.mxu0 0
    %5012 = vmatpush1.bf16.msra.mxu0 0
    %5013 = vmatprep.subr.bf16.mxu0 0
    %5014 = vmatpush1.bf16.msra.mxu0 0
    %5015 = vmatprep.subr.bf16.mxu0 0
    %5016 = vmatpush1.bf16.msra.mxu0 0
    %5017 = vmatprep.subr.bf16.mxu0 0
    %5018 = vmatpush1.bf16.msra.mxu0 0
    %5019 = vmatprep.subr.bf16.mxu0 0
    %5020 = vmatpush1.bf16.msra.mxu0 0
    %5021 = vmatprep.subr.bf16.mxu0 0
    %5022 = vmatpush1.bf16.msra.mxu0 0
    %5023 = vmatprep.mubr.bf16.mxu0 0
    %5024 = vmatmul.mubr.bf16.gmra.mrb[0].mxu0 %v4986
    %v5025 = vpop.f32.mrb[0].mxu0
    %v5026 = vadd.f32 0.0, %v5025
    %v5027 = vpop.f32.mrb[0].mxu0
    %v5028 = vpop.f32.mrb[0].mxu0
    %v5029 = vpop.f32.mrb[0].mxu0
    %5030 = vdwg.mxu0
    %v5032 = vsel %vm1251, %v4843, 0
    %5034 = vmatprep.subr.bf16.mxu0 0
    %5035 = vmatpush1.bf16.msra.mxu0 %v4851
    %5036 = vmatprep.subr.bf16.mxu0 0
    %5037 = vmatpush1.bf16.msra.mxu0 0
    %5038 = vmatprep.subr.bf16.mxu0 0
    %5039 = vmatpush1.bf16.msra.mxu0 0
    %5040 = vmatprep.subr.bf16.mxu0 0
    %5041 = vmatpush1.bf16.msra.mxu0 0
    %5042 = vmatprep.subr.bf16.mxu0 0
    %5043 = vmatpush1.bf16.msra.mxu0 0
    %5044 = vmatprep.subr.bf16.mxu0 0
    %5045 = vmatpush1.bf16.msra.mxu0 0
    %5046 = vmatprep.subr.bf16.mxu0 0
    %5047 = vmatpush1.bf16.msra.mxu0 0
    %5048 = vmatprep.subr.bf16.mxu0 0
    %5049 = vmatpush1.bf16.msra.mxu0 0
    %5050 = vmatprep.subr.bf16.mxu0 0
    %5051 = vmatpush1.bf16.msra.mxu0 0
    %5052 = vmatprep.subr.bf16.mxu0 0
    %5053 = vmatpush1.bf16.msra.mxu0 0
    %5054 = vmatprep.subr.bf16.mxu0 0
    %5055 = vmatpush1.bf16.msra.mxu0 0
    %5056 = vmatprep.subr.bf16.mxu0 0
    %5057 = vmatpush1.bf16.msra.mxu0 0
    %5058 = vmatprep.subr.bf16.mxu0 0
    %5059 = vmatpush1.bf16.msra.mxu0 0
    %5060 = vmatprep.subr.bf16.mxu0 0
    %5061 = vmatpush1.bf16.msra.mxu0 0
    %5062 = vmatprep.subr.bf16.mxu0 0
    %5063 = vmatpush1.bf16.msra.mxu0 0
    %5064 = vmatprep.subr.bf16.mxu0 0
    %5065 = vmatpush1.bf16.msra.mxu0 0
    %5066 = vmatprep.mubr.bf16.mxu0 0
    %5067 = vmatmul.mubr.bf16.gmra.mrb[0].mxu0 %v5032
    %v5068 = vpop.f32.mrb[0].mxu0
    %v5069 = vadd.f32 0.0, %v5068
    %v5070 = vpop.f32.mrb[0].mxu0
    %v5071 = vpop.f32.mrb[0].mxu0
    %v5072 = vpop.f32.mrb[0].mxu0
    %5073 = vdwg.mxu0
    %v5075 = vsel %vm1251, %v4844, 0
    %5077 = vmatprep.subr.bf16.mxu0 0
    %5078 = vmatpush1.bf16.msra.mxu0 %v4897
    %5079 = vmatprep.subr.bf16.mxu0 0
    %5080 = vmatpush1.bf16.msra.mxu0 0
    %5081 = vmatprep.subr.bf16.mxu0 0
    %5082 = vmatpush1.bf16.msra.mxu0 0
    %5083 = vmatprep.subr.bf16.mxu0 0
    %5084 = vmatpush1.bf16.msra.mxu0 0
    %5085 = vmatprep.subr.bf16.mxu0 0
    %5086 = vmatpush1.bf16.msra.mxu0 0
    %5087 = vmatprep.subr.bf16.mxu0 0
    %5088 = vmatpush1.bf16.msra.mxu0 0
    %5089 = vmatprep.subr.bf16.mxu0 0
    %5090 = vmatpush1.bf16.msra.mxu0 0
    %5091 = vmatprep.subr.bf16.mxu0 0
    %5092 = vmatpush1.bf16.msra.mxu0 0
    %5093 = vmatprep.subr.bf16.mxu0 0
    %5094 = vmatpush1.bf16.msra.mxu0 0
    %5095 = vmatprep.subr.bf16.mxu0 0
    %5096 = vmatpush1.bf16.msra.mxu0 0
    %5097 = vmatprep.subr.bf16.mxu0 0
    %5098 = vmatpush1.bf16.msra.mxu0 0
    %5099 = vmatprep.subr.bf16.mxu0 0
    %5100 = vmatpush1.bf16.msra.mxu0 0
    %5101 = vmatprep.subr.bf16.mxu0 0
    %5102 = vmatpush1.bf16.msra.mxu0 0
    %5103 = vmatprep.subr.bf16.mxu0 0
    %5104 = vmatpush1.bf16.msra.mxu0 0
    %5105 = vmatprep.subr.bf16.mxu0 0
    %5106 = vmatpush1.bf16.msra.mxu0 0
    %5107 = vmatprep.subr.bf16.mxu0 0
    %5108 = vmatpush1.bf16.msra.mxu0 0
    %5109 = vmatprep.mubr.bf16.mxu0 0
    %5110 = vmatmul.mubr.bf16.gmra.mrb[0].mxu0 %v5075
    %v5111 = vpop.f32.mrb[0].mxu0
    %v5112 = vadd.f32 0.0, %v5111
    %v5113 = vpop.f32.mrb[0].mxu0
    %v5114 = vpop.f32.mrb[0].mxu0
    %v5115 = vpop.f32.mrb[0].mxu0
    %5116 = vdwg.mxu0
    %v5118 = vsel %vm1251, %v4845, 0
    %5120 = vmatprep.subr.bf16.mxu0 0
    %5121 = vmatpush1.bf16.msra.mxu0 %v4943
    %5122 = vmatprep.subr.bf16.mxu0 0
    %5123 = vmatpush1.bf16.msra.mxu0 0
    %5124 = vmatprep.subr.bf16.mxu0 0
    %5125 = vmatpush1.bf16.msra.mxu0 0
    %5126 = vmatprep.subr.bf16.mxu0 0
    %5127 = vmatpush1.bf16.msra.mxu0 0
    %5128 = vmatprep.subr.bf16.mxu0 0
    %5129 = vmatpush1.bf16.msra.mxu0 0
    %5130 = vmatprep.subr.bf16.mxu0 0
    %5131 = vmatpush1.bf16.msra.mxu0 0
    %5132 = vmatprep.subr.bf16.mxu0 0
    %5133 = vmatpush1.bf16.msra.mxu0 0
    %5134 = vmatprep.subr.bf16.mxu0 0
    %5135 = vmatpush1.bf16.msra.mxu0 0
    %5136 = vmatprep.subr.bf16.mxu0 0
    %5137 = vmatpush1.bf16.msra.mxu0 0
    %5138 = vmatprep.subr.bf16.mxu0 0
    %5139 = vmatpush1.bf16.msra.mxu0 0
    %5140 = vmatprep.subr.bf16.mxu0 0
    %5141 = vmatpush1.bf16.msra.mxu0 0
    %5142 = vmatprep.subr.bf16.mxu0 0
    %5143 = vmatpush1.bf16.msra.mxu0 0
    %5144 = vmatprep.subr.bf16.mxu0 0
    %5145 = vmatpush1.bf16.msra.mxu0 0
    %5146 = vmatprep.subr.bf16.mxu0 0
    %5147 = vmatpush1.bf16.msra.mxu0 0
    %5148 = vmatprep.subr.bf16.mxu0 0
    %5149 = vmatpush1.bf16.msra.mxu0 0
    %5150 = vmatprep.subr.bf16.mxu0 0
    %5151 = vmatpush1.bf16.msra.mxu0 0
    %5152 = vmatprep.mubr.bf16.mxu0 0
    %5153 = vmatmul.mubr.bf16.gmra.mrb[0].mxu0 %v5118
    %v5154 = vpop.f32.mrb[0].mxu0
    %v5155 = vadd.f32 0.0, %v5154
    %v5156 = vpop.f32.mrb[0].mxu0
    %v5157 = vpop.f32.mrb[0].mxu0
    %v5158 = vpop.f32.mrb[0].mxu0
    %5159 = vdwg.mxu0
    %v5161 = vsel %vm1251, %v4846, 0
    %5163 = vmatprep.subr.bf16.mxu0 0
    %5164 = vmatpush1.bf16.msra.mxu0 %v4989
    %5165 = vmatprep.subr.bf16.mxu0 0
    %5166 = vmatpush1.bf16.msra.mxu0 0
    %5167 = vmatprep.subr.bf16.mxu0 0
    %5168 = vmatpush1.bf16.msra.mxu0 0
    %5169 = vmatprep.subr.bf16.mxu0 0
    %5170 = vmatpush1.bf16.msra.mxu0 0
    %5171 = vmatprep.subr.bf16.mxu0 0
    %5172 = vmatpush1.bf16.msra.mxu0 0
    %5173 = vmatprep.subr.bf16.mxu0 0
    %5174 = vmatpush1.bf16.msra.mxu0 0
    %5175 = vmatprep.subr.bf16.mxu0 0
    %5176 = vmatpush1.bf16.msra.mxu0 0
    %5177 = vmatprep.subr.bf16.mxu0 0
    %5178 = vmatpush1.bf16.msra.mxu0 0
    %5179 = vmatprep.subr.bf16.mxu0 0
    %5180 = vmatpush1.bf16.msra.mxu0 0
    %5181 = vmatprep.subr.bf16.mxu0 0
    %5182 = vmatpush1.bf16.msra.mxu0 0
    %5183 = vmatprep.subr.bf16.mxu0 0
    %5184 = vmatpush1.bf16.msra.mxu0 0
    %5185 = vmatprep.subr.bf16.mxu0 0
    %5186 = vmatpush1.bf16.msra.mxu0 0
    %5187 = vmatprep.subr.bf16.mxu0 0
    %5188 = vmatpush1.bf16.msra.mxu0 0
    %5189 = vmatprep.subr.bf16.mxu0 0
    %5190 = vmatpush1.bf16.msra.mxu0 0
    %5191 = vmatprep.subr.bf16.mxu0 0
    %5192 = vmatpush1.bf16.msra.mxu0 0
    %5193 = vmatprep.subr.bf16.mxu0 0
    %5194 = vmatpush1.bf16.msra.mxu0 0
    %5195 = vmatprep.mubr.bf16.mxu0 0
    %5196 = vmatmul.mubr.bf16.gmra.mrb[0].mxu0 %v5161
    %v5197 = vpop.f32.mrb[0].mxu0
    %v5198 = vadd.f32 0.0, %v5197
    %v5199 = vpop.f32.mrb[0].mxu0
    %v5200 = vpop.f32.mrb[0].mxu0
    %v5201 = vpop.f32.mrb[0].mxu0
    %5202 = vdwg.mxu0
    %v5203 = vadd.f32 %v4888, %v4934
    %v5204 = vadd.f32 %v5069, %v5112
    %v5205 = vadd.f32 %v5203, %v4980
    %v5206 = vadd.f32 %v5204, %v5155
    %v5207 = vadd.f32 %v5205, %v5026
    %v5208 = vadd.f32 %v5206, %v5198
    %v5209 = vadd.f32 %v2771, %v5207
    %v5210 = vadd.f32 %v2772, %v5208
    %v5211 = vsel %vm136, %v5209, 0.0
    %5212 = vadd.xlane.f32.xlu0 %v5211
    %v5213 = vpop.xlane.xlu0 %5212
    %v5214 = vsel %vm136, %v5210, 0.0
    %5215 = vadd.xlane.f32.xlu0 %v5214
    %v5216 = vpop.xlane.xlu0 %5215
    %v5217 = vmul.f32 %v5213, %v2535
    %v5218 = vmul.f32 %v5216, %v2535
    %v5219 = vsub.f32 %v5209, %v5217
    %v5220 = vsub.f32 %v5210, %v5218
    %v5221 = vmul.f32 %v5219, %v5219
    %v5222 = vmul.f32 %v5220, %v5220
    %v5223 = vsel %vm136, %v5221, 0.0
    %5224 = vadd.xlane.f32.xlu0 %v5223
    %v5225 = vpop.xlane.xlu0 %5224
    %v5226 = vsel %vm136, %v5222, 0.0
    %5227 = vadd.xlane.f32.xlu0 %v5226
    %v5228 = vpop.xlane.xlu0 %5227
    %v5229 = vmul.f32 %v5225, %v2535
    %v5230 = vmul.f32 %v5228, %v2535
    %v5231 = vadd.f32 %v5229, 1e-05
    %v5232 = vadd.f32 %v5230, 1e-05
    %v5233 = vrsqrt.pop %v5231
    %v5234 = vrsqrt.pop %v5232
    %v5235 = vmul.f32 %v5219, %v5233
    %v5236 = vmul.f32 %v5220, %v5234
    %v5238 = vlaneseq
    %v5239 = vshrl.u32 %v5238, 7
    %v5240 = vsub.s32 0, %v5239
    %v5241 = vrot.slane %v2848, %v5240
    %v5243 = vmul.f32 %v5235, %v5241
    %v5244 = vmul.f32 %v5236, %v5241
    %v5246 = vlaneseq
    %v5247 = vshrl.u32 %v5246, 7
    %v5248 = vsub.s32 0, %v5247
    %v5249 = vrot.slane %v2850, %v5248
    %v5251 = vadd.f32 %v5243, %v5249
    %v5252 = vadd.f32 %v5244, %v5249
    %v5253 = vpack.c.bf16 %v5252, %v5251
    %v5255 = vlaneseq
    %v5256 = vshrl.u32 %v5255, 7
    %v5257 = vsub.s32 0, %v5256
    %v5258 = vrot.slane %v2835, %v5257
    %v5264 = vunpack.c.l.b16 %v2830
    %v5265 = vunpack.c.l.b16 %v2831
    %v5266 = vunpack.c.l.b16 %v2832
    %v5267 = vunpack.c.l.b16 %v2833
    %v5268 = vpack.c.b16 %v5265, %v5264
    %v5269 = vpack.c.b16 %v5267, %v5266
    %v5273 = vsel %vm136, %v5253, 0
    %5275 = vmatprep.subr.bf16.mxu0 0
    %5276 = vmatpush1.bf16.msra.mxu0 %v5268
    %5277 = vmatprep.subr.bf16.mxu0 0
    %5278 = vmatpush1.bf16.msra.mxu0 %v5269
    %5279 = vmatprep.subr.bf16.mxu0 0
    %5280 = vmatpush1.bf16.msra.mxu0 0
    %5281 = vmatprep.subr.bf16.mxu0 0
    %5282 = vmatpush1.bf16.msra.mxu0 0
    %5283 = vmatprep.subr.bf16.mxu0 0
    %5284 = vmatpush1.bf16.msra.mxu0 0
    %5285 = vmatprep.subr.bf16.mxu0 0
    %5286 = vmatpush1.bf16.msra.mxu0 0
    %5287 = vmatprep.subr.bf16.mxu0 0
    %5288 = vmatpush1.bf16.msra.mxu0 0
    %5289 = vmatprep.subr.bf16.mxu0 0
    %5290 = vmatpush1.bf16.msra.mxu0 0
    %5291 = vmatprep.subr.bf16.mxu0 0
    %5292 = vmatpush1.bf16.msra.mxu0 0
    %5293 = vmatprep.subr.bf16.mxu0 0
    %5294 = vmatpush1.bf16.msra.mxu0 0
    %5295 = vmatprep.subr.bf16.mxu0 0
    %5296 = vmatpush1.bf16.msra.mxu0 0
    %5297 = vmatprep.subr.bf16.mxu0 0
    %5298 = vmatpush1.bf16.msra.mxu0 0
    %5299 = vmatprep.subr.bf16.mxu0 0
    %5300 = vmatpush1.bf16.msra.mxu0 0
    %5301 = vmatprep.subr.bf16.mxu0 0
    %5302 = vmatpush1.bf16.msra.mxu0 0
    %5303 = vmatprep.subr.bf16.mxu0 0
    %5304 = vmatpush1.bf16.msra.mxu0 0
    %5305 = vmatprep.subr.bf16.mxu0 0
    %5306 = vmatpush1.bf16.msra.mxu0 0
    %5307 = vmatprep.mubr.bf16.mxu0 0
    %5308 = vmatmul.mubr.bf16.gmra.mrb[0].mxu0 %v5273
    %v5309 = vpop.f32.mrb[0].mxu0
    %v5310 = vadd.f32 %v5258, %v5309
    %v5311 = vpop.f32.mrb[0].mxu0
    %v5312 = vpop.f32.mrb[0].mxu0
    %v5313 = vadd.f32 %v5258, %v5312
    %v5314 = vpop.f32.mrb[0].mxu0
    %5315 = vdwg.mxu0
    %v5316 = vmul.f32 %v5310, 0.5
    %v5317 = vmul.f32 %v5313, 0.5
    %v5318 = vmul.f32 %v5310, 0.044715
    %v5319 = vmul.f32 %v5313, 0.044715
    %v5320 = vmul.f32 %v5318, %v5310
    %v5321 = vmul.f32 %v5319, %v5313
    %v5322 = vmul.f32 %v5320, %v5310
    %v5323 = vmul.f32 %v5321, %v5313
    %v5324 = vadd.f32 %v5310, %v5322
    %v5325 = vadd.f32 %v5313, %v5323
    %v5326 = vmul.f32 %v5324, 0.7978846
    %v5327 = vmul.f32 %v5325, 0.7978846
    %v5328 = vtanh.pop %v5326
    %v5329 = vtanh.pop %v5327
    %v5330 = vadd.f32 %v5328, 1.0
    %v5331 = vadd.f32 %v5329, 1.0
    %v5332 = vmul.f32 %v5316, %v5330
    %v5333 = vmul.f32 %v5317, %v5331
    %v5334 = vpack.c.bf16 %v5333, %v5332
    %v5336 = vlaneseq
    %v5337 = vshrl.u32 %v5336, 7
    %v5338 = vsub.s32 0, %v5337
    %v5339 = vrot.slane %v2846, %v5338
    %v5349 = vunpack.c.l.b16 %v2837
    %v5350 = vunpack.c.l.b16 %v2838
    %v5351 = vunpack.c.l.b16 %v2839
    %v5352 = vunpack.c.l.b16 %v2840
    %v5353 = vunpack.c.l.b16 %v2841
    %v5354 = vunpack.c.l.b16 %v2842
    %v5355 = vunpack.c.l.b16 %v2843
    %v5356 = vunpack.c.l.b16 %v2844
    %v5357 = vpack.c.b16 %v5350, %v5349
    %v5358 = vpack.c.b16 %v5352, %v5351
    %v5359 = vpack.c.b16 %v5354, %v5353
    %v5360 = vpack.c.b16 %v5356, %v5355
    %v5366 = vsel %vm2684, %v5334, 0
    %5368 = vmatprep.subr.bf16.mxu0 0
    %5369 = vmatpush1.bf16.msra.mxu0 %v5357
    %5370 = vmatprep.subr.bf16.mxu0 0
    %5371 = vmatpush1.bf16.msra.mxu0 %v5358
    %5372 = vmatprep.subr.bf16.mxu0 0
    %5373 = vmatpush1.bf16.msra.mxu0 %v5359
    %5374 = vmatprep.subr.bf16.mxu0 0
    %5375 = vmatpush1.bf16.msra.mxu0 %v5360
    %5376 = vmatprep.subr.bf16.mxu0 0
    %5377 = vmatpush1.bf16.msra.mxu0 0
    %5378 = vmatprep.subr.bf16.mxu0 0
    %5379 = vmatpush1.bf16.msra.mxu0 0
    %5380 = vmatprep.subr.bf16.mxu0 0
    %5381 = vmatpush1.bf16.msra.mxu0 0
    %5382 = vmatprep.subr.bf16.mxu0 0
    %5383 = vmatpush1.bf16.msra.mxu0 0
    %5384 = vmatprep.subr.bf16.mxu0 0
    %5385 = vmatpush1.bf16.msra.mxu0 0
    %5386 = vmatprep.subr.bf16.mxu0 0
    %5387 = vmatpush1.bf16.msra.mxu0 0
    %5388 = vmatprep.subr.bf16.mxu0 0
    %5389 = vmatpush1.bf16.msra.mxu0 0
    %5390 = vmatprep.subr.bf16.mxu0 0
    %5391 = vmatpush1.bf16.msra.mxu0 0
    %5392 = vmatprep.subr.bf16.mxu0 0
    %5393 = vmatpush1.bf16.msra.mxu0 0
    %5394 = vmatprep.subr.bf16.mxu0 0
    %5395 = vmatpush1.bf16.msra.mxu0 0
    %5396 = vmatprep.subr.bf16.mxu0 0
    %5397 = vmatpush1.bf16.msra.mxu0 0
    %5398 = vmatprep.subr.bf16.mxu0 0
    %5399 = vmatpush1.bf16.msra.mxu0 0
    %5400 = vmatprep.mubr.bf16.mxu0 0
    %5401 = vmatmul.mubr.bf16.gmra.mrb[0].mxu0 %v5366
    %v5402 = vpop.f32.mrb[0].mxu0
    %v5403 = vadd.f32 %v5339, %v5402
    %v5404 = vpop.f32.mrb[0].mxu0
    %v5405 = vpop.f32.mrb[0].mxu0
    %v5406 = vadd.f32 %v5339, %v5405
    %v5407 = vpop.f32.mrb[0].mxu0
    %5408 = vdwg.mxu0
    %v5409 = vadd.f32 %v5251, %v5403
    %v5410 = vadd.f32 %v5252, %v5406
    %v5411 = vsel %vm136, %v5409, 0.0
    %5412 = vadd.xlane.f32.xlu0 %v5411
    %v5413 = vpop.xlane.xlu0 %5412
    %v5414 = vsel %vm136, %v5410, 0.0
    %5415 = vadd.xlane.f32.xlu0 %v5414
    %v5416 = vpop.xlane.xlu0 %5415
    %v5417 = vmul.f32 %v5413, %v2535
    %v5418 = vmul.f32 %v5416, %v2535
    %v5419 = vsub.f32 %v5409, %v5417
    %v5420 = vsub.f32 %v5410, %v5418
    %v5421 = vmul.f32 %v5419, %v5419
    %v5422 = vmul.f32 %v5420, %v5420
    %v5423 = vsel %vm136, %v5421, 0.0
    %5424 = vadd.xlane.f32.xlu0 %v5423
    %v5425 = vpop.xlane.xlu0 %5424
    %v5426 = vsel %vm136, %v5422, 0.0
    %5427 = vadd.xlane.f32.xlu0 %v5426
    %v5428 = vpop.xlane.xlu0 %5427
    %v5429 = vmul.f32 %v5425, %v2535
    %v5430 = vmul.f32 %v5428, %v2535
    %v5431 = vadd.f32 %v5429, 1e-05
    %v5432 = vadd.f32 %v5430, 1e-05
    %v5433 = vrsqrt.pop %v5431
    %v5434 = vrsqrt.pop %v5432
    %v5435 = vmul.f32 %v5419, %v5433
    %v5436 = vmul.f32 %v5420, %v5434
    %v5438 = vlaneseq
    %v5439 = vshrl.u32 %v5438, 7
    %v5440 = vsub.s32 0, %v5439
    %v5441 = vrot.slane %v2852, %v5440
    %v5443 = vmul.f32 %v5435, %v5441
    %v5444 = vmul.f32 %v5436, %v5441
    %v5446 = vlaneseq
    %v5447 = vshrl.u32 %v5446, 7
    %v5448 = vsub.s32 0, %v5447
    %v5449 = vrot.slane %v2854, %v5448
    %v5451 = vadd.f32 %v5443, %v5449
    %v5452 = vadd.f32 %v5444, %v5449
    %s5453 = scalar_lea.vmem %s2, 384
    %v5454 = vld [vmem:[%s5453] sm:$0xf]
    %v5455 = vld [vmem:[%s5453 + $0x4] sm:$0xf]
    %v5456 = vld [vmem:[%s5453 + $0x8] sm:$0xf]
    %v5457 = vld [vmem:[%s5453 + $0xc] sm:$0xf]
    %v5458 = vld [vmem:[%s5453 + $0x10] sm:$0xf]
    %v5459 = vld [vmem:[%s5453 + $0x14] sm:$0xf]
    %v5460 = vld [vmem:[%s5453 + $0x18] sm:$0xf]
    %v5461 = vld [vmem:[%s5453 + $0x1c] sm:$0xf]
    %v5462 = vld [vmem:[%s5453 + $0x20] sm:$0xf]
    %v5463 = vld [vmem:[%s5453 + $0x24] sm:$0xf]
    %v5464 = vld [vmem:[%s5453 + $0x28] sm:$0xf]
    %v5465 = vld [vmem:[%s5453 + $0x2c] sm:$0xf]
    %v5466 = vld [vmem:[%s5453 + $0x30] sm:$0xf]
    %v5467 = vld [vmem:[%s5453 + $0x34] sm:$0xf]
    %v5468 = vld [vmem:[%s5453 + $0x38] sm:$0xf]
    %v5469 = vld [vmem:[%s5453 + $0x3c] sm:$0xf]
    %s5470 = scalar_lea.vmem %s2, 448
    %v5471 = vld [vmem:[%s5470] sm:$0xf]
    %v5472 = vld [vmem:[%s5470 + $0x4] sm:$0xf]
    %v5473 = vld [vmem:[%s5470 + $0x8] sm:$0xf]
    %v5474 = vld [vmem:[%s5470 + $0xc] sm:$0xf]
    %v5475 = vld [vmem:[%s5470 + $0x10] sm:$0xf]
    %v5476 = vld [vmem:[%s5470 + $0x14] sm:$0xf]
    %v5477 = vld [vmem:[%s5470 + $0x18] sm:$0xf]
    %v5478 = vld [vmem:[%s5470 + $0x1c] sm:$0xf]
    %v5479 = vld [vmem:[%s5470 + $0x20] sm:$0xf]
    %v5480 = vld [vmem:[%s5470 + $0x24] sm:$0xf]
    %v5481 = vld [vmem:[%s5470 + $0x28] sm:$0xf]
    %v5482 = vld [vmem:[%s5470 + $0x2c] sm:$0xf]
    %v5483 = vld [vmem:[%s5470 + $0x30] sm:$0xf]
    %v5484 = vld [vmem:[%s5470 + $0x34] sm:$0xf]
    %v5485 = vld [vmem:[%s5470 + $0x38] sm:$0xf]
    %v5486 = vld [vmem:[%s5470 + $0x3c] sm:$0xf]
    %s5487 = scalar_lea.vmem %s2, 512
    %v5488 = vld [vmem:[%s5487] sm:$0xf]
    %v5489 = vld [vmem:[%s5487 + $0x4] sm:$0xf]
    %v5490 = vld [vmem:[%s5487 + $0x8] sm:$0xf]
    %v5491 = vld [vmem:[%s5487 + $0xc] sm:$0xf]
    %v5492 = vld [vmem:[%s5487 + $0x10] sm:$0xf]
    %v5493 = vld [vmem:[%s5487 + $0x14] sm:$0xf]
    %v5494 = vld [vmem:[%s5487 + $0x18] sm:$0xf]
    %v5495 = vld [vmem:[%s5487 + $0x1c] sm:$0xf]
    %v5496 = vld [vmem:[%s5487 + $0x20] sm:$0xf]
    %v5497 = vld [vmem:[%s5487 + $0x24] sm:$0xf]
    %v5498 = vld [vmem:[%s5487 + $0x28] sm:$0xf]
    %v5499 = vld [vmem:[%s5487 + $0x2c] sm:$0xf]
    %v5500 = vld [vmem:[%s5487 + $0x30] sm:$0xf]
    %v5501 = vld [vmem:[%s5487 + $0x34] sm:$0xf]
    %v5502 = vld [vmem:[%s5487 + $0x38] sm:$0xf]
    %v5503 = vld [vmem:[%s5487 + $0x3c] sm:$0xf]
    %s5504 = scalar_lea.vmem %s3, 32
    %v5505 = vld [vmem:[%s5504] sm:$0xf]
    %v5506 = vld [vmem:[%s5504 + $0x4] sm:$0xf]
    %v5507 = vld [vmem:[%s5504 + $0x8] sm:$0xf]
    %v5508 = vld [vmem:[%s5504 + $0xc] sm:$0xf]
    %s5509 = scalar_lea.vmem %s4, 32
    %v5510 = vld [vmem:[%s5509] sm:$0xf]
    %v5511 = vld [vmem:[%s5509 + $0x4] sm:$0xf]
    %v5512 = vld [vmem:[%s5509 + $0x8] sm:$0xf]
    %v5513 = vld [vmem:[%s5509 + $0xc] sm:$0xf]
    %s5514 = scalar_lea.vmem %s5, 2
    %v5515 = vld [vmem:[%s5514] sm:$0x1]
    %s5516 = scalar_lea.vmem %s6, 64
    %v5517 = vld [vmem:[%s5516] sm:$0xf]
    %v5518 = vld [vmem:[%s5516 + $0x4] sm:$0xf]
    %v5519 = vld [vmem:[%s5516 + $0x8] sm:$0xf]
    %v5520 = vld [vmem:[%s5516 + $0xc] sm:$0xf]
    %v5521 = vld [vmem:[%s5516 + $0x10] sm:$0xf]
    %v5522 = vld [vmem:[%s5516 + $0x14] sm:$0xf]
    %v5523 = vld [vmem:[%s5516 + $0x18] sm:$0xf]
    %v5524 = vld [vmem:[%s5516 + $0x1c] sm:$0xf]
    %s5525 = scalar_lea.vmem %s7, 2
    %v5526 = vld [vmem:[%s5525] sm:$0x1]
    %s5527 = scalar_lea.vmem %s8, 8
    %v5528 = vld [vmem:[%s5527] sm:$0x1]
    %s5529 = scalar_lea.vmem %s8, 9
    %v5530 = vld [vmem:[%s5529] sm:$0x1]
    %s5531 = scalar_lea.vmem %s8, 10
    %v5532 = vld [vmem:[%s5531] sm:$0x1]
    %s5533 = scalar_lea.vmem %s8, 11
    %v5534 = vld [vmem:[%s5533] sm:$0x1]
    %v5535 = vpack.c.bf16 %v5451, %v5451
    %v5536 = vpack.c.bf16 %v5452, %v5452
    %v5541 = vunpack.c.l.b16 %v5454
    %v5542 = vunpack.c.l.b16 %v5455
    %v5543 = vunpack.c.l.b16 %v5456
    %v5544 = vunpack.c.l.b16 %v5457
    %v5545 = vpack.c.b16 %v5542, %v5541
    %v5546 = vpack.c.b16 %v5544, %v5543
    %v5550 = vsel %vm136, %v5535, 0
    %5552 = vmatprep.subr.bf16.mxu0 0
    %5553 = vmatpush1.bf16.msra.mxu0 %v5545
    %5554 = vmatprep.subr.bf16.mxu0 0
    %5555 = vmatpush1.bf16.msra.mxu0 %v5546
    %5556 = vmatprep.subr.bf16.mxu0 0
    %5557 = vmatpush1.bf16.msra.mxu0 0
    %5558 = vmatprep.subr.bf16.mxu0 0
    %5559 = vmatpush1.bf16.msra.mxu0 0
    %5560 = vmatprep.subr.bf16.mxu0 0
    %5561 = vmatpush1.bf16.msra.mxu0 0
    %5562 = vmatprep.subr.bf16.mxu0 0
    %5563 = vmatpush1.bf16.msra.mxu0 0
    %5564 = vmatprep.subr.bf16.mxu0 0
    %5565 = vmatpush1.bf16.msra.mxu0 0
    %5566 = vmatprep.subr.bf16.mxu0 0
    %5567 = vmatpush1.bf16.msra.mxu0 0
    %5568 = vmatprep.subr.bf16.mxu0 0
    %5569 = vmatpush1.bf16.msra.mxu0 0
    %5570 = vmatprep.subr.bf16.mxu0 0
    %5571 = vmatpush1.bf16.msra.mxu0 0
    %5572 = vmatprep.subr.bf16.mxu0 0
    %5573 = vmatpush1.bf16.msra.mxu0 0
    %5574 = vmatprep.subr.bf16.mxu0 0
    %5575 = vmatpush1.bf16.msra.mxu0 0
    %5576 = vmatprep.subr.bf16.mxu0 0
    %5577 = vmatpush1.bf16.msra.mxu0 0
    %5578 = vmatprep.subr.bf16.mxu0 0
    %5579 = vmatpush1.bf16.msra.mxu0 0
    %5580 = vmatprep.subr.bf16.mxu0 0
    %5581 = vmatpush1.bf16.msra.mxu0 0
    %5582 = vmatprep.subr.bf16.mxu0 0
    %5583 = vmatpush1.bf16.msra.mxu0 0
    %5584 = vmatprep.mubr.bf16.mxu0 0
    %5585 = vmatmul.mubr.bf16.gmra.mrb[0].mxu0 %v5550
    %v5586 = vpop.f32.mrb[0].mxu0
    %v5587 = vadd.f32 0.0, %v5586
    %v5588 = vpop.f32.mrb[0].mxu0
    %v5589 = vpop.f32.mrb[0].mxu0
    %v5590 = vpop.f32.mrb[0].mxu0
    %5591 = vdwg.mxu0
    %v5596 = vunpack.c.l.b16 %v5458
    %v5597 = vunpack.c.l.b16 %v5459
    %v5598 = vunpack.c.l.b16 %v5460
    %v5599 = vunpack.c.l.b16 %v5461
    %v5600 = vpack.c.b16 %v5597, %v5596
    %v5601 = vpack.c.b16 %v5599, %v5598
    %5604 = vmatprep.subr.bf16.mxu0 0
    %5605 = vmatpush1.bf16.msra.mxu0 %v5600
    %5606 = vmatprep.subr.bf16.mxu0 0
    %5607 = vmatpush1.bf16.msra.mxu0 %v5601
    %5608 = vmatprep.subr.bf16.mxu0 0
    %5609 = vmatpush1.bf16.msra.mxu0 0
    %5610 = vmatprep.subr.bf16.mxu0 0
    %5611 = vmatpush1.bf16.msra.mxu0 0
    %5612 = vmatprep.subr.bf16.mxu0 0
    %5613 = vmatpush1.bf16.msra.mxu0 0
    %5614 = vmatprep.subr.bf16.mxu0 0
    %5615 = vmatpush1.bf16.msra.mxu0 0
    %5616 = vmatprep.subr.bf16.mxu0 0
    %5617 = vmatpush1.bf16.msra.mxu0 0
    %5618 = vmatprep.subr.bf16.mxu0 0
    %5619 = vmatpush1.bf16.msra.mxu0 0
    %5620 = vmatprep.subr.bf16.mxu0 0
    %5621 = vmatpush1.bf16.msra.mxu0 0
    %5622 = vmatprep.subr.bf16.mxu0 0
    %5623 = vmatpush1.bf16.msra.mxu0 0
    %5624 = vmatprep.subr.bf16.mxu0 0
    %5625 = vmatpush1.bf16.msra.mxu0 0
    %5626 = vmatprep.subr.bf16.mxu0 0
    %5627 = vmatpush1.bf16.msra.mxu0 0
    %5628 = vmatprep.subr.bf16.mxu0 0
    %5629 = vmatpush1.bf16.msra.mxu0 0
    %5630 = vmatprep.subr.bf16.mxu0 0
    %5631 = vmatpush1.bf16.msra.mxu0 0
    %5632 = vmatprep.subr.bf16.mxu0 0
    %5633 = vmatpush1.bf16.msra.mxu0 0
    %5634 = vmatprep.subr.bf16.mxu0 0
    %5635 = vmatpush1.bf16.msra.mxu0 0
    %5636 = vmatprep.mubr.bf16.mxu0 0
    %5637 = vmatmul.mubr.bf16.gmra.mrb[0].mxu0 %v5550
    %v5638 = vpop.f32.mrb[0].mxu0
    %v5639 = vadd.f32 0.0, %v5638
    %v5640 = vpop.f32.mrb[0].mxu0
    %v5641 = vpop.f32.mrb[0].mxu0
    %v5642 = vpop.f32.mrb[0].mxu0
    %5643 = vdwg.mxu0
    %v5648 = vunpack.c.l.b16 %v5462
    %v5649 = vunpack.c.l.b16 %v5463
    %v5650 = vunpack.c.l.b16 %v5464
    %v5651 = vunpack.c.l.b16 %v5465
    %v5652 = vpack.c.b16 %v5649, %v5648
    %v5653 = vpack.c.b16 %v5651, %v5650
    %5656 = vmatprep.subr.bf16.mxu0 0
    %5657 = vmatpush1.bf16.msra.mxu0 %v5652
    %5658 = vmatprep.subr.bf16.mxu0 0
    %5659 = vmatpush1.bf16.msra.mxu0 %v5653
    %5660 = vmatprep.subr.bf16.mxu0 0
    %5661 = vmatpush1.bf16.msra.mxu0 0
    %5662 = vmatprep.subr.bf16.mxu0 0
    %5663 = vmatpush1.bf16.msra.mxu0 0
    %5664 = vmatprep.subr.bf16.mxu0 0
    %5665 = vmatpush1.bf16.msra.mxu0 0
    %5666 = vmatprep.subr.bf16.mxu0 0
    %5667 = vmatpush1.bf16.msra.mxu0 0
    %5668 = vmatprep.subr.bf16.mxu0 0
    %5669 = vmatpush1.bf16.msra.mxu0 0
    %5670 = vmatprep.subr.bf16.mxu0 0
    %5671 = vmatpush1.bf16.msra.mxu0 0
    %5672 = vmatprep.subr.bf16.mxu0 0
    %5673 = vmatpush1.bf16.msra.mxu0 0
    %5674 = vmatprep.subr.bf16.mxu0 0
    %5675 = vmatpush1.bf16.msra.mxu0 0
    %5676 = vmatprep.subr.bf16.mxu0 0
    %5677 = vmatpush1.bf16.msra.mxu0 0
    %5678 = vmatprep.subr.bf16.mxu0 0
    %5679 = vmatpush1.bf16.msra.mxu0 0
    %5680 = vmatprep.subr.bf16.mxu0 0
    %5681 = vmatpush1.bf16.msra.mxu0 0
    %5682 = vmatprep.subr.bf16.mxu0 0
    %5683 = vmatpush1.bf16.msra.mxu0 0
    %5684 = vmatprep.subr.bf16.mxu0 0
    %5685 = vmatpush1.bf16.msra.mxu0 0
    %5686 = vmatprep.subr.bf16.mxu0 0
    %5687 = vmatpush1.bf16.msra.mxu0 0
    %5688 = vmatprep.mubr.bf16.mxu0 0
    %5689 = vmatmul.mubr.bf16.gmra.mrb[0].mxu0 %v5550
    %v5690 = vpop.f32.mrb[0].mxu0
    %v5691 = vadd.f32 0.0, %v5690
    %v5692 = vpop.f32.mrb[0].mxu0
    %v5693 = vpop.f32.mrb[0].mxu0
    %v5694 = vpop.f32.mrb[0].mxu0
    %5695 = vdwg.mxu0
    %v5700 = vunpack.c.l.b16 %v5466
    %v5701 = vunpack.c.l.b16 %v5467
    %v5702 = vunpack.c.l.b16 %v5468
    %v5703 = vunpack.c.l.b16 %v5469
    %v5704 = vpack.c.b16 %v5701, %v5700
    %v5705 = vpack.c.b16 %v5703, %v5702
    %5708 = vmatprep.subr.bf16.mxu0 0
    %5709 = vmatpush1.bf16.msra.mxu0 %v5704
    %5710 = vmatprep.subr.bf16.mxu0 0
    %5711 = vmatpush1.bf16.msra.mxu0 %v5705
    %5712 = vmatprep.subr.bf16.mxu0 0
    %5713 = vmatpush1.bf16.msra.mxu0 0
    %5714 = vmatprep.subr.bf16.mxu0 0
    %5715 = vmatpush1.bf16.msra.mxu0 0
    %5716 = vmatprep.subr.bf16.mxu0 0
    %5717 = vmatpush1.bf16.msra.mxu0 0
    %5718 = vmatprep.subr.bf16.mxu0 0
    %5719 = vmatpush1.bf16.msra.mxu0 0
    %5720 = vmatprep.subr.bf16.mxu0 0
    %5721 = vmatpush1.bf16.msra.mxu0 0
    %5722 = vmatprep.subr.bf16.mxu0 0
    %5723 = vmatpush1.bf16.msra.mxu0 0
    %5724 = vmatprep.subr.bf16.mxu0 0
    %5725 = vmatpush1.bf16.msra.mxu0 0
    %5726 = vmatprep.subr.bf16.mxu0 0
    %5727 = vmatpush1.bf16.msra.mxu0 0
    %5728 = vmatprep.subr.bf16.mxu0 0
    %5729 = vmatpush1.bf16.msra.mxu0 0
    %5730 = vmatprep.subr.bf16.mxu0 0
    %5731 = vmatpush1.bf16.msra.mxu0 0
    %5732 = vmatprep.subr.bf16.mxu0 0
    %5733 = vmatpush1.bf16.msra.mxu0 0
    %5734 = vmatprep.subr.bf16.mxu0 0
    %5735 = vmatpush1.bf16.msra.mxu0 0
    %5736 = vmatprep.subr.bf16.mxu0 0
    %5737 = vmatpush1.bf16.msra.mxu0 0
    %5738 = vmatprep.subr.bf16.mxu0 0
    %5739 = vmatpush1.bf16.msra.mxu0 0
    %5740 = vmatprep.mubr.bf16.mxu0 0
    %5741 = vmatmul.mubr.bf16.gmra.mrb[0].mxu0 %v5550
    %v5742 = vpop.f32.mrb[0].mxu0
    %v5743 = vadd.f32 0.0, %v5742
    %v5744 = vpop.f32.mrb[0].mxu0
    %v5745 = vpop.f32.mrb[0].mxu0
    %v5746 = vpop.f32.mrb[0].mxu0
    %5747 = vdwg.mxu0
    %v5749 = vsel %vm136, %v5536, 0
    %5751 = vmatprep.subr.bf16.mxu0 0
    %5752 = vmatpush1.bf16.msra.mxu0 %v5545
    %5753 = vmatprep.subr.bf16.mxu0 0
    %5754 = vmatpush1.bf16.msra.mxu0 %v5546
    %5755 = vmatprep.subr.bf16.mxu0 0
    %5756 = vmatpush1.bf16.msra.mxu0 0
    %5757 = vmatprep.subr.bf16.mxu0 0
    %5758 = vmatpush1.bf16.msra.mxu0 0
    %5759 = vmatprep.subr.bf16.mxu0 0
    %5760 = vmatpush1.bf16.msra.mxu0 0
    %5761 = vmatprep.subr.bf16.mxu0 0
    %5762 = vmatpush1.bf16.msra.mxu0 0
    %5763 = vmatprep.subr.bf16.mxu0 0
    %5764 = vmatpush1.bf16.msra.mxu0 0
    %5765 = vmatprep.subr.bf16.mxu0 0
    %5766 = vmatpush1.bf16.msra.mxu0 0
    %5767 = vmatprep.subr.bf16.mxu0 0
    %5768 = vmatpush1.bf16.msra.mxu0 0
    %5769 = vmatprep.subr.bf16.mxu0 0
    %5770 = vmatpush1.bf16.msra.mxu0 0
    %5771 = vmatprep.subr.bf16.mxu0 0
    %5772 = vmatpush1.bf16.msra.mxu0 0
    %5773 = vmatprep.subr.bf16.mxu0 0
    %5774 = vmatpush1.bf16.msra.mxu0 0
    %5775 = vmatprep.subr.bf16.mxu0 0
    %5776 = vmatpush1.bf16.msra.mxu0 0
    %5777 = vmatprep.subr.bf16.mxu0 0
    %5778 = vmatpush1.bf16.msra.mxu0 0
    %5779 = vmatprep.subr.bf16.mxu0 0
    %5780 = vmatpush1.bf16.msra.mxu0 0
    %5781 = vmatprep.subr.bf16.mxu0 0
    %5782 = vmatpush1.bf16.msra.mxu0 0
    %5783 = vmatprep.mubr.bf16.mxu0 0
    %5784 = vmatmul.mubr.bf16.gmra.mrb[0].mxu0 %v5749
    %v5785 = vpop.f32.mrb[0].mxu0
    %v5786 = vadd.f32 0.0, %v5785
    %v5787 = vpop.f32.mrb[0].mxu0
    %v5788 = vpop.f32.mrb[0].mxu0
    %v5789 = vpop.f32.mrb[0].mxu0
    %5790 = vdwg.mxu0
    %5791 = vmatprep.subr.bf16.mxu0 0
    %5792 = vmatpush1.bf16.msra.mxu0 %v5600
    %5793 = vmatprep.subr.bf16.mxu0 0
    %5794 = vmatpush1.bf16.msra.mxu0 %v5601
    %5795 = vmatprep.subr.bf16.mxu0 0
    %5796 = vmatpush1.bf16.msra.mxu0 0
    %5797 = vmatprep.subr.bf16.mxu0 0
    %5798 = vmatpush1.bf16.msra.mxu0 0
    %5799 = vmatprep.subr.bf16.mxu0 0
    %5800 = vmatpush1.bf16.msra.mxu0 0
    %5801 = vmatprep.subr.bf16.mxu0 0
    %5802 = vmatpush1.bf16.msra.mxu0 0
    %5803 = vmatprep.subr.bf16.mxu0 0
    %5804 = vmatpush1.bf16.msra.mxu0 0
    %5805 = vmatprep.subr.bf16.mxu0 0
    %5806 = vmatpush1.bf16.msra.mxu0 0
    %5807 = vmatprep.subr.bf16.mxu0 0
    %5808 = vmatpush1.bf16.msra.mxu0 0
    %5809 = vmatprep.subr.bf16.mxu0 0
    %5810 = vmatpush1.bf16.msra.mxu0 0
    %5811 = vmatprep.subr.bf16.mxu0 0
    %5812 = vmatpush1.bf16.msra.mxu0 0
    %5813 = vmatprep.subr.bf16.mxu0 0
    %5814 = vmatpush1.bf16.msra.mxu0 0
    %5815 = vmatprep.subr.bf16.mxu0 0
    %5816 = vmatpush1.bf16.msra.mxu0 0
    %5817 = vmatprep.subr.bf16.mxu0 0
    %5818 = vmatpush1.bf16.msra.mxu0 0
    %5819 = vmatprep.subr.bf16.mxu0 0
    %5820 = vmatpush1.bf16.msra.mxu0 0
    %5821 = vmatprep.subr.bf16.mxu0 0
    %5822 = vmatpush1.bf16.msra.mxu0 0
    %5823 = vmatprep.mubr.bf16.mxu0 0
    %5824 = vmatmul.mubr.bf16.gmra.mrb[0].mxu0 %v5749
    %v5825 = vpop.f32.mrb[0].mxu0
    %v5826 = vadd.f32 0.0, %v5825
    %v5827 = vpop.f32.mrb[0].mxu0
    %v5828 = vpop.f32.mrb[0].mxu0
    %v5829 = vpop.f32.mrb[0].mxu0
    %5830 = vdwg.mxu0
    %5831 = vmatprep.subr.bf16.mxu0 0
    %5832 = vmatpush1.bf16.msra.mxu0 %v5652
    %5833 = vmatprep.subr.bf16.mxu0 0
    %5834 = vmatpush1.bf16.msra.mxu0 %v5653
    %5835 = vmatprep.subr.bf16.mxu0 0
    %5836 = vmatpush1.bf16.msra.mxu0 0
    %5837 = vmatprep.subr.bf16.mxu0 0
    %5838 = vmatpush1.bf16.msra.mxu0 0
    %5839 = vmatprep.subr.bf16.mxu0 0
    %5840 = vmatpush1.bf16.msra.mxu0 0
    %5841 = vmatprep.subr.bf16.mxu0 0
    %5842 = vmatpush1.bf16.msra.mxu0 0
    %5843 = vmatprep.subr.bf16.mxu0 0
    %5844 = vmatpush1.bf16.msra.mxu0 0
    %5845 = vmatprep.subr.bf16.mxu0 0
    %5846 = vmatpush1.bf16.msra.mxu0 0
    %5847 = vmatprep.subr.bf16.mxu0 0
    %5848 = vmatpush1.bf16.msra.mxu0 0
    %5849 = vmatprep.subr.bf16.mxu0 0
    %5850 = vmatpush1.bf16.msra.mxu0 0
    %5851 = vmatprep.subr.bf16.mxu0 0
    %5852 = vmatpush1.bf16.msra.mxu0 0
    %5853 = vmatprep.subr.bf16.mxu0 0
    %5854 = vmatpush1.bf16.msra.mxu0 0
    %5855 = vmatprep.subr.bf16.mxu0 0
    %5856 = vmatpush1.bf16.msra.mxu0 0
    %5857 = vmatprep.subr.bf16.mxu0 0
    %5858 = vmatpush1.bf16.msra.mxu0 0
    %5859 = vmatprep.subr.bf16.mxu0 0
    %5860 = vmatpush1.bf16.msra.mxu0 0
    %5861 = vmatprep.subr.bf16.mxu0 0
    %5862 = vmatpush1.bf16.msra.mxu0 0
    %5863 = vmatprep.mubr.bf16.mxu0 0
    %5864 = vmatmul.mubr.bf16.gmra.mrb[0].mxu0 %v5749
    %v5865 = vpop.f32.mrb[0].mxu0
    %v5866 = vadd.f32 0.0, %v5865
    %v5867 = vpop.f32.mrb[0].mxu0
    %v5868 = vpop.f32.mrb[0].mxu0
    %v5869 = vpop.f32.mrb[0].mxu0
    %5870 = vdwg.mxu0
    %5871 = vmatprep.subr.bf16.mxu0 0
    %5872 = vmatpush1.bf16.msra.mxu0 %v5704
    %5873 = vmatprep.subr.bf16.mxu0 0
    %5874 = vmatpush1.bf16.msra.mxu0 %v5705
    %5875 = vmatprep.subr.bf16.mxu0 0
    %5876 = vmatpush1.bf16.msra.mxu0 0
    %5877 = vmatprep.subr.bf16.mxu0 0
    %5878 = vmatpush1.bf16.msra.mxu0 0
    %5879 = vmatprep.subr.bf16.mxu0 0
    %5880 = vmatpush1.bf16.msra.mxu0 0
    %5881 = vmatprep.subr.bf16.mxu0 0
    %5882 = vmatpush1.bf16.msra.mxu0 0
    %5883 = vmatprep.subr.bf16.mxu0 0
    %5884 = vmatpush1.bf16.msra.mxu0 0
    %5885 = vmatprep.subr.bf16.mxu0 0
    %5886 = vmatpush1.bf16.msra.mxu0 0
    %5887 = vmatprep.subr.bf16.mxu0 0
    %5888 = vmatpush1.bf16.msra.mxu0 0
    %5889 = vmatprep.subr.bf16.mxu0 0
    %5890 = vmatpush1.bf16.msra.mxu0 0
    %5891 = vmatprep.subr.bf16.mxu0 0
    %5892 = vmatpush1.bf16.msra.mxu0 0
    %5893 = vmatprep.subr.bf16.mxu0 0
    %5894 = vmatpush1.bf16.msra.mxu0 0
    %5895 = vmatprep.subr.bf16.mxu0 0
    %5896 = vmatpush1.bf16.msra.mxu0 0
    %5897 = vmatprep.subr.bf16.mxu0 0
    %5898 = vmatpush1.bf16.msra.mxu0 0
    %5899 = vmatprep.subr.bf16.mxu0 0
    %5900 = vmatpush1.bf16.msra.mxu0 0
    %5901 = vmatprep.subr.bf16.mxu0 0
    %5902 = vmatpush1.bf16.msra.mxu0 0
    %5903 = vmatprep.mubr.bf16.mxu0 0
    %5904 = vmatmul.mubr.bf16.gmra.mrb[0].mxu0 %v5749
    %v5905 = vpop.f32.mrb[0].mxu0
    %v5906 = vadd.f32 0.0, %v5905
    %v5907 = vpop.f32.mrb[0].mxu0
    %v5908 = vpop.f32.mrb[0].mxu0
    %v5909 = vpop.f32.mrb[0].mxu0
    %5910 = vdwg.mxu0
    %v5915 = vunpack.c.l.b16 %v5471
    %v5916 = vunpack.c.l.b16 %v5472
    %v5917 = vunpack.c.l.b16 %v5473
    %v5918 = vunpack.c.l.b16 %v5474
    %v5919 = vpack.c.b16 %v5916, %v5915
    %v5920 = vpack.c.b16 %v5918, %v5917
    %5923 = vmatprep.subr.bf16.mxu0 0
    %5924 = vmatpush1.bf16.msra.mxu0 %v5919
    %5925 = vmatprep.subr.bf16.mxu0 0
    %5926 = vmatpush1.bf16.msra.mxu0 %v5920
    %5927 = vmatprep.subr.bf16.mxu0 0
    %5928 = vmatpush1.bf16.msra.mxu0 0
    %5929 = vmatprep.subr.bf16.mxu0 0
    %5930 = vmatpush1.bf16.msra.mxu0 0
    %5931 = vmatprep.subr.bf16.mxu0 0
    %5932 = vmatpush1.bf16.msra.mxu0 0
    %5933 = vmatprep.subr.bf16.mxu0 0
    %5934 = vmatpush1.bf16.msra.mxu0 0
    %5935 = vmatprep.subr.bf16.mxu0 0
    %5936 = vmatpush1.bf16.msra.mxu0 0
    %5937 = vmatprep.subr.bf16.mxu0 0
    %5938 = vmatpush1.bf16.msra.mxu0 0
    %5939 = vmatprep.subr.bf16.mxu0 0
    %5940 = vmatpush1.bf16.msra.mxu0 0
    %5941 = vmatprep.subr.bf16.mxu0 0
    %5942 = vmatpush1.bf16.msra.mxu0 0
    %5943 = vmatprep.subr.bf16.mxu0 0
    %5944 = vmatpush1.bf16.msra.mxu0 0
    %5945 = vmatprep.subr.bf16.mxu0 0
    %5946 = vmatpush1.bf16.msra.mxu0 0
    %5947 = vmatprep.subr.bf16.mxu0 0
    %5948 = vmatpush1.bf16.msra.mxu0 0
    %5949 = vmatprep.subr.bf16.mxu0 0
    %5950 = vmatpush1.bf16.msra.mxu0 0
    %5951 = vmatprep.subr.bf16.mxu0 0
    %5952 = vmatpush1.bf16.msra.mxu0 0
    %5953 = vmatprep.subr.bf16.mxu0 0
    %5954 = vmatpush1.bf16.msra.mxu0 0
    %5955 = vmatprep.mubr.bf16.mxu0 0
    %5956 = vmatmul.mubr.bf16.gmra.mrb[0].mxu0 %v5550
    %v5957 = vpop.f32.mrb[0].mxu0
    %v5958 = vadd.f32 0.0, %v5957
    %v5959 = vpop.f32.mrb[0].mxu0
    %v5960 = vpop.f32.mrb[0].mxu0
    %v5961 = vpop.f32.mrb[0].mxu0
    %5962 = vdwg.mxu0
    %v5967 = vunpack.c.l.b16 %v5475
    %v5968 = vunpack.c.l.b16 %v5476
    %v5969 = vunpack.c.l.b16 %v5477
    %v5970 = vunpack.c.l.b16 %v5478
    %v5971 = vpack.c.b16 %v5968, %v5967
    %v5972 = vpack.c.b16 %v5970, %v5969
    %5975 = vmatprep.subr.bf16.mxu0 0
    %5976 = vmatpush1.bf16.msra.mxu0 %v5971
    %5977 = vmatprep.subr.bf16.mxu0 0
    %5978 = vmatpush1.bf16.msra.mxu0 %v5972
    %5979 = vmatprep.subr.bf16.mxu0 0
    %5980 = vmatpush1.bf16.msra.mxu0 0
    %5981 = vmatprep.subr.bf16.mxu0 0
    %5982 = vmatpush1.bf16.msra.mxu0 0
    %5983 = vmatprep.subr.bf16.mxu0 0
    %5984 = vmatpush1.bf16.msra.mxu0 0
    %5985 = vmatprep.subr.bf16.mxu0 0
    %5986 = vmatpush1.bf16.msra.mxu0 0
    %5987 = vmatprep.subr.bf16.mxu0 0
    %5988 = vmatpush1.bf16.msra.mxu0 0
    %5989 = vmatprep.subr.bf16.mxu0 0
    %5990 = vmatpush1.bf16.msra.mxu0 0
    %5991 = vmatprep.subr.bf16.mxu0 0
    %5992 = vmatpush1.bf16.msra.mxu0 0
    %5993 = vmatprep.subr.bf16.mxu0 0
    %5994 = vmatpush1.bf16.msra.mxu0 0
    %5995 = vmatprep.subr.bf16.mxu0 0
    %5996 = vmatpush1.bf16.msra.mxu0 0
    %5997 = vmatprep.subr.bf16.mxu0 0
    %5998 = vmatpush1.bf16.msra.mxu0 0
    %5999 = vmatprep.subr.bf16.mxu0 0
    %6000 = vmatpush1.bf16.msra.mxu0 0
    %6001 = vmatprep.subr.bf16.mxu0 0
    %6002 = vmatpush1.bf16.msra.mxu0 0
    %6003 = vmatprep.subr.bf16.mxu0 0
    %6004 = vmatpush1.bf16.msra.mxu0 0
    %6005 = vmatprep.subr.bf16.mxu0 0
    %6006 = vmatpush1.bf16.msra.mxu0 0
    %6007 = vmatprep.mubr.bf16.mxu0 0
    %6008 = vmatmul.mubr.bf16.gmra.mrb[0].mxu0 %v5550
    %v6009 = vpop.f32.mrb[0].mxu0
    %v6010 = vadd.f32 0.0, %v6009
    %v6011 = vpop.f32.mrb[0].mxu0
    %v6012 = vpop.f32.mrb[0].mxu0
    %v6013 = vpop.f32.mrb[0].mxu0
    %6014 = vdwg.mxu0
    %v6019 = vunpack.c.l.b16 %v5479
    %v6020 = vunpack.c.l.b16 %v5480
    %v6021 = vunpack.c.l.b16 %v5481
    %v6022 = vunpack.c.l.b16 %v5482
    %v6023 = vpack.c.b16 %v6020, %v6019
    %v6024 = vpack.c.b16 %v6022, %v6021
    %6027 = vmatprep.subr.bf16.mxu0 0
    %6028 = vmatpush1.bf16.msra.mxu0 %v6023
    %6029 = vmatprep.subr.bf16.mxu0 0
    %6030 = vmatpush1.bf16.msra.mxu0 %v6024
    %6031 = vmatprep.subr.bf16.mxu0 0
    %6032 = vmatpush1.bf16.msra.mxu0 0
    %6033 = vmatprep.subr.bf16.mxu0 0
    %6034 = vmatpush1.bf16.msra.mxu0 0
    %6035 = vmatprep.subr.bf16.mxu0 0
    %6036 = vmatpush1.bf16.msra.mxu0 0
    %6037 = vmatprep.subr.bf16.mxu0 0
    %6038 = vmatpush1.bf16.msra.mxu0 0
    %6039 = vmatprep.subr.bf16.mxu0 0
    %6040 = vmatpush1.bf16.msra.mxu0 0
    %6041 = vmatprep.subr.bf16.mxu0 0
    %6042 = vmatpush1.bf16.msra.mxu0 0
    %6043 = vmatprep.subr.bf16.mxu0 0
    %6044 = vmatpush1.bf16.msra.mxu0 0
    %6045 = vmatprep.subr.bf16.mxu0 0
    %6046 = vmatpush1.bf16.msra.mxu0 0
    %6047 = vmatprep.subr.bf16.mxu0 0
    %6048 = vmatpush1.bf16.msra.mxu0 0
    %6049 = vmatprep.subr.bf16.mxu0 0
    %6050 = vmatpush1.bf16.msra.mxu0 0
    %6051 = vmatprep.subr.bf16.mxu0 0
    %6052 = vmatpush1.bf16.msra.mxu0 0
    %6053 = vmatprep.subr.bf16.mxu0 0
    %6054 = vmatpush1.bf16.msra.mxu0 0
    %6055 = vmatprep.subr.bf16.mxu0 0
    %6056 = vmatpush1.bf16.msra.mxu0 0
    %6057 = vmatprep.subr.bf16.mxu0 0
    %6058 = vmatpush1.bf16.msra.mxu0 0
    %6059 = vmatprep.mubr.bf16.mxu0 0
    %6060 = vmatmul.mubr.bf16.gmra.mrb[0].mxu0 %v5550
    %v6061 = vpop.f32.mrb[0].mxu0
    %v6062 = vadd.f32 0.0, %v6061
    %v6063 = vpop.f32.mrb[0].mxu0
    %v6064 = vpop.f32.mrb[0].mxu0
    %v6065 = vpop.f32.mrb[0].mxu0
    %6066 = vdwg.mxu0
    %v6071 = vunpack.c.l.b16 %v5483
    %v6072 = vunpack.c.l.b16 %v5484
    %v6073 = vunpack.c.l.b16 %v5485
    %v6074 = vunpack.c.l.b16 %v5486
    %v6075 = vpack.c.b16 %v6072, %v6071
    %v6076 = vpack.c.b16 %v6074, %v6073
    %6079 = vmatprep.subr.bf16.mxu0 0
    %6080 = vmatpush1.bf16.msra.mxu0 %v6075
    %6081 = vmatprep.subr.bf16.mxu0 0
    %6082 = vmatpush1.bf16.msra.mxu0 %v6076
    %6083 = vmatprep.subr.bf16.mxu0 0
    %6084 = vmatpush1.bf16.msra.mxu0 0
    %6085 = vmatprep.subr.bf16.mxu0 0
    %6086 = vmatpush1.bf16.msra.mxu0 0
    %6087 = vmatprep.subr.bf16.mxu0 0
    %6088 = vmatpush1.bf16.msra.mxu0 0
    %6089 = vmatprep.subr.bf16.mxu0 0
    %6090 = vmatpush1.bf16.msra.mxu0 0
    %6091 = vmatprep.subr.bf16.mxu0 0
    %6092 = vmatpush1.bf16.msra.mxu0 0
    %6093 = vmatprep.subr.bf16.mxu0 0
    %6094 = vmatpush1.bf16.msra.mxu0 0
    %6095 = vmatprep.subr.bf16.mxu0 0
    %6096 = vmatpush1.bf16.msra.mxu0 0
    %6097 = vmatprep.subr.bf16.mxu0 0
    %6098 = vmatpush1.bf16.msra.mxu0 0
    %6099 = vmatprep.subr.bf16.mxu0 0
    %6100 = vmatpush1.bf16.msra.mxu0 0
    %6101 = vmatprep.subr.bf16.mxu0 0
    %6102 = vmatpush1.bf16.msra.mxu0 0
    %6103 = vmatprep.subr.bf16.mxu0 0
    %6104 = vmatpush1.bf16.msra.mxu0 0
    %6105 = vmatprep.subr.bf16.mxu0 0
    %6106 = vmatpush1.bf16.msra.mxu0 0
    %6107 = vmatprep.subr.bf16.mxu0 0
    %6108 = vmatpush1.bf16.msra.mxu0 0
    %6109 = vmatprep.subr.bf16.mxu0 0
    %6110 = vmatpush1.bf16.msra.mxu0 0
    %6111 = vmatprep.mubr.bf16.mxu0 0
    %6112 = vmatmul.mubr.bf16.gmra.mrb[0].mxu0 %v5550
    %v6113 = vpop.f32.mrb[0].mxu0
    %v6114 = vadd.f32 0.0, %v6113
    %v6115 = vpop.f32.mrb[0].mxu0
    %v6116 = vpop.f32.mrb[0].mxu0
    %v6117 = vpop.f32.mrb[0].mxu0
    %6118 = vdwg.mxu0
    %6119 = vmatprep.subr.bf16.mxu0 0
    %6120 = vmatpush1.bf16.msra.mxu0 %v5919
    %6121 = vmatprep.subr.bf16.mxu0 0
    %6122 = vmatpush1.bf16.msra.mxu0 %v5920
    %6123 = vmatprep.subr.bf16.mxu0 0
    %6124 = vmatpush1.bf16.msra.mxu0 0
    %6125 = vmatprep.subr.bf16.mxu0 0
    %6126 = vmatpush1.bf16.msra.mxu0 0
    %6127 = vmatprep.subr.bf16.mxu0 0
    %6128 = vmatpush1.bf16.msra.mxu0 0
    %6129 = vmatprep.subr.bf16.mxu0 0
    %6130 = vmatpush1.bf16.msra.mxu0 0
    %6131 = vmatprep.subr.bf16.mxu0 0
    %6132 = vmatpush1.bf16.msra.mxu0 0
    %6133 = vmatprep.subr.bf16.mxu0 0
    %6134 = vmatpush1.bf16.msra.mxu0 0
    %6135 = vmatprep.subr.bf16.mxu0 0
    %6136 = vmatpush1.bf16.msra.mxu0 0
    %6137 = vmatprep.subr.bf16.mxu0 0
    %6138 = vmatpush1.bf16.msra.mxu0 0
    %6139 = vmatprep.subr.bf16.mxu0 0
    %6140 = vmatpush1.bf16.msra.mxu0 0
    %6141 = vmatprep.subr.bf16.mxu0 0
    %6142 = vmatpush1.bf16.msra.mxu0 0
    %6143 = vmatprep.subr.bf16.mxu0 0
    %6144 = vmatpush1.bf16.msra.mxu0 0
    %6145 = vmatprep.subr.bf16.mxu0 0
    %6146 = vmatpush1.bf16.msra.mxu0 0
    %6147 = vmatprep.subr.bf16.mxu0 0
    %6148 = vmatpush1.bf16.msra.mxu0 0
    %6149 = vmatprep.subr.bf16.mxu0 0
    %6150 = vmatpush1.bf16.msra.mxu0 0
    %6151 = vmatprep.mubr.bf16.mxu0 0
    %6152 = vmatmul.mubr.bf16.gmra.mrb[0].mxu0 %v5749
    %v6153 = vpop.f32.mrb[0].mxu0
    %v6154 = vadd.f32 0.0, %v6153
    %v6155 = vpop.f32.mrb[0].mxu0
    %v6156 = vpop.f32.mrb[0].mxu0
    %v6157 = vpop.f32.mrb[0].mxu0
    %6158 = vdwg.mxu0
    %6159 = vmatprep.subr.bf16.mxu0 0
    %6160 = vmatpush1.bf16.msra.mxu0 %v5971
    %6161 = vmatprep.subr.bf16.mxu0 0
    %6162 = vmatpush1.bf16.msra.mxu0 %v5972
    %6163 = vmatprep.subr.bf16.mxu0 0
    %6164 = vmatpush1.bf16.msra.mxu0 0
    %6165 = vmatprep.subr.bf16.mxu0 0
    %6166 = vmatpush1.bf16.msra.mxu0 0
    %6167 = vmatprep.subr.bf16.mxu0 0
    %6168 = vmatpush1.bf16.msra.mxu0 0
    %6169 = vmatprep.subr.bf16.mxu0 0
    %6170 = vmatpush1.bf16.msra.mxu0 0
    %6171 = vmatprep.subr.bf16.mxu0 0
    %6172 = vmatpush1.bf16.msra.mxu0 0
    %6173 = vmatprep.subr.bf16.mxu0 0
    %6174 = vmatpush1.bf16.msra.mxu0 0
    %6175 = vmatprep.subr.bf16.mxu0 0
    %6176 = vmatpush1.bf16.msra.mxu0 0
    %6177 = vmatprep.subr.bf16.mxu0 0
    %6178 = vmatpush1.bf16.msra.mxu0 0
    %6179 = vmatprep.subr.bf16.mxu0 0
    %6180 = vmatpush1.bf16.msra.mxu0 0
    %6181 = vmatprep.subr.bf16.mxu0 0
    %6182 = vmatpush1.bf16.msra.mxu0 0
    %6183 = vmatprep.subr.bf16.mxu0 0
    %6184 = vmatpush1.bf16.msra.mxu0 0
    %6185 = vmatprep.subr.bf16.mxu0 0
    %6186 = vmatpush1.bf16.msra.mxu0 0
    %6187 = vmatprep.subr.bf16.mxu0 0
    %6188 = vmatpush1.bf16.msra.mxu0 0
    %6189 = vmatprep.subr.bf16.mxu0 0
    %6190 = vmatpush1.bf16.msra.mxu0 0
    %6191 = vmatprep.mubr.bf16.mxu0 0
    %6192 = vmatmul.mubr.bf16.gmra.mrb[0].mxu0 %v5749
    %v6193 = vpop.f32.mrb[0].mxu0
    %v6194 = vadd.f32 0.0, %v6193
    %v6195 = vpop.f32.mrb[0].mxu0
    %v6196 = vpop.f32.mrb[0].mxu0
    %v6197 = vpop.f32.mrb[0].mxu0
    %6198 = vdwg.mxu0
    %6199 = vmatprep.subr.bf16.mxu0 0
    %6200 = vmatpush1.bf16.msra.mxu0 %v6023
    %6201 = vmatprep.subr.bf16.mxu0 0
    %6202 = vmatpush1.bf16.msra.mxu0 %v6024
    %6203 = vmatprep.subr.bf16.mxu0 0
    %6204 = vmatpush1.bf16.msra.mxu0 0
    %6205 = vmatprep.subr.bf16.mxu0 0
    %6206 = vmatpush1.bf16.msra.mxu0 0
    %6207 = vmatprep.subr.bf16.mxu0 0
    %6208 = vmatpush1.bf16.msra.mxu0 0
    %6209 = vmatprep.subr.bf16.mxu0 0
    %6210 = vmatpush1.bf16.msra.mxu0 0
    %6211 = vmatprep.subr.bf16.mxu0 0
    %6212 = vmatpush1.bf16.msra.mxu0 0
    %6213 = vmatprep.subr.bf16.mxu0 0
    %6214 = vmatpush1.bf16.msra.mxu0 0
    %6215 = vmatprep.subr.bf16.mxu0 0
    %6216 = vmatpush1.bf16.msra.mxu0 0
    %6217 = vmatprep.subr.bf16.mxu0 0
    %6218 = vmatpush1.bf16.msra.mxu0 0
    %6219 = vmatprep.subr.bf16.mxu0 0
    %6220 = vmatpush1.bf16.msra.mxu0 0
    %6221 = vmatprep.subr.bf16.mxu0 0
    %6222 = vmatpush1.bf16.msra.mxu0 0
    %6223 = vmatprep.subr.bf16.mxu0 0
    %6224 = vmatpush1.bf16.msra.mxu0 0
    %6225 = vmatprep.subr.bf16.mxu0 0
    %6226 = vmatpush1.bf16.msra.mxu0 0
    %6227 = vmatprep.subr.bf16.mxu0 0
    %6228 = vmatpush1.bf16.msra.mxu0 0
    %6229 = vmatprep.subr.bf16.mxu0 0
    %6230 = vmatpush1.bf16.msra.mxu0 0
    %6231 = vmatprep.mubr.bf16.mxu0 0
    %6232 = vmatmul.mubr.bf16.gmra.mrb[0].mxu0 %v5749
    %v6233 = vpop.f32.mrb[0].mxu0
    %v6234 = vadd.f32 0.0, %v6233
    %v6235 = vpop.f32.mrb[0].mxu0
    %v6236 = vpop.f32.mrb[0].mxu0
    %v6237 = vpop.f32.mrb[0].mxu0
    %6238 = vdwg.mxu0
    %6239 = vmatprep.subr.bf16.mxu0 0
    %6240 = vmatpush1.bf16.msra.mxu0 %v6075
    %6241 = vmatprep.subr.bf16.mxu0 0
    %6242 = vmatpush1.bf16.msra.mxu0 %v6076
    %6243 = vmatprep.subr.bf16.mxu0 0
    %6244 = vmatpush1.bf16.msra.mxu0 0
    %6245 = vmatprep.subr.bf16.mxu0 0
    %6246 = vmatpush1.bf16.msra.mxu0 0
    %6247 = vmatprep.subr.bf16.mxu0 0
    %6248 = vmatpush1.bf16.msra.mxu0 0
    %6249 = vmatprep.subr.bf16.mxu0 0
    %6250 = vmatpush1.bf16.msra.mxu0 0
    %6251 = vmatprep.subr.bf16.mxu0 0
    %6252 = vmatpush1.bf16.msra.mxu0 0
    %6253 = vmatprep.subr.bf16.mxu0 0
    %6254 = vmatpush1.bf16.msra.mxu0 0
    %6255 = vmatprep.subr.bf16.mxu0 0
    %6256 = vmatpush1.bf16.msra.mxu0 0
    %6257 = vmatprep.subr.bf16.mxu0 0
    %6258 = vmatpush1.bf16.msra.mxu0 0
    %6259 = vmatprep.subr.bf16.mxu0 0
    %6260 = vmatpush1.bf16.msra.mxu0 0
    %6261 = vmatprep.subr.bf16.mxu0 0
    %6262 = vmatpush1.bf16.msra.mxu0 0
    %6263 = vmatprep.subr.bf16.mxu0 0
    %6264 = vmatpush1.bf16.msra.mxu0 0
    %6265 = vmatprep.subr.bf16.mxu0 0
    %6266 = vmatpush1.bf16.msra.mxu0 0
    %6267 = vmatprep.subr.bf16.mxu0 0
    %6268 = vmatpush1.bf16.msra.mxu0 0
    %6269 = vmatprep.subr.bf16.mxu0 0
    %6270 = vmatpush1.bf16.msra.mxu0 0
    %6271 = vmatprep.mubr.bf16.mxu0 0
    %6272 = vmatmul.mubr.bf16.gmra.mrb[0].mxu0 %v5749
    %v6273 = vpop.f32.mrb[0].mxu0
    %v6274 = vadd.f32 0.0, %v6273
    %v6275 = vpop.f32.mrb[0].mxu0
    %v6276 = vpop.f32.mrb[0].mxu0
    %v6277 = vpop.f32.mrb[0].mxu0
    %6278 = vdwg.mxu0
    %v6283 = vunpack.c.l.b16 %v5488
    %v6284 = vunpack.c.l.b16 %v5489
    %v6285 = vunpack.c.l.b16 %v5490
    %v6286 = vunpack.c.l.b16 %v5491
    %v6287 = vpack.c.b16 %v6284, %v6283
    %v6288 = vpack.c.b16 %v6286, %v6285
    %6291 = vmatprep.subr.bf16.mxu0 0
    %6292 = vmatpush1.bf16.msra.mxu0 %v6287
    %6293 = vmatprep.subr.bf16.mxu0 0
    %6294 = vmatpush1.bf16.msra.mxu0 %v6288
    %6295 = vmatprep.subr.bf16.mxu0 0
    %6296 = vmatpush1.bf16.msra.mxu0 0
    %6297 = vmatprep.subr.bf16.mxu0 0
    %6298 = vmatpush1.bf16.msra.mxu0 0
    %6299 = vmatprep.subr.bf16.mxu0 0
    %6300 = vmatpush1.bf16.msra.mxu0 0
    %6301 = vmatprep.subr.bf16.mxu0 0
    %6302 = vmatpush1.bf16.msra.mxu0 0
    %6303 = vmatprep.subr.bf16.mxu0 0
    %6304 = vmatpush1.bf16.msra.mxu0 0
    %6305 = vmatprep.subr.bf16.mxu0 0
    %6306 = vmatpush1.bf16.msra.mxu0 0
    %6307 = vmatprep.subr.bf16.mxu0 0
    %6308 = vmatpush1.bf16.msra.mxu0 0
    %6309 = vmatprep.subr.bf16.mxu0 0
    %6310 = vmatpush1.bf16.msra.mxu0 0
    %6311 = vmatprep.subr.bf16.mxu0 0
    %6312 = vmatpush1.bf16.msra.mxu0 0
    %6313 = vmatprep.subr.bf16.mxu0 0
    %6314 = vmatpush1.bf16.msra.mxu0 0
    %6315 = vmatprep.subr.bf16.mxu0 0
    %6316 = vmatpush1.bf16.msra.mxu0 0
    %6317 = vmatprep.subr.bf16.mxu0 0
    %6318 = vmatpush1.bf16.msra.mxu0 0
    %6319 = vmatprep.subr.bf16.mxu0 0
    %6320 = vmatpush1.bf16.msra.mxu0 0
    %6321 = vmatprep.subr.bf16.mxu0 0
    %6322 = vmatpush1.bf16.msra.mxu0 0
    %6323 = vmatprep.mubr.bf16.mxu0 0
    %6324 = vmatmul.mubr.bf16.gmra.mrb[0].mxu0 %v5550
    %v6325 = vpop.f32.mrb[0].mxu0
    %v6326 = vadd.f32 0.0, %v6325
    %v6327 = vpop.f32.mrb[0].mxu0
    %v6328 = vpop.f32.mrb[0].mxu0
    %v6329 = vpop.f32.mrb[0].mxu0
    %6330 = vdwg.mxu0
    %v6335 = vunpack.c.l.b16 %v5492
    %v6336 = vunpack.c.l.b16 %v5493
    %v6337 = vunpack.c.l.b16 %v5494
    %v6338 = vunpack.c.l.b16 %v5495
    %v6339 = vpack.c.b16 %v6336, %v6335
    %v6340 = vpack.c.b16 %v6338, %v6337
    %6343 = vmatprep.subr.bf16.mxu0 0
    %6344 = vmatpush1.bf16.msra.mxu0 %v6339
    %6345 = vmatprep.subr.bf16.mxu0 0
    %6346 = vmatpush1.bf16.msra.mxu0 %v6340
    %6347 = vmatprep.subr.bf16.mxu0 0
    %6348 = vmatpush1.bf16.msra.mxu0 0
    %6349 = vmatprep.subr.bf16.mxu0 0
    %6350 = vmatpush1.bf16.msra.mxu0 0
    %6351 = vmatprep.subr.bf16.mxu0 0
    %6352 = vmatpush1.bf16.msra.mxu0 0
    %6353 = vmatprep.subr.bf16.mxu0 0
    %6354 = vmatpush1.bf16.msra.mxu0 0
    %6355 = vmatprep.subr.bf16.mxu0 0
    %6356 = vmatpush1.bf16.msra.mxu0 0
    %6357 = vmatprep.subr.bf16.mxu0 0
    %6358 = vmatpush1.bf16.msra.mxu0 0
    %6359 = vmatprep.subr.bf16.mxu0 0
    %6360 = vmatpush1.bf16.msra.mxu0 0
    %6361 = vmatprep.subr.bf16.mxu0 0
    %6362 = vmatpush1.bf16.msra.mxu0 0
    %6363 = vmatprep.subr.bf16.mxu0 0
    %6364 = vmatpush1.bf16.msra.mxu0 0
    %6365 = vmatprep.subr.bf16.mxu0 0
    %6366 = vmatpush1.bf16.msra.mxu0 0
    %6367 = vmatprep.subr.bf16.mxu0 0
    %6368 = vmatpush1.bf16.msra.mxu0 0
    %6369 = vmatprep.subr.bf16.mxu0 0
    %6370 = vmatpush1.bf16.msra.mxu0 0
    %6371 = vmatprep.subr.bf16.mxu0 0
    %6372 = vmatpush1.bf16.msra.mxu0 0
    %6373 = vmatprep.subr.bf16.mxu0 0
    %6374 = vmatpush1.bf16.msra.mxu0 0
    %6375 = vmatprep.mubr.bf16.mxu0 0
    %6376 = vmatmul.mubr.bf16.gmra.mrb[0].mxu0 %v5550
    %v6377 = vpop.f32.mrb[0].mxu0
    %v6378 = vadd.f32 0.0, %v6377
    %v6379 = vpop.f32.mrb[0].mxu0
    %v6380 = vpop.f32.mrb[0].mxu0
    %v6381 = vpop.f32.mrb[0].mxu0
    %6382 = vdwg.mxu0
    %v6387 = vunpack.c.l.b16 %v5496
    %v6388 = vunpack.c.l.b16 %v5497
    %v6389 = vunpack.c.l.b16 %v5498
    %v6390 = vunpack.c.l.b16 %v5499
    %v6391 = vpack.c.b16 %v6388, %v6387
    %v6392 = vpack.c.b16 %v6390, %v6389
    %6395 = vmatprep.subr.bf16.mxu0 0
    %6396 = vmatpush1.bf16.msra.mxu0 %v6391
    %6397 = vmatprep.subr.bf16.mxu0 0
    %6398 = vmatpush1.bf16.msra.mxu0 %v6392
    %6399 = vmatprep.subr.bf16.mxu0 0
    %6400 = vmatpush1.bf16.msra.mxu0 0
    %6401 = vmatprep.subr.bf16.mxu0 0
    %6402 = vmatpush1.bf16.msra.mxu0 0
    %6403 = vmatprep.subr.bf16.mxu0 0
    %6404 = vmatpush1.bf16.msra.mxu0 0
    %6405 = vmatprep.subr.bf16.mxu0 0
    %6406 = vmatpush1.bf16.msra.mxu0 0
    %6407 = vmatprep.subr.bf16.mxu0 0
    %6408 = vmatpush1.bf16.msra.mxu0 0
    %6409 = vmatprep.subr.bf16.mxu0 0
    %6410 = vmatpush1.bf16.msra.mxu0 0
    %6411 = vmatprep.subr.bf16.mxu0 0
    %6412 = vmatpush1.bf16.msra.mxu0 0
    %6413 = vmatprep.subr.bf16.mxu0 0
    %6414 = vmatpush1.bf16.msra.mxu0 0
    %6415 = vmatprep.subr.bf16.mxu0 0
    %6416 = vmatpush1.bf16.msra.mxu0 0
    %6417 = vmatprep.subr.bf16.mxu0 0
    %6418 = vmatpush1.bf16.msra.mxu0 0
    %6419 = vmatprep.subr.bf16.mxu0 0
    %6420 = vmatpush1.bf16.msra.mxu0 0
    %6421 = vmatprep.subr.bf16.mxu0 0
    %6422 = vmatpush1.bf16.msra.mxu0 0
    %6423 = vmatprep.subr.bf16.mxu0 0
    %6424 = vmatpush1.bf16.msra.mxu0 0
    %6425 = vmatprep.subr.bf16.mxu0 0
    %6426 = vmatpush1.bf16.msra.mxu0 0
    %6427 = vmatprep.mubr.bf16.mxu0 0
    %6428 = vmatmul.mubr.bf16.gmra.mrb[0].mxu0 %v5550
    %v6429 = vpop.f32.mrb[0].mxu0
    %v6430 = vadd.f32 0.0, %v6429
    %v6431 = vpop.f32.mrb[0].mxu0
    %v6432 = vpop.f32.mrb[0].mxu0
    %v6433 = vpop.f32.mrb[0].mxu0
    %6434 = vdwg.mxu0
    %v6439 = vunpack.c.l.b16 %v5500
    %v6440 = vunpack.c.l.b16 %v5501
    %v6441 = vunpack.c.l.b16 %v5502
    %v6442 = vunpack.c.l.b16 %v5503
    %v6443 = vpack.c.b16 %v6440, %v6439
    %v6444 = vpack.c.b16 %v6442, %v6441
    %6447 = vmatprep.subr.bf16.mxu0 0
    %6448 = vmatpush1.bf16.msra.mxu0 %v6443
    %6449 = vmatprep.subr.bf16.mxu0 0
    %6450 = vmatpush1.bf16.msra.mxu0 %v6444
    %6451 = vmatprep.subr.bf16.mxu0 0
    %6452 = vmatpush1.bf16.msra.mxu0 0
    %6453 = vmatprep.subr.bf16.mxu0 0
    %6454 = vmatpush1.bf16.msra.mxu0 0
    %6455 = vmatprep.subr.bf16.mxu0 0
    %6456 = vmatpush1.bf16.msra.mxu0 0
    %6457 = vmatprep.subr.bf16.mxu0 0
    %6458 = vmatpush1.bf16.msra.mxu0 0
    %6459 = vmatprep.subr.bf16.mxu0 0
    %6460 = vmatpush1.bf16.msra.mxu0 0
    %6461 = vmatprep.subr.bf16.mxu0 0
    %6462 = vmatpush1.bf16.msra.mxu0 0
    %6463 = vmatprep.subr.bf16.mxu0 0
    %6464 = vmatpush1.bf16.msra.mxu0 0
    %6465 = vmatprep.subr.bf16.mxu0 0
    %6466 = vmatpush1.bf16.msra.mxu0 0
    %6467 = vmatprep.subr.bf16.mxu0 0
    %6468 = vmatpush1.bf16.msra.mxu0 0
    %6469 = vmatprep.subr.bf16.mxu0 0
    %6470 = vmatpush1.bf16.msra.mxu0 0
    %6471 = vmatprep.subr.bf16.mxu0 0
    %6472 = vmatpush1.bf16.msra.mxu0 0
    %6473 = vmatprep.subr.bf16.mxu0 0
    %6474 = vmatpush1.bf16.msra.mxu0 0
    %6475 = vmatprep.subr.bf16.mxu0 0
    %6476 = vmatpush1.bf16.msra.mxu0 0
    %6477 = vmatprep.subr.bf16.mxu0 0
    %6478 = vmatpush1.bf16.msra.mxu0 0
    %6479 = vmatprep.mubr.bf16.mxu0 0
    %6480 = vmatmul.mubr.bf16.gmra.mrb[0].mxu0 %v5550
    %v6481 = vpop.f32.mrb[0].mxu0
    %v6482 = vadd.f32 0.0, %v6481
    %v6483 = vpop.f32.mrb[0].mxu0
    %v6484 = vpop.f32.mrb[0].mxu0
    %v6485 = vpop.f32.mrb[0].mxu0
    %6486 = vdwg.mxu0
    %6487 = vmatprep.subr.bf16.mxu0 0
    %6488 = vmatpush1.bf16.msra.mxu0 %v6287
    %6489 = vmatprep.subr.bf16.mxu0 0
    %6490 = vmatpush1.bf16.msra.mxu0 %v6288
    %6491 = vmatprep.subr.bf16.mxu0 0
    %6492 = vmatpush1.bf16.msra.mxu0 0
    %6493 = vmatprep.subr.bf16.mxu0 0
    %6494 = vmatpush1.bf16.msra.mxu0 0
    %6495 = vmatprep.subr.bf16.mxu0 0
    %6496 = vmatpush1.bf16.msra.mxu0 0
    %6497 = vmatprep.subr.bf16.mxu0 0
    %6498 = vmatpush1.bf16.msra.mxu0 0
    %6499 = vmatprep.subr.bf16.mxu0 0
    %6500 = vmatpush1.bf16.msra.mxu0 0
    %6501 = vmatprep.subr.bf16.mxu0 0
    %6502 = vmatpush1.bf16.msra.mxu0 0
    %6503 = vmatprep.subr.bf16.mxu0 0
    %6504 = vmatpush1.bf16.msra.mxu0 0
    %6505 = vmatprep.subr.bf16.mxu0 0
    %6506 = vmatpush1.bf16.msra.mxu0 0
    %6507 = vmatprep.subr.bf16.mxu0 0
    %6508 = vmatpush1.bf16.msra.mxu0 0
    %6509 = vmatprep.subr.bf16.mxu0 0
    %6510 = vmatpush1.bf16.msra.mxu0 0
    %6511 = vmatprep.subr.bf16.mxu0 0
    %6512 = vmatpush1.bf16.msra.mxu0 0
    %6513 = vmatprep.subr.bf16.mxu0 0
    %6514 = vmatpush1.bf16.msra.mxu0 0
    %6515 = vmatprep.subr.bf16.mxu0 0
    %6516 = vmatpush1.bf16.msra.mxu0 0
    %6517 = vmatprep.subr.bf16.mxu0 0
    %6518 = vmatpush1.bf16.msra.mxu0 0
    %6519 = vmatprep.mubr.bf16.mxu0 0
    %6520 = vmatmul.mubr.bf16.gmra.mrb[0].mxu0 %v5749
    %v6521 = vpop.f32.mrb[0].mxu0
    %v6522 = vadd.f32 0.0, %v6521
    %v6523 = vpop.f32.mrb[0].mxu0
    %v6524 = vpop.f32.mrb[0].mxu0
    %v6525 = vpop.f32.mrb[0].mxu0
    %6526 = vdwg.mxu0
    %6527 = vmatprep.subr.bf16.mxu0 0
    %6528 = vmatpush1.bf16.msra.mxu0 %v6339
    %6529 = vmatprep.subr.bf16.mxu0 0
    %6530 = vmatpush1.bf16.msra.mxu0 %v6340
    %6531 = vmatprep.subr.bf16.mxu0 0
    %6532 = vmatpush1.bf16.msra.mxu0 0
    %6533 = vmatprep.subr.bf16.mxu0 0
    %6534 = vmatpush1.bf16.msra.mxu0 0
    %6535 = vmatprep.subr.bf16.mxu0 0
    %6536 = vmatpush1.bf16.msra.mxu0 0
    %6537 = vmatprep.subr.bf16.mxu0 0
    %6538 = vmatpush1.bf16.msra.mxu0 0
    %6539 = vmatprep.subr.bf16.mxu0 0
    %6540 = vmatpush1.bf16.msra.mxu0 0
    %6541 = vmatprep.subr.bf16.mxu0 0
    %6542 = vmatpush1.bf16.msra.mxu0 0
    %6543 = vmatprep.subr.bf16.mxu0 0
    %6544 = vmatpush1.bf16.msra.mxu0 0
    %6545 = vmatprep.subr.bf16.mxu0 0
    %6546 = vmatpush1.bf16.msra.mxu0 0
    %6547 = vmatprep.subr.bf16.mxu0 0
    %6548 = vmatpush1.bf16.msra.mxu0 0
    %6549 = vmatprep.subr.bf16.mxu0 0
    %6550 = vmatpush1.bf16.msra.mxu0 0
    %6551 = vmatprep.subr.bf16.mxu0 0
    %6552 = vmatpush1.bf16.msra.mxu0 0
    %6553 = vmatprep.subr.bf16.mxu0 0
    %6554 = vmatpush1.bf16.msra.mxu0 0
    %6555 = vmatprep.subr.bf16.mxu0 0
    %6556 = vmatpush1.bf16.msra.mxu0 0
    %6557 = vmatprep.subr.bf16.mxu0 0
    %6558 = vmatpush1.bf16.msra.mxu0 0
    %6559 = vmatprep.mubr.bf16.mxu0 0
    %6560 = vmatmul.mubr.bf16.gmra.mrb[0].mxu0 %v5749
    %v6561 = vpop.f32.mrb[0].mxu0
    %v6562 = vadd.f32 0.0, %v6561
    %v6563 = vpop.f32.mrb[0].mxu0
    %v6564 = vpop.f32.mrb[0].mxu0
    %v6565 = vpop.f32.mrb[0].mxu0
    %6566 = vdwg.mxu0
    %6567 = vmatprep.subr.bf16.mxu0 0
    %6568 = vmatpush1.bf16.msra.mxu0 %v6391
    %6569 = vmatprep.subr.bf16.mxu0 0
    %6570 = vmatpush1.bf16.msra.mxu0 %v6392
    %6571 = vmatprep.subr.bf16.mxu0 0
    %6572 = vmatpush1.bf16.msra.mxu0 0
    %6573 = vmatprep.subr.bf16.mxu0 0
    %6574 = vmatpush1.bf16.msra.mxu0 0
    %6575 = vmatprep.subr.bf16.mxu0 0
    %6576 = vmatpush1.bf16.msra.mxu0 0
    %6577 = vmatprep.subr.bf16.mxu0 0
    %6578 = vmatpush1.bf16.msra.mxu0 0
    %6579 = vmatprep.subr.bf16.mxu0 0
    %6580 = vmatpush1.bf16.msra.mxu0 0
    %6581 = vmatprep.subr.bf16.mxu0 0
    %6582 = vmatpush1.bf16.msra.mxu0 0
    %6583 = vmatprep.subr.bf16.mxu0 0
    %6584 = vmatpush1.bf16.msra.mxu0 0
    %6585 = vmatprep.subr.bf16.mxu0 0
    %6586 = vmatpush1.bf16.msra.mxu0 0
    %6587 = vmatprep.subr.bf16.mxu0 0
    %6588 = vmatpush1.bf16.msra.mxu0 0
    %6589 = vmatprep.subr.bf16.mxu0 0
    %6590 = vmatpush1.bf16.msra.mxu0 0
    %6591 = vmatprep.subr.bf16.mxu0 0
    %6592 = vmatpush1.bf16.msra.mxu0 0
    %6593 = vmatprep.subr.bf16.mxu0 0
    %6594 = vmatpush1.bf16.msra.mxu0 0
    %6595 = vmatprep.subr.bf16.mxu0 0
    %6596 = vmatpush1.bf16.msra.mxu0 0
    %6597 = vmatprep.subr.bf16.mxu0 0
    %6598 = vmatpush1.bf16.msra.mxu0 0
    %6599 = vmatprep.mubr.bf16.mxu0 0
    %6600 = vmatmul.mubr.bf16.gmra.mrb[0].mxu0 %v5749
    %v6601 = vpop.f32.mrb[0].mxu0
    %v6602 = vadd.f32 0.0, %v6601
    %v6603 = vpop.f32.mrb[0].mxu0
    %v6604 = vpop.f32.mrb[0].mxu0
    %v6605 = vpop.f32.mrb[0].mxu0
    %6606 = vdwg.mxu0
    %6607 = vmatprep.subr.bf16.mxu0 0
    %6608 = vmatpush1.bf16.msra.mxu0 %v6443
    %6609 = vmatprep.subr.bf16.mxu0 0
    %6610 = vmatpush1.bf16.msra.mxu0 %v6444
    %6611 = vmatprep.subr.bf16.mxu0 0
    %6612 = vmatpush1.bf16.msra.mxu0 0
    %6613 = vmatprep.subr.bf16.mxu0 0
    %6614 = vmatpush1.bf16.msra.mxu0 0
    %6615 = vmatprep.subr.bf16.mxu0 0
    %6616 = vmatpush1.bf16.msra.mxu0 0
    %6617 = vmatprep.subr.bf16.mxu0 0
    %6618 = vmatpush1.bf16.msra.mxu0 0
    %6619 = vmatprep.subr.bf16.mxu0 0
    %6620 = vmatpush1.bf16.msra.mxu0 0
    %6621 = vmatprep.subr.bf16.mxu0 0
    %6622 = vmatpush1.bf16.msra.mxu0 0
    %6623 = vmatprep.subr.bf16.mxu0 0
    %6624 = vmatpush1.bf16.msra.mxu0 0
    %6625 = vmatprep.subr.bf16.mxu0 0
    %6626 = vmatpush1.bf16.msra.mxu0 0
    %6627 = vmatprep.subr.bf16.mxu0 0
    %6628 = vmatpush1.bf16.msra.mxu0 0
    %6629 = vmatprep.subr.bf16.mxu0 0
    %6630 = vmatpush1.bf16.msra.mxu0 0
    %6631 = vmatprep.subr.bf16.mxu0 0
    %6632 = vmatpush1.bf16.msra.mxu0 0
    %6633 = vmatprep.subr.bf16.mxu0 0
    %6634 = vmatpush1.bf16.msra.mxu0 0
    %6635 = vmatprep.subr.bf16.mxu0 0
    %6636 = vmatpush1.bf16.msra.mxu0 0
    %6637 = vmatprep.subr.bf16.mxu0 0
    %6638 = vmatpush1.bf16.msra.mxu0 0
    %6639 = vmatprep.mubr.bf16.mxu0 0
    %6640 = vmatmul.mubr.bf16.gmra.mrb[0].mxu0 %v5749
    %v6641 = vpop.f32.mrb[0].mxu0
    %v6642 = vadd.f32 0.0, %v6641
    %v6643 = vpop.f32.mrb[0].mxu0
    %v6644 = vpop.f32.mrb[0].mxu0
    %v6645 = vpop.f32.mrb[0].mxu0
    %6646 = vdwg.mxu0
    %v6647 = vpack.c.bf16 %v5587, %v5587
    %v6648 = vpack.c.bf16 %v5639, %v5639
    %v6649 = vpack.c.bf16 %v5691, %v5691
    %v6650 = vpack.c.bf16 %v5743, %v5743
    %v6651 = vpack.c.bf16 %v5786, %v5786
    %v6652 = vpack.c.bf16 %v5826, %v5826
    %v6653 = vpack.c.bf16 %v5866, %v5866
    %v6654 = vpack.c.bf16 %v5906, %v5906
    %v6655 = vpack.c.bf16 %v5958, %v5958
    %v6656 = vpack.c.bf16 %v6010, %v6010
    %v6657 = vpack.c.bf16 %v6062, %v6062
    %v6658 = vpack.c.bf16 %v6114, %v6114
    %v6659 = vpack.c.bf16 %v6154, %v6154
    %v6660 = vpack.c.bf16 %v6194, %v6194
    %v6661 = vpack.c.bf16 %v6234, %v6234
    %v6662 = vpack.c.bf16 %v6274, %v6274
    %v6664 = vsel %vm1251, %v6647, 0
    %v6667 = vsel %vm1251, %v6655, 0
    %6669 = vmatprep.subr.bf16.mxu0 0
    %6670 = vmatpush1.bf16.xpose.msra.mxu0 %v6667
    %6671 = vmatprep.subr.bf16.mxu0 0
    %6672 = vmatpush1.bf16.xpose.msra.mxu0 0
    %6673 = vmatprep.subr.bf16.mxu0 0
    %6674 = vmatpush1.bf16.xpose.msra.mxu0 0
    %6675 = vmatprep.subr.bf16.mxu0 0
    %6676 = vmatpush1.bf16.xpose.msra.mxu0 0
    %6677 = vmatprep.subr.bf16.mxu0 0
    %6678 = vmatpush1.bf16.xpose.msra.mxu0 0
    %6679 = vmatprep.subr.bf16.mxu0 0
    %6680 = vmatpush1.bf16.xpose.msra.mxu0 0
    %6681 = vmatprep.subr.bf16.mxu0 0
    %6682 = vmatpush1.bf16.xpose.msra.mxu0 0
    %6683 = vmatprep.subr.bf16.mxu0 0
    %6684 = vmatpush1.bf16.xpose.msra.mxu0 0
    %6685 = vmatprep.subr.bf16.mxu0 0
    %6686 = vmatpush1.bf16.xpose.msra.mxu0 0
    %6687 = vmatprep.subr.bf16.mxu0 0
    %6688 = vmatpush1.bf16.xpose.msra.mxu0 0
    %6689 = vmatprep.subr.bf16.mxu0 0
    %6690 = vmatpush1.bf16.xpose.msra.mxu0 0
    %6691 = vmatprep.subr.bf16.mxu0 0
    %6692 = vmatpush1.bf16.xpose.msra.mxu0 0
    %6693 = vmatprep.subr.bf16.mxu0 0
    %6694 = vmatpush1.bf16.xpose.msra.mxu0 0
    %6695 = vmatprep.subr.bf16.mxu0 0
    %6696 = vmatpush1.bf16.xpose.msra.mxu0 0
    %6697 = vmatprep.subr.bf16.mxu0 0
    %6698 = vmatpush1.bf16.xpose.msra.mxu0 0
    %6699 = vmatprep.subr.bf16.mxu0 0
    %6700 = vmatpush1.bf16.xpose.msra.mxu0 0
    %6701 = vmatprep.mubr.bf16.mxu0 0
    %6702 = vmatmul.mubr.bf16.gmra.mrb[0].mxu0 %v6664
    %v6703 = vpop.f32.mrb[0].mxu0
    %v6704 = vadd.f32 0.0, %v6703
    %v6705 = vpop.f32.mrb[0].mxu0
    %v6706 = vpop.f32.mrb[0].mxu0
    %v6707 = vpop.f32.mrb[0].mxu0
    %6708 = vdwg.mxu0
    %v6710 = vsel %vm1251, %v6648, 0
    %v6713 = vsel %vm1251, %v6656, 0
    %6715 = vmatprep.subr.bf16.mxu0 0
    %6716 = vmatpush1.bf16.xpose.msra.mxu0 %v6713
    %6717 = vmatprep.subr.bf16.mxu0 0
    %6718 = vmatpush1.bf16.xpose.msra.mxu0 0
    %6719 = vmatprep.subr.bf16.mxu0 0
    %6720 = vmatpush1.bf16.xpose.msra.mxu0 0
    %6721 = vmatprep.subr.bf16.mxu0 0
    %6722 = vmatpush1.bf16.xpose.msra.mxu0 0
    %6723 = vmatprep.subr.bf16.mxu0 0
    %6724 = vmatpush1.bf16.xpose.msra.mxu0 0
    %6725 = vmatprep.subr.bf16.mxu0 0
    %6726 = vmatpush1.bf16.xpose.msra.mxu0 0
    %6727 = vmatprep.subr.bf16.mxu0 0
    %6728 = vmatpush1.bf16.xpose.msra.mxu0 0
    %6729 = vmatprep.subr.bf16.mxu0 0
    %6730 = vmatpush1.bf16.xpose.msra.mxu0 0
    %6731 = vmatprep.subr.bf16.mxu0 0
    %6732 = vmatpush1.bf16.xpose.msra.mxu0 0
    %6733 = vmatprep.subr.bf16.mxu0 0
    %6734 = vmatpush1.bf16.xpose.msra.mxu0 0
    %6735 = vmatprep.subr.bf16.mxu0 0
    %6736 = vmatpush1.bf16.xpose.msra.mxu0 0
    %6737 = vmatprep.subr.bf16.mxu0 0
    %6738 = vmatpush1.bf16.xpose.msra.mxu0 0
    %6739 = vmatprep.subr.bf16.mxu0 0
    %6740 = vmatpush1.bf16.xpose.msra.mxu0 0
    %6741 = vmatprep.subr.bf16.mxu0 0
    %6742 = vmatpush1.bf16.xpose.msra.mxu0 0
    %6743 = vmatprep.subr.bf16.mxu0 0
    %6744 = vmatpush1.bf16.xpose.msra.mxu0 0
    %6745 = vmatprep.subr.bf16.mxu0 0
    %6746 = vmatpush1.bf16.xpose.msra.mxu0 0
    %6747 = vmatprep.mubr.bf16.mxu0 0
    %6748 = vmatmul.mubr.bf16.gmra.mrb[0].mxu0 %v6710
    %v6749 = vpop.f32.mrb[0].mxu0
    %v6750 = vadd.f32 0.0, %v6749
    %v6751 = vpop.f32.mrb[0].mxu0
    %v6752 = vpop.f32.mrb[0].mxu0
    %v6753 = vpop.f32.mrb[0].mxu0
    %6754 = vdwg.mxu0
    %v6756 = vsel %vm1251, %v6649, 0
    %v6759 = vsel %vm1251, %v6657, 0
    %6761 = vmatprep.subr.bf16.mxu0 0
    %6762 = vmatpush1.bf16.xpose.msra.mxu0 %v6759
    %6763 = vmatprep.subr.bf16.mxu0 0
    %6764 = vmatpush1.bf16.xpose.msra.mxu0 0
    %6765 = vmatprep.subr.bf16.mxu0 0
    %6766 = vmatpush1.bf16.xpose.msra.mxu0 0
    %6767 = vmatprep.subr.bf16.mxu0 0
    %6768 = vmatpush1.bf16.xpose.msra.mxu0 0
    %6769 = vmatprep.subr.bf16.mxu0 0
    %6770 = vmatpush1.bf16.xpose.msra.mxu0 0
    %6771 = vmatprep.subr.bf16.mxu0 0
    %6772 = vmatpush1.bf16.xpose.msra.mxu0 0
    %6773 = vmatprep.subr.bf16.mxu0 0
    %6774 = vmatpush1.bf16.xpose.msra.mxu0 0
    %6775 = vmatprep.subr.bf16.mxu0 0
    %6776 = vmatpush1.bf16.xpose.msra.mxu0 0
    %6777 = vmatprep.subr.bf16.mxu0 0
    %6778 = vmatpush1.bf16.xpose.msra.mxu0 0
    %6779 = vmatprep.subr.bf16.mxu0 0
    %6780 = vmatpush1.bf16.xpose.msra.mxu0 0
    %6781 = vmatprep.subr.bf16.mxu0 0
    %6782 = vmatpush1.bf16.xpose.msra.mxu0 0
    %6783 = vmatprep.subr.bf16.mxu0 0
    %6784 = vmatpush1.bf16.xpose.msra.mxu0 0
    %6785 = vmatprep.subr.bf16.mxu0 0
    %6786 = vmatpush1.bf16.xpose.msra.mxu0 0
    %6787 = vmatprep.subr.bf16.mxu0 0
    %6788 = vmatpush1.bf16.xpose.msra.mxu0 0
    %6789 = vmatprep.subr.bf16.mxu0 0
    %6790 = vmatpush1.bf16.xpose.msra.mxu0 0
    %6791 = vmatprep.subr.bf16.mxu0 0
    %6792 = vmatpush1.bf16.xpose.msra.mxu0 0
    %6793 = vmatprep.mubr.bf16.mxu0 0
    %6794 = vmatmul.mubr.bf16.gmra.mrb[0].mxu0 %v6756
    %v6795 = vpop.f32.mrb[0].mxu0
    %v6796 = vadd.f32 0.0, %v6795
    %v6797 = vpop.f32.mrb[0].mxu0
    %v6798 = vpop.f32.mrb[0].mxu0
    %v6799 = vpop.f32.mrb[0].mxu0
    %6800 = vdwg.mxu0
    %v6802 = vsel %vm1251, %v6650, 0
    %v6805 = vsel %vm1251, %v6658, 0
    %6807 = vmatprep.subr.bf16.mxu0 0
    %6808 = vmatpush1.bf16.xpose.msra.mxu0 %v6805
    %6809 = vmatprep.subr.bf16.mxu0 0
    %6810 = vmatpush1.bf16.xpose.msra.mxu0 0
    %6811 = vmatprep.subr.bf16.mxu0 0
    %6812 = vmatpush1.bf16.xpose.msra.mxu0 0
    %6813 = vmatprep.subr.bf16.mxu0 0
    %6814 = vmatpush1.bf16.xpose.msra.mxu0 0
    %6815 = vmatprep.subr.bf16.mxu0 0
    %6816 = vmatpush1.bf16.xpose.msra.mxu0 0
    %6817 = vmatprep.subr.bf16.mxu0 0
    %6818 = vmatpush1.bf16.xpose.msra.mxu0 0
    %6819 = vmatprep.subr.bf16.mxu0 0
    %6820 = vmatpush1.bf16.xpose.msra.mxu0 0
    %6821 = vmatprep.subr.bf16.mxu0 0
    %6822 = vmatpush1.bf16.xpose.msra.mxu0 0
    %6823 = vmatprep.subr.bf16.mxu0 0
    %6824 = vmatpush1.bf16.xpose.msra.mxu0 0
    %6825 = vmatprep.subr.bf16.mxu0 0
    %6826 = vmatpush1.bf16.xpose.msra.mxu0 0
    %6827 = vmatprep.subr.bf16.mxu0 0
    %6828 = vmatpush1.bf16.xpose.msra.mxu0 0
    %6829 = vmatprep.subr.bf16.mxu0 0
    %6830 = vmatpush1.bf16.xpose.msra.mxu0 0
    %6831 = vmatprep.subr.bf16.mxu0 0
    %6832 = vmatpush1.bf16.xpose.msra.mxu0 0
    %6833 = vmatprep.subr.bf16.mxu0 0
    %6834 = vmatpush1.bf16.xpose.msra.mxu0 0
    %6835 = vmatprep.subr.bf16.mxu0 0
    %6836 = vmatpush1.bf16.xpose.msra.mxu0 0
    %6837 = vmatprep.subr.bf16.mxu0 0
    %6838 = vmatpush1.bf16.xpose.msra.mxu0 0
    %6839 = vmatprep.mubr.bf16.mxu0 0
    %6840 = vmatmul.mubr.bf16.gmra.mrb[0].mxu0 %v6802
    %v6841 = vpop.f32.mrb[0].mxu0
    %v6842 = vadd.f32 0.0, %v6841
    %v6843 = vpop.f32.mrb[0].mxu0
    %v6844 = vpop.f32.mrb[0].mxu0
    %v6845 = vpop.f32.mrb[0].mxu0
    %6846 = vdwg.mxu0
    %v6848 = vsel %vm1251, %v6651, 0
    %v6851 = vsel %vm1251, %v6659, 0
    %6853 = vmatprep.subr.bf16.mxu0 0
    %6854 = vmatpush1.bf16.xpose.msra.mxu0 %v6851
    %6855 = vmatprep.subr.bf16.mxu0 0
    %6856 = vmatpush1.bf16.xpose.msra.mxu0 0
    %6857 = vmatprep.subr.bf16.mxu0 0
    %6858 = vmatpush1.bf16.xpose.msra.mxu0 0
    %6859 = vmatprep.subr.bf16.mxu0 0
    %6860 = vmatpush1.bf16.xpose.msra.mxu0 0
    %6861 = vmatprep.subr.bf16.mxu0 0
    %6862 = vmatpush1.bf16.xpose.msra.mxu0 0
    %6863 = vmatprep.subr.bf16.mxu0 0
    %6864 = vmatpush1.bf16.xpose.msra.mxu0 0
    %6865 = vmatprep.subr.bf16.mxu0 0
    %6866 = vmatpush1.bf16.xpose.msra.mxu0 0
    %6867 = vmatprep.subr.bf16.mxu0 0
    %6868 = vmatpush1.bf16.xpose.msra.mxu0 0
    %6869 = vmatprep.subr.bf16.mxu0 0
    %6870 = vmatpush1.bf16.xpose.msra.mxu0 0
    %6871 = vmatprep.subr.bf16.mxu0 0
    %6872 = vmatpush1.bf16.xpose.msra.mxu0 0
    %6873 = vmatprep.subr.bf16.mxu0 0
    %6874 = vmatpush1.bf16.xpose.msra.mxu0 0
    %6875 = vmatprep.subr.bf16.mxu0 0
    %6876 = vmatpush1.bf16.xpose.msra.mxu0 0
    %6877 = vmatprep.subr.bf16.mxu0 0
    %6878 = vmatpush1.bf16.xpose.msra.mxu0 0
    %6879 = vmatprep.subr.bf16.mxu0 0
    %6880 = vmatpush1.bf16.xpose.msra.mxu0 0
    %6881 = vmatprep.subr.bf16.mxu0 0
    %6882 = vmatpush1.bf16.xpose.msra.mxu0 0
    %6883 = vmatprep.subr.bf16.mxu0 0
    %6884 = vmatpush1.bf16.xpose.msra.mxu0 0
    %6885 = vmatprep.mubr.bf16.mxu0 0
    %6886 = vmatmul.mubr.bf16.gmra.mrb[0].mxu0 %v6848
    %v6887 = vpop.f32.mrb[0].mxu0
    %v6888 = vadd.f32 0.0, %v6887
    %v6889 = vpop.f32.mrb[0].mxu0
    %v6890 = vpop.f32.mrb[0].mxu0
    %v6891 = vpop.f32.mrb[0].mxu0
    %6892 = vdwg.mxu0
    %v6894 = vsel %vm1251, %v6652, 0
    %v6897 = vsel %vm1251, %v6660, 0
    %6899 = vmatprep.subr.bf16.mxu0 0
    %6900 = vmatpush1.bf16.xpose.msra.mxu0 %v6897
    %6901 = vmatprep.subr.bf16.mxu0 0
    %6902 = vmatpush1.bf16.xpose.msra.mxu0 0
    %6903 = vmatprep.subr.bf16.mxu0 0
    %6904 = vmatpush1.bf16.xpose.msra.mxu0 0
    %6905 = vmatprep.subr.bf16.mxu0 0
    %6906 = vmatpush1.bf16.xpose.msra.mxu0 0
    %6907 = vmatprep.subr.bf16.mxu0 0
    %6908 = vmatpush1.bf16.xpose.msra.mxu0 0
    %6909 = vmatprep.subr.bf16.mxu0 0
    %6910 = vmatpush1.bf16.xpose.msra.mxu0 0
    %6911 = vmatprep.subr.bf16.mxu0 0
    %6912 = vmatpush1.bf16.xpose.msra.mxu0 0
    %6913 = vmatprep.subr.bf16.mxu0 0
    %6914 = vmatpush1.bf16.xpose.msra.mxu0 0
    %6915 = vmatprep.subr.bf16.mxu0 0
    %6916 = vmatpush1.bf16.xpose.msra.mxu0 0
    %6917 = vmatprep.subr.bf16.mxu0 0
    %6918 = vmatpush1.bf16.xpose.msra.mxu0 0
    %6919 = vmatprep.subr.bf16.mxu0 0
    %6920 = vmatpush1.bf16.xpose.msra.mxu0 0
    %6921 = vmatprep.subr.bf16.mxu0 0
    %6922 = vmatpush1.bf16.xpose.msra.mxu0 0
    %6923 = vmatprep.subr.bf16.mxu0 0
    %6924 = vmatpush1.bf16.xpose.msra.mxu0 0
    %6925 = vmatprep.subr.bf16.mxu0 0
    %6926 = vmatpush1.bf16.xpose.msra.mxu0 0
    %6927 = vmatprep.subr.bf16.mxu0 0
    %6928 = vmatpush1.bf16.xpose.msra.mxu0 0
    %6929 = vmatprep.subr.bf16.mxu0 0
    %6930 = vmatpush1.bf16.xpose.msra.mxu0 0
    %6931 = vmatprep.mubr.bf16.mxu0 0
    %6932 = vmatmul.mubr.bf16.gmra.mrb[0].mxu0 %v6894
    %v6933 = vpop.f32.mrb[0].mxu0
    %v6934 = vadd.f32 0.0, %v6933
    %v6935 = vpop.f32.mrb[0].mxu0
    %v6936 = vpop.f32.mrb[0].mxu0
    %v6937 = vpop.f32.mrb[0].mxu0
    %6938 = vdwg.mxu0
    %v6940 = vsel %vm1251, %v6653, 0
    %v6943 = vsel %vm1251, %v6661, 0
    %6945 = vmatprep.subr.bf16.mxu0 0
    %6946 = vmatpush1.bf16.xpose.msra.mxu0 %v6943
    %6947 = vmatprep.subr.bf16.mxu0 0
    %6948 = vmatpush1.bf16.xpose.msra.mxu0 0
    %6949 = vmatprep.subr.bf16.mxu0 0
    %6950 = vmatpush1.bf16.xpose.msra.mxu0 0
    %6951 = vmatprep.subr.bf16.mxu0 0
    %6952 = vmatpush1.bf16.xpose.msra.mxu0 0
    %6953 = vmatprep.subr.bf16.mxu0 0
    %6954 = vmatpush1.bf16.xpose.msra.mxu0 0
    %6955 = vmatprep.subr.bf16.mxu0 0
    %6956 = vmatpush1.bf16.xpose.msra.mxu0 0
    %6957 = vmatprep.subr.bf16.mxu0 0
    %6958 = vmatpush1.bf16.xpose.msra.mxu0 0
    %6959 = vmatprep.subr.bf16.mxu0 0
    %6960 = vmatpush1.bf16.xpose.msra.mxu0 0
    %6961 = vmatprep.subr.bf16.mxu0 0
    %6962 = vmatpush1.bf16.xpose.msra.mxu0 0
    %6963 = vmatprep.subr.bf16.mxu0 0
    %6964 = vmatpush1.bf16.xpose.msra.mxu0 0
    %6965 = vmatprep.subr.bf16.mxu0 0
    %6966 = vmatpush1.bf16.xpose.msra.mxu0 0
    %6967 = vmatprep.subr.bf16.mxu0 0
    %6968 = vmatpush1.bf16.xpose.msra.mxu0 0
    %6969 = vmatprep.subr.bf16.mxu0 0
    %6970 = vmatpush1.bf16.xpose.msra.mxu0 0
    %6971 = vmatprep.subr.bf16.mxu0 0
    %6972 = vmatpush1.bf16.xpose.msra.mxu0 0
    %6973 = vmatprep.subr.bf16.mxu0 0
    %6974 = vmatpush1.bf16.xpose.msra.mxu0 0
    %6975 = vmatprep.subr.bf16.mxu0 0
    %6976 = vmatpush1.bf16.xpose.msra.mxu0 0
    %6977 = vmatprep.mubr.bf16.mxu0 0
    %6978 = vmatmul.mubr.bf16.gmra.mrb[0].mxu0 %v6940
    %v6979 = vpop.f32.mrb[0].mxu0
    %v6980 = vadd.f32 0.0, %v6979
    %v6981 = vpop.f32.mrb[0].mxu0
    %v6982 = vpop.f32.mrb[0].mxu0
    %v6983 = vpop.f32.mrb[0].mxu0
    %6984 = vdwg.mxu0
    %v6986 = vsel %vm1251, %v6654, 0
    %v6989 = vsel %vm1251, %v6662, 0
    %6991 = vmatprep.subr.bf16.mxu0 0
    %6992 = vmatpush1.bf16.xpose.msra.mxu0 %v6989
    %6993 = vmatprep.subr.bf16.mxu0 0
    %6994 = vmatpush1.bf16.xpose.msra.mxu0 0
    %6995 = vmatprep.subr.bf16.mxu0 0
    %6996 = vmatpush1.bf16.xpose.msra.mxu0 0
    %6997 = vmatprep.subr.bf16.mxu0 0
    %6998 = vmatpush1.bf16.xpose.msra.mxu0 0
    %6999 = vmatprep.subr.bf16.mxu0 0
    %7000 = vmatpush1.bf16.xpose.msra.mxu0 0
    %7001 = vmatprep.subr.bf16.mxu0 0
    %7002 = vmatpush1.bf16.xpose.msra.mxu0 0
    %7003 = vmatprep.subr.bf16.mxu0 0
    %7004 = vmatpush1.bf16.xpose.msra.mxu0 0
    %7005 = vmatprep.subr.bf16.mxu0 0
    %7006 = vmatpush1.bf16.xpose.msra.mxu0 0
    %7007 = vmatprep.subr.bf16.mxu0 0
    %7008 = vmatpush1.bf16.xpose.msra.mxu0 0
    %7009 = vmatprep.subr.bf16.mxu0 0
    %7010 = vmatpush1.bf16.xpose.msra.mxu0 0
    %7011 = vmatprep.subr.bf16.mxu0 0
    %7012 = vmatpush1.bf16.xpose.msra.mxu0 0
    %7013 = vmatprep.subr.bf16.mxu0 0
    %7014 = vmatpush1.bf16.xpose.msra.mxu0 0
    %7015 = vmatprep.subr.bf16.mxu0 0
    %7016 = vmatpush1.bf16.xpose.msra.mxu0 0
    %7017 = vmatprep.subr.bf16.mxu0 0
    %7018 = vmatpush1.bf16.xpose.msra.mxu0 0
    %7019 = vmatprep.subr.bf16.mxu0 0
    %7020 = vmatpush1.bf16.xpose.msra.mxu0 0
    %7021 = vmatprep.subr.bf16.mxu0 0
    %7022 = vmatpush1.bf16.xpose.msra.mxu0 0
    %7023 = vmatprep.mubr.bf16.mxu0 0
    %7024 = vmatmul.mubr.bf16.gmra.mrb[0].mxu0 %v6986
    %v7025 = vpop.f32.mrb[0].mxu0
    %v7026 = vadd.f32 0.0, %v7025
    %v7027 = vpop.f32.mrb[0].mxu0
    %v7028 = vpop.f32.mrb[0].mxu0
    %v7029 = vpop.f32.mrb[0].mxu0
    %7030 = vdwg.mxu0
    %v7031 = vmul.f32 %v6704, 0.35355338
    %v7032 = vmul.f32 %v6750, 0.35355338
    %v7033 = vmul.f32 %v6796, 0.35355338
    %v7034 = vmul.f32 %v6842, 0.35355338
    %v7035 = vmul.f32 %v6888, 0.35355338
    %v7036 = vmul.f32 %v6934, 0.35355338
    %v7037 = vmul.f32 %v6980, 0.35355338
    %v7038 = vmul.f32 %v7026, 0.35355338
    %v7039 = vadd.f32 %v7031, %v1639
    %v7040 = vadd.f32 %v7032, %v1643
    %v7041 = vadd.f32 %v7033, %v1647
    %v7042 = vadd.f32 %v7034, %v1651
    %v7043 = vadd.f32 %v7035, %v1655
    %v7044 = vadd.f32 %v7036, %v1659
    %v7045 = vadd.f32 %v7037, %v1663
    %v7046 = vadd.f32 %v7038, %v1667
    %v7047 = vsel %vm1251, %v7039, -inf
    %7048 = vmax.xlane.f32.xlu0 %v7047
    %v7049 = vpop.xlane.xlu0 %7048
    %v7050 = vsel %vm1251, %v7040, -inf
    %7051 = vmax.xlane.f32.xlu0 %v7050
    %v7052 = vpop.xlane.xlu0 %7051
    %v7053 = vsel %vm1251, %v7041, -inf
    %7054 = vmax.xlane.f32.xlu0 %v7053
    %v7055 = vpop.xlane.xlu0 %7054
    %v7056 = vsel %vm1251, %v7042, -inf
    %7057 = vmax.xlane.f32.xlu0 %v7056
    %v7058 = vpop.xlane.xlu0 %7057
    %v7059 = vsel %vm1251, %v7043, -inf
    %7060 = vmax.xlane.f32.xlu0 %v7059
    %v7061 = vpop.xlane.xlu0 %7060
    %v7062 = vsel %vm1251, %v7044, -inf
    %7063 = vmax.xlane.f32.xlu0 %v7062
    %v7064 = vpop.xlane.xlu0 %7063
    %v7065 = vsel %vm1251, %v7045, -inf
    %7066 = vmax.xlane.f32.xlu0 %v7065
    %v7067 = vpop.xlane.xlu0 %7066
    %v7068 = vsel %vm1251, %v7046, -inf
    %7069 = vmax.xlane.f32.xlu0 %v7068
    %v7070 = vpop.xlane.xlu0 %7069
    %v7071 = vsub.f32 %v7039, %v7049
    %v7072 = vsub.f32 %v7040, %v7052
    %v7073 = vsub.f32 %v7041, %v7055
    %v7074 = vsub.f32 %v7042, %v7058
    %v7075 = vsub.f32 %v7043, %v7061
    %v7076 = vsub.f32 %v7044, %v7064
    %v7077 = vsub.f32 %v7045, %v7067
    %v7078 = vsub.f32 %v7046, %v7070
    %v7079 = vmul.f32 %v7071, 1.442695
    %v7080 = vpow.pop %v7079
    %v7081 = vmul.f32 %v7072, 1.442695
    %v7082 = vpow.pop %v7081
    %v7083 = vmul.f32 %v7073, 1.442695
    %v7084 = vpow.pop %v7083
    %v7085 = vmul.f32 %v7074, 1.442695
    %v7086 = vpow.pop %v7085
    %v7087 = vmul.f32 %v7075, 1.442695
    %v7088 = vpow.pop %v7087
    %v7089 = vmul.f32 %v7076, 1.442695
    %v7090 = vpow.pop %v7089
    %v7091 = vmul.f32 %v7077, 1.442695
    %v7092 = vpow.pop %v7091
    %v7093 = vmul.f32 %v7078, 1.442695
    %v7094 = vpow.pop %v7093
    %v7095 = vsel %vm1251, %v7080, 0.0
    %7096 = vadd.xlane.f32.xlu0 %v7095
    %v7097 = vpop.xlane.xlu0 %7096
    %v7098 = vsel %vm1251, %v7082, 0.0
    %7099 = vadd.xlane.f32.xlu0 %v7098
    %v7100 = vpop.xlane.xlu0 %7099
    %v7101 = vsel %vm1251, %v7084, 0.0
    %7102 = vadd.xlane.f32.xlu0 %v7101
    %v7103 = vpop.xlane.xlu0 %7102
    %v7104 = vsel %vm1251, %v7086, 0.0
    %7105 = vadd.xlane.f32.xlu0 %v7104
    %v7106 = vpop.xlane.xlu0 %7105
    %v7107 = vsel %vm1251, %v7088, 0.0
    %7108 = vadd.xlane.f32.xlu0 %v7107
    %v7109 = vpop.xlane.xlu0 %7108
    %v7110 = vsel %vm1251, %v7090, 0.0
    %7111 = vadd.xlane.f32.xlu0 %v7110
    %v7112 = vpop.xlane.xlu0 %7111
    %v7113 = vsel %vm1251, %v7092, 0.0
    %7114 = vadd.xlane.f32.xlu0 %v7113
    %v7115 = vpop.xlane.xlu0 %7114
    %v7116 = vsel %vm1251, %v7094, 0.0
    %7117 = vadd.xlane.f32.xlu0 %v7116
    %v7118 = vpop.xlane.xlu0 %7117
    %v7119 = vrcp.pop %v7097
    %v7120 = vrcp.pop %v7100
    %v7121 = vrcp.pop %v7103
    %v7122 = vrcp.pop %v7106
    %v7123 = vrcp.pop %v7109
    %v7124 = vrcp.pop %v7112
    %v7125 = vrcp.pop %v7115
    %v7126 = vrcp.pop %v7118
    %v7127 = vmul.f32 %v7080, %v7119
    %v7128 = vmul.f32 %v7082, %v7120
    %v7129 = vmul.f32 %v7084, %v7121
    %v7130 = vmul.f32 %v7086, %v7122
    %v7131 = vmul.f32 %v7088, %v7123
    %v7132 = vmul.f32 %v7090, %v7124
    %v7133 = vmul.f32 %v7092, %v7125
    %v7134 = vmul.f32 %v7094, %v7126
    %v7135 = vpack.c.bf16 %v7127, %v7127
    %v7136 = vpack.c.bf16 %v7128, %v7128
    %v7137 = vpack.c.bf16 %v7129, %v7129
    %v7138 = vpack.c.bf16 %v7130, %v7130
    %v7139 = vpack.c.bf16 %v7131, %v7131
    %v7140 = vpack.c.bf16 %v7132, %v7132
    %v7141 = vpack.c.bf16 %v7133, %v7133
    %v7142 = vpack.c.bf16 %v7134, %v7134
    %v7143 = vpack.c.bf16 %v6326, %v6326
    %v7144 = vpack.c.bf16 %v6378, %v6378
    %v7145 = vpack.c.bf16 %v6430, %v6430
    %v7146 = vpack.c.bf16 %v6482, %v6482
    %v7147 = vpack.c.bf16 %v6522, %v6522
    %v7148 = vpack.c.bf16 %v6562, %v6562
    %v7149 = vpack.c.bf16 %v6602, %v6602
    %v7150 = vpack.c.bf16 %v6642, %v6642
    %v7152 = vsel %vm1251, %v7135, 0
    %v7155 = vsel %vm1791, %v7143, 0
    %7157 = vmatprep.subr.bf16.mxu0 0
    %7158 = vmatpush1.bf16.msra.mxu0 %v7155
    %7159 = vmatprep.subr.bf16.mxu0 0
    %7160 = vmatpush1.bf16.msra.mxu0 0
    %7161 = vmatprep.subr.bf16.mxu0 0
    %7162 = vmatpush1.bf16.msra.mxu0 0
    %7163 = vmatprep.subr.bf16.mxu0 0
    %7164 = vmatpush1.bf16.msra.mxu0 0
    %7165 = vmatprep.subr.bf16.mxu0 0
    %7166 = vmatpush1.bf16.msra.mxu0 0
    %7167 = vmatprep.subr.bf16.mxu0 0
    %7168 = vmatpush1.bf16.msra.mxu0 0
    %7169 = vmatprep.subr.bf16.mxu0 0
    %7170 = vmatpush1.bf16.msra.mxu0 0
    %7171 = vmatprep.subr.bf16.mxu0 0
    %7172 = vmatpush1.bf16.msra.mxu0 0
    %7173 = vmatprep.subr.bf16.mxu0 0
    %7174 = vmatpush1.bf16.msra.mxu0 0
    %7175 = vmatprep.subr.bf16.mxu0 0
    %7176 = vmatpush1.bf16.msra.mxu0 0
    %7177 = vmatprep.subr.bf16.mxu0 0
    %7178 = vmatpush1.bf16.msra.mxu0 0
    %7179 = vmatprep.subr.bf16.mxu0 0
    %7180 = vmatpush1.bf16.msra.mxu0 0
    %7181 = vmatprep.subr.bf16.mxu0 0
    %7182 = vmatpush1.bf16.msra.mxu0 0
    %7183 = vmatprep.subr.bf16.mxu0 0
    %7184 = vmatpush1.bf16.msra.mxu0 0
    %7185 = vmatprep.subr.bf16.mxu0 0
    %7186 = vmatpush1.bf16.msra.mxu0 0
    %7187 = vmatprep.subr.bf16.mxu0 0
    %7188 = vmatpush1.bf16.msra.mxu0 0
    %7189 = vmatprep.mubr.bf16.mxu0 0
    %7190 = vmatmul.mubr.bf16.gmra.mrb[0].mxu0 %v7152
    %v7191 = vpop.f32.mrb[0].mxu0
    %v7192 = vadd.f32 0.0, %v7191
    %v7193 = vpop.f32.mrb[0].mxu0
    %v7194 = vpop.f32.mrb[0].mxu0
    %v7195 = vpop.f32.mrb[0].mxu0
    %7196 = vdwg.mxu0
    %v7198 = vsel %vm1251, %v7136, 0
    %v7201 = vsel %vm1791, %v7144, 0
    %7203 = vmatprep.subr.bf16.mxu0 0
    %7204 = vmatpush1.bf16.msra.mxu0 %v7201
    %7205 = vmatprep.subr.bf16.mxu0 0
    %7206 = vmatpush1.bf16.msra.mxu0 0
    %7207 = vmatprep.subr.bf16.mxu0 0
    %7208 = vmatpush1.bf16.msra.mxu0 0
    %7209 = vmatprep.subr.bf16.mxu0 0
    %7210 = vmatpush1.bf16.msra.mxu0 0
    %7211 = vmatprep.subr.bf16.mxu0 0
    %7212 = vmatpush1.bf16.msra.mxu0 0
    %7213 = vmatprep.subr.bf16.mxu0 0
    %7214 = vmatpush1.bf16.msra.mxu0 0
    %7215 = vmatprep.subr.bf16.mxu0 0
    %7216 = vmatpush1.bf16.msra.mxu0 0
    %7217 = vmatprep.subr.bf16.mxu0 0
    %7218 = vmatpush1.bf16.msra.mxu0 0
    %7219 = vmatprep.subr.bf16.mxu0 0
    %7220 = vmatpush1.bf16.msra.mxu0 0
    %7221 = vmatprep.subr.bf16.mxu0 0
    %7222 = vmatpush1.bf16.msra.mxu0 0
    %7223 = vmatprep.subr.bf16.mxu0 0
    %7224 = vmatpush1.bf16.msra.mxu0 0
    %7225 = vmatprep.subr.bf16.mxu0 0
    %7226 = vmatpush1.bf16.msra.mxu0 0
    %7227 = vmatprep.subr.bf16.mxu0 0
    %7228 = vmatpush1.bf16.msra.mxu0 0
    %7229 = vmatprep.subr.bf16.mxu0 0
    %7230 = vmatpush1.bf16.msra.mxu0 0
    %7231 = vmatprep.subr.bf16.mxu0 0
    %7232 = vmatpush1.bf16.msra.mxu0 0
    %7233 = vmatprep.subr.bf16.mxu0 0
    %7234 = vmatpush1.bf16.msra.mxu0 0
    %7235 = vmatprep.mubr.bf16.mxu0 0
    %7236 = vmatmul.mubr.bf16.gmra.mrb[0].mxu0 %v7198
    %v7237 = vpop.f32.mrb[0].mxu0
    %v7238 = vadd.f32 0.0, %v7237
    %v7239 = vpop.f32.mrb[0].mxu0
    %v7240 = vpop.f32.mrb[0].mxu0
    %v7241 = vpop.f32.mrb[0].mxu0
    %7242 = vdwg.mxu0
    %v7244 = vsel %vm1251, %v7137, 0
    %v7247 = vsel %vm1791, %v7145, 0
    %7249 = vmatprep.subr.bf16.mxu0 0
    %7250 = vmatpush1.bf16.msra.mxu0 %v7247
    %7251 = vmatprep.subr.bf16.mxu0 0
    %7252 = vmatpush1.bf16.msra.mxu0 0
    %7253 = vmatprep.subr.bf16.mxu0 0
    %7254 = vmatpush1.bf16.msra.mxu0 0
    %7255 = vmatprep.subr.bf16.mxu0 0
    %7256 = vmatpush1.bf16.msra.mxu0 0
    %7257 = vmatprep.subr.bf16.mxu0 0
    %7258 = vmatpush1.bf16.msra.mxu0 0
    %7259 = vmatprep.subr.bf16.mxu0 0
    %7260 = vmatpush1.bf16.msra.mxu0 0
    %7261 = vmatprep.subr.bf16.mxu0 0
    %7262 = vmatpush1.bf16.msra.mxu0 0
    %7263 = vmatprep.subr.bf16.mxu0 0
    %7264 = vmatpush1.bf16.msra.mxu0 0
    %7265 = vmatprep.subr.bf16.mxu0 0
    %7266 = vmatpush1.bf16.msra.mxu0 0
    %7267 = vmatprep.subr.bf16.mxu0 0
    %7268 = vmatpush1.bf16.msra.mxu0 0
    %7269 = vmatprep.subr.bf16.mxu0 0
    %7270 = vmatpush1.bf16.msra.mxu0 0
    %7271 = vmatprep.subr.bf16.mxu0 0
    %7272 = vmatpush1.bf16.msra.mxu0 0
    %7273 = vmatprep.subr.bf16.mxu0 0
    %7274 = vmatpush1.bf16.msra.mxu0 0
    %7275 = vmatprep.subr.bf16.mxu0 0
    %7276 = vmatpush1.bf16.msra.mxu0 0
    %7277 = vmatprep.subr.bf16.mxu0 0
    %7278 = vmatpush1.bf16.msra.mxu0 0
    %7279 = vmatprep.subr.bf16.mxu0 0
    %7280 = vmatpush1.bf16.msra.mxu0 0
    %7281 = vmatprep.mubr.bf16.mxu0 0
    %7282 = vmatmul.mubr.bf16.gmra.mrb[0].mxu0 %v7244
    %v7283 = vpop.f32.mrb[0].mxu0
    %v7284 = vadd.f32 0.0, %v7283
    %v7285 = vpop.f32.mrb[0].mxu0
    %v7286 = vpop.f32.mrb[0].mxu0
    %v7287 = vpop.f32.mrb[0].mxu0
    %7288 = vdwg.mxu0
    %v7290 = vsel %vm1251, %v7138, 0
    %v7293 = vsel %vm1791, %v7146, 0
    %7295 = vmatprep.subr.bf16.mxu0 0
    %7296 = vmatpush1.bf16.msra.mxu0 %v7293
    %7297 = vmatprep.subr.bf16.mxu0 0
    %7298 = vmatpush1.bf16.msra.mxu0 0
    %7299 = vmatprep.subr.bf16.mxu0 0
    %7300 = vmatpush1.bf16.msra.mxu0 0
    %7301 = vmatprep.subr.bf16.mxu0 0
    %7302 = vmatpush1.bf16.msra.mxu0 0
    %7303 = vmatprep.subr.bf16.mxu0 0
    %7304 = vmatpush1.bf16.msra.mxu0 0
    %7305 = vmatprep.subr.bf16.mxu0 0
    %7306 = vmatpush1.bf16.msra.mxu0 0
    %7307 = vmatprep.subr.bf16.mxu0 0
    %7308 = vmatpush1.bf16.msra.mxu0 0
    %7309 = vmatprep.subr.bf16.mxu0 0
    %7310 = vmatpush1.bf16.msra.mxu0 0
    %7311 = vmatprep.subr.bf16.mxu0 0
    %7312 = vmatpush1.bf16.msra.mxu0 0
    %7313 = vmatprep.subr.bf16.mxu0 0
    %7314 = vmatpush1.bf16.msra.mxu0 0
    %7315 = vmatprep.subr.bf16.mxu0 0
    %7316 = vmatpush1.bf16.msra.mxu0 0
    %7317 = vmatprep.subr.bf16.mxu0 0
    %7318 = vmatpush1.bf16.msra.mxu0 0
    %7319 = vmatprep.subr.bf16.mxu0 0
    %7320 = vmatpush1.bf16.msra.mxu0 0
    %7321 = vmatprep.subr.bf16.mxu0 0
    %7322 = vmatpush1.bf16.msra.mxu0 0
    %7323 = vmatprep.subr.bf16.mxu0 0
    %7324 = vmatpush1.bf16.msra.mxu0 0
    %7325 = vmatprep.subr.bf16.mxu0 0
    %7326 = vmatpush1.bf16.msra.mxu0 0
    %7327 = vmatprep.mubr.bf16.mxu0 0
    %7328 = vmatmul.mubr.bf16.gmra.mrb[0].mxu0 %v7290
    %v7329 = vpop.f32.mrb[0].mxu0
    %v7330 = vadd.f32 0.0, %v7329
    %v7331 = vpop.f32.mrb[0].mxu0
    %v7332 = vpop.f32.mrb[0].mxu0
    %v7333 = vpop.f32.mrb[0].mxu0
    %7334 = vdwg.mxu0
    %v7336 = vsel %vm1251, %v7139, 0
    %v7339 = vsel %vm1791, %v7147, 0
    %7341 = vmatprep.subr.bf16.mxu0 0
    %7342 = vmatpush1.bf16.msra.mxu0 %v7339
    %7343 = vmatprep.subr.bf16.mxu0 0
    %7344 = vmatpush1.bf16.msra.mxu0 0
    %7345 = vmatprep.subr.bf16.mxu0 0
    %7346 = vmatpush1.bf16.msra.mxu0 0
    %7347 = vmatprep.subr.bf16.mxu0 0
    %7348 = vmatpush1.bf16.msra.mxu0 0
    %7349 = vmatprep.subr.bf16.mxu0 0
    %7350 = vmatpush1.bf16.msra.mxu0 0
    %7351 = vmatprep.subr.bf16.mxu0 0
    %7352 = vmatpush1.bf16.msra.mxu0 0
    %7353 = vmatprep.subr.bf16.mxu0 0
    %7354 = vmatpush1.bf16.msra.mxu0 0
    %7355 = vmatprep.subr.bf16.mxu0 0
    %7356 = vmatpush1.bf16.msra.mxu0 0
    %7357 = vmatprep.subr.bf16.mxu0 0
    %7358 = vmatpush1.bf16.msra.mxu0 0
    %7359 = vmatprep.subr.bf16.mxu0 0
    %7360 = vmatpush1.bf16.msra.mxu0 0
    %7361 = vmatprep.subr.bf16.mxu0 0
    %7362 = vmatpush1.bf16.msra.mxu0 0
    %7363 = vmatprep.subr.bf16.mxu0 0
    %7364 = vmatpush1.bf16.msra.mxu0 0
    %7365 = vmatprep.subr.bf16.mxu0 0
    %7366 = vmatpush1.bf16.msra.mxu0 0
    %7367 = vmatprep.subr.bf16.mxu0 0
    %7368 = vmatpush1.bf16.msra.mxu0 0
    %7369 = vmatprep.subr.bf16.mxu0 0
    %7370 = vmatpush1.bf16.msra.mxu0 0
    %7371 = vmatprep.subr.bf16.mxu0 0
    %7372 = vmatpush1.bf16.msra.mxu0 0
    %7373 = vmatprep.mubr.bf16.mxu0 0
    %7374 = vmatmul.mubr.bf16.gmra.mrb[0].mxu0 %v7336
    %v7375 = vpop.f32.mrb[0].mxu0
    %v7376 = vadd.f32 0.0, %v7375
    %v7377 = vpop.f32.mrb[0].mxu0
    %v7378 = vpop.f32.mrb[0].mxu0
    %v7379 = vpop.f32.mrb[0].mxu0
    %7380 = vdwg.mxu0
    %v7382 = vsel %vm1251, %v7140, 0
    %v7385 = vsel %vm1791, %v7148, 0
    %7387 = vmatprep.subr.bf16.mxu0 0
    %7388 = vmatpush1.bf16.msra.mxu0 %v7385
    %7389 = vmatprep.subr.bf16.mxu0 0
    %7390 = vmatpush1.bf16.msra.mxu0 0
    %7391 = vmatprep.subr.bf16.mxu0 0
    %7392 = vmatpush1.bf16.msra.mxu0 0
    %7393 = vmatprep.subr.bf16.mxu0 0
    %7394 = vmatpush1.bf16.msra.mxu0 0
    %7395 = vmatprep.subr.bf16.mxu0 0
    %7396 = vmatpush1.bf16.msra.mxu0 0
    %7397 = vmatprep.subr.bf16.mxu0 0
    %7398 = vmatpush1.bf16.msra.mxu0 0
    %7399 = vmatprep.subr.bf16.mxu0 0
    %7400 = vmatpush1.bf16.msra.mxu0 0
    %7401 = vmatprep.subr.bf16.mxu0 0
    %7402 = vmatpush1.bf16.msra.mxu0 0
    %7403 = vmatprep.subr.bf16.mxu0 0
    %7404 = vmatpush1.bf16.msra.mxu0 0
    %7405 = vmatprep.subr.bf16.mxu0 0
    %7406 = vmatpush1.bf16.msra.mxu0 0
    %7407 = vmatprep.subr.bf16.mxu0 0
    %7408 = vmatpush1.bf16.msra.mxu0 0
    %7409 = vmatprep.subr.bf16.mxu0 0
    %7410 = vmatpush1.bf16.msra.mxu0 0
    %7411 = vmatprep.subr.bf16.mxu0 0
    %7412 = vmatpush1.bf16.msra.mxu0 0
    %7413 = vmatprep.subr.bf16.mxu0 0
    %7414 = vmatpush1.bf16.msra.mxu0 0
    %7415 = vmatprep.subr.bf16.mxu0 0
    %7416 = vmatpush1.bf16.msra.mxu0 0
    %7417 = vmatprep.subr.bf16.mxu0 0
    %7418 = vmatpush1.bf16.msra.mxu0 0
    %7419 = vmatprep.mubr.bf16.mxu0 0
    %7420 = vmatmul.mubr.bf16.gmra.mrb[0].mxu0 %v7382
    %v7421 = vpop.f32.mrb[0].mxu0
    %v7422 = vadd.f32 0.0, %v7421
    %v7423 = vpop.f32.mrb[0].mxu0
    %v7424 = vpop.f32.mrb[0].mxu0
    %v7425 = vpop.f32.mrb[0].mxu0
    %7426 = vdwg.mxu0
    %v7428 = vsel %vm1251, %v7141, 0
    %v7431 = vsel %vm1791, %v7149, 0
    %7433 = vmatprep.subr.bf16.mxu0 0
    %7434 = vmatpush1.bf16.msra.mxu0 %v7431
    %7435 = vmatprep.subr.bf16.mxu0 0
    %7436 = vmatpush1.bf16.msra.mxu0 0
    %7437 = vmatprep.subr.bf16.mxu0 0
    %7438 = vmatpush1.bf16.msra.mxu0 0
    %7439 = vmatprep.subr.bf16.mxu0 0
    %7440 = vmatpush1.bf16.msra.mxu0 0
    %7441 = vmatprep.subr.bf16.mxu0 0
    %7442 = vmatpush1.bf16.msra.mxu0 0
    %7443 = vmatprep.subr.bf16.mxu0 0
    %7444 = vmatpush1.bf16.msra.mxu0 0
    %7445 = vmatprep.subr.bf16.mxu0 0
    %7446 = vmatpush1.bf16.msra.mxu0 0
    %7447 = vmatprep.subr.bf16.mxu0 0
    %7448 = vmatpush1.bf16.msra.mxu0 0
    %7449 = vmatprep.subr.bf16.mxu0 0
    %7450 = vmatpush1.bf16.msra.mxu0 0
    %7451 = vmatprep.subr.bf16.mxu0 0
    %7452 = vmatpush1.bf16.msra.mxu0 0
    %7453 = vmatprep.subr.bf16.mxu0 0
    %7454 = vmatpush1.bf16.msra.mxu0 0
    %7455 = vmatprep.subr.bf16.mxu0 0
    %7456 = vmatpush1.bf16.msra.mxu0 0
    %7457 = vmatprep.subr.bf16.mxu0 0
    %7458 = vmatpush1.bf16.msra.mxu0 0
    %7459 = vmatprep.subr.bf16.mxu0 0
    %7460 = vmatpush1.bf16.msra.mxu0 0
    %7461 = vmatprep.subr.bf16.mxu0 0
    %7462 = vmatpush1.bf16.msra.mxu0 0
    %7463 = vmatprep.subr.bf16.mxu0 0
    %7464 = vmatpush1.bf16.msra.mxu0 0
    %7465 = vmatprep.mubr.bf16.mxu0 0
    %7466 = vmatmul.mubr.bf16.gmra.mrb[0].mxu0 %v7428
    %v7467 = vpop.f32.mrb[0].mxu0
    %v7468 = vadd.f32 0.0, %v7467
    %v7469 = vpop.f32.mrb[0].mxu0
    %v7470 = vpop.f32.mrb[0].mxu0
    %v7471 = vpop.f32.mrb[0].mxu0
    %7472 = vdwg.mxu0
    %v7474 = vsel %vm1251, %v7142, 0
    %v7477 = vsel %vm1791, %v7150, 0
    %7479 = vmatprep.subr.bf16.mxu0 0
    %7480 = vmatpush1.bf16.msra.mxu0 %v7477
    %7481 = vmatprep.subr.bf16.mxu0 0
    %7482 = vmatpush1.bf16.msra.mxu0 0
    %7483 = vmatprep.subr.bf16.mxu0 0
    %7484 = vmatpush1.bf16.msra.mxu0 0
    %7485 = vmatprep.subr.bf16.mxu0 0
    %7486 = vmatpush1.bf16.msra.mxu0 0
    %7487 = vmatprep.subr.bf16.mxu0 0
    %7488 = vmatpush1.bf16.msra.mxu0 0
    %7489 = vmatprep.subr.bf16.mxu0 0
    %7490 = vmatpush1.bf16.msra.mxu0 0
    %7491 = vmatprep.subr.bf16.mxu0 0
    %7492 = vmatpush1.bf16.msra.mxu0 0
    %7493 = vmatprep.subr.bf16.mxu0 0
    %7494 = vmatpush1.bf16.msra.mxu0 0
    %7495 = vmatprep.subr.bf16.mxu0 0
    %7496 = vmatpush1.bf16.msra.mxu0 0
    %7497 = vmatprep.subr.bf16.mxu0 0
    %7498 = vmatpush1.bf16.msra.mxu0 0
    %7499 = vmatprep.subr.bf16.mxu0 0
    %7500 = vmatpush1.bf16.msra.mxu0 0
    %7501 = vmatprep.subr.bf16.mxu0 0
    %7502 = vmatpush1.bf16.msra.mxu0 0
    %7503 = vmatprep.subr.bf16.mxu0 0
    %7504 = vmatpush1.bf16.msra.mxu0 0
    %7505 = vmatprep.subr.bf16.mxu0 0
    %7506 = vmatpush1.bf16.msra.mxu0 0
    %7507 = vmatprep.subr.bf16.mxu0 0
    %7508 = vmatpush1.bf16.msra.mxu0 0
    %7509 = vmatprep.subr.bf16.mxu0 0
    %7510 = vmatpush1.bf16.msra.mxu0 0
    %7511 = vmatprep.mubr.bf16.mxu0 0
    %7512 = vmatmul.mubr.bf16.gmra.mrb[0].mxu0 %v7474
    %v7513 = vpop.f32.mrb[0].mxu0
    %v7514 = vadd.f32 0.0, %v7513
    %v7515 = vpop.f32.mrb[0].mxu0
    %v7516 = vpop.f32.mrb[0].mxu0
    %v7517 = vpop.f32.mrb[0].mxu0
    %7518 = vdwg.mxu0
    %v7519 = vpack.c.bf16 %v7192, %v7192
    %v7520 = vpack.c.bf16 %v7238, %v7238
    %v7521 = vpack.c.bf16 %v7284, %v7284
    %v7522 = vpack.c.bf16 %v7330, %v7330
    %v7523 = vpack.c.bf16 %v7376, %v7376
    %v7524 = vpack.c.bf16 %v7422, %v7422
    %v7525 = vpack.c.bf16 %v7468, %v7468
    %v7526 = vpack.c.bf16 %v7514, %v7514
    %v7528 = vsel %vm1251, %v7519, 0
    %v7531 = vsel %vm1791, %v5505, 0
    %7533 = vmatprep.subr.bf16.mxu0 0
    %7534 = vmatpush1.bf16.msra.mxu0 %v7531
    %7535 = vmatprep.subr.bf16.mxu0 0
    %7536 = vmatpush1.bf16.msra.mxu0 0
    %7537 = vmatprep.subr.bf16.mxu0 0
    %7538 = vmatpush1.bf16.msra.mxu0 0
    %7539 = vmatprep.subr.bf16.mxu0 0
    %7540 = vmatpush1.bf16.msra.mxu0 0
    %7541 = vmatprep.subr.bf16.mxu0 0
    %7542 = vmatpush1.bf16.msra.mxu0 0
    %7543 = vmatprep.subr.bf16.mxu0 0
    %7544 = vmatpush1.bf16.msra.mxu0 0
    %7545 = vmatprep.subr.bf16.mxu0 0
    %7546 = vmatpush1.bf16.msra.mxu0 0
    %7547 = vmatprep.subr.bf16.mxu0 0
    %7548 = vmatpush1.bf16.msra.mxu0 0
    %7549 = vmatprep.subr.bf16.mxu0 0
    %7550 = vmatpush1.bf16.msra.mxu0 0
    %7551 = vmatprep.subr.bf16.mxu0 0
    %7552 = vmatpush1.bf16.msra.mxu0 0
    %7553 = vmatprep.subr.bf16.mxu0 0
    %7554 = vmatpush1.bf16.msra.mxu0 0
    %7555 = vmatprep.subr.bf16.mxu0 0
    %7556 = vmatpush1.bf16.msra.mxu0 0
    %7557 = vmatprep.subr.bf16.mxu0 0
    %7558 = vmatpush1.bf16.msra.mxu0 0
    %7559 = vmatprep.subr.bf16.mxu0 0
    %7560 = vmatpush1.bf16.msra.mxu0 0
    %7561 = vmatprep.subr.bf16.mxu0 0
    %7562 = vmatpush1.bf16.msra.mxu0 0
    %7563 = vmatprep.subr.bf16.mxu0 0
    %7564 = vmatpush1.bf16.msra.mxu0 0
    %7565 = vmatprep.mubr.bf16.mxu0 0
    %7566 = vmatmul.mubr.bf16.gmra.mrb[0].mxu0 %v7528
    %v7567 = vpop.f32.mrb[0].mxu0
    %v7568 = vadd.f32 0.0, %v7567
    %v7569 = vpop.f32.mrb[0].mxu0
    %v7570 = vpop.f32.mrb[0].mxu0
    %v7571 = vpop.f32.mrb[0].mxu0
    %7572 = vdwg.mxu0
    %v7574 = vsel %vm1251, %v7520, 0
    %v7577 = vsel %vm1791, %v5506, 0
    %7579 = vmatprep.subr.bf16.mxu0 0
    %7580 = vmatpush1.bf16.msra.mxu0 %v7577
    %7581 = vmatprep.subr.bf16.mxu0 0
    %7582 = vmatpush1.bf16.msra.mxu0 0
    %7583 = vmatprep.subr.bf16.mxu0 0
    %7584 = vmatpush1.bf16.msra.mxu0 0
    %7585 = vmatprep.subr.bf16.mxu0 0
    %7586 = vmatpush1.bf16.msra.mxu0 0
    %7587 = vmatprep.subr.bf16.mxu0 0
    %7588 = vmatpush1.bf16.msra.mxu0 0
    %7589 = vmatprep.subr.bf16.mxu0 0
    %7590 = vmatpush1.bf16.msra.mxu0 0
    %7591 = vmatprep.subr.bf16.mxu0 0
    %7592 = vmatpush1.bf16.msra.mxu0 0
    %7593 = vmatprep.subr.bf16.mxu0 0
    %7594 = vmatpush1.bf16.msra.mxu0 0
    %7595 = vmatprep.subr.bf16.mxu0 0
    %7596 = vmatpush1.bf16.msra.mxu0 0
    %7597 = vmatprep.subr.bf16.mxu0 0
    %7598 = vmatpush1.bf16.msra.mxu0 0
    %7599 = vmatprep.subr.bf16.mxu0 0
    %7600 = vmatpush1.bf16.msra.mxu0 0
    %7601 = vmatprep.subr.bf16.mxu0 0
    %7602 = vmatpush1.bf16.msra.mxu0 0
    %7603 = vmatprep.subr.bf16.mxu0 0
    %7604 = vmatpush1.bf16.msra.mxu0 0
    %7605 = vmatprep.subr.bf16.mxu0 0
    %7606 = vmatpush1.bf16.msra.mxu0 0
    %7607 = vmatprep.subr.bf16.mxu0 0
    %7608 = vmatpush1.bf16.msra.mxu0 0
    %7609 = vmatprep.subr.bf16.mxu0 0
    %7610 = vmatpush1.bf16.msra.mxu0 0
    %7611 = vmatprep.mubr.bf16.mxu0 0
    %7612 = vmatmul.mubr.bf16.gmra.mrb[0].mxu0 %v7574
    %v7613 = vpop.f32.mrb[0].mxu0
    %v7614 = vadd.f32 0.0, %v7613
    %v7615 = vpop.f32.mrb[0].mxu0
    %v7616 = vpop.f32.mrb[0].mxu0
    %v7617 = vpop.f32.mrb[0].mxu0
    %7618 = vdwg.mxu0
    %v7620 = vsel %vm1251, %v7521, 0
    %v7623 = vsel %vm1791, %v5507, 0
    %7625 = vmatprep.subr.bf16.mxu0 0
    %7626 = vmatpush1.bf16.msra.mxu0 %v7623
    %7627 = vmatprep.subr.bf16.mxu0 0
    %7628 = vmatpush1.bf16.msra.mxu0 0
    %7629 = vmatprep.subr.bf16.mxu0 0
    %7630 = vmatpush1.bf16.msra.mxu0 0
    %7631 = vmatprep.subr.bf16.mxu0 0
    %7632 = vmatpush1.bf16.msra.mxu0 0
    %7633 = vmatprep.subr.bf16.mxu0 0
    %7634 = vmatpush1.bf16.msra.mxu0 0
    %7635 = vmatprep.subr.bf16.mxu0 0
    %7636 = vmatpush1.bf16.msra.mxu0 0
    %7637 = vmatprep.subr.bf16.mxu0 0
    %7638 = vmatpush1.bf16.msra.mxu0 0
    %7639 = vmatprep.subr.bf16.mxu0 0
    %7640 = vmatpush1.bf16.msra.mxu0 0
    %7641 = vmatprep.subr.bf16.mxu0 0
    %7642 = vmatpush1.bf16.msra.mxu0 0
    %7643 = vmatprep.subr.bf16.mxu0 0
    %7644 = vmatpush1.bf16.msra.mxu0 0
    %7645 = vmatprep.subr.bf16.mxu0 0
    %7646 = vmatpush1.bf16.msra.mxu0 0
    %7647 = vmatprep.subr.bf16.mxu0 0
    %7648 = vmatpush1.bf16.msra.mxu0 0
    %7649 = vmatprep.subr.bf16.mxu0 0
    %7650 = vmatpush1.bf16.msra.mxu0 0
    %7651 = vmatprep.subr.bf16.mxu0 0
    %7652 = vmatpush1.bf16.msra.mxu0 0
    %7653 = vmatprep.subr.bf16.mxu0 0
    %7654 = vmatpush1.bf16.msra.mxu0 0
    %7655 = vmatprep.subr.bf16.mxu0 0
    %7656 = vmatpush1.bf16.msra.mxu0 0
    %7657 = vmatprep.mubr.bf16.mxu0 0
    %7658 = vmatmul.mubr.bf16.gmra.mrb[0].mxu0 %v7620
    %v7659 = vpop.f32.mrb[0].mxu0
    %v7660 = vadd.f32 0.0, %v7659
    %v7661 = vpop.f32.mrb[0].mxu0
    %v7662 = vpop.f32.mrb[0].mxu0
    %v7663 = vpop.f32.mrb[0].mxu0
    %7664 = vdwg.mxu0
    %v7666 = vsel %vm1251, %v7522, 0
    %v7669 = vsel %vm1791, %v5508, 0
    %7671 = vmatprep.subr.bf16.mxu0 0
    %7672 = vmatpush1.bf16.msra.mxu0 %v7669
    %7673 = vmatprep.subr.bf16.mxu0 0
    %7674 = vmatpush1.bf16.msra.mxu0 0
    %7675 = vmatprep.subr.bf16.mxu0 0
    %7676 = vmatpush1.bf16.msra.mxu0 0
    %7677 = vmatprep.subr.bf16.mxu0 0
    %7678 = vmatpush1.bf16.msra.mxu0 0
    %7679 = vmatprep.subr.bf16.mxu0 0
    %7680 = vmatpush1.bf16.msra.mxu0 0
    %7681 = vmatprep.subr.bf16.mxu0 0
    %7682 = vmatpush1.bf16.msra.mxu0 0
    %7683 = vmatprep.subr.bf16.mxu0 0
    %7684 = vmatpush1.bf16.msra.mxu0 0
    %7685 = vmatprep.subr.bf16.mxu0 0
    %7686 = vmatpush1.bf16.msra.mxu0 0
    %7687 = vmatprep.subr.bf16.mxu0 0
    %7688 = vmatpush1.bf16.msra.mxu0 0
    %7689 = vmatprep.subr.bf16.mxu0 0
    %7690 = vmatpush1.bf16.msra.mxu0 0
    %7691 = vmatprep.subr.bf16.mxu0 0
    %7692 = vmatpush1.bf16.msra.mxu0 0
    %7693 = vmatprep.subr.bf16.mxu0 0
    %7694 = vmatpush1.bf16.msra.mxu0 0
    %7695 = vmatprep.subr.bf16.mxu0 0
    %7696 = vmatpush1.bf16.msra.mxu0 0
    %7697 = vmatprep.subr.bf16.mxu0 0
    %7698 = vmatpush1.bf16.msra.mxu0 0
    %7699 = vmatprep.subr.bf16.mxu0 0
    %7700 = vmatpush1.bf16.msra.mxu0 0
    %7701 = vmatprep.subr.bf16.mxu0 0
    %7702 = vmatpush1.bf16.msra.mxu0 0
    %7703 = vmatprep.mubr.bf16.mxu0 0
    %7704 = vmatmul.mubr.bf16.gmra.mrb[0].mxu0 %v7666
    %v7705 = vpop.f32.mrb[0].mxu0
    %v7706 = vadd.f32 0.0, %v7705
    %v7707 = vpop.f32.mrb[0].mxu0
    %v7708 = vpop.f32.mrb[0].mxu0
    %v7709 = vpop.f32.mrb[0].mxu0
    %7710 = vdwg.mxu0
    %v7712 = vsel %vm1251, %v7523, 0
    %7714 = vmatprep.subr.bf16.mxu0 0
    %7715 = vmatpush1.bf16.msra.mxu0 %v7531
    %7716 = vmatprep.subr.bf16.mxu0 0
    %7717 = vmatpush1.bf16.msra.mxu0 0
    %7718 = vmatprep.subr.bf16.mxu0 0
    %7719 = vmatpush1.bf16.msra.mxu0 0
    %7720 = vmatprep.subr.bf16.mxu0 0
    %7721 = vmatpush1.bf16.msra.mxu0 0
    %7722 = vmatprep.subr.bf16.mxu0 0
    %7723 = vmatpush1.bf16.msra.mxu0 0
    %7724 = vmatprep.subr.bf16.mxu0 0
    %7725 = vmatpush1.bf16.msra.mxu0 0
    %7726 = vmatprep.subr.bf16.mxu0 0
    %7727 = vmatpush1.bf16.msra.mxu0 0
    %7728 = vmatprep.subr.bf16.mxu0 0
    %7729 = vmatpush1.bf16.msra.mxu0 0
    %7730 = vmatprep.subr.bf16.mxu0 0
    %7731 = vmatpush1.bf16.msra.mxu0 0
    %7732 = vmatprep.subr.bf16.mxu0 0
    %7733 = vmatpush1.bf16.msra.mxu0 0
    %7734 = vmatprep.subr.bf16.mxu0 0
    %7735 = vmatpush1.bf16.msra.mxu0 0
    %7736 = vmatprep.subr.bf16.mxu0 0
    %7737 = vmatpush1.bf16.msra.mxu0 0
    %7738 = vmatprep.subr.bf16.mxu0 0
    %7739 = vmatpush1.bf16.msra.mxu0 0
    %7740 = vmatprep.subr.bf16.mxu0 0
    %7741 = vmatpush1.bf16.msra.mxu0 0
    %7742 = vmatprep.subr.bf16.mxu0 0
    %7743 = vmatpush1.bf16.msra.mxu0 0
    %7744 = vmatprep.subr.bf16.mxu0 0
    %7745 = vmatpush1.bf16.msra.mxu0 0
    %7746 = vmatprep.mubr.bf16.mxu0 0
    %7747 = vmatmul.mubr.bf16.gmra.mrb[0].mxu0 %v7712
    %v7748 = vpop.f32.mrb[0].mxu0
    %v7749 = vadd.f32 0.0, %v7748
    %v7750 = vpop.f32.mrb[0].mxu0
    %v7751 = vpop.f32.mrb[0].mxu0
    %v7752 = vpop.f32.mrb[0].mxu0
    %7753 = vdwg.mxu0
    %v7755 = vsel %vm1251, %v7524, 0
    %7757 = vmatprep.subr.bf16.mxu0 0
    %7758 = vmatpush1.bf16.msra.mxu0 %v7577
    %7759 = vmatprep.subr.bf16.mxu0 0
    %7760 = vmatpush1.bf16.msra.mxu0 0
    %7761 = vmatprep.subr.bf16.mxu0 0
    %7762 = vmatpush1.bf16.msra.mxu0 0
    %7763 = vmatprep.subr.bf16.mxu0 0
    %7764 = vmatpush1.bf16.msra.mxu0 0
    %7765 = vmatprep.subr.bf16.mxu0 0
    %7766 = vmatpush1.bf16.msra.mxu0 0
    %7767 = vmatprep.subr.bf16.mxu0 0
    %7768 = vmatpush1.bf16.msra.mxu0 0
    %7769 = vmatprep.subr.bf16.mxu0 0
    %7770 = vmatpush1.bf16.msra.mxu0 0
    %7771 = vmatprep.subr.bf16.mxu0 0
    %7772 = vmatpush1.bf16.msra.mxu0 0
    %7773 = vmatprep.subr.bf16.mxu0 0
    %7774 = vmatpush1.bf16.msra.mxu0 0
    %7775 = vmatprep.subr.bf16.mxu0 0
    %7776 = vmatpush1.bf16.msra.mxu0 0
    %7777 = vmatprep.subr.bf16.mxu0 0
    %7778 = vmatpush1.bf16.msra.mxu0 0
    %7779 = vmatprep.subr.bf16.mxu0 0
    %7780 = vmatpush1.bf16.msra.mxu0 0
    %7781 = vmatprep.subr.bf16.mxu0 0
    %7782 = vmatpush1.bf16.msra.mxu0 0
    %7783 = vmatprep.subr.bf16.mxu0 0
    %7784 = vmatpush1.bf16.msra.mxu0 0
    %7785 = vmatprep.subr.bf16.mxu0 0
    %7786 = vmatpush1.bf16.msra.mxu0 0
    %7787 = vmatprep.subr.bf16.mxu0 0
    %7788 = vmatpush1.bf16.msra.mxu0 0
    %7789 = vmatprep.mubr.bf16.mxu0 0
    %7790 = vmatmul.mubr.bf16.gmra.mrb[0].mxu0 %v7755
    %v7791 = vpop.f32.mrb[0].mxu0
    %v7792 = vadd.f32 0.0, %v7791
    %v7793 = vpop.f32.mrb[0].mxu0
    %v7794 = vpop.f32.mrb[0].mxu0
    %v7795 = vpop.f32.mrb[0].mxu0
    %7796 = vdwg.mxu0
    %v7798 = vsel %vm1251, %v7525, 0
    %7800 = vmatprep.subr.bf16.mxu0 0
    %7801 = vmatpush1.bf16.msra.mxu0 %v7623
    %7802 = vmatprep.subr.bf16.mxu0 0
    %7803 = vmatpush1.bf16.msra.mxu0 0
    %7804 = vmatprep.subr.bf16.mxu0 0
    %7805 = vmatpush1.bf16.msra.mxu0 0
    %7806 = vmatprep.subr.bf16.mxu0 0
    %7807 = vmatpush1.bf16.msra.mxu0 0
    %7808 = vmatprep.subr.bf16.mxu0 0
    %7809 = vmatpush1.bf16.msra.mxu0 0
    %7810 = vmatprep.subr.bf16.mxu0 0
    %7811 = vmatpush1.bf16.msra.mxu0 0
    %7812 = vmatprep.subr.bf16.mxu0 0
    %7813 = vmatpush1.bf16.msra.mxu0 0
    %7814 = vmatprep.subr.bf16.mxu0 0
    %7815 = vmatpush1.bf16.msra.mxu0 0
    %7816 = vmatprep.subr.bf16.mxu0 0
    %7817 = vmatpush1.bf16.msra.mxu0 0
    %7818 = vmatprep.subr.bf16.mxu0 0
    %7819 = vmatpush1.bf16.msra.mxu0 0
    %7820 = vmatprep.subr.bf16.mxu0 0
    %7821 = vmatpush1.bf16.msra.mxu0 0
    %7822 = vmatprep.subr.bf16.mxu0 0
    %7823 = vmatpush1.bf16.msra.mxu0 0
    %7824 = vmatprep.subr.bf16.mxu0 0
    %7825 = vmatpush1.bf16.msra.mxu0 0
    %7826 = vmatprep.subr.bf16.mxu0 0
    %7827 = vmatpush1.bf16.msra.mxu0 0
    %7828 = vmatprep.subr.bf16.mxu0 0
    %7829 = vmatpush1.bf16.msra.mxu0 0
    %7830 = vmatprep.subr.bf16.mxu0 0
    %7831 = vmatpush1.bf16.msra.mxu0 0
    %7832 = vmatprep.mubr.bf16.mxu0 0
    %7833 = vmatmul.mubr.bf16.gmra.mrb[0].mxu0 %v7798
    %v7834 = vpop.f32.mrb[0].mxu0
    %v7835 = vadd.f32 0.0, %v7834
    %v7836 = vpop.f32.mrb[0].mxu0
    %v7837 = vpop.f32.mrb[0].mxu0
    %v7838 = vpop.f32.mrb[0].mxu0
    %7839 = vdwg.mxu0
    %v7841 = vsel %vm1251, %v7526, 0
    %7843 = vmatprep.subr.bf16.mxu0 0
    %7844 = vmatpush1.bf16.msra.mxu0 %v7669
    %7845 = vmatprep.subr.bf16.mxu0 0
    %7846 = vmatpush1.bf16.msra.mxu0 0
    %7847 = vmatprep.subr.bf16.mxu0 0
    %7848 = vmatpush1.bf16.msra.mxu0 0
    %7849 = vmatprep.subr.bf16.mxu0 0
    %7850 = vmatpush1.bf16.msra.mxu0 0
    %7851 = vmatprep.subr.bf16.mxu0 0
    %7852 = vmatpush1.bf16.msra.mxu0 0
    %7853 = vmatprep.subr.bf16.mxu0 0
    %7854 = vmatpush1.bf16.msra.mxu0 0
    %7855 = vmatprep.subr.bf16.mxu0 0
    %7856 = vmatpush1.bf16.msra.mxu0 0
    %7857 = vmatprep.subr.bf16.mxu0 0
    %7858 = vmatpush1.bf16.msra.mxu0 0
    %7859 = vmatprep.subr.bf16.mxu0 0
    %7860 = vmatpush1.bf16.msra.mxu0 0
    %7861 = vmatprep.subr.bf16.mxu0 0
    %7862 = vmatpush1.bf16.msra.mxu0 0
    %7863 = vmatprep.subr.bf16.mxu0 0
    %7864 = vmatpush1.bf16.msra.mxu0 0
    %7865 = vmatprep.subr.bf16.mxu0 0
    %7866 = vmatpush1.bf16.msra.mxu0 0
    %7867 = vmatprep.subr.bf16.mxu0 0
    %7868 = vmatpush1.bf16.msra.mxu0 0
    %7869 = vmatprep.subr.bf16.mxu0 0
    %7870 = vmatpush1.bf16.msra.mxu0 0
    %7871 = vmatprep.subr.bf16.mxu0 0
    %7872 = vmatpush1.bf16.msra.mxu0 0
    %7873 = vmatprep.subr.bf16.mxu0 0
    %7874 = vmatpush1.bf16.msra.mxu0 0
    %7875 = vmatprep.mubr.bf16.mxu0 0
    %7876 = vmatmul.mubr.bf16.gmra.mrb[0].mxu0 %v7841
    %v7877 = vpop.f32.mrb[0].mxu0
    %v7878 = vadd.f32 0.0, %v7877
    %v7879 = vpop.f32.mrb[0].mxu0
    %v7880 = vpop.f32.mrb[0].mxu0
    %v7881 = vpop.f32.mrb[0].mxu0
    %7882 = vdwg.mxu0
    %v7883 = vadd.f32 %v7568, %v7614
    %v7884 = vadd.f32 %v7749, %v7792
    %v7885 = vadd.f32 %v7883, %v7660
    %v7886 = vadd.f32 %v7884, %v7835
    %v7887 = vadd.f32 %v7885, %v7706
    %v7888 = vadd.f32 %v7886, %v7878
    %v7889 = vadd.f32 %v5451, %v7887
    %v7890 = vadd.f32 %v5452, %v7888
    %v7891 = vsel %vm136, %v7889, 0.0
    %7892 = vadd.xlane.f32.xlu0 %v7891
    %v7893 = vpop.xlane.xlu0 %7892
    %v7894 = vsel %vm136, %v7890, 0.0
    %7895 = vadd.xlane.f32.xlu0 %v7894
    %v7896 = vpop.xlane.xlu0 %7895
    %v7897 = vmul.f32 %v7893, %v2535
    %v7898 = vmul.f32 %v7896, %v2535
    %v7899 = vsub.f32 %v7889, %v7897
    %v7900 = vsub.f32 %v7890, %v7898
    %v7901 = vmul.f32 %v7899, %v7899
    %v7902 = vmul.f32 %v7900, %v7900
    %v7903 = vsel %vm136, %v7901, 0.0
    %7904 = vadd.xlane.f32.xlu0 %v7903
    %v7905 = vpop.xlane.xlu0 %7904
    %v7906 = vsel %vm136, %v7902, 0.0
    %7907 = vadd.xlane.f32.xlu0 %v7906
    %v7908 = vpop.xlane.xlu0 %7907
    %v7909 = vmul.f32 %v7905, %v2535
    %v7910 = vmul.f32 %v7908, %v2535
    %v7911 = vadd.f32 %v7909, 1e-05
    %v7912 = vadd.f32 %v7910, 1e-05
    %v7913 = vrsqrt.pop %v7911
    %v7914 = vrsqrt.pop %v7912
    %v7915 = vmul.f32 %v7899, %v7913
    %v7916 = vmul.f32 %v7900, %v7914
    %v7918 = vlaneseq
    %v7919 = vshrl.u32 %v7918, 7
    %v7920 = vsub.s32 0, %v7919
    %v7921 = vrot.slane %v5528, %v7920
    %v7923 = vmul.f32 %v7915, %v7921
    %v7924 = vmul.f32 %v7916, %v7921
    %v7926 = vlaneseq
    %v7927 = vshrl.u32 %v7926, 7
    %v7928 = vsub.s32 0, %v7927
    %v7929 = vrot.slane %v5530, %v7928
    %v7931 = vadd.f32 %v7923, %v7929
    %v7932 = vadd.f32 %v7924, %v7929
    %v7933 = vpack.c.bf16 %v7932, %v7931
    %v7935 = vlaneseq
    %v7936 = vshrl.u32 %v7935, 7
    %v7937 = vsub.s32 0, %v7936
    %v7938 = vrot.slane %v5515, %v7937
    %v7944 = vunpack.c.l.b16 %v5510
    %v7945 = vunpack.c.l.b16 %v5511
    %v7946 = vunpack.c.l.b16 %v5512
    %v7947 = vunpack.c.l.b16 %v5513
    %v7948 = vpack.c.b16 %v7945, %v7944
    %v7949 = vpack.c.b16 %v7947, %v7946
    %v7953 = vsel %vm136, %v7933, 0
    %7955 = vmatprep.subr.bf16.mxu0 0
    %7956 = vmatpush1.bf16.msra.mxu0 %v7948
    %7957 = vmatprep.subr.bf16.mxu0 0
    %7958 = vmatpush1.bf16.msra.mxu0 %v7949
    %7959 = vmatprep.subr.bf16.mxu0 0
    %7960 = vmatpush1.bf16.msra.mxu0 0
    %7961 = vmatprep.subr.bf16.mxu0 0
    %7962 = vmatpush1.bf16.msra.mxu0 0
    %7963 = vmatprep.subr.bf16.mxu0 0
    %7964 = vmatpush1.bf16.msra.mxu0 0
    %7965 = vmatprep.subr.bf16.mxu0 0
    %7966 = vmatpush1.bf16.msra.mxu0 0
    %7967 = vmatprep.subr.bf16.mxu0 0
    %7968 = vmatpush1.bf16.msra.mxu0 0
    %7969 = vmatprep.subr.bf16.mxu0 0
    %7970 = vmatpush1.bf16.msra.mxu0 0
    %7971 = vmatprep.subr.bf16.mxu0 0
    %7972 = vmatpush1.bf16.msra.mxu0 0
    %7973 = vmatprep.subr.bf16.mxu0 0
    %7974 = vmatpush1.bf16.msra.mxu0 0
    %7975 = vmatprep.subr.bf16.mxu0 0
    %7976 = vmatpush1.bf16.msra.mxu0 0
    %7977 = vmatprep.subr.bf16.mxu0 0
    %7978 = vmatpush1.bf16.msra.mxu0 0
    %7979 = vmatprep.subr.bf16.mxu0 0
    %7980 = vmatpush1.bf16.msra.mxu0 0
    %7981 = vmatprep.subr.bf16.mxu0 0
    %7982 = vmatpush1.bf16.msra.mxu0 0
    %7983 = vmatprep.subr.bf16.mxu0 0
    %7984 = vmatpush1.bf16.msra.mxu0 0
    %7985 = vmatprep.subr.bf16.mxu0 0
    %7986 = vmatpush1.bf16.msra.mxu0 0
    %7987 = vmatprep.mubr.bf16.mxu0 0
    %7988 = vmatmul.mubr.bf16.gmra.mrb[0].mxu0 %v7953
    %v7989 = vpop.f32.mrb[0].mxu0
    %v7990 = vadd.f32 %v7938, %v7989
    %v7991 = vpop.f32.mrb[0].mxu0
    %v7992 = vpop.f32.mrb[0].mxu0
    %v7993 = vadd.f32 %v7938, %v7992
    %v7994 = vpop.f32.mrb[0].mxu0
    %7995 = vdwg.mxu0
    %v7996 = vmul.f32 %v7990, 0.5
    %v7997 = vmul.f32 %v7993, 0.5
    %v7998 = vmul.f32 %v7990, 0.044715
    %v7999 = vmul.f32 %v7993, 0.044715
    %v8000 = vmul.f32 %v7998, %v7990
    %v8001 = vmul.f32 %v7999, %v7993
    %v8002 = vmul.f32 %v8000, %v7990
    %v8003 = vmul.f32 %v8001, %v7993
    %v8004 = vadd.f32 %v7990, %v8002
    %v8005 = vadd.f32 %v7993, %v8003
    %v8006 = vmul.f32 %v8004, 0.7978846
    %v8007 = vmul.f32 %v8005, 0.7978846
    %v8008 = vtanh.pop %v8006
    %v8009 = vtanh.pop %v8007
    %v8010 = vadd.f32 %v8008, 1.0
    %v8011 = vadd.f32 %v8009, 1.0
    %v8012 = vmul.f32 %v7996, %v8010
    %v8013 = vmul.f32 %v7997, %v8011
    %v8014 = vpack.c.bf16 %v8013, %v8012
    %v8016 = vlaneseq
    %v8017 = vshrl.u32 %v8016, 7
    %v8018 = vsub.s32 0, %v8017
    %v8019 = vrot.slane %v5526, %v8018
    %v8029 = vunpack.c.l.b16 %v5517
    %v8030 = vunpack.c.l.b16 %v5518
    %v8031 = vunpack.c.l.b16 %v5519
    %v8032 = vunpack.c.l.b16 %v5520
    %v8033 = vunpack.c.l.b16 %v5521
    %v8034 = vunpack.c.l.b16 %v5522
    %v8035 = vunpack.c.l.b16 %v5523
    %v8036 = vunpack.c.l.b16 %v5524
    %v8037 = vpack.c.b16 %v8030, %v8029
    %v8038 = vpack.c.b16 %v8032, %v8031
    %v8039 = vpack.c.b16 %v8034, %v8033
    %v8040 = vpack.c.b16 %v8036, %v8035
    %v8046 = vsel %vm2684, %v8014, 0
    %8048 = vmatprep.subr.bf16.mxu0 0
    %8049 = vmatpush1.bf16.msra.mxu0 %v8037
    %8050 = vmatprep.subr.bf16.mxu0 0
    %8051 = vmatpush1.bf16.msra.mxu0 %v8038
    %8052 = vmatprep.subr.bf16.mxu0 0
    %8053 = vmatpush1.bf16.msra.mxu0 %v8039
    %8054 = vmatprep.subr.bf16.mxu0 0
    %8055 = vmatpush1.bf16.msra.mxu0 %v8040
    %8056 = vmatprep.subr.bf16.mxu0 0
    %8057 = vmatpush1.bf16.msra.mxu0 0
    %8058 = vmatprep.subr.bf16.mxu0 0
    %8059 = vmatpush1.bf16.msra.mxu0 0
    %8060 = vmatprep.subr.bf16.mxu0 0
    %8061 = vmatpush1.bf16.msra.mxu0 0
    %8062 = vmatprep.subr.bf16.mxu0 0
    %8063 = vmatpush1.bf16.msra.mxu0 0
    %8064 = vmatprep.subr.bf16.mxu0 0
    %8065 = vmatpush1.bf16.msra.mxu0 0
    %8066 = vmatprep.subr.bf16.mxu0 0
    %8067 = vmatpush1.bf16.msra.mxu0 0
    %8068 = vmatprep.subr.bf16.mxu0 0
    %8069 = vmatpush1.bf16.msra.mxu0 0
    %8070 = vmatprep.subr.bf16.mxu0 0
    %8071 = vmatpush1.bf16.msra.mxu0 0
    %8072 = vmatprep.subr.bf16.mxu0 0
    %8073 = vmatpush1.bf16.msra.mxu0 0
    %8074 = vmatprep.subr.bf16.mxu0 0
    %8075 = vmatpush1.bf16.msra.mxu0 0
    %8076 = vmatprep.subr.bf16.mxu0 0
    %8077 = vmatpush1.bf16.msra.mxu0 0
    %8078 = vmatprep.subr.bf16.mxu0 0
    %8079 = vmatpush1.bf16.msra.mxu0 0
    %8080 = vmatprep.mubr.bf16.mxu0 0
    %8081 = vmatmul.mubr.bf16.gmra.mrb[0].mxu0 %v8046
    %v8082 = vpop.f32.mrb[0].mxu0
    %v8083 = vadd.f32 %v8019, %v8082
    %v8084 = vpop.f32.mrb[0].mxu0
    %v8085 = vpop.f32.mrb[0].mxu0
    %v8086 = vadd.f32 %v8019, %v8085
    %v8087 = vpop.f32.mrb[0].mxu0
    %8088 = vdwg.mxu0
    %v8089 = vadd.f32 %v7931, %v8083
    %v8090 = vadd.f32 %v7932, %v8086
    %v8091 = vsel %vm136, %v8089, 0.0
    %8092 = vadd.xlane.f32.xlu0 %v8091
    %v8093 = vpop.xlane.xlu0 %8092
    %v8094 = vsel %vm136, %v8090, 0.0
    %8095 = vadd.xlane.f32.xlu0 %v8094
    %v8096 = vpop.xlane.xlu0 %8095
    %v8097 = vmul.f32 %v8093, %v2535
    %v8098 = vmul.f32 %v8096, %v2535
    %v8099 = vsub.f32 %v8089, %v8097
    %v8100 = vsub.f32 %v8090, %v8098
    %v8101 = vmul.f32 %v8099, %v8099
    %v8102 = vmul.f32 %v8100, %v8100
    %v8103 = vsel %vm136, %v8101, 0.0
    %8104 = vadd.xlane.f32.xlu0 %v8103
    %v8105 = vpop.xlane.xlu0 %8104
    %v8106 = vsel %vm136, %v8102, 0.0
    %8107 = vadd.xlane.f32.xlu0 %v8106
    %v8108 = vpop.xlane.xlu0 %8107
    %v8109 = vmul.f32 %v8105, %v2535
    %v8110 = vmul.f32 %v8108, %v2535
    %v8111 = vadd.f32 %v8109, 1e-05
    %v8112 = vadd.f32 %v8110, 1e-05
    %v8113 = vrsqrt.pop %v8111
    %v8114 = vrsqrt.pop %v8112
    %v8115 = vmul.f32 %v8099, %v8113
    %v8116 = vmul.f32 %v8100, %v8114
    %v8118 = vlaneseq
    %v8119 = vshrl.u32 %v8118, 7
    %v8120 = vsub.s32 0, %v8119
    %v8121 = vrot.slane %v5532, %v8120
    %v8123 = vmul.f32 %v8115, %v8121
    %v8124 = vmul.f32 %v8116, %v8121
    %v8126 = vlaneseq
    %v8127 = vshrl.u32 %v8126, 7
    %v8128 = vsub.s32 0, %v8127
    %v8129 = vrot.slane %v5534, %v8128
    %v8131 = vadd.f32 %v8123, %v8129
    %v8132 = vadd.f32 %v8124, %v8129
    %s8133 = scalar_lea.vmem %s2, 576
    %v8134 = vld [vmem:[%s8133] sm:$0xf]
    %v8135 = vld [vmem:[%s8133 + $0x4] sm:$0xf]
    %v8136 = vld [vmem:[%s8133 + $0x8] sm:$0xf]
    %v8137 = vld [vmem:[%s8133 + $0xc] sm:$0xf]
    %v8138 = vld [vmem:[%s8133 + $0x10] sm:$0xf]
    %v8139 = vld [vmem:[%s8133 + $0x14] sm:$0xf]
    %v8140 = vld [vmem:[%s8133 + $0x18] sm:$0xf]
    %v8141 = vld [vmem:[%s8133 + $0x1c] sm:$0xf]
    %v8142 = vld [vmem:[%s8133 + $0x20] sm:$0xf]
    %v8143 = vld [vmem:[%s8133 + $0x24] sm:$0xf]
    %v8144 = vld [vmem:[%s8133 + $0x28] sm:$0xf]
    %v8145 = vld [vmem:[%s8133 + $0x2c] sm:$0xf]
    %v8146 = vld [vmem:[%s8133 + $0x30] sm:$0xf]
    %v8147 = vld [vmem:[%s8133 + $0x34] sm:$0xf]
    %v8148 = vld [vmem:[%s8133 + $0x38] sm:$0xf]
    %v8149 = vld [vmem:[%s8133 + $0x3c] sm:$0xf]
    %s8150 = scalar_lea.vmem %s2, 640
    %v8151 = vld [vmem:[%s8150] sm:$0xf]
    %v8152 = vld [vmem:[%s8150 + $0x4] sm:$0xf]
    %v8153 = vld [vmem:[%s8150 + $0x8] sm:$0xf]
    %v8154 = vld [vmem:[%s8150 + $0xc] sm:$0xf]
    %v8155 = vld [vmem:[%s8150 + $0x10] sm:$0xf]
    %v8156 = vld [vmem:[%s8150 + $0x14] sm:$0xf]
    %v8157 = vld [vmem:[%s8150 + $0x18] sm:$0xf]
    %v8158 = vld [vmem:[%s8150 + $0x1c] sm:$0xf]
    %v8159 = vld [vmem:[%s8150 + $0x20] sm:$0xf]
    %v8160 = vld [vmem:[%s8150 + $0x24] sm:$0xf]
    %v8161 = vld [vmem:[%s8150 + $0x28] sm:$0xf]
    %v8162 = vld [vmem:[%s8150 + $0x2c] sm:$0xf]
    %v8163 = vld [vmem:[%s8150 + $0x30] sm:$0xf]
    %v8164 = vld [vmem:[%s8150 + $0x34] sm:$0xf]
    %v8165 = vld [vmem:[%s8150 + $0x38] sm:$0xf]
    %v8166 = vld [vmem:[%s8150 + $0x3c] sm:$0xf]
    %s8167 = scalar_lea.vmem %s2, 704
    %v8168 = vld [vmem:[%s8167] sm:$0xf]
    %v8169 = vld [vmem:[%s8167 + $0x4] sm:$0xf]
    %v8170 = vld [vmem:[%s8167 + $0x8] sm:$0xf]
    %v8171 = vld [vmem:[%s8167 + $0xc] sm:$0xf]
    %v8172 = vld [vmem:[%s8167 + $0x10] sm:$0xf]
    %v8173 = vld [vmem:[%s8167 + $0x14] sm:$0xf]
    %v8174 = vld [vmem:[%s8167 + $0x18] sm:$0xf]
    %v8175 = vld [vmem:[%s8167 + $0x1c] sm:$0xf]
    %v8176 = vld [vmem:[%s8167 + $0x20] sm:$0xf]
    %v8177 = vld [vmem:[%s8167 + $0x24] sm:$0xf]
    %v8178 = vld [vmem:[%s8167 + $0x28] sm:$0xf]
    %v8179 = vld [vmem:[%s8167 + $0x2c] sm:$0xf]
    %v8180 = vld [vmem:[%s8167 + $0x30] sm:$0xf]
    %v8181 = vld [vmem:[%s8167 + $0x34] sm:$0xf]
    %v8182 = vld [vmem:[%s8167 + $0x38] sm:$0xf]
    %v8183 = vld [vmem:[%s8167 + $0x3c] sm:$0xf]
    %s8184 = scalar_lea.vmem %s3, 48
    %v8185 = vld [vmem:[%s8184] sm:$0xf]
    %v8186 = vld [vmem:[%s8184 + $0x4] sm:$0xf]
    %v8187 = vld [vmem:[%s8184 + $0x8] sm:$0xf]
    %v8188 = vld [vmem:[%s8184 + $0xc] sm:$0xf]
    %s8189 = scalar_lea.vmem %s4, 48
    %v8190 = vld [vmem:[%s8189] sm:$0xf]
    %v8191 = vld [vmem:[%s8189 + $0x4] sm:$0xf]
    %v8192 = vld [vmem:[%s8189 + $0x8] sm:$0xf]
    %v8193 = vld [vmem:[%s8189 + $0xc] sm:$0xf]
    %s8194 = scalar_lea.vmem %s5, 3
    %v8195 = vld [vmem:[%s8194] sm:$0x1]
    %s8196 = scalar_lea.vmem %s6, 96
    %v8197 = vld [vmem:[%s8196] sm:$0xf]
    %v8198 = vld [vmem:[%s8196 + $0x4] sm:$0xf]
    %v8199 = vld [vmem:[%s8196 + $0x8] sm:$0xf]
    %v8200 = vld [vmem:[%s8196 + $0xc] sm:$0xf]
    %v8201 = vld [vmem:[%s8196 + $0x10] sm:$0xf]
    %v8202 = vld [vmem:[%s8196 + $0x14] sm:$0xf]
    %v8203 = vld [vmem:[%s8196 + $0x18] sm:$0xf]
    %v8204 = vld [vmem:[%s8196 + $0x1c] sm:$0xf]
    %s8205 = scalar_lea.vmem %s7, 3
    %v8206 = vld [vmem:[%s8205] sm:$0x1]
    %s8207 = scalar_lea.vmem %s8, 12
    %v8208 = vld [vmem:[%s8207] sm:$0x1]
    %s8209 = scalar_lea.vmem %s8, 13
    %v8210 = vld [vmem:[%s8209] sm:$0x1]
    %s8211 = scalar_lea.vmem %s8, 14
    %v8212 = vld [vmem:[%s8211] sm:$0x1]
    %s8213 = scalar_lea.vmem %s8, 15
    %v8214 = vld [vmem:[%s8213] sm:$0x1]
    %v8215 = vpack.c.bf16 %v8131, %v8131
    %v8216 = vpack.c.bf16 %v8132, %v8132
    %v8221 = vunpack.c.l.b16 %v8134
    %v8222 = vunpack.c.l.b16 %v8135
    %v8223 = vunpack.c.l.b16 %v8136
    %v8224 = vunpack.c.l.b16 %v8137
    %v8225 = vpack.c.b16 %v8222, %v8221
    %v8226 = vpack.c.b16 %v8224, %v8223
    %v8230 = vsel %vm136, %v8215, 0
    %8232 = vmatprep.subr.bf16.mxu0 0
    %8233 = vmatpush1.bf16.msra.mxu0 %v8225
    %8234 = vmatprep.subr.bf16.mxu0 0
    %8235 = vmatpush1.bf16.msra.mxu0 %v8226
    %8236 = vmatprep.subr.bf16.mxu0 0
    %8237 = vmatpush1.bf16.msra.mxu0 0
    %8238 = vmatprep.subr.bf16.mxu0 0
    %8239 = vmatpush1.bf16.msra.mxu0 0
    %8240 = vmatprep.subr.bf16.mxu0 0
    %8241 = vmatpush1.bf16.msra.mxu0 0
    %8242 = vmatprep.subr.bf16.mxu0 0
    %8243 = vmatpush1.bf16.msra.mxu0 0
    %8244 = vmatprep.subr.bf16.mxu0 0
    %8245 = vmatpush1.bf16.msra.mxu0 0
    %8246 = vmatprep.subr.bf16.mxu0 0
    %8247 = vmatpush1.bf16.msra.mxu0 0
    %8248 = vmatprep.subr.bf16.mxu0 0
    %8249 = vmatpush1.bf16.msra.mxu0 0
    %8250 = vmatprep.subr.bf16.mxu0 0
    %8251 = vmatpush1.bf16.msra.mxu0 0
    %8252 = vmatprep.subr.bf16.mxu0 0
    %8253 = vmatpush1.bf16.msra.mxu0 0
    %8254 = vmatprep.subr.bf16.mxu0 0
    %8255 = vmatpush1.bf16.msra.mxu0 0
    %8256 = vmatprep.subr.bf16.mxu0 0
    %8257 = vmatpush1.bf16.msra.mxu0 0
    %8258 = vmatprep.subr.bf16.mxu0 0
    %8259 = vmatpush1.bf16.msra.mxu0 0
    %8260 = vmatprep.subr.bf16.mxu0 0
    %8261 = vmatpush1.bf16.msra.mxu0 0
    %8262 = vmatprep.subr.bf16.mxu0 0
    %8263 = vmatpush1.bf16.msra.mxu0 0
    %8264 = vmatprep.mubr.bf16.mxu0 0
    %8265 = vmatmul.mubr.bf16.gmra.mrb[0].mxu0 %v8230
    %v8266 = vpop.f32.mrb[0].mxu0
    %v8267 = vadd.f32 0.0, %v8266
    %v8268 = vpop.f32.mrb[0].mxu0
    %v8269 = vpop.f32.mrb[0].mxu0
    %v8270 = vpop.f32.mrb[0].mxu0
    %8271 = vdwg.mxu0
    %v8276 = vunpack.c.l.b16 %v8138
    %v8277 = vunpack.c.l.b16 %v8139
    %v8278 = vunpack.c.l.b16 %v8140
    %v8279 = vunpack.c.l.b16 %v8141
    %v8280 = vpack.c.b16 %v8277, %v8276
    %v8281 = vpack.c.b16 %v8279, %v8278
    %8284 = vmatprep.subr.bf16.mxu0 0
    %8285 = vmatpush1.bf16.msra.mxu0 %v8280
    %8286 = vmatprep.subr.bf16.mxu0 0
    %8287 = vmatpush1.bf16.msra.mxu0 %v8281
    %8288 = vmatprep.subr.bf16.mxu0 0
    %8289 = vmatpush1.bf16.msra.mxu0 0
    %8290 = vmatprep.subr.bf16.mxu0 0
    %8291 = vmatpush1.bf16.msra.mxu0 0
    %8292 = vmatprep.subr.bf16.mxu0 0
    %8293 = vmatpush1.bf16.msra.mxu0 0
    %8294 = vmatprep.subr.bf16.mxu0 0
    %8295 = vmatpush1.bf16.msra.mxu0 0
    %8296 = vmatprep.subr.bf16.mxu0 0
    %8297 = vmatpush1.bf16.msra.mxu0 0
    %8298 = vmatprep.subr.bf16.mxu0 0
    %8299 = vmatpush1.bf16.msra.mxu0 0
    %8300 = vmatprep.subr.bf16.mxu0 0
    %8301 = vmatpush1.bf16.msra.mxu0 0
    %8302 = vmatprep.subr.bf16.mxu0 0
    %8303 = vmatpush1.bf16.msra.mxu0 0
    %8304 = vmatprep.subr.bf16.mxu0 0
    %8305 = vmatpush1.bf16.msra.mxu0 0
    %8306 = vmatprep.subr.bf16.mxu0 0
    %8307 = vmatpush1.bf16.msra.mxu0 0
    %8308 = vmatprep.subr.bf16.mxu0 0
    %8309 = vmatpush1.bf16.msra.mxu0 0
    %8310 = vmatprep.subr.bf16.mxu0 0
    %8311 = vmatpush1.bf16.msra.mxu0 0
    %8312 = vmatprep.subr.bf16.mxu0 0
    %8313 = vmatpush1.bf16.msra.mxu0 0
    %8314 = vmatprep.subr.bf16.mxu0 0
    %8315 = vmatpush1.bf16.msra.mxu0 0
    %8316 = vmatprep.mubr.bf16.mxu0 0
    %8317 = vmatmul.mubr.bf16.gmra.mrb[0].mxu0 %v8230
    %v8318 = vpop.f32.mrb[0].mxu0
    %v8319 = vadd.f32 0.0, %v8318
    %v8320 = vpop.f32.mrb[0].mxu0
    %v8321 = vpop.f32.mrb[0].mxu0
    %v8322 = vpop.f32.mrb[0].mxu0
    %8323 = vdwg.mxu0
    %v8328 = vunpack.c.l.b16 %v8142
    %v8329 = vunpack.c.l.b16 %v8143
    %v8330 = vunpack.c.l.b16 %v8144
    %v8331 = vunpack.c.l.b16 %v8145
    %v8332 = vpack.c.b16 %v8329, %v8328
    %v8333 = vpack.c.b16 %v8331, %v8330
    %8336 = vmatprep.subr.bf16.mxu0 0
    %8337 = vmatpush1.bf16.msra.mxu0 %v8332
    %8338 = vmatprep.subr.bf16.mxu0 0
    %8339 = vmatpush1.bf16.msra.mxu0 %v8333
    %8340 = vmatprep.subr.bf16.mxu0 0
    %8341 = vmatpush1.bf16.msra.mxu0 0
    %8342 = vmatprep.subr.bf16.mxu0 0
    %8343 = vmatpush1.bf16.msra.mxu0 0
    %8344 = vmatprep.subr.bf16.mxu0 0
    %8345 = vmatpush1.bf16.msra.mxu0 0
    %8346 = vmatprep.subr.bf16.mxu0 0
    %8347 = vmatpush1.bf16.msra.mxu0 0
    %8348 = vmatprep.subr.bf16.mxu0 0
    %8349 = vmatpush1.bf16.msra.mxu0 0
    %8350 = vmatprep.subr.bf16.mxu0 0
    %8351 = vmatpush1.bf16.msra.mxu0 0
    %8352 = vmatprep.subr.bf16.mxu0 0
    %8353 = vmatpush1.bf16.msra.mxu0 0
    %8354 = vmatprep.subr.bf16.mxu0 0
    %8355 = vmatpush1.bf16.msra.mxu0 0
    %8356 = vmatprep.subr.bf16.mxu0 0
    %8357 = vmatpush1.bf16.msra.mxu0 0
    %8358 = vmatprep.subr.bf16.mxu0 0
    %8359 = vmatpush1.bf16.msra.mxu0 0
    %8360 = vmatprep.subr.bf16.mxu0 0
    %8361 = vmatpush1.bf16.msra.mxu0 0
    %8362 = vmatprep.subr.bf16.mxu0 0
    %8363 = vmatpush1.bf16.msra.mxu0 0
    %8364 = vmatprep.subr.bf16.mxu0 0
    %8365 = vmatpush1.bf16.msra.mxu0 0
    %8366 = vmatprep.subr.bf16.mxu0 0
    %8367 = vmatpush1.bf16.msra.mxu0 0
    %8368 = vmatprep.mubr.bf16.mxu0 0
    %8369 = vmatmul.mubr.bf16.gmra.mrb[0].mxu0 %v8230
    %v8370 = vpop.f32.mrb[0].mxu0
    %v8371 = vadd.f32 0.0, %v8370
    %v8372 = vpop.f32.mrb[0].mxu0
    %v8373 = vpop.f32.mrb[0].mxu0
    %v8374 = vpop.f32.mrb[0].mxu0
    %8375 = vdwg.mxu0
    %v8380 = vunpack.c.l.b16 %v8146
    %v8381 = vunpack.c.l.b16 %v8147
    %v8382 = vunpack.c.l.b16 %v8148
    %v8383 = vunpack.c.l.b16 %v8149
    %v8384 = vpack.c.b16 %v8381, %v8380
    %v8385 = vpack.c.b16 %v8383, %v8382
    %8388 = vmatprep.subr.bf16.mxu0 0
    %8389 = vmatpush1.bf16.msra.mxu0 %v8384
    %8390 = vmatprep.subr.bf16.mxu0 0
    %8391 = vmatpush1.bf16.msra.mxu0 %v8385
    %8392 = vmatprep.subr.bf16.mxu0 0
    %8393 = vmatpush1.bf16.msra.mxu0 0
    %8394 = vmatprep.subr.bf16.mxu0 0
    %8395 = vmatpush1.bf16.msra.mxu0 0
    %8396 = vmatprep.subr.bf16.mxu0 0
    %8397 = vmatpush1.bf16.msra.mxu0 0
    %8398 = vmatprep.subr.bf16.mxu0 0
    %8399 = vmatpush1.bf16.msra.mxu0 0
    %8400 = vmatprep.subr.bf16.mxu0 0
    %8401 = vmatpush1.bf16.msra.mxu0 0
    %8402 = vmatprep.subr.bf16.mxu0 0
    %8403 = vmatpush1.bf16.msra.mxu0 0
    %8404 = vmatprep.subr.bf16.mxu0 0
    %8405 = vmatpush1.bf16.msra.mxu0 0
    %8406 = vmatprep.subr.bf16.mxu0 0
    %8407 = vmatpush1.bf16.msra.mxu0 0
    %8408 = vmatprep.subr.bf16.mxu0 0
    %8409 = vmatpush1.bf16.msra.mxu0 0
    %8410 = vmatprep.subr.bf16.mxu0 0
    %8411 = vmatpush1.bf16.msra.mxu0 0
    %8412 = vmatprep.subr.bf16.mxu0 0
    %8413 = vmatpush1.bf16.msra.mxu0 0
    %8414 = vmatprep.subr.bf16.mxu0 0
    %8415 = vmatpush1.bf16.msra.mxu0 0
    %8416 = vmatprep.subr.bf16.mxu0 0
    %8417 = vmatpush1.bf16.msra.mxu0 0
    %8418 = vmatprep.subr.bf16.mxu0 0
    %8419 = vmatpush1.bf16.msra.mxu0 0
    %8420 = vmatprep.mubr.bf16.mxu0 0
    %8421 = vmatmul.mubr.bf16.gmra.mrb[0].mxu0 %v8230
    %v8422 = vpop.f32.mrb[0].mxu0
    %v8423 = vadd.f32 0.0, %v8422
    %v8424 = vpop.f32.mrb[0].mxu0
    %v8425 = vpop.f32.mrb[0].mxu0
    %v8426 = vpop.f32.mrb[0].mxu0
    %8427 = vdwg.mxu0
    %v8429 = vsel %vm136, %v8216, 0
    %8431 = vmatprep.subr.bf16.mxu0 0
    %8432 = vmatpush1.bf16.msra.mxu0 %v8225
    %8433 = vmatprep.subr.bf16.mxu0 0
    %8434 = vmatpush1.bf16.msra.mxu0 %v8226
    %8435 = vmatprep.subr.bf16.mxu0 0
    %8436 = vmatpush1.bf16.msra.mxu0 0
    %8437 = vmatprep.subr.bf16.mxu0 0
    %8438 = vmatpush1.bf16.msra.mxu0 0
    %8439 = vmatprep.subr.bf16.mxu0 0
    %8440 = vmatpush1.bf16.msra.mxu0 0
    %8441 = vmatprep.subr.bf16.mxu0 0
    %8442 = vmatpush1.bf16.msra.mxu0 0
    %8443 = vmatprep.subr.bf16.mxu0 0
    %8444 = vmatpush1.bf16.msra.mxu0 0
    %8445 = vmatprep.subr.bf16.mxu0 0
    %8446 = vmatpush1.bf16.msra.mxu0 0
    %8447 = vmatprep.subr.bf16.mxu0 0
    %8448 = vmatpush1.bf16.msra.mxu0 0
    %8449 = vmatprep.subr.bf16.mxu0 0
    %8450 = vmatpush1.bf16.msra.mxu0 0
    %8451 = vmatprep.subr.bf16.mxu0 0
    %8452 = vmatpush1.bf16.msra.mxu0 0
    %8453 = vmatprep.subr.bf16.mxu0 0
    %8454 = vmatpush1.bf16.msra.mxu0 0
    %8455 = vmatprep.subr.bf16.mxu0 0
    %8456 = vmatpush1.bf16.msra.mxu0 0
    %8457 = vmatprep.subr.bf16.mxu0 0
    %8458 = vmatpush1.bf16.msra.mxu0 0
    %8459 = vmatprep.subr.bf16.mxu0 0
    %8460 = vmatpush1.bf16.msra.mxu0 0
    %8461 = vmatprep.subr.bf16.mxu0 0
    %8462 = vmatpush1.bf16.msra.mxu0 0
    %8463 = vmatprep.mubr.bf16.mxu0 0
    %8464 = vmatmul.mubr.bf16.gmra.mrb[0].mxu0 %v8429
    %v8465 = vpop.f32.mrb[0].mxu0
    %v8466 = vadd.f32 0.0, %v8465
    %v8467 = vpop.f32.mrb[0].mxu0
    %v8468 = vpop.f32.mrb[0].mxu0
    %v8469 = vpop.f32.mrb[0].mxu0
    %8470 = vdwg.mxu0
    %8471 = vmatprep.subr.bf16.mxu0 0
    %8472 = vmatpush1.bf16.msra.mxu0 %v8280
    %8473 = vmatprep.subr.bf16.mxu0 0
    %8474 = vmatpush1.bf16.msra.mxu0 %v8281
    %8475 = vmatprep.subr.bf16.mxu0 0
    %8476 = vmatpush1.bf16.msra.mxu0 0
    %8477 = vmatprep.subr.bf16.mxu0 0
    %8478 = vmatpush1.bf16.msra.mxu0 0
    %8479 = vmatprep.subr.bf16.mxu0 0
    %8480 = vmatpush1.bf16.msra.mxu0 0
    %8481 = vmatprep.subr.bf16.mxu0 0
    %8482 = vmatpush1.bf16.msra.mxu0 0
    %8483 = vmatprep.subr.bf16.mxu0 0
    %8484 = vmatpush1.bf16.msra.mxu0 0
    %8485 = vmatprep.subr.bf16.mxu0 0
    %8486 = vmatpush1.bf16.msra.mxu0 0
    %8487 = vmatprep.subr.bf16.mxu0 0
    %8488 = vmatpush1.bf16.msra.mxu0 0
    %8489 = vmatprep.subr.bf16.mxu0 0
    %8490 = vmatpush1.bf16.msra.mxu0 0
    %8491 = vmatprep.subr.bf16.mxu0 0
    %8492 = vmatpush1.bf16.msra.mxu0 0
    %8493 = vmatprep.subr.bf16.mxu0 0
    %8494 = vmatpush1.bf16.msra.mxu0 0
    %8495 = vmatprep.subr.bf16.mxu0 0
    %8496 = vmatpush1.bf16.msra.mxu0 0
    %8497 = vmatprep.subr.bf16.mxu0 0
    %8498 = vmatpush1.bf16.msra.mxu0 0
    %8499 = vmatprep.subr.bf16.mxu0 0
    %8500 = vmatpush1.bf16.msra.mxu0 0
    %8501 = vmatprep.subr.bf16.mxu0 0
    %8502 = vmatpush1.bf16.msra.mxu0 0
    %8503 = vmatprep.mubr.bf16.mxu0 0
    %8504 = vmatmul.mubr.bf16.gmra.mrb[0].mxu0 %v8429
    %v8505 = vpop.f32.mrb[0].mxu0
    %v8506 = vadd.f32 0.0, %v8505
    %v8507 = vpop.f32.mrb[0].mxu0
    %v8508 = vpop.f32.mrb[0].mxu0
    %v8509 = vpop.f32.mrb[0].mxu0
    %8510 = vdwg.mxu0
    %8511 = vmatprep.subr.bf16.mxu0 0
    %8512 = vmatpush1.bf16.msra.mxu0 %v8332
    %8513 = vmatprep.subr.bf16.mxu0 0
    %8514 = vmatpush1.bf16.msra.mxu0 %v8333
    %8515 = vmatprep.subr.bf16.mxu0 0
    %8516 = vmatpush1.bf16.msra.mxu0 0
    %8517 = vmatprep.subr.bf16.mxu0 0
    %8518 = vmatpush1.bf16.msra.mxu0 0
    %8519 = vmatprep.subr.bf16.mxu0 0
    %8520 = vmatpush1.bf16.msra.mxu0 0
    %8521 = vmatprep.subr.bf16.mxu0 0
    %8522 = vmatpush1.bf16.msra.mxu0 0
    %8523 = vmatprep.subr.bf16.mxu0 0
    %8524 = vmatpush1.bf16.msra.mxu0 0
    %8525 = vmatprep.subr.bf16.mxu0 0
    %8526 = vmatpush1.bf16.msra.mxu0 0
    %8527 = vmatprep.subr.bf16.mxu0 0
    %8528 = vmatpush1.bf16.msra.mxu0 0
    %8529 = vmatprep.subr.bf16.mxu0 0
    %8530 = vmatpush1.bf16.msra.mxu0 0
    %8531 = vmatprep.subr.bf16.mxu0 0
    %8532 = vmatpush1.bf16.msra.mxu0 0
    %8533 = vmatprep.subr.bf16.mxu0 0
    %8534 = vmatpush1.bf16.msra.mxu0 0
    %8535 = vmatprep.subr.bf16.mxu0 0
    %8536 = vmatpush1.bf16.msra.mxu0 0
    %8537 = vmatprep.subr.bf16.mxu0 0
    %8538 = vmatpush1.bf16.msra.mxu0 0
    %8539 = vmatprep.subr.bf16.mxu0 0
    %8540 = vmatpush1.bf16.msra.mxu0 0
    %8541 = vmatprep.subr.bf16.mxu0 0
    %8542 = vmatpush1.bf16.msra.mxu0 0
    %8543 = vmatprep.mubr.bf16.mxu0 0
    %8544 = vmatmul.mubr.bf16.gmra.mrb[0].mxu0 %v8429
    %v8545 = vpop.f32.mrb[0].mxu0
    %v8546 = vadd.f32 0.0, %v8545
    %v8547 = vpop.f32.mrb[0].mxu0
    %v8548 = vpop.f32.mrb[0].mxu0
    %v8549 = vpop.f32.mrb[0].mxu0
    %8550 = vdwg.mxu0
    %8551 = vmatprep.subr.bf16.mxu0 0
    %8552 = vmatpush1.bf16.msra.mxu0 %v8384
    %8553 = vmatprep.subr.bf16.mxu0 0
    %8554 = vmatpush1.bf16.msra.mxu0 %v8385
    %8555 = vmatprep.subr.bf16.mxu0 0
    %8556 = vmatpush1.bf16.msra.mxu0 0
    %8557 = vmatprep.subr.bf16.mxu0 0
    %8558 = vmatpush1.bf16.msra.mxu0 0
    %8559 = vmatprep.subr.bf16.mxu0 0
    %8560 = vmatpush1.bf16.msra.mxu0 0
    %8561 = vmatprep.subr.bf16.mxu0 0
    %8562 = vmatpush1.bf16.msra.mxu0 0
    %8563 = vmatprep.subr.bf16.mxu0 0
    %8564 = vmatpush1.bf16.msra.mxu0 0
    %8565 = vmatprep.subr.bf16.mxu0 0
    %8566 = vmatpush1.bf16.msra.mxu0 0
    %8567 = vmatprep.subr.bf16.mxu0 0
    %8568 = vmatpush1.bf16.msra.mxu0 0
    %8569 = vmatprep.subr.bf16.mxu0 0
    %8570 = vmatpush1.bf16.msra.mxu0 0
    %8571 = vmatprep.subr.bf16.mxu0 0
    %8572 = vmatpush1.bf16.msra.mxu0 0
    %8573 = vmatprep.subr.bf16.mxu0 0
    %8574 = vmatpush1.bf16.msra.mxu0 0
    %8575 = vmatprep.subr.bf16.mxu0 0
    %8576 = vmatpush1.bf16.msra.mxu0 0
    %8577 = vmatprep.subr.bf16.mxu0 0
    %8578 = vmatpush1.bf16.msra.mxu0 0
    %8579 = vmatprep.subr.bf16.mxu0 0
    %8580 = vmatpush1.bf16.msra.mxu0 0
    %8581 = vmatprep.subr.bf16.mxu0 0
    %8582 = vmatpush1.bf16.msra.mxu0 0
    %8583 = vmatprep.mubr.bf16.mxu0 0
    %8584 = vmatmul.mubr.bf16.gmra.mrb[0].mxu0 %v8429
    %v8585 = vpop.f32.mrb[0].mxu0
    %v8586 = vadd.f32 0.0, %v8585
    %v8587 = vpop.f32.mrb[0].mxu0
    %v8588 = vpop.f32.mrb[0].mxu0
    %v8589 = vpop.f32.mrb[0].mxu0
    %8590 = vdwg.mxu0
    %v8595 = vunpack.c.l.b16 %v8151
    %v8596 = vunpack.c.l.b16 %v8152
    %v8597 = vunpack.c.l.b16 %v8153
    %v8598 = vunpack.c.l.b16 %v8154
    %v8599 = vpack.c.b16 %v8596, %v8595
    %v8600 = vpack.c.b16 %v8598, %v8597
    %8603 = vmatprep.subr.bf16.mxu0 0
    %8604 = vmatpush1.bf16.msra.mxu0 %v8599
    %8605 = vmatprep.subr.bf16.mxu0 0
    %8606 = vmatpush1.bf16.msra.mxu0 %v8600
    %8607 = vmatprep.subr.bf16.mxu0 0
    %8608 = vmatpush1.bf16.msra.mxu0 0
    %8609 = vmatprep.subr.bf16.mxu0 0
    %8610 = vmatpush1.bf16.msra.mxu0 0
    %8611 = vmatprep.subr.bf16.mxu0 0
    %8612 = vmatpush1.bf16.msra.mxu0 0
    %8613 = vmatprep.subr.bf16.mxu0 0
    %8614 = vmatpush1.bf16.msra.mxu0 0
    %8615 = vmatprep.subr.bf16.mxu0 0
    %8616 = vmatpush1.bf16.msra.mxu0 0
    %8617 = vmatprep.subr.bf16.mxu0 0
    %8618 = vmatpush1.bf16.msra.mxu0 0
    %8619 = vmatprep.subr.bf16.mxu0 0
    %8620 = vmatpush1.bf16.msra.mxu0 0
    %8621 = vmatprep.subr.bf16.mxu0 0
    %8622 = vmatpush1.bf16.msra.mxu0 0
    %8623 = vmatprep.subr.bf16.mxu0 0
    %8624 = vmatpush1.bf16.msra.mxu0 0
    %8625 = vmatprep.subr.bf16.mxu0 0
    %8626 = vmatpush1.bf16.msra.mxu0 0
    %8627 = vmatprep.subr.bf16.mxu0 0
    %8628 = vmatpush1.bf16.msra.mxu0 0
    %8629 = vmatprep.subr.bf16.mxu0 0
    %8630 = vmatpush1.bf16.msra.mxu0 0
    %8631 = vmatprep.subr.bf16.mxu0 0
    %8632 = vmatpush1.bf16.msra.mxu0 0
    %8633 = vmatprep.subr.bf16.mxu0 0
    %8634 = vmatpush1.bf16.msra.mxu0 0
    %8635 = vmatprep.mubr.bf16.mxu0 0
    %8636 = vmatmul.mubr.bf16.gmra.mrb[0].mxu0 %v8230
    %v8637 = vpop.f32.mrb[0].mxu0
    %v8638 = vadd.f32 0.0, %v8637
    %v8639 = vpop.f32.mrb[0].mxu0
    %v8640 = vpop.f32.mrb[0].mxu0
    %v8641 = vpop.f32.mrb[0].mxu0
    %8642 = vdwg.mxu0
    %v8647 = vunpack.c.l.b16 %v8155
    %v8648 = vunpack.c.l.b16 %v8156
    %v8649 = vunpack.c.l.b16 %v8157
    %v8650 = vunpack.c.l.b16 %v8158
    %v8651 = vpack.c.b16 %v8648, %v8647
    %v8652 = vpack.c.b16 %v8650, %v8649
    %8655 = vmatprep.subr.bf16.mxu0 0
    %8656 = vmatpush1.bf16.msra.mxu0 %v8651
    %8657 = vmatprep.subr.bf16.mxu0 0
    %8658 = vmatpush1.bf16.msra.mxu0 %v8652
    %8659 = vmatprep.subr.bf16.mxu0 0
    %8660 = vmatpush1.bf16.msra.mxu0 0
    %8661 = vmatprep.subr.bf16.mxu0 0
    %8662 = vmatpush1.bf16.msra.mxu0 0
    %8663 = vmatprep.subr.bf16.mxu0 0
    %8664 = vmatpush1.bf16.msra.mxu0 0
    %8665 = vmatprep.subr.bf16.mxu0 0
    %8666 = vmatpush1.bf16.msra.mxu0 0
    %8667 = vmatprep.subr.bf16.mxu0 0
    %8668 = vmatpush1.bf16.msra.mxu0 0
    %8669 = vmatprep.subr.bf16.mxu0 0
    %8670 = vmatpush1.bf16.msra.mxu0 0
    %8671 = vmatprep.subr.bf16.mxu0 0
    %8672 = vmatpush1.bf16.msra.mxu0 0
    %8673 = vmatprep.subr.bf16.mxu0 0
    %8674 = vmatpush1.bf16.msra.mxu0 0
    %8675 = vmatprep.subr.bf16.mxu0 0
    %8676 = vmatpush1.bf16.msra.mxu0 0
    %8677 = vmatprep.subr.bf16.mxu0 0
    %8678 = vmatpush1.bf16.msra.mxu0 0
    %8679 = vmatprep.subr.bf16.mxu0 0
    %8680 = vmatpush1.bf16.msra.mxu0 0
    %8681 = vmatprep.subr.bf16.mxu0 0
    %8682 = vmatpush1.bf16.msra.mxu0 0
    %8683 = vmatprep.subr.bf16.mxu0 0
    %8684 = vmatpush1.bf16.msra.mxu0 0
    %8685 = vmatprep.subr.bf16.mxu0 0
    %8686 = vmatpush1.bf16.msra.mxu0 0
    %8687 = vmatprep.mubr.bf16.mxu0 0
    %8688 = vmatmul.mubr.bf16.gmra.mrb[0].mxu0 %v8230
    %v8689 = vpop.f32.mrb[0].mxu0
    %v8690 = vadd.f32 0.0, %v8689
    %v8691 = vpop.f32.mrb[0].mxu0
    %v8692 = vpop.f32.mrb[0].mxu0
    %v8693 = vpop.f32.mrb[0].mxu0
    %8694 = vdwg.mxu0
    %v8699 = vunpack.c.l.b16 %v8159
    %v8700 = vunpack.c.l.b16 %v8160
    %v8701 = vunpack.c.l.b16 %v8161
    %v8702 = vunpack.c.l.b16 %v8162
    %v8703 = vpack.c.b16 %v8700, %v8699
    %v8704 = vpack.c.b16 %v8702, %v8701
    %8707 = vmatprep.subr.bf16.mxu0 0
    %8708 = vmatpush1.bf16.msra.mxu0 %v8703
    %8709 = vmatprep.subr.bf16.mxu0 0
    %8710 = vmatpush1.bf16.msra.mxu0 %v8704
    %8711 = vmatprep.subr.bf16.mxu0 0
    %8712 = vmatpush1.bf16.msra.mxu0 0
    %8713 = vmatprep.subr.bf16.mxu0 0
    %8714 = vmatpush1.bf16.msra.mxu0 0
    %8715 = vmatprep.subr.bf16.mxu0 0
    %8716 = vmatpush1.bf16.msra.mxu0 0
    %8717 = vmatprep.subr.bf16.mxu0 0
    %8718 = vmatpush1.bf16.msra.mxu0 0
    %8719 = vmatprep.subr.bf16.mxu0 0
    %8720 = vmatpush1.bf16.msra.mxu0 0
    %8721 = vmatprep.subr.bf16.mxu0 0
    %8722 = vmatpush1.bf16.msra.mxu0 0
    %8723 = vmatprep.subr.bf16.mxu0 0
    %8724 = vmatpush1.bf16.msra.mxu0 0
    %8725 = vmatprep.subr.bf16.mxu0 0
    %8726 = vmatpush1.bf16.msra.mxu0 0
    %8727 = vmatprep.subr.bf16.mxu0 0
    %8728 = vmatpush1.bf16.msra.mxu0 0
    %8729 = vmatprep.subr.bf16.mxu0 0
    %8730 = vmatpush1.bf16.msra.mxu0 0
    %8731 = vmatprep.subr.bf16.mxu0 0
    %8732 = vmatpush1.bf16.msra.mxu0 0
    %8733 = vmatprep.subr.bf16.mxu0 0
    %8734 = vmatpush1.bf16.msra.mxu0 0
    %8735 = vmatprep.subr.bf16.mxu0 0
    %8736 = vmatpush1.bf16.msra.mxu0 0
    %8737 = vmatprep.subr.bf16.mxu0 0
    %8738 = vmatpush1.bf16.msra.mxu0 0
    %8739 = vmatprep.mubr.bf16.mxu0 0
    %8740 = vmatmul.mubr.bf16.gmra.mrb[0].mxu0 %v8230
    %v8741 = vpop.f32.mrb[0].mxu0
    %v8742 = vadd.f32 0.0, %v8741
    %v8743 = vpop.f32.mrb[0].mxu0
    %v8744 = vpop.f32.mrb[0].mxu0
    %v8745 = vpop.f32.mrb[0].mxu0
    %8746 = vdwg.mxu0
    %v8751 = vunpack.c.l.b16 %v8163
    %v8752 = vunpack.c.l.b16 %v8164
    %v8753 = vunpack.c.l.b16 %v8165
    %v8754 = vunpack.c.l.b16 %v8166
    %v8755 = vpack.c.b16 %v8752, %v8751
    %v8756 = vpack.c.b16 %v8754, %v8753
    %8759 = vmatprep.subr.bf16.mxu0 0
    %8760 = vmatpush1.bf16.msra.mxu0 %v8755
    %8761 = vmatprep.subr.bf16.mxu0 0
    %8762 = vmatpush1.bf16.msra.mxu0 %v8756
    %8763 = vmatprep.subr.bf16.mxu0 0
    %8764 = vmatpush1.bf16.msra.mxu0 0
    %8765 = vmatprep.subr.bf16.mxu0 0
    %8766 = vmatpush1.bf16.msra.mxu0 0
    %8767 = vmatprep.subr.bf16.mxu0 0
    %8768 = vmatpush1.bf16.msra.mxu0 0
    %8769 = vmatprep.subr.bf16.mxu0 0
    %8770 = vmatpush1.bf16.msra.mxu0 0
    %8771 = vmatprep.subr.bf16.mxu0 0
    %8772 = vmatpush1.bf16.msra.mxu0 0
    %8773 = vmatprep.subr.bf16.mxu0 0
    %8774 = vmatpush1.bf16.msra.mxu0 0
    %8775 = vmatprep.subr.bf16.mxu0 0
    %8776 = vmatpush1.bf16.msra.mxu0 0
    %8777 = vmatprep.subr.bf16.mxu0 0
    %8778 = vmatpush1.bf16.msra.mxu0 0
    %8779 = vmatprep.subr.bf16.mxu0 0
    %8780 = vmatpush1.bf16.msra.mxu0 0
    %8781 = vmatprep.subr.bf16.mxu0 0
    %8782 = vmatpush1.bf16.msra.mxu0 0
    %8783 = vmatprep.subr.bf16.mxu0 0
    %8784 = vmatpush1.bf16.msra.mxu0 0
    %8785 = vmatprep.subr.bf16.mxu0 0
    %8786 = vmatpush1.bf16.msra.mxu0 0
    %8787 = vmatprep.subr.bf16.mxu0 0
    %8788 = vmatpush1.bf16.msra.mxu0 0
    %8789 = vmatprep.subr.bf16.mxu0 0
    %8790 = vmatpush1.bf16.msra.mxu0 0
    %8791 = vmatprep.mubr.bf16.mxu0 0
    %8792 = vmatmul.mubr.bf16.gmra.mrb[0].mxu0 %v8230
    %v8793 = vpop.f32.mrb[0].mxu0
    %v8794 = vadd.f32 0.0, %v8793
    %v8795 = vpop.f32.mrb[0].mxu0
    %v8796 = vpop.f32.mrb[0].mxu0
    %v8797 = vpop.f32.mrb[0].mxu0
    %8798 = vdwg.mxu0
    %8799 = vmatprep.subr.bf16.mxu0 0
    %8800 = vmatpush1.bf16.msra.mxu0 %v8599
    %8801 = vmatprep.subr.bf16.mxu0 0
    %8802 = vmatpush1.bf16.msra.mxu0 %v8600
    %8803 = vmatprep.subr.bf16.mxu0 0
    %8804 = vmatpush1.bf16.msra.mxu0 0
    %8805 = vmatprep.subr.bf16.mxu0 0
    %8806 = vmatpush1.bf16.msra.mxu0 0
    %8807 = vmatprep.subr.bf16.mxu0 0
    %8808 = vmatpush1.bf16.msra.mxu0 0
    %8809 = vmatprep.subr.bf16.mxu0 0
    %8810 = vmatpush1.bf16.msra.mxu0 0
    %8811 = vmatprep.subr.bf16.mxu0 0
    %8812 = vmatpush1.bf16.msra.mxu0 0
    %8813 = vmatprep.subr.bf16.mxu0 0
    %8814 = vmatpush1.bf16.msra.mxu0 0
    %8815 = vmatprep.subr.bf16.mxu0 0
    %8816 = vmatpush1.bf16.msra.mxu0 0
    %8817 = vmatprep.subr.bf16.mxu0 0
    %8818 = vmatpush1.bf16.msra.mxu0 0
    %8819 = vmatprep.subr.bf16.mxu0 0
    %8820 = vmatpush1.bf16.msra.mxu0 0
    %8821 = vmatprep.subr.bf16.mxu0 0
    %8822 = vmatpush1.bf16.msra.mxu0 0
    %8823 = vmatprep.subr.bf16.mxu0 0
    %8824 = vmatpush1.bf16.msra.mxu0 0
    %8825 = vmatprep.subr.bf16.mxu0 0
    %8826 = vmatpush1.bf16.msra.mxu0 0
    %8827 = vmatprep.subr.bf16.mxu0 0
    %8828 = vmatpush1.bf16.msra.mxu0 0
    %8829 = vmatprep.subr.bf16.mxu0 0
    %8830 = vmatpush1.bf16.msra.mxu0 0
    %8831 = vmatprep.mubr.bf16.mxu0 0
    %8832 = vmatmul.mubr.bf16.gmra.mrb[0].mxu0 %v8429
    %v8833 = vpop.f32.mrb[0].mxu0
    %v8834 = vadd.f32 0.0, %v8833
    %v8835 = vpop.f32.mrb[0].mxu0
    %v8836 = vpop.f32.mrb[0].mxu0
    %v8837 = vpop.f32.mrb[0].mxu0
    %8838 = vdwg.mxu0
    %8839 = vmatprep.subr.bf16.mxu0 0
    %8840 = vmatpush1.bf16.msra.mxu0 %v8651
    %8841 = vmatprep.subr.bf16.mxu0 0
    %8842 = vmatpush1.bf16.msra.mxu0 %v8652
    %8843 = vmatprep.subr.bf16.mxu0 0
    %8844 = vmatpush1.bf16.msra.mxu0 0
    %8845 = vmatprep.subr.bf16.mxu0 0
    %8846 = vmatpush1.bf16.msra.mxu0 0
    %8847 = vmatprep.subr.bf16.mxu0 0
    %8848 = vmatpush1.bf16.msra.mxu0 0
    %8849 = vmatprep.subr.bf16.mxu0 0
    %8850 = vmatpush1.bf16.msra.mxu0 0
    %8851 = vmatprep.subr.bf16.mxu0 0
    %8852 = vmatpush1.bf16.msra.mxu0 0
    %8853 = vmatprep.subr.bf16.mxu0 0
    %8854 = vmatpush1.bf16.msra.mxu0 0
    %8855 = vmatprep.subr.bf16.mxu0 0
    %8856 = vmatpush1.bf16.msra.mxu0 0
    %8857 = vmatprep.subr.bf16.mxu0 0
    %8858 = vmatpush1.bf16.msra.mxu0 0
    %8859 = vmatprep.subr.bf16.mxu0 0
    %8860 = vmatpush1.bf16.msra.mxu0 0
    %8861 = vmatprep.subr.bf16.mxu0 0
    %8862 = vmatpush1.bf16.msra.mxu0 0
    %8863 = vmatprep.subr.bf16.mxu0 0
    %8864 = vmatpush1.bf16.msra.mxu0 0
    %8865 = vmatprep.subr.bf16.mxu0 0
    %8866 = vmatpush1.bf16.msra.mxu0 0
    %8867 = vmatprep.subr.bf16.mxu0 0
    %8868 = vmatpush1.bf16.msra.mxu0 0
    %8869 = vmatprep.subr.bf16.mxu0 0
    %8870 = vmatpush1.bf16.msra.mxu0 0
    %8871 = vmatprep.mubr.bf16.mxu0 0
    %8872 = vmatmul.mubr.bf16.gmra.mrb[0].mxu0 %v8429
    %v8873 = vpop.f32.mrb[0].mxu0
    %v8874 = vadd.f32 0.0, %v8873
    %v8875 = vpop.f32.mrb[0].mxu0
    %v8876 = vpop.f32.mrb[0].mxu0
    %v8877 = vpop.f32.mrb[0].mxu0
    %8878 = vdwg.mxu0
    %8879 = vmatprep.subr.bf16.mxu0 0
    %8880 = vmatpush1.bf16.msra.mxu0 %v8703
    %8881 = vmatprep.subr.bf16.mxu0 0
    %8882 = vmatpush1.bf16.msra.mxu0 %v8704
    %8883 = vmatprep.subr.bf16.mxu0 0
    %8884 = vmatpush1.bf16.msra.mxu0 0
    %8885 = vmatprep.subr.bf16.mxu0 0
    %8886 = vmatpush1.bf16.msra.mxu0 0
    %8887 = vmatprep.subr.bf16.mxu0 0
    %8888 = vmatpush1.bf16.msra.mxu0 0
    %8889 = vmatprep.subr.bf16.mxu0 0
    %8890 = vmatpush1.bf16.msra.mxu0 0
    %8891 = vmatprep.subr.bf16.mxu0 0
    %8892 = vmatpush1.bf16.msra.mxu0 0
    %8893 = vmatprep.subr.bf16.mxu0 0
    %8894 = vmatpush1.bf16.msra.mxu0 0
    %8895 = vmatprep.subr.bf16.mxu0 0
    %8896 = vmatpush1.bf16.msra.mxu0 0
    %8897 = vmatprep.subr.bf16.mxu0 0
    %8898 = vmatpush1.bf16.msra.mxu0 0
    %8899 = vmatprep.subr.bf16.mxu0 0
    %8900 = vmatpush1.bf16.msra.mxu0 0
    %8901 = vmatprep.subr.bf16.mxu0 0
    %8902 = vmatpush1.bf16.msra.mxu0 0
    %8903 = vmatprep.subr.bf16.mxu0 0
    %8904 = vmatpush1.bf16.msra.mxu0 0
    %8905 = vmatprep.subr.bf16.mxu0 0
    %8906 = vmatpush1.bf16.msra.mxu0 0
    %8907 = vmatprep.subr.bf16.mxu0 0
    %8908 = vmatpush1.bf16.msra.mxu0 0
    %8909 = vmatprep.subr.bf16.mxu0 0
    %8910 = vmatpush1.bf16.msra.mxu0 0
    %8911 = vmatprep.mubr.bf16.mxu0 0
    %8912 = vmatmul.mubr.bf16.gmra.mrb[0].mxu0 %v8429
    %v8913 = vpop.f32.mrb[0].mxu0
    %v8914 = vadd.f32 0.0, %v8913
    %v8915 = vpop.f32.mrb[0].mxu0
    %v8916 = vpop.f32.mrb[0].mxu0
    %v8917 = vpop.f32.mrb[0].mxu0
    %8918 = vdwg.mxu0
    %8919 = vmatprep.subr.bf16.mxu0 0
    %8920 = vmatpush1.bf16.msra.mxu0 %v8755
    %8921 = vmatprep.subr.bf16.mxu0 0
    %8922 = vmatpush1.bf16.msra.mxu0 %v8756
    %8923 = vmatprep.subr.bf16.mxu0 0
    %8924 = vmatpush1.bf16.msra.mxu0 0
    %8925 = vmatprep.subr.bf16.mxu0 0
    %8926 = vmatpush1.bf16.msra.mxu0 0
    %8927 = vmatprep.subr.bf16.mxu0 0
    %8928 = vmatpush1.bf16.msra.mxu0 0
    %8929 = vmatprep.subr.bf16.mxu0 0
    %8930 = vmatpush1.bf16.msra.mxu0 0
    %8931 = vmatprep.subr.bf16.mxu0 0
    %8932 = vmatpush1.bf16.msra.mxu0 0
    %8933 = vmatprep.subr.bf16.mxu0 0
    %8934 = vmatpush1.bf16.msra.mxu0 0
    %8935 = vmatprep.subr.bf16.mxu0 0
    %8936 = vmatpush1.bf16.msra.mxu0 0
    %8937 = vmatprep.subr.bf16.mxu0 0
    %8938 = vmatpush1.bf16.msra.mxu0 0
    %8939 = vmatprep.subr.bf16.mxu0 0
    %8940 = vmatpush1.bf16.msra.mxu0 0
    %8941 = vmatprep.subr.bf16.mxu0 0
    %8942 = vmatpush1.bf16.msra.mxu0 0
    %8943 = vmatprep.subr.bf16.mxu0 0
    %8944 = vmatpush1.bf16.msra.mxu0 0
    %8945 = vmatprep.subr.bf16.mxu0 0
    %8946 = vmatpush1.bf16.msra.mxu0 0
    %8947 = vmatprep.subr.bf16.mxu0 0
    %8948 = vmatpush1.bf16.msra.mxu0 0
    %8949 = vmatprep.subr.bf16.mxu0 0
    %8950 = vmatpush1.bf16.msra.mxu0 0
    %8951 = vmatprep.mubr.bf16.mxu0 0
    %8952 = vmatmul.mubr.bf16.gmra.mrb[0].mxu0 %v8429
    %v8953 = vpop.f32.mrb[0].mxu0
    %v8954 = vadd.f32 0.0, %v8953
    %v8955 = vpop.f32.mrb[0].mxu0
    %v8956 = vpop.f32.mrb[0].mxu0
    %v8957 = vpop.f32.mrb[0].mxu0
    %8958 = vdwg.mxu0
    %v8963 = vunpack.c.l.b16 %v8168
    %v8964 = vunpack.c.l.b16 %v8169
    %v8965 = vunpack.c.l.b16 %v8170
    %v8966 = vunpack.c.l.b16 %v8171
    %v8967 = vpack.c.b16 %v8964, %v8963
    %v8968 = vpack.c.b16 %v8966, %v8965
    %8971 = vmatprep.subr.bf16.mxu0 0
    %8972 = vmatpush1.bf16.msra.mxu0 %v8967
    %8973 = vmatprep.subr.bf16.mxu0 0
    %8974 = vmatpush1.bf16.msra.mxu0 %v8968
    %8975 = vmatprep.subr.bf16.mxu0 0
    %8976 = vmatpush1.bf16.msra.mxu0 0
    %8977 = vmatprep.subr.bf16.mxu0 0
    %8978 = vmatpush1.bf16.msra.mxu0 0
    %8979 = vmatprep.subr.bf16.mxu0 0
    %8980 = vmatpush1.bf16.msra.mxu0 0
    %8981 = vmatprep.subr.bf16.mxu0 0
    %8982 = vmatpush1.bf16.msra.mxu0 0
    %8983 = vmatprep.subr.bf16.mxu0 0
    %8984 = vmatpush1.bf16.msra.mxu0 0
    %8985 = vmatprep.subr.bf16.mxu0 0
    %8986 = vmatpush1.bf16.msra.mxu0 0
    %8987 = vmatprep.subr.bf16.mxu0 0
    %8988 = vmatpush1.bf16.msra.mxu0 0
    %8989 = vmatprep.subr.bf16.mxu0 0
    %8990 = vmatpush1.bf16.msra.mxu0 0
    %8991 = vmatprep.subr.bf16.mxu0 0
    %8992 = vmatpush1.bf16.msra.mxu0 0
    %8993 = vmatprep.subr.bf16.mxu0 0
    %8994 = vmatpush1.bf16.msra.mxu0 0
    %8995 = vmatprep.subr.bf16.mxu0 0
    %8996 = vmatpush1.bf16.msra.mxu0 0
    %8997 = vmatprep.subr.bf16.mxu0 0
    %8998 = vmatpush1.bf16.msra.mxu0 0
    %8999 = vmatprep.subr.bf16.mxu0 0
    %9000 = vmatpush1.bf16.msra.mxu0 0
    %9001 = vmatprep.subr.bf16.mxu0 0
    %9002 = vmatpush1.bf16.msra.mxu0 0
    %9003 = vmatprep.mubr.bf16.mxu0 0
    %9004 = vmatmul.mubr.bf16.gmra.mrb[0].mxu0 %v8230
    %v9005 = vpop.f32.mrb[0].mxu0
    %v9006 = vadd.f32 0.0, %v9005
    %v9007 = vpop.f32.mrb[0].mxu0
    %v9008 = vpop.f32.mrb[0].mxu0
    %v9009 = vpop.f32.mrb[0].mxu0
    %9010 = vdwg.mxu0
    %v9015 = vunpack.c.l.b16 %v8172
    %v9016 = vunpack.c.l.b16 %v8173
    %v9017 = vunpack.c.l.b16 %v8174
    %v9018 = vunpack.c.l.b16 %v8175
    %v9019 = vpack.c.b16 %v9016, %v9015
    %v9020 = vpack.c.b16 %v9018, %v9017
    %9023 = vmatprep.subr.bf16.mxu0 0
    %9024 = vmatpush1.bf16.msra.mxu0 %v9019
    %9025 = vmatprep.subr.bf16.mxu0 0
    %9026 = vmatpush1.bf16.msra.mxu0 %v9020
    %9027 = vmatprep.subr.bf16.mxu0 0
    %9028 = vmatpush1.bf16.msra.mxu0 0
    %9029 = vmatprep.subr.bf16.mxu0 0
    %9030 = vmatpush1.bf16.msra.mxu0 0
    %9031 = vmatprep.subr.bf16.mxu0 0
    %9032 = vmatpush1.bf16.msra.mxu0 0
    %9033 = vmatprep.subr.bf16.mxu0 0
    %9034 = vmatpush1.bf16.msra.mxu0 0
    %9035 = vmatprep.subr.bf16.mxu0 0
    %9036 = vmatpush1.bf16.msra.mxu0 0
    %9037 = vmatprep.subr.bf16.mxu0 0
    %9038 = vmatpush1.bf16.msra.mxu0 0
    %9039 = vmatprep.subr.bf16.mxu0 0
    %9040 = vmatpush1.bf16.msra.mxu0 0
    %9041 = vmatprep.subr.bf16.mxu0 0
    %9042 = vmatpush1.bf16.msra.mxu0 0
    %9043 = vmatprep.subr.bf16.mxu0 0
    %9044 = vmatpush1.bf16.msra.mxu0 0
    %9045 = vmatprep.subr.bf16.mxu0 0
    %9046 = vmatpush1.bf16.msra.mxu0 0
    %9047 = vmatprep.subr.bf16.mxu0 0
    %9048 = vmatpush1.bf16.msra.mxu0 0
    %9049 = vmatprep.subr.bf16.mxu0 0
    %9050 = vmatpush1.bf16.msra.mxu0 0
    %9051 = vmatprep.subr.bf16.mxu0 0
    %9052 = vmatpush1.bf16.msra.mxu0 0
    %9053 = vmatprep.subr.bf16.mxu0 0
    %9054 = vmatpush1.bf16.msra.mxu0 0
    %9055 = vmatprep.mubr.bf16.mxu0 0
    %9056 = vmatmul.mubr.bf16.gmra.mrb[0].mxu0 %v8230
    %v9057 = vpop.f32.mrb[0].mxu0
    %v9058 = vadd.f32 0.0, %v9057
    %v9059 = vpop.f32.mrb[0].mxu0
    %v9060 = vpop.f32.mrb[0].mxu0
    %v9061 = vpop.f32.mrb[0].mxu0
    %9062 = vdwg.mxu0
    %v9067 = vunpack.c.l.b16 %v8176
    %v9068 = vunpack.c.l.b16 %v8177
    %v9069 = vunpack.c.l.b16 %v8178
    %v9070 = vunpack.c.l.b16 %v8179
    %v9071 = vpack.c.b16 %v9068, %v9067
    %v9072 = vpack.c.b16 %v9070, %v9069
    %9075 = vmatprep.subr.bf16.mxu0 0
    %9076 = vmatpush1.bf16.msra.mxu0 %v9071
    %9077 = vmatprep.subr.bf16.mxu0 0
    %9078 = vmatpush1.bf16.msra.mxu0 %v9072
    %9079 = vmatprep.subr.bf16.mxu0 0
    %9080 = vmatpush1.bf16.msra.mxu0 0
    %9081 = vmatprep.subr.bf16.mxu0 0
    %9082 = vmatpush1.bf16.msra.mxu0 0
    %9083 = vmatprep.subr.bf16.mxu0 0
    %9084 = vmatpush1.bf16.msra.mxu0 0
    %9085 = vmatprep.subr.bf16.mxu0 0
    %9086 = vmatpush1.bf16.msra.mxu0 0
    %9087 = vmatprep.subr.bf16.mxu0 0
    %9088 = vmatpush1.bf16.msra.mxu0 0
    %9089 = vmatprep.subr.bf16.mxu0 0
    %9090 = vmatpush1.bf16.msra.mxu0 0
    %9091 = vmatprep.subr.bf16.mxu0 0
    %9092 = vmatpush1.bf16.msra.mxu0 0
    %9093 = vmatprep.subr.bf16.mxu0 0
    %9094 = vmatpush1.bf16.msra.mxu0 0
    %9095 = vmatprep.subr.bf16.mxu0 0
    %9096 = vmatpush1.bf16.msra.mxu0 0
    %9097 = vmatprep.subr.bf16.mxu0 0
    %9098 = vmatpush1.bf16.msra.mxu0 0
    %9099 = vmatprep.subr.bf16.mxu0 0
    %9100 = vmatpush1.bf16.msra.mxu0 0
    %9101 = vmatprep.subr.bf16.mxu0 0
    %9102 = vmatpush1.bf16.msra.mxu0 0
    %9103 = vmatprep.subr.bf16.mxu0 0
    %9104 = vmatpush1.bf16.msra.mxu0 0
    %9105 = vmatprep.subr.bf16.mxu0 0
    %9106 = vmatpush1.bf16.msra.mxu0 0
    %9107 = vmatprep.mubr.bf16.mxu0 0
    %9108 = vmatmul.mubr.bf16.gmra.mrb[0].mxu0 %v8230
    %v9109 = vpop.f32.mrb[0].mxu0
    %v9110 = vadd.f32 0.0, %v9109
    %v9111 = vpop.f32.mrb[0].mxu0
    %v9112 = vpop.f32.mrb[0].mxu0
    %v9113 = vpop.f32.mrb[0].mxu0
    %9114 = vdwg.mxu0
    %v9119 = vunpack.c.l.b16 %v8180
    %v9120 = vunpack.c.l.b16 %v8181
    %v9121 = vunpack.c.l.b16 %v8182
    %v9122 = vunpack.c.l.b16 %v8183
    %v9123 = vpack.c.b16 %v9120, %v9119
    %v9124 = vpack.c.b16 %v9122, %v9121
    %9127 = vmatprep.subr.bf16.mxu0 0
    %9128 = vmatpush1.bf16.msra.mxu0 %v9123
    %9129 = vmatprep.subr.bf16.mxu0 0
    %9130 = vmatpush1.bf16.msra.mxu0 %v9124
    %9131 = vmatprep.subr.bf16.mxu0 0
    %9132 = vmatpush1.bf16.msra.mxu0 0
    %9133 = vmatprep.subr.bf16.mxu0 0
    %9134 = vmatpush1.bf16.msra.mxu0 0
    %9135 = vmatprep.subr.bf16.mxu0 0
    %9136 = vmatpush1.bf16.msra.mxu0 0
    %9137 = vmatprep.subr.bf16.mxu0 0
    %9138 = vmatpush1.bf16.msra.mxu0 0
    %9139 = vmatprep.subr.bf16.mxu0 0
    %9140 = vmatpush1.bf16.msra.mxu0 0
    %9141 = vmatprep.subr.bf16.mxu0 0
    %9142 = vmatpush1.bf16.msra.mxu0 0
    %9143 = vmatprep.subr.bf16.mxu0 0
    %9144 = vmatpush1.bf16.msra.mxu0 0
    %9145 = vmatprep.subr.bf16.mxu0 0
    %9146 = vmatpush1.bf16.msra.mxu0 0
    %9147 = vmatprep.subr.bf16.mxu0 0
    %9148 = vmatpush1.bf16.msra.mxu0 0
    %9149 = vmatprep.subr.bf16.mxu0 0
    %9150 = vmatpush1.bf16.msra.mxu0 0
    %9151 = vmatprep.subr.bf16.mxu0 0
    %9152 = vmatpush1.bf16.msra.mxu0 0
    %9153 = vmatprep.subr.bf16.mxu0 0
    %9154 = vmatpush1.bf16.msra.mxu0 0
    %9155 = vmatprep.subr.bf16.mxu0 0
    %9156 = vmatpush1.bf16.msra.mxu0 0
    %9157 = vmatprep.subr.bf16.mxu0 0
    %9158 = vmatpush1.bf16.msra.mxu0 0
    %9159 = vmatprep.mubr.bf16.mxu0 0
    %9160 = vmatmul.mubr.bf16.gmra.mrb[0].mxu0 %v8230
    %v9161 = vpop.f32.mrb[0].mxu0
    %v9162 = vadd.f32 0.0, %v9161
    %v9163 = vpop.f32.mrb[0].mxu0
    %v9164 = vpop.f32.mrb[0].mxu0
    %v9165 = vpop.f32.mrb[0].mxu0
    %9166 = vdwg.mxu0
    %9167 = vmatprep.subr.bf16.mxu0 0
    %9168 = vmatpush1.bf16.msra.mxu0 %v8967
    %9169 = vmatprep.subr.bf16.mxu0 0
    %9170 = vmatpush1.bf16.msra.mxu0 %v8968
    %9171 = vmatprep.subr.bf16.mxu0 0
    %9172 = vmatpush1.bf16.msra.mxu0 0
    %9173 = vmatprep.subr.bf16.mxu0 0
    %9174 = vmatpush1.bf16.msra.mxu0 0
    %9175 = vmatprep.subr.bf16.mxu0 0
    %9176 = vmatpush1.bf16.msra.mxu0 0
    %9177 = vmatprep.subr.bf16.mxu0 0
    %9178 = vmatpush1.bf16.msra.mxu0 0
    %9179 = vmatprep.subr.bf16.mxu0 0
    %9180 = vmatpush1.bf16.msra.mxu0 0
    %9181 = vmatprep.subr.bf16.mxu0 0
    %9182 = vmatpush1.bf16.msra.mxu0 0
    %9183 = vmatprep.subr.bf16.mxu0 0
    %9184 = vmatpush1.bf16.msra.mxu0 0
    %9185 = vmatprep.subr.bf16.mxu0 0
    %9186 = vmatpush1.bf16.msra.mxu0 0
    %9187 = vmatprep.subr.bf16.mxu0 0
    %9188 = vmatpush1.bf16.msra.mxu0 0
    %9189 = vmatprep.subr.bf16.mxu0 0
    %9190 = vmatpush1.bf16.msra.mxu0 0
    %9191 = vmatprep.subr.bf16.mxu0 0
    %9192 = vmatpush1.bf16.msra.mxu0 0
    %9193 = vmatprep.subr.bf16.mxu0 0
    %9194 = vmatpush1.bf16.msra.mxu0 0
    %9195 = vmatprep.subr.bf16.mxu0 0
    %9196 = vmatpush1.bf16.msra.mxu0 0
    %9197 = vmatprep.subr.bf16.mxu0 0
    %9198 = vmatpush1.bf16.msra.mxu0 0
    %9199 = vmatprep.mubr.bf16.mxu0 0
    %9200 = vmatmul.mubr.bf16.gmra.mrb[0].mxu0 %v8429
    %v9201 = vpop.f32.mrb[0].mxu0
    %v9202 = vadd.f32 0.0, %v9201
    %v9203 = vpop.f32.mrb[0].mxu0
    %v9204 = vpop.f32.mrb[0].mxu0
    %v9205 = vpop.f32.mrb[0].mxu0
    %9206 = vdwg.mxu0
    %9207 = vmatprep.subr.bf16.mxu0 0
    %9208 = vmatpush1.bf16.msra.mxu0 %v9019
    %9209 = vmatprep.subr.bf16.mxu0 0
    %9210 = vmatpush1.bf16.msra.mxu0 %v9020
    %9211 = vmatprep.subr.bf16.mxu0 0
    %9212 = vmatpush1.bf16.msra.mxu0 0
    %9213 = vmatprep.subr.bf16.mxu0 0
    %9214 = vmatpush1.bf16.msra.mxu0 0
    %9215 = vmatprep.subr.bf16.mxu0 0
    %9216 = vmatpush1.bf16.msra.mxu0 0
    %9217 = vmatprep.subr.bf16.mxu0 0
    %9218 = vmatpush1.bf16.msra.mxu0 0
    %9219 = vmatprep.subr.bf16.mxu0 0
    %9220 = vmatpush1.bf16.msra.mxu0 0
    %9221 = vmatprep.subr.bf16.mxu0 0
    %9222 = vmatpush1.bf16.msra.mxu0 0
    %9223 = vmatprep.subr.bf16.mxu0 0
    %9224 = vmatpush1.bf16.msra.mxu0 0
    %9225 = vmatprep.subr.bf16.mxu0 0
    %9226 = vmatpush1.bf16.msra.mxu0 0
    %9227 = vmatprep.subr.bf16.mxu0 0
    %9228 = vmatpush1.bf16.msra.mxu0 0
    %9229 = vmatprep.subr.bf16.mxu0 0
    %9230 = vmatpush1.bf16.msra.mxu0 0
    %9231 = vmatprep.subr.bf16.mxu0 0
    %9232 = vmatpush1.bf16.msra.mxu0 0
    %9233 = vmatprep.subr.bf16.mxu0 0
    %9234 = vmatpush1.bf16.msra.mxu0 0
    %9235 = vmatprep.subr.bf16.mxu0 0
    %9236 = vmatpush1.bf16.msra.mxu0 0
    %9237 = vmatprep.subr.bf16.mxu0 0
    %9238 = vmatpush1.bf16.msra.mxu0 0
    %9239 = vmatprep.mubr.bf16.mxu0 0
    %9240 = vmatmul.mubr.bf16.gmra.mrb[0].mxu0 %v8429
    %v9241 = vpop.f32.mrb[0].mxu0
    %v9242 = vadd.f32 0.0, %v9241
    %v9243 = vpop.f32.mrb[0].mxu0
    %v9244 = vpop.f32.mrb[0].mxu0
    %v9245 = vpop.f32.mrb[0].mxu0
    %9246 = vdwg.mxu0
    %9247 = vmatprep.subr.bf16.mxu0 0
    %9248 = vmatpush1.bf16.msra.mxu0 %v9071
    %9249 = vmatprep.subr.bf16.mxu0 0
    %9250 = vmatpush1.bf16.msra.mxu0 %v9072
    %9251 = vmatprep.subr.bf16.mxu0 0
    %9252 = vmatpush1.bf16.msra.mxu0 0
    %9253 = vmatprep.subr.bf16.mxu0 0
    %9254 = vmatpush1.bf16.msra.mxu0 0
    %9255 = vmatprep.subr.bf16.mxu0 0
    %9256 = vmatpush1.bf16.msra.mxu0 0
    %9257 = vmatprep.subr.bf16.mxu0 0
    %9258 = vmatpush1.bf16.msra.mxu0 0
    %9259 = vmatprep.subr.bf16.mxu0 0
    %9260 = vmatpush1.bf16.msra.mxu0 0
    %9261 = vmatprep.subr.bf16.mxu0 0
    %9262 = vmatpush1.bf16.msra.mxu0 0
    %9263 = vmatprep.subr.bf16.mxu0 0
    %9264 = vmatpush1.bf16.msra.mxu0 0
    %9265 = vmatprep.subr.bf16.mxu0 0
    %9266 = vmatpush1.bf16.msra.mxu0 0
    %9267 = vmatprep.subr.bf16.mxu0 0
    %9268 = vmatpush1.bf16.msra.mxu0 0
    %9269 = vmatprep.subr.bf16.mxu0 0
    %9270 = vmatpush1.bf16.msra.mxu0 0
    %9271 = vmatprep.subr.bf16.mxu0 0
    %9272 = vmatpush1.bf16.msra.mxu0 0
    %9273 = vmatprep.subr.bf16.mxu0 0
    %9274 = vmatpush1.bf16.msra.mxu0 0
    %9275 = vmatprep.subr.bf16.mxu0 0
    %9276 = vmatpush1.bf16.msra.mxu0 0
    %9277 = vmatprep.subr.bf16.mxu0 0
    %9278 = vmatpush1.bf16.msra.mxu0 0
    %9279 = vmatprep.mubr.bf16.mxu0 0
    %9280 = vmatmul.mubr.bf16.gmra.mrb[0].mxu0 %v8429
    %v9281 = vpop.f32.mrb[0].mxu0
    %v9282 = vadd.f32 0.0, %v9281
    %v9283 = vpop.f32.mrb[0].mxu0
    %v9284 = vpop.f32.mrb[0].mxu0
    %v9285 = vpop.f32.mrb[0].mxu0
    %9286 = vdwg.mxu0
    %9287 = vmatprep.subr.bf16.mxu0 0
    %9288 = vmatpush1.bf16.msra.mxu0 %v9123
    %9289 = vmatprep.subr.bf16.mxu0 0
    %9290 = vmatpush1.bf16.msra.mxu0 %v9124
    %9291 = vmatprep.subr.bf16.mxu0 0
    %9292 = vmatpush1.bf16.msra.mxu0 0
    %9293 = vmatprep.subr.bf16.mxu0 0
    %9294 = vmatpush1.bf16.msra.mxu0 0
    %9295 = vmatprep.subr.bf16.mxu0 0
    %9296 = vmatpush1.bf16.msra.mxu0 0
    %9297 = vmatprep.subr.bf16.mxu0 0
    %9298 = vmatpush1.bf16.msra.mxu0 0
    %9299 = vmatprep.subr.bf16.mxu0 0
    %9300 = vmatpush1.bf16.msra.mxu0 0
    %9301 = vmatprep.subr.bf16.mxu0 0
    %9302 = vmatpush1.bf16.msra.mxu0 0
    %9303 = vmatprep.subr.bf16.mxu0 0
    %9304 = vmatpush1.bf16.msra.mxu0 0
    %9305 = vmatprep.subr.bf16.mxu0 0
    %9306 = vmatpush1.bf16.msra.mxu0 0
    %9307 = vmatprep.subr.bf16.mxu0 0
    %9308 = vmatpush1.bf16.msra.mxu0 0
    %9309 = vmatprep.subr.bf16.mxu0 0
    %9310 = vmatpush1.bf16.msra.mxu0 0
    %9311 = vmatprep.subr.bf16.mxu0 0
    %9312 = vmatpush1.bf16.msra.mxu0 0
    %9313 = vmatprep.subr.bf16.mxu0 0
    %9314 = vmatpush1.bf16.msra.mxu0 0
    %9315 = vmatprep.subr.bf16.mxu0 0
    %9316 = vmatpush1.bf16.msra.mxu0 0
    %9317 = vmatprep.subr.bf16.mxu0 0
    %9318 = vmatpush1.bf16.msra.mxu0 0
    %9319 = vmatprep.mubr.bf16.mxu0 0
    %9320 = vmatmul.mubr.bf16.gmra.mrb[0].mxu0 %v8429
    %v9321 = vpop.f32.mrb[0].mxu0
    %v9322 = vadd.f32 0.0, %v9321
    %v9323 = vpop.f32.mrb[0].mxu0
    %v9324 = vpop.f32.mrb[0].mxu0
    %v9325 = vpop.f32.mrb[0].mxu0
    %9326 = vdwg.mxu0
    %v9327 = vpack.c.bf16 %v8267, %v8267
    %v9328 = vpack.c.bf16 %v8319, %v8319
    %v9329 = vpack.c.bf16 %v8371, %v8371
    %v9330 = vpack.c.bf16 %v8423, %v8423
    %v9331 = vpack.c.bf16 %v8466, %v8466
    %v9332 = vpack.c.bf16 %v8506, %v8506
    %v9333 = vpack.c.bf16 %v8546, %v8546
    %v9334 = vpack.c.bf16 %v8586, %v8586
    %v9335 = vpack.c.bf16 %v8638, %v8638
    %v9336 = vpack.c.bf16 %v8690, %v8690
    %v9337 = vpack.c.bf16 %v8742, %v8742
    %v9338 = vpack.c.bf16 %v8794, %v8794
    %v9339 = vpack.c.bf16 %v8834, %v8834
    %v9340 = vpack.c.bf16 %v8874, %v8874
    %v9341 = vpack.c.bf16 %v8914, %v8914
    %v9342 = vpack.c.bf16 %v8954, %v8954
    %v9344 = vsel %vm1251, %v9327, 0
    %v9347 = vsel %vm1251, %v9335, 0
    %9349 = vmatprep.subr.bf16.mxu0 0
    %9350 = vmatpush1.bf16.xpose.msra.mxu0 %v9347
    %9351 = vmatprep.subr.bf16.mxu0 0
    %9352 = vmatpush1.bf16.xpose.msra.mxu0 0
    %9353 = vmatprep.subr.bf16.mxu0 0
    %9354 = vmatpush1.bf16.xpose.msra.mxu0 0
    %9355 = vmatprep.subr.bf16.mxu0 0
    %9356 = vmatpush1.bf16.xpose.msra.mxu0 0
    %9357 = vmatprep.subr.bf16.mxu0 0
    %9358 = vmatpush1.bf16.xpose.msra.mxu0 0
    %9359 = vmatprep.subr.bf16.mxu0 0
    %9360 = vmatpush1.bf16.xpose.msra.mxu0 0
    %9361 = vmatprep.subr.bf16.mxu0 0
    %9362 = vmatpush1.bf16.xpose.msra.mxu0 0
    %9363 = vmatprep.subr.bf16.mxu0 0
    %9364 = vmatpush1.bf16.xpose.msra.mxu0 0
    %9365 = vmatprep.subr.bf16.mxu0 0
    %9366 = vmatpush1.bf16.xpose.msra.mxu0 0
    %9367 = vmatprep.subr.bf16.mxu0 0
    %9368 = vmatpush1.bf16.xpose.msra.mxu0 0
    %9369 = vmatprep.subr.bf16.mxu0 0
    %9370 = vmatpush1.bf16.xpose.msra.mxu0 0
    %9371 = vmatprep.subr.bf16.mxu0 0
    %9372 = vmatpush1.bf16.xpose.msra.mxu0 0
    %9373 = vmatprep.subr.bf16.mxu0 0
    %9374 = vmatpush1.bf16.xpose.msra.mxu0 0
    %9375 = vmatprep.subr.bf16.mxu0 0
    %9376 = vmatpush1.bf16.xpose.msra.mxu0 0
    %9377 = vmatprep.subr.bf16.mxu0 0
    %9378 = vmatpush1.bf16.xpose.msra.mxu0 0
    %9379 = vmatprep.subr.bf16.mxu0 0
    %9380 = vmatpush1.bf16.xpose.msra.mxu0 0
    %9381 = vmatprep.mubr.bf16.mxu0 0
    %9382 = vmatmul.mubr.bf16.gmra.mrb[0].mxu0 %v9344
    %v9383 = vpop.f32.mrb[0].mxu0
    %v9384 = vadd.f32 0.0, %v9383
    %v9385 = vpop.f32.mrb[0].mxu0
    %v9386 = vpop.f32.mrb[0].mxu0
    %v9387 = vpop.f32.mrb[0].mxu0
    %9388 = vdwg.mxu0
    %v9390 = vsel %vm1251, %v9328, 0
    %v9393 = vsel %vm1251, %v9336, 0
    %9395 = vmatprep.subr.bf16.mxu0 0
    %9396 = vmatpush1.bf16.xpose.msra.mxu0 %v9393
    %9397 = vmatprep.subr.bf16.mxu0 0
    %9398 = vmatpush1.bf16.xpose.msra.mxu0 0
    %9399 = vmatprep.subr.bf16.mxu0 0
    %9400 = vmatpush1.bf16.xpose.msra.mxu0 0
    %9401 = vmatprep.subr.bf16.mxu0 0
    %9402 = vmatpush1.bf16.xpose.msra.mxu0 0
    %9403 = vmatprep.subr.bf16.mxu0 0
    %9404 = vmatpush1.bf16.xpose.msra.mxu0 0
    %9405 = vmatprep.subr.bf16.mxu0 0
    %9406 = vmatpush1.bf16.xpose.msra.mxu0 0
    %9407 = vmatprep.subr.bf16.mxu0 0
    %9408 = vmatpush1.bf16.xpose.msra.mxu0 0
    %9409 = vmatprep.subr.bf16.mxu0 0
    %9410 = vmatpush1.bf16.xpose.msra.mxu0 0
    %9411 = vmatprep.subr.bf16.mxu0 0
    %9412 = vmatpush1.bf16.xpose.msra.mxu0 0
    %9413 = vmatprep.subr.bf16.mxu0 0
    %9414 = vmatpush1.bf16.xpose.msra.mxu0 0
    %9415 = vmatprep.subr.bf16.mxu0 0
    %9416 = vmatpush1.bf16.xpose.msra.mxu0 0
    %9417 = vmatprep.subr.bf16.mxu0 0
    %9418 = vmatpush1.bf16.xpose.msra.mxu0 0
    %9419 = vmatprep.subr.bf16.mxu0 0
    %9420 = vmatpush1.bf16.xpose.msra.mxu0 0
    %9421 = vmatprep.subr.bf16.mxu0 0
    %9422 = vmatpush1.bf16.xpose.msra.mxu0 0
    %9423 = vmatprep.subr.bf16.mxu0 0
    %9424 = vmatpush1.bf16.xpose.msra.mxu0 0
    %9425 = vmatprep.subr.bf16.mxu0 0
    %9426 = vmatpush1.bf16.xpose.msra.mxu0 0
    %9427 = vmatprep.mubr.bf16.mxu0 0
    %9428 = vmatmul.mubr.bf16.gmra.mrb[0].mxu0 %v9390
    %v9429 = vpop.f32.mrb[0].mxu0
    %v9430 = vadd.f32 0.0, %v9429
    %v9431 = vpop.f32.mrb[0].mxu0
    %v9432 = vpop.f32.mrb[0].mxu0
    %v9433 = vpop.f32.mrb[0].mxu0
    %9434 = vdwg.mxu0
    %v9436 = vsel %vm1251, %v9329, 0
    %v9439 = vsel %vm1251, %v9337, 0
    %9441 = vmatprep.subr.bf16.mxu0 0
    %9442 = vmatpush1.bf16.xpose.msra.mxu0 %v9439
    %9443 = vmatprep.subr.bf16.mxu0 0
    %9444 = vmatpush1.bf16.xpose.msra.mxu0 0
    %9445 = vmatprep.subr.bf16.mxu0 0
    %9446 = vmatpush1.bf16.xpose.msra.mxu0 0
    %9447 = vmatprep.subr.bf16.mxu0 0
    %9448 = vmatpush1.bf16.xpose.msra.mxu0 0
    %9449 = vmatprep.subr.bf16.mxu0 0
    %9450 = vmatpush1.bf16.xpose.msra.mxu0 0
    %9451 = vmatprep.subr.bf16.mxu0 0
    %9452 = vmatpush1.bf16.xpose.msra.mxu0 0
    %9453 = vmatprep.subr.bf16.mxu0 0
    %9454 = vmatpush1.bf16.xpose.msra.mxu0 0
    %9455 = vmatprep.subr.bf16.mxu0 0
    %9456 = vmatpush1.bf16.xpose.msra.mxu0 0
    %9457 = vmatprep.subr.bf16.mxu0 0
    %9458 = vmatpush1.bf16.xpose.msra.mxu0 0
    %9459 = vmatprep.subr.bf16.mxu0 0
    %9460 = vmatpush1.bf16.xpose.msra.mxu0 0
    %9461 = vmatprep.subr.bf16.mxu0 0
    %9462 = vmatpush1.bf16.xpose.msra.mxu0 0
    %9463 = vmatprep.subr.bf16.mxu0 0
    %9464 = vmatpush1.bf16.xpose.msra.mxu0 0
    %9465 = vmatprep.subr.bf16.mxu0 0
    %9466 = vmatpush1.bf16.xpose.msra.mxu0 0
    %9467 = vmatprep.subr.bf16.mxu0 0
    %9468 = vmatpush1.bf16.xpose.msra.mxu0 0
    %9469 = vmatprep.subr.bf16.mxu0 0
    %9470 = vmatpush1.bf16.xpose.msra.mxu0 0
    %9471 = vmatprep.subr.bf16.mxu0 0
    %9472 = vmatpush1.bf16.xpose.msra.mxu0 0
    %9473 = vmatprep.mubr.bf16.mxu0 0
    %9474 = vmatmul.mubr.bf16.gmra.mrb[0].mxu0 %v9436
    %v9475 = vpop.f32.mrb[0].mxu0
    %v9476 = vadd.f32 0.0, %v9475
    %v9477 = vpop.f32.mrb[0].mxu0
    %v9478 = vpop.f32.mrb[0].mxu0
    %v9479 = vpop.f32.mrb[0].mxu0
    %9480 = vdwg.mxu0
    %v9482 = vsel %vm1251, %v9330, 0
    %v9485 = vsel %vm1251, %v9338, 0
    %9487 = vmatprep.subr.bf16.mxu0 0
    %9488 = vmatpush1.bf16.xpose.msra.mxu0 %v9485
    %9489 = vmatprep.subr.bf16.mxu0 0
    %9490 = vmatpush1.bf16.xpose.msra.mxu0 0
    %9491 = vmatprep.subr.bf16.mxu0 0
    %9492 = vmatpush1.bf16.xpose.msra.mxu0 0
    %9493 = vmatprep.subr.bf16.mxu0 0
    %9494 = vmatpush1.bf16.xpose.msra.mxu0 0
    %9495 = vmatprep.subr.bf16.mxu0 0
    %9496 = vmatpush1.bf16.xpose.msra.mxu0 0
    %9497 = vmatprep.subr.bf16.mxu0 0
    %9498 = vmatpush1.bf16.xpose.msra.mxu0 0
    %9499 = vmatprep.subr.bf16.mxu0 0
    %9500 = vmatpush1.bf16.xpose.msra.mxu0 0
    %9501 = vmatprep.subr.bf16.mxu0 0
    %9502 = vmatpush1.bf16.xpose.msra.mxu0 0
    %9503 = vmatprep.subr.bf16.mxu0 0
    %9504 = vmatpush1.bf16.xpose.msra.mxu0 0
    %9505 = vmatprep.subr.bf16.mxu0 0
    %9506 = vmatpush1.bf16.xpose.msra.mxu0 0
    %9507 = vmatprep.subr.bf16.mxu0 0
    %9508 = vmatpush1.bf16.xpose.msra.mxu0 0
    %9509 = vmatprep.subr.bf16.mxu0 0
    %9510 = vmatpush1.bf16.xpose.msra.mxu0 0
    %9511 = vmatprep.subr.bf16.mxu0 0
    %9512 = vmatpush1.bf16.xpose.msra.mxu0 0
    %9513 = vmatprep.subr.bf16.mxu0 0
    %9514 = vmatpush1.bf16.xpose.msra.mxu0 0
    %9515 = vmatprep.subr.bf16.mxu0 0
    %9516 = vmatpush1.bf16.xpose.msra.mxu0 0
    %9517 = vmatprep.subr.bf16.mxu0 0
    %9518 = vmatpush1.bf16.xpose.msra.mxu0 0
    %9519 = vmatprep.mubr.bf16.mxu0 0
    %9520 = vmatmul.mubr.bf16.gmra.mrb[0].mxu0 %v9482
    %v9521 = vpop.f32.mrb[0].mxu0
    %v9522 = vadd.f32 0.0, %v9521
    %v9523 = vpop.f32.mrb[0].mxu0
    %v9524 = vpop.f32.mrb[0].mxu0
    %v9525 = vpop.f32.mrb[0].mxu0
    %9526 = vdwg.mxu0
    %v9528 = vsel %vm1251, %v9331, 0
    %v9531 = vsel %vm1251, %v9339, 0
    %9533 = vmatprep.subr.bf16.mxu0 0
    %9534 = vmatpush1.bf16.xpose.msra.mxu0 %v9531
    %9535 = vmatprep.subr.bf16.mxu0 0
    %9536 = vmatpush1.bf16.xpose.msra.mxu0 0
    %9537 = vmatprep.subr.bf16.mxu0 0
    %9538 = vmatpush1.bf16.xpose.msra.mxu0 0
    %9539 = vmatprep.subr.bf16.mxu0 0
    %9540 = vmatpush1.bf16.xpose.msra.mxu0 0
    %9541 = vmatprep.subr.bf16.mxu0 0
    %9542 = vmatpush1.bf16.xpose.msra.mxu0 0
    %9543 = vmatprep.subr.bf16.mxu0 0
    %9544 = vmatpush1.bf16.xpose.msra.mxu0 0
    %9545 = vmatprep.subr.bf16.mxu0 0
    %9546 = vmatpush1.bf16.xpose.msra.mxu0 0
    %9547 = vmatprep.subr.bf16.mxu0 0
    %9548 = vmatpush1.bf16.xpose.msra.mxu0 0
    %9549 = vmatprep.subr.bf16.mxu0 0
    %9550 = vmatpush1.bf16.xpose.msra.mxu0 0
    %9551 = vmatprep.subr.bf16.mxu0 0
    %9552 = vmatpush1.bf16.xpose.msra.mxu0 0
    %9553 = vmatprep.subr.bf16.mxu0 0
    %9554 = vmatpush1.bf16.xpose.msra.mxu0 0
    %9555 = vmatprep.subr.bf16.mxu0 0
    %9556 = vmatpush1.bf16.xpose.msra.mxu0 0
    %9557 = vmatprep.subr.bf16.mxu0 0
    %9558 = vmatpush1.bf16.xpose.msra.mxu0 0
    %9559 = vmatprep.subr.bf16.mxu0 0
    %9560 = vmatpush1.bf16.xpose.msra.mxu0 0
    %9561 = vmatprep.subr.bf16.mxu0 0
    %9562 = vmatpush1.bf16.xpose.msra.mxu0 0
    %9563 = vmatprep.subr.bf16.mxu0 0
    %9564 = vmatpush1.bf16.xpose.msra.mxu0 0
    %9565 = vmatprep.mubr.bf16.mxu0 0
    %9566 = vmatmul.mubr.bf16.gmra.mrb[0].mxu0 %v9528
    %v9567 = vpop.f32.mrb[0].mxu0
    %v9568 = vadd.f32 0.0, %v9567
    %v9569 = vpop.f32.mrb[0].mxu0
    %v9570 = vpop.f32.mrb[0].mxu0
    %v9571 = vpop.f32.mrb[0].mxu0
    %9572 = vdwg.mxu0
    %v9574 = vsel %vm1251, %v9332, 0
    %v9577 = vsel %vm1251, %v9340, 0
    %9579 = vmatprep.subr.bf16.mxu0 0
    %9580 = vmatpush1.bf16.xpose.msra.mxu0 %v9577
    %9581 = vmatprep.subr.bf16.mxu0 0
    %9582 = vmatpush1.bf16.xpose.msra.mxu0 0
    %9583 = vmatprep.subr.bf16.mxu0 0
    %9584 = vmatpush1.bf16.xpose.msra.mxu0 0
    %9585 = vmatprep.subr.bf16.mxu0 0
    %9586 = vmatpush1.bf16.xpose.msra.mxu0 0
    %9587 = vmatprep.subr.bf16.mxu0 0
    %9588 = vmatpush1.bf16.xpose.msra.mxu0 0
    %9589 = vmatprep.subr.bf16.mxu0 0
    %9590 = vmatpush1.bf16.xpose.msra.mxu0 0
    %9591 = vmatprep.subr.bf16.mxu0 0
    %9592 = vmatpush1.bf16.xpose.msra.mxu0 0
    %9593 = vmatprep.subr.bf16.mxu0 0
    %9594 = vmatpush1.bf16.xpose.msra.mxu0 0
    %9595 = vmatprep.subr.bf16.mxu0 0
    %9596 = vmatpush1.bf16.xpose.msra.mxu0 0
    %9597 = vmatprep.subr.bf16.mxu0 0
    %9598 = vmatpush1.bf16.xpose.msra.mxu0 0
    %9599 = vmatprep.subr.bf16.mxu0 0
    %9600 = vmatpush1.bf16.xpose.msra.mxu0 0
    %9601 = vmatprep.subr.bf16.mxu0 0
    %9602 = vmatpush1.bf16.xpose.msra.mxu0 0
    %9603 = vmatprep.subr.bf16.mxu0 0
    %9604 = vmatpush1.bf16.xpose.msra.mxu0 0
    %9605 = vmatprep.subr.bf16.mxu0 0
    %9606 = vmatpush1.bf16.xpose.msra.mxu0 0
    %9607 = vmatprep.subr.bf16.mxu0 0
    %9608 = vmatpush1.bf16.xpose.msra.mxu0 0
    %9609 = vmatprep.subr.bf16.mxu0 0
    %9610 = vmatpush1.bf16.xpose.msra.mxu0 0
    %9611 = vmatprep.mubr.bf16.mxu0 0
    %9612 = vmatmul.mubr.bf16.gmra.mrb[0].mxu0 %v9574
    %v9613 = vpop.f32.mrb[0].mxu0
    %v9614 = vadd.f32 0.0, %v9613
    %v9615 = vpop.f32.mrb[0].mxu0
    %v9616 = vpop.f32.mrb[0].mxu0
    %v9617 = vpop.f32.mrb[0].mxu0
    %9618 = vdwg.mxu0
    %v9620 = vsel %vm1251, %v9333, 0
    %v9623 = vsel %vm1251, %v9341, 0
    %9625 = vmatprep.subr.bf16.mxu0 0
    %9626 = vmatpush1.bf16.xpose.msra.mxu0 %v9623
    %9627 = vmatprep.subr.bf16.mxu0 0
    %9628 = vmatpush1.bf16.xpose.msra.mxu0 0
    %9629 = vmatprep.subr.bf16.mxu0 0
    %9630 = vmatpush1.bf16.xpose.msra.mxu0 0
    %9631 = vmatprep.subr.bf16.mxu0 0
    %9632 = vmatpush1.bf16.xpose.msra.mxu0 0
    %9633 = vmatprep.subr.bf16.mxu0 0
    %9634 = vmatpush1.bf16.xpose.msra.mxu0 0
    %9635 = vmatprep.subr.bf16.mxu0 0
    %9636 = vmatpush1.bf16.xpose.msra.mxu0 0
    %9637 = vmatprep.subr.bf16.mxu0 0
    %9638 = vmatpush1.bf16.xpose.msra.mxu0 0
    %9639 = vmatprep.subr.bf16.mxu0 0
    %9640 = vmatpush1.bf16.xpose.msra.mxu0 0
    %9641 = vmatprep.subr.bf16.mxu0 0
    %9642 = vmatpush1.bf16.xpose.msra.mxu0 0
    %9643 = vmatprep.subr.bf16.mxu0 0
    %9644 = vmatpush1.bf16.xpose.msra.mxu0 0
    %9645 = vmatprep.subr.bf16.mxu0 0
    %9646 = vmatpush1.bf16.xpose.msra.mxu0 0
    %9647 = vmatprep.subr.bf16.mxu0 0
    %9648 = vmatpush1.bf16.xpose.msra.mxu0 0
    %9649 = vmatprep.subr.bf16.mxu0 0
    %9650 = vmatpush1.bf16.xpose.msra.mxu0 0
    %9651 = vmatprep.subr.bf16.mxu0 0
    %9652 = vmatpush1.bf16.xpose.msra.mxu0 0
    %9653 = vmatprep.subr.bf16.mxu0 0
    %9654 = vmatpush1.bf16.xpose.msra.mxu0 0
    %9655 = vmatprep.subr.bf16.mxu0 0
    %9656 = vmatpush1.bf16.xpose.msra.mxu0 0
    %9657 = vmatprep.mubr.bf16.mxu0 0
    %9658 = vmatmul.mubr.bf16.gmra.mrb[0].mxu0 %v9620
    %v9659 = vpop.f32.mrb[0].mxu0
    %v9660 = vadd.f32 0.0, %v9659
    %v9661 = vpop.f32.mrb[0].mxu0
    %v9662 = vpop.f32.mrb[0].mxu0
    %v9663 = vpop.f32.mrb[0].mxu0
    %9664 = vdwg.mxu0
    %v9666 = vsel %vm1251, %v9334, 0
    %v9669 = vsel %vm1251, %v9342, 0
    %9671 = vmatprep.subr.bf16.mxu0 0
    %9672 = vmatpush1.bf16.xpose.msra.mxu0 %v9669
    %9673 = vmatprep.subr.bf16.mxu0 0
    %9674 = vmatpush1.bf16.xpose.msra.mxu0 0
    %9675 = vmatprep.subr.bf16.mxu0 0
    %9676 = vmatpush1.bf16.xpose.msra.mxu0 0
    %9677 = vmatprep.subr.bf16.mxu0 0
    %9678 = vmatpush1.bf16.xpose.msra.mxu0 0
    %9679 = vmatprep.subr.bf16.mxu0 0
    %9680 = vmatpush1.bf16.xpose.msra.mxu0 0
    %9681 = vmatprep.subr.bf16.mxu0 0
    %9682 = vmatpush1.bf16.xpose.msra.mxu0 0
    %9683 = vmatprep.subr.bf16.mxu0 0
    %9684 = vmatpush1.bf16.xpose.msra.mxu0 0
    %9685 = vmatprep.subr.bf16.mxu0 0
    %9686 = vmatpush1.bf16.xpose.msra.mxu0 0
    %9687 = vmatprep.subr.bf16.mxu0 0
    %9688 = vmatpush1.bf16.xpose.msra.mxu0 0
    %9689 = vmatprep.subr.bf16.mxu0 0
    %9690 = vmatpush1.bf16.xpose.msra.mxu0 0
    %9691 = vmatprep.subr.bf16.mxu0 0
    %9692 = vmatpush1.bf16.xpose.msra.mxu0 0
    %9693 = vmatprep.subr.bf16.mxu0 0
    %9694 = vmatpush1.bf16.xpose.msra.mxu0 0
    %9695 = vmatprep.subr.bf16.mxu0 0
    %9696 = vmatpush1.bf16.xpose.msra.mxu0 0
    %9697 = vmatprep.subr.bf16.mxu0 0
    %9698 = vmatpush1.bf16.xpose.msra.mxu0 0
    %9699 = vmatprep.subr.bf16.mxu0 0
    %9700 = vmatpush1.bf16.xpose.msra.mxu0 0
    %9701 = vmatprep.subr.bf16.mxu0 0
    %9702 = vmatpush1.bf16.xpose.msra.mxu0 0
    %9703 = vmatprep.mubr.bf16.mxu0 0
    %9704 = vmatmul.mubr.bf16.gmra.mrb[0].mxu0 %v9666
    %v9705 = vpop.f32.mrb[0].mxu0
    %v9706 = vadd.f32 0.0, %v9705
    %v9707 = vpop.f32.mrb[0].mxu0
    %v9708 = vpop.f32.mrb[0].mxu0
    %v9709 = vpop.f32.mrb[0].mxu0
    %9710 = vdwg.mxu0
    %v9711 = vmul.f32 %v9384, 0.35355338
    %v9712 = vmul.f32 %v9430, 0.35355338
    %v9713 = vmul.f32 %v9476, 0.35355338
    %v9714 = vmul.f32 %v9522, 0.35355338
    %v9715 = vmul.f32 %v9568, 0.35355338
    %v9716 = vmul.f32 %v9614, 0.35355338
    %v9717 = vmul.f32 %v9660, 0.35355338
    %v9718 = vmul.f32 %v9706, 0.35355338
    %v9719 = vadd.f32 %v9711, %v1639
    %v9720 = vadd.f32 %v9712, %v1643
    %v9721 = vadd.f32 %v9713, %v1647
    %v9722 = vadd.f32 %v9714, %v1651
    %v9723 = vadd.f32 %v9715, %v1655
    %v9724 = vadd.f32 %v9716, %v1659
    %v9725 = vadd.f32 %v9717, %v1663
    %v9726 = vadd.f32 %v9718, %v1667
    %v9727 = vsel %vm1251, %v9719, -inf
    %9728 = vmax.xlane.f32.xlu0 %v9727
    %v9729 = vpop.xlane.xlu0 %9728
    %v9730 = vsel %vm1251, %v9720, -inf
    %9731 = vmax.xlane.f32.xlu0 %v9730
    %v9732 = vpop.xlane.xlu0 %9731
    %v9733 = vsel %vm1251, %v9721, -inf
    %9734 = vmax.xlane.f32.xlu0 %v9733
    %v9735 = vpop.xlane.xlu0 %9734
    %v9736 = vsel %vm1251, %v9722, -inf
    %9737 = vmax.xlane.f32.xlu0 %v9736
    %v9738 = vpop.xlane.xlu0 %9737
    %v9739 = vsel %vm1251, %v9723, -inf
    %9740 = vmax.xlane.f32.xlu0 %v9739
    %v9741 = vpop.xlane.xlu0 %9740
    %v9742 = vsel %vm1251, %v9724, -inf
    %9743 = vmax.xlane.f32.xlu0 %v9742
    %v9744 = vpop.xlane.xlu0 %9743
    %v9745 = vsel %vm1251, %v9725, -inf
    %9746 = vmax.xlane.f32.xlu0 %v9745
    %v9747 = vpop.xlane.xlu0 %9746
    %v9748 = vsel %vm1251, %v9726, -inf
    %9749 = vmax.xlane.f32.xlu0 %v9748
    %v9750 = vpop.xlane.xlu0 %9749
    %v9751 = vsub.f32 %v9719, %v9729
    %v9752 = vsub.f32 %v9720, %v9732
    %v9753 = vsub.f32 %v9721, %v9735
    %v9754 = vsub.f32 %v9722, %v9738
    %v9755 = vsub.f32 %v9723, %v9741
    %v9756 = vsub.f32 %v9724, %v9744
    %v9757 = vsub.f32 %v9725, %v9747
    %v9758 = vsub.f32 %v9726, %v9750
    %v9759 = vmul.f32 %v9751, 1.442695
    %v9760 = vpow.pop %v9759
    %v9761 = vmul.f32 %v9752, 1.442695
    %v9762 = vpow.pop %v9761
    %v9763 = vmul.f32 %v9753, 1.442695
    %v9764 = vpow.pop %v9763
    %v9765 = vmul.f32 %v9754, 1.442695
    %v9766 = vpow.pop %v9765
    %v9767 = vmul.f32 %v9755, 1.442695
    %v9768 = vpow.pop %v9767
    %v9769 = vmul.f32 %v9756, 1.442695
    %v9770 = vpow.pop %v9769
    %v9771 = vmul.f32 %v9757, 1.442695
    %v9772 = vpow.pop %v9771
    %v9773 = vmul.f32 %v9758, 1.442695
    %v9774 = vpow.pop %v9773
    %v9775 = vsel %vm1251, %v9760, 0.0
    %9776 = vadd.xlane.f32.xlu0 %v9775
    %v9777 = vpop.xlane.xlu0 %9776
    %v9778 = vsel %vm1251, %v9762, 0.0
    %9779 = vadd.xlane.f32.xlu0 %v9778
    %v9780 = vpop.xlane.xlu0 %9779
    %v9781 = vsel %vm1251, %v9764, 0.0
    %9782 = vadd.xlane.f32.xlu0 %v9781
    %v9783 = vpop.xlane.xlu0 %9782
    %v9784 = vsel %vm1251, %v9766, 0.0
    %9785 = vadd.xlane.f32.xlu0 %v9784
    %v9786 = vpop.xlane.xlu0 %9785
    %v9787 = vsel %vm1251, %v9768, 0.0
    %9788 = vadd.xlane.f32.xlu0 %v9787
    %v9789 = vpop.xlane.xlu0 %9788
    %v9790 = vsel %vm1251, %v9770, 0.0
    %9791 = vadd.xlane.f32.xlu0 %v9790
    %v9792 = vpop.xlane.xlu0 %9791
    %v9793 = vsel %vm1251, %v9772, 0.0
    %9794 = vadd.xlane.f32.xlu0 %v9793
    %v9795 = vpop.xlane.xlu0 %9794
    %v9796 = vsel %vm1251, %v9774, 0.0
    %9797 = vadd.xlane.f32.xlu0 %v9796
    %v9798 = vpop.xlane.xlu0 %9797
    %v9799 = vrcp.pop %v9777
    %v9800 = vrcp.pop %v9780
    %v9801 = vrcp.pop %v9783
    %v9802 = vrcp.pop %v9786
    %v9803 = vrcp.pop %v9789
    %v9804 = vrcp.pop %v9792
    %v9805 = vrcp.pop %v9795
    %v9806 = vrcp.pop %v9798
    %v9807 = vmul.f32 %v9760, %v9799
    %v9808 = vmul.f32 %v9762, %v9800
    %v9809 = vmul.f32 %v9764, %v9801
    %v9810 = vmul.f32 %v9766, %v9802
    %v9811 = vmul.f32 %v9768, %v9803
    %v9812 = vmul.f32 %v9770, %v9804
    %v9813 = vmul.f32 %v9772, %v9805
    %v9814 = vmul.f32 %v9774, %v9806
    %v9815 = vpack.c.bf16 %v9807, %v9807
    %v9816 = vpack.c.bf16 %v9808, %v9808
    %v9817 = vpack.c.bf16 %v9809, %v9809
    %v9818 = vpack.c.bf16 %v9810, %v9810
    %v9819 = vpack.c.bf16 %v9811, %v9811
    %v9820 = vpack.c.bf16 %v9812, %v9812
    %v9821 = vpack.c.bf16 %v9813, %v9813
    %v9822 = vpack.c.bf16 %v9814, %v9814
    %v9823 = vpack.c.bf16 %v9006, %v9006
    %v9824 = vpack.c.bf16 %v9058, %v9058
    %v9825 = vpack.c.bf16 %v9110, %v9110
    %v9826 = vpack.c.bf16 %v9162, %v9162
    %v9827 = vpack.c.bf16 %v9202, %v9202
    %v9828 = vpack.c.bf16 %v9242, %v9242
    %v9829 = vpack.c.bf16 %v9282, %v9282
    %v9830 = vpack.c.bf16 %v9322, %v9322
    %v9832 = vsel %vm1251, %v9815, 0
    %v9835 = vsel %vm1791, %v9823, 0
    %9837 = vmatprep.subr.bf16.mxu0 0
    %9838 = vmatpush1.bf16.msra.mxu0 %v9835
    %9839 = vmatprep.subr.bf16.mxu0 0
    %9840 = vmatpush1.bf16.msra.mxu0 0
    %9841 = vmatprep.subr.bf16.mxu0 0
    %9842 = vmatpush1.bf16.msra.mxu0 0
    %9843 = vmatprep.subr.bf16.mxu0 0
    %9844 = vmatpush1.bf16.msra.mxu0 0
    %9845 = vmatprep.subr.bf16.mxu0 0
    %9846 = vmatpush1.bf16.msra.mxu0 0
    %9847 = vmatprep.subr.bf16.mxu0 0
    %9848 = vmatpush1.bf16.msra.mxu0 0
    %9849 = vmatprep.subr.bf16.mxu0 0
    %9850 = vmatpush1.bf16.msra.mxu0 0
    %9851 = vmatprep.subr.bf16.mxu0 0
    %9852 = vmatpush1.bf16.msra.mxu0 0
    %9853 = vmatprep.subr.bf16.mxu0 0
    %9854 = vmatpush1.bf16.msra.mxu0 0
    %9855 = vmatprep.subr.bf16.mxu0 0
    %9856 = vmatpush1.bf16.msra.mxu0 0
    %9857 = vmatprep.subr.bf16.mxu0 0
    %9858 = vmatpush1.bf16.msra.mxu0 0
    %9859 = vmatprep.subr.bf16.mxu0 0
    %9860 = vmatpush1.bf16.msra.mxu0 0
    %9861 = vmatprep.subr.bf16.mxu0 0
    %9862 = vmatpush1.bf16.msra.mxu0 0
    %9863 = vmatprep.subr.bf16.mxu0 0
    %9864 = vmatpush1.bf16.msra.mxu0 0
    %9865 = vmatprep.subr.bf16.mxu0 0
    %9866 = vmatpush1.bf16.msra.mxu0 0
    %9867 = vmatprep.subr.bf16.mxu0 0
    %9868 = vmatpush1.bf16.msra.mxu0 0
    %9869 = vmatprep.mubr.bf16.mxu0 0
    %9870 = vmatmul.mubr.bf16.gmra.mrb[0].mxu0 %v9832
    %v9871 = vpop.f32.mrb[0].mxu0
    %v9872 = vadd.f32 0.0, %v9871
    %v9873 = vpop.f32.mrb[0].mxu0
    %v9874 = vpop.f32.mrb[0].mxu0
    %v9875 = vpop.f32.mrb[0].mxu0
    %9876 = vdwg.mxu0
    %v9878 = vsel %vm1251, %v9816, 0
    %v9881 = vsel %vm1791, %v9824, 0
    %9883 = vmatprep.subr.bf16.mxu0 0
    %9884 = vmatpush1.bf16.msra.mxu0 %v9881
    %9885 = vmatprep.subr.bf16.mxu0 0
    %9886 = vmatpush1.bf16.msra.mxu0 0
    %9887 = vmatprep.subr.bf16.mxu0 0
    %9888 = vmatpush1.bf16.msra.mxu0 0
    %9889 = vmatprep.subr.bf16.mxu0 0
    %9890 = vmatpush1.bf16.msra.mxu0 0
    %9891 = vmatprep.subr.bf16.mxu0 0
    %9892 = vmatpush1.bf16.msra.mxu0 0
    %9893 = vmatprep.subr.bf16.mxu0 0
    %9894 = vmatpush1.bf16.msra.mxu0 0
    %9895 = vmatprep.subr.bf16.mxu0 0
    %9896 = vmatpush1.bf16.msra.mxu0 0
    %9897 = vmatprep.subr.bf16.mxu0 0
    %9898 = vmatpush1.bf16.msra.mxu0 0
    %9899 = vmatprep.subr.bf16.mxu0 0
    %9900 = vmatpush1.bf16.msra.mxu0 0
    %9901 = vmatprep.subr.bf16.mxu0 0
    %9902 = vmatpush1.bf16.msra.mxu0 0
    %9903 = vmatprep.subr.bf16.mxu0 0
    %9904 = vmatpush1.bf16.msra.mxu0 0
    %9905 = vmatprep.subr.bf16.mxu0 0
    %9906 = vmatpush1.bf16.msra.mxu0 0
    %9907 = vmatprep.subr.bf16.mxu0 0
    %9908 = vmatpush1.bf16.msra.mxu0 0
    %9909 = vmatprep.subr.bf16.mxu0 0
    %9910 = vmatpush1.bf16.msra.mxu0 0
    %9911 = vmatprep.subr.bf16.mxu0 0
    %9912 = vmatpush1.bf16.msra.mxu0 0
    %9913 = vmatprep.subr.bf16.mxu0 0
    %9914 = vmatpush1.bf16.msra.mxu0 0
    %9915 = vmatprep.mubr.bf16.mxu0 0
    %9916 = vmatmul.mubr.bf16.gmra.mrb[0].mxu0 %v9878
    %v9917 = vpop.f32.mrb[0].mxu0
    %v9918 = vadd.f32 0.0, %v9917
    %v9919 = vpop.f32.mrb[0].mxu0
    %v9920 = vpop.f32.mrb[0].mxu0
    %v9921 = vpop.f32.mrb[0].mxu0
    %9922 = vdwg.mxu0
    %v9924 = vsel %vm1251, %v9817, 0
    %v9927 = vsel %vm1791, %v9825, 0
    %9929 = vmatprep.subr.bf16.mxu0 0
    %9930 = vmatpush1.bf16.msra.mxu0 %v9927
    %9931 = vmatprep.subr.bf16.mxu0 0
    %9932 = vmatpush1.bf16.msra.mxu0 0
    %9933 = vmatprep.subr.bf16.mxu0 0
    %9934 = vmatpush1.bf16.msra.mxu0 0
    %9935 = vmatprep.subr.bf16.mxu0 0
    %9936 = vmatpush1.bf16.msra.mxu0 0
    %9937 = vmatprep.subr.bf16.mxu0 0
    %9938 = vmatpush1.bf16.msra.mxu0 0
    %9939 = vmatprep.subr.bf16.mxu0 0
    %9940 = vmatpush1.bf16.msra.mxu0 0
    %9941 = vmatprep.subr.bf16.mxu0 0
    %9942 = vmatpush1.bf16.msra.mxu0 0
    %9943 = vmatprep.subr.bf16.mxu0 0
    %9944 = vmatpush1.bf16.msra.mxu0 0
    %9945 = vmatprep.subr.bf16.mxu0 0
    %9946 = vmatpush1.bf16.msra.mxu0 0
    %9947 = vmatprep.subr.bf16.mxu0 0
    %9948 = vmatpush1.bf16.msra.mxu0 0
    %9949 = vmatprep.subr.bf16.mxu0 0
    %9950 = vmatpush1.bf16.msra.mxu0 0
    %9951 = vmatprep.subr.bf16.mxu0 0
    %9952 = vmatpush1.bf16.msra.mxu0 0
    %9953 = vmatprep.subr.bf16.mxu0 0
    %9954 = vmatpush1.bf16.msra.mxu0 0
    %9955 = vmatprep.subr.bf16.mxu0 0
    %9956 = vmatpush1.bf16.msra.mxu0 0
    %9957 = vmatprep.subr.bf16.mxu0 0
    %9958 = vmatpush1.bf16.msra.mxu0 0
    %9959 = vmatprep.subr.bf16.mxu0 0
    %9960 = vmatpush1.bf16.msra.mxu0 0
    %9961 = vmatprep.mubr.bf16.mxu0 0
    %9962 = vmatmul.mubr.bf16.gmra.mrb[0].mxu0 %v9924
    %v9963 = vpop.f32.mrb[0].mxu0
    %v9964 = vadd.f32 0.0, %v9963
    %v9965 = vpop.f32.mrb[0].mxu0
    %v9966 = vpop.f32.mrb[0].mxu0
    %v9967 = vpop.f32.mrb[0].mxu0
    %9968 = vdwg.mxu0
    %v9970 = vsel %vm1251, %v9818, 0
    %v9973 = vsel %vm1791, %v9826, 0
    %9975 = vmatprep.subr.bf16.mxu0 0
    %9976 = vmatpush1.bf16.msra.mxu0 %v9973
    %9977 = vmatprep.subr.bf16.mxu0 0
    %9978 = vmatpush1.bf16.msra.mxu0 0
    %9979 = vmatprep.subr.bf16.mxu0 0
    %9980 = vmatpush1.bf16.msra.mxu0 0
    %9981 = vmatprep.subr.bf16.mxu0 0
    %9982 = vmatpush1.bf16.msra.mxu0 0
    %9983 = vmatprep.subr.bf16.mxu0 0
    %9984 = vmatpush1.bf16.msra.mxu0 0
    %9985 = vmatprep.subr.bf16.mxu0 0
    %9986 = vmatpush1.bf16.msra.mxu0 0
    %9987 = vmatprep.subr.bf16.mxu0 0
    %9988 = vmatpush1.bf16.msra.mxu0 0
    %9989 = vmatprep.subr.bf16.mxu0 0
    %9990 = vmatpush1.bf16.msra.mxu0 0
    %9991 = vmatprep.subr.bf16.mxu0 0
    %9992 = vmatpush1.bf16.msra.mxu0 0
    %9993 = vmatprep.subr.bf16.mxu0 0
    %9994 = vmatpush1.bf16.msra.mxu0 0
    %9995 = vmatprep.subr.bf16.mxu0 0
    %9996 = vmatpush1.bf16.msra.mxu0 0
    %9997 = vmatprep.subr.bf16.mxu0 0
    %9998 = vmatpush1.bf16.msra.mxu0 0
    %9999 = vmatprep.subr.bf16.mxu0 0
    %10000 = vmatpush1.bf16.msra.mxu0 0
    %10001 = vmatprep.subr.bf16.mxu0 0
    %10002 = vmatpush1.bf16.msra.mxu0 0
    %10003 = vmatprep.subr.bf16.mxu0 0
    %10004 = vmatpush1.bf16.msra.mxu0 0
    %10005 = vmatprep.subr.bf16.mxu0 0
    %10006 = vmatpush1.bf16.msra.mxu0 0
    %10007 = vmatprep.mubr.bf16.mxu0 0
    %10008 = vmatmul.mubr.bf16.gmra.mrb[0].mxu0 %v9970
    %v10009 = vpop.f32.mrb[0].mxu0
    %v10010 = vadd.f32 0.0, %v10009
    %v10011 = vpop.f32.mrb[0].mxu0
    %v10012 = vpop.f32.mrb[0].mxu0
    %v10013 = vpop.f32.mrb[0].mxu0
    %10014 = vdwg.mxu0
    %v10016 = vsel %vm1251, %v9819, 0
    %v10019 = vsel %vm1791, %v9827, 0
    %10021 = vmatprep.subr.bf16.mxu0 0
    %10022 = vmatpush1.bf16.msra.mxu0 %v10019
    %10023 = vmatprep.subr.bf16.mxu0 0
    %10024 = vmatpush1.bf16.msra.mxu0 0
    %10025 = vmatprep.subr.bf16.mxu0 0
    %10026 = vmatpush1.bf16.msra.mxu0 0
    %10027 = vmatprep.subr.bf16.mxu0 0
    %10028 = vmatpush1.bf16.msra.mxu0 0
    %10029 = vmatprep.subr.bf16.mxu0 0
    %10030 = vmatpush1.bf16.msra.mxu0 0
    %10031 = vmatprep.subr.bf16.mxu0 0
    %10032 = vmatpush1.bf16.msra.mxu0 0
    %10033 = vmatprep.subr.bf16.mxu0 0
    %10034 = vmatpush1.bf16.msra.mxu0 0
    %10035 = vmatprep.subr.bf16.mxu0 0
    %10036 = vmatpush1.bf16.msra.mxu0 0
    %10037 = vmatprep.subr.bf16.mxu0 0
    %10038 = vmatpush1.bf16.msra.mxu0 0
    %10039 = vmatprep.subr.bf16.mxu0 0
    %10040 = vmatpush1.bf16.msra.mxu0 0
    %10041 = vmatprep.subr.bf16.mxu0 0
    %10042 = vmatpush1.bf16.msra.mxu0 0
    %10043 = vmatprep.subr.bf16.mxu0 0
    %10044 = vmatpush1.bf16.msra.mxu0 0
    %10045 = vmatprep.subr.bf16.mxu0 0
    %10046 = vmatpush1.bf16.msra.mxu0 0
    %10047 = vmatprep.subr.bf16.mxu0 0
    %10048 = vmatpush1.bf16.msra.mxu0 0
    %10049 = vmatprep.subr.bf16.mxu0 0
    %10050 = vmatpush1.bf16.msra.mxu0 0
    %10051 = vmatprep.subr.bf16.mxu0 0
    %10052 = vmatpush1.bf16.msra.mxu0 0
    %10053 = vmatprep.mubr.bf16.mxu0 0
    %10054 = vmatmul.mubr.bf16.gmra.mrb[0].mxu0 %v10016
    %v10055 = vpop.f32.mrb[0].mxu0
    %v10056 = vadd.f32 0.0, %v10055
    %v10057 = vpop.f32.mrb[0].mxu0
    %v10058 = vpop.f32.mrb[0].mxu0
    %v10059 = vpop.f32.mrb[0].mxu0
    %10060 = vdwg.mxu0
    %v10062 = vsel %vm1251, %v9820, 0
    %v10065 = vsel %vm1791, %v9828, 0
    %10067 = vmatprep.subr.bf16.mxu0 0
    %10068 = vmatpush1.bf16.msra.mxu0 %v10065
    %10069 = vmatprep.subr.bf16.mxu0 0
    %10070 = vmatpush1.bf16.msra.mxu0 0
    %10071 = vmatprep.subr.bf16.mxu0 0
    %10072 = vmatpush1.bf16.msra.mxu0 0
    %10073 = vmatprep.subr.bf16.mxu0 0
    %10074 = vmatpush1.bf16.msra.mxu0 0
    %10075 = vmatprep.subr.bf16.mxu0 0
    %10076 = vmatpush1.bf16.msra.mxu0 0
    %10077 = vmatprep.subr.bf16.mxu0 0
    %10078 = vmatpush1.bf16.msra.mxu0 0
    %10079 = vmatprep.subr.bf16.mxu0 0
    %10080 = vmatpush1.bf16.msra.mxu0 0
    %10081 = vmatprep.subr.bf16.mxu0 0
    %10082 = vmatpush1.bf16.msra.mxu0 0
    %10083 = vmatprep.subr.bf16.mxu0 0
    %10084 = vmatpush1.bf16.msra.mxu0 0
    %10085 = vmatprep.subr.bf16.mxu0 0
    %10086 = vmatpush1.bf16.msra.mxu0 0
    %10087 = vmatprep.subr.bf16.mxu0 0
    %10088 = vmatpush1.bf16.msra.mxu0 0
    %10089 = vmatprep.subr.bf16.mxu0 0
    %10090 = vmatpush1.bf16.msra.mxu0 0
    %10091 = vmatprep.subr.bf16.mxu0 0
    %10092 = vmatpush1.bf16.msra.mxu0 0
    %10093 = vmatprep.subr.bf16.mxu0 0
    %10094 = vmatpush1.bf16.msra.mxu0 0
    %10095 = vmatprep.subr.bf16.mxu0 0
    %10096 = vmatpush1.bf16.msra.mxu0 0
    %10097 = vmatprep.subr.bf16.mxu0 0
    %10098 = vmatpush1.bf16.msra.mxu0 0
    %10099 = vmatprep.mubr.bf16.mxu0 0
    %10100 = vmatmul.mubr.bf16.gmra.mrb[0].mxu0 %v10062
    %v10101 = vpop.f32.mrb[0].mxu0
    %v10102 = vadd.f32 0.0, %v10101
    %v10103 = vpop.f32.mrb[0].mxu0
    %v10104 = vpop.f32.mrb[0].mxu0
    %v10105 = vpop.f32.mrb[0].mxu0
    %10106 = vdwg.mxu0
    %v10108 = vsel %vm1251, %v9821, 0
    %v10111 = vsel %vm1791, %v9829, 0
    %10113 = vmatprep.subr.bf16.mxu0 0
    %10114 = vmatpush1.bf16.msra.mxu0 %v10111
    %10115 = vmatprep.subr.bf16.mxu0 0
    %10116 = vmatpush1.bf16.msra.mxu0 0
    %10117 = vmatprep.subr.bf16.mxu0 0
    %10118 = vmatpush1.bf16.msra.mxu0 0
    %10119 = vmatprep.subr.bf16.mxu0 0
    %10120 = vmatpush1.bf16.msra.mxu0 0
    %10121 = vmatprep.subr.bf16.mxu0 0
    %10122 = vmatpush1.bf16.msra.mxu0 0
    %10123 = vmatprep.subr.bf16.mxu0 0
    %10124 = vmatpush1.bf16.msra.mxu0 0
    %10125 = vmatprep.subr.bf16.mxu0 0
    %10126 = vmatpush1.bf16.msra.mxu0 0
    %10127 = vmatprep.subr.bf16.mxu0 0
    %10128 = vmatpush1.bf16.msra.mxu0 0
    %10129 = vmatprep.subr.bf16.mxu0 0
    %10130 = vmatpush1.bf16.msra.mxu0 0
    %10131 = vmatprep.subr.bf16.mxu0 0
    %10132 = vmatpush1.bf16.msra.mxu0 0
    %10133 = vmatprep.subr.bf16.mxu0 0
    %10134 = vmatpush1.bf16.msra.mxu0 0
    %10135 = vmatprep.subr.bf16.mxu0 0
    %10136 = vmatpush1.bf16.msra.mxu0 0
    %10137 = vmatprep.subr.bf16.mxu0 0
    %10138 = vmatpush1.bf16.msra.mxu0 0
    %10139 = vmatprep.subr.bf16.mxu0 0
    %10140 = vmatpush1.bf16.msra.mxu0 0
    %10141 = vmatprep.subr.bf16.mxu0 0
    %10142 = vmatpush1.bf16.msra.mxu0 0
    %10143 = vmatprep.subr.bf16.mxu0 0
    %10144 = vmatpush1.bf16.msra.mxu0 0
    %10145 = vmatprep.mubr.bf16.mxu0 0
    %10146 = vmatmul.mubr.bf16.gmra.mrb[0].mxu0 %v10108
    %v10147 = vpop.f32.mrb[0].mxu0
    %v10148 = vadd.f32 0.0, %v10147
    %v10149 = vpop.f32.mrb[0].mxu0
    %v10150 = vpop.f32.mrb[0].mxu0
    %v10151 = vpop.f32.mrb[0].mxu0
    %10152 = vdwg.mxu0
    %v10154 = vsel %vm1251, %v9822, 0
    %v10157 = vsel %vm1791, %v9830, 0
    %10159 = vmatprep.subr.bf16.mxu0 0
    %10160 = vmatpush1.bf16.msra.mxu0 %v10157
    %10161 = vmatprep.subr.bf16.mxu0 0
    %10162 = vmatpush1.bf16.msra.mxu0 0
    %10163 = vmatprep.subr.bf16.mxu0 0
    %10164 = vmatpush1.bf16.msra.mxu0 0
    %10165 = vmatprep.subr.bf16.mxu0 0
    %10166 = vmatpush1.bf16.msra.mxu0 0
    %10167 = vmatprep.subr.bf16.mxu0 0
    %10168 = vmatpush1.bf16.msra.mxu0 0
    %10169 = vmatprep.subr.bf16.mxu0 0
    %10170 = vmatpush1.bf16.msra.mxu0 0
    %10171 = vmatprep.subr.bf16.mxu0 0
    %10172 = vmatpush1.bf16.msra.mxu0 0
    %10173 = vmatprep.subr.bf16.mxu0 0
    %10174 = vmatpush1.bf16.msra.mxu0 0
    %10175 = vmatprep.subr.bf16.mxu0 0
    %10176 = vmatpush1.bf16.msra.mxu0 0
    %10177 = vmatprep.subr.bf16.mxu0 0
    %10178 = vmatpush1.bf16.msra.mxu0 0
    %10179 = vmatprep.subr.bf16.mxu0 0
    %10180 = vmatpush1.bf16.msra.mxu0 0
    %10181 = vmatprep.subr.bf16.mxu0 0
    %10182 = vmatpush1.bf16.msra.mxu0 0
    %10183 = vmatprep.subr.bf16.mxu0 0
    %10184 = vmatpush1.bf16.msra.mxu0 0
    %10185 = vmatprep.subr.bf16.mxu0 0
    %10186 = vmatpush1.bf16.msra.mxu0 0
    %10187 = vmatprep.subr.bf16.mxu0 0
    %10188 = vmatpush1.bf16.msra.mxu0 0
    %10189 = vmatprep.subr.bf16.mxu0 0
    %10190 = vmatpush1.bf16.msra.mxu0 0
    %10191 = vmatprep.mubr.bf16.mxu0 0
    %10192 = vmatmul.mubr.bf16.gmra.mrb[0].mxu0 %v10154
    %v10193 = vpop.f32.mrb[0].mxu0
    %v10194 = vadd.f32 0.0, %v10193
    %v10195 = vpop.f32.mrb[0].mxu0
    %v10196 = vpop.f32.mrb[0].mxu0
    %v10197 = vpop.f32.mrb[0].mxu0
    %10198 = vdwg.mxu0
    %v10199 = vpack.c.bf16 %v9872, %v9872
    %v10200 = vpack.c.bf16 %v9918, %v9918
    %v10201 = vpack.c.bf16 %v9964, %v9964
    %v10202 = vpack.c.bf16 %v10010, %v10010
    %v10203 = vpack.c.bf16 %v10056, %v10056
    %v10204 = vpack.c.bf16 %v10102, %v10102
    %v10205 = vpack.c.bf16 %v10148, %v10148
    %v10206 = vpack.c.bf16 %v10194, %v10194
    %v10208 = vsel %vm1251, %v10199, 0
    %v10211 = vsel %vm1791, %v8185, 0
    %10213 = vmatprep.subr.bf16.mxu0 0
    %10214 = vmatpush1.bf16.msra.mxu0 %v10211
    %10215 = vmatprep.subr.bf16.mxu0 0
    %10216 = vmatpush1.bf16.msra.mxu0 0
    %10217 = vmatprep.subr.bf16.mxu0 0
    %10218 = vmatpush1.bf16.msra.mxu0 0
    %10219 = vmatprep.subr.bf16.mxu0 0
    %10220 = vmatpush1.bf16.msra.mxu0 0
    %10221 = vmatprep.subr.bf16.mxu0 0
    %10222 = vmatpush1.bf16.msra.mxu0 0
    %10223 = vmatprep.subr.bf16.mxu0 0
    %10224 = vmatpush1.bf16.msra.mxu0 0
    %10225 = vmatprep.subr.bf16.mxu0 0
    %10226 = vmatpush1.bf16.msra.mxu0 0
    %10227 = vmatprep.subr.bf16.mxu0 0
    %10228 = vmatpush1.bf16.msra.mxu0 0
    %10229 = vmatprep.subr.bf16.mxu0 0
    %10230 = vmatpush1.bf16.msra.mxu0 0
    %10231 = vmatprep.subr.bf16.mxu0 0
    %10232 = vmatpush1.bf16.msra.mxu0 0
    %10233 = vmatprep.subr.bf16.mxu0 0
    %10234 = vmatpush1.bf16.msra.mxu0 0
    %10235 = vmatprep.subr.bf16.mxu0 0
    %10236 = vmatpush1.bf16.msra.mxu0 0
    %10237 = vmatprep.subr.bf16.mxu0 0
    %10238 = vmatpush1.bf16.msra.mxu0 0
    %10239 = vmatprep.subr.bf16.mxu0 0
    %10240 = vmatpush1.bf16.msra.mxu0 0
    %10241 = vmatprep.subr.bf16.mxu0 0
    %10242 = vmatpush1.bf16.msra.mxu0 0
    %10243 = vmatprep.subr.bf16.mxu0 0
    %10244 = vmatpush1.bf16.msra.mxu0 0
    %10245 = vmatprep.mubr.bf16.mxu0 0
    %10246 = vmatmul.mubr.bf16.gmra.mrb[0].mxu0 %v10208
    %v10247 = vpop.f32.mrb[0].mxu0
    %v10248 = vadd.f32 0.0, %v10247
    %v10249 = vpop.f32.mrb[0].mxu0
    %v10250 = vpop.f32.mrb[0].mxu0
    %v10251 = vpop.f32.mrb[0].mxu0
    %10252 = vdwg.mxu0
    %v10254 = vsel %vm1251, %v10200, 0
    %v10257 = vsel %vm1791, %v8186, 0
    %10259 = vmatprep.subr.bf16.mxu0 0
    %10260 = vmatpush1.bf16.msra.mxu0 %v10257
    %10261 = vmatprep.subr.bf16.mxu0 0
    %10262 = vmatpush1.bf16.msra.mxu0 0
    %10263 = vmatprep.subr.bf16.mxu0 0
    %10264 = vmatpush1.bf16.msra.mxu0 0
    %10265 = vmatprep.subr.bf16.mxu0 0
    %10266 = vmatpush1.bf16.msra.mxu0 0
    %10267 = vmatprep.subr.bf16.mxu0 0
    %10268 = vmatpush1.bf16.msra.mxu0 0
    %10269 = vmatprep.subr.bf16.mxu0 0
    %10270 = vmatpush1.bf16.msra.mxu0 0
    %10271 = vmatprep.subr.bf16.mxu0 0
    %10272 = vmatpush1.bf16.msra.mxu0 0
    %10273 = vmatprep.subr.bf16.mxu0 0
    %10274 = vmatpush1.bf16.msra.mxu0 0
    %10275 = vmatprep.subr.bf16.mxu0 0
    %10276 = vmatpush1.bf16.msra.mxu0 0
    %10277 = vmatprep.subr.bf16.mxu0 0
    %10278 = vmatpush1.bf16.msra.mxu0 0
    %10279 = vmatprep.subr.bf16.mxu0 0
    %10280 = vmatpush1.bf16.msra.mxu0 0
    %10281 = vmatprep.subr.bf16.mxu0 0
    %10282 = vmatpush1.bf16.msra.mxu0 0
    %10283 = vmatprep.subr.bf16.mxu0 0
    %10284 = vmatpush1.bf16.msra.mxu0 0
    %10285 = vmatprep.subr.bf16.mxu0 0
    %10286 = vmatpush1.bf16.msra.mxu0 0
    %10287 = vmatprep.subr.bf16.mxu0 0
    %10288 = vmatpush1.bf16.msra.mxu0 0
    %10289 = vmatprep.subr.bf16.mxu0 0
    %10290 = vmatpush1.bf16.msra.mxu0 0
    %10291 = vmatprep.mubr.bf16.mxu0 0
    %10292 = vmatmul.mubr.bf16.gmra.mrb[0].mxu0 %v10254
    %v10293 = vpop.f32.mrb[0].mxu0
    %v10294 = vadd.f32 0.0, %v10293
    %v10295 = vpop.f32.mrb[0].mxu0
    %v10296 = vpop.f32.mrb[0].mxu0
    %v10297 = vpop.f32.mrb[0].mxu0
    %10298 = vdwg.mxu0
    %v10300 = vsel %vm1251, %v10201, 0
    %v10303 = vsel %vm1791, %v8187, 0
    %10305 = vmatprep.subr.bf16.mxu0 0
    %10306 = vmatpush1.bf16.msra.mxu0 %v10303
    %10307 = vmatprep.subr.bf16.mxu0 0
    %10308 = vmatpush1.bf16.msra.mxu0 0
    %10309 = vmatprep.subr.bf16.mxu0 0
    %10310 = vmatpush1.bf16.msra.mxu0 0
    %10311 = vmatprep.subr.bf16.mxu0 0
    %10312 = vmatpush1.bf16.msra.mxu0 0
    %10313 = vmatprep.subr.bf16.mxu0 0
    %10314 = vmatpush1.bf16.msra.mxu0 0
    %10315 = vmatprep.subr.bf16.mxu0 0
    %10316 = vmatpush1.bf16.msra.mxu0 0
    %10317 = vmatprep.subr.bf16.mxu0 0
    %10318 = vmatpush1.bf16.msra.mxu0 0
    %10319 = vmatprep.subr.bf16.mxu0 0
    %10320 = vmatpush1.bf16.msra.mxu0 0
    %10321 = vmatprep.subr.bf16.mxu0 0
    %10322 = vmatpush1.bf16.msra.mxu0 0
    %10323 = vmatprep.subr.bf16.mxu0 0
    %10324 = vmatpush1.bf16.msra.mxu0 0
    %10325 = vmatprep.subr.bf16.mxu0 0
    %10326 = vmatpush1.bf16.msra.mxu0 0
    %10327 = vmatprep.subr.bf16.mxu0 0
    %10328 = vmatpush1.bf16.msra.mxu0 0
    %10329 = vmatprep.subr.bf16.mxu0 0
    %10330 = vmatpush1.bf16.msra.mxu0 0
    %10331 = vmatprep.subr.bf16.mxu0 0
    %10332 = vmatpush1.bf16.msra.mxu0 0
    %10333 = vmatprep.subr.bf16.mxu0 0
    %10334 = vmatpush1.bf16.msra.mxu0 0
    %10335 = vmatprep.subr.bf16.mxu0 0
    %10336 = vmatpush1.bf16.msra.mxu0 0
    %10337 = vmatprep.mubr.bf16.mxu0 0
    %10338 = vmatmul.mubr.bf16.gmra.mrb[0].mxu0 %v10300
    %v10339 = vpop.f32.mrb[0].mxu0
    %v10340 = vadd.f32 0.0, %v10339
    %v10341 = vpop.f32.mrb[0].mxu0
    %v10342 = vpop.f32.mrb[0].mxu0
    %v10343 = vpop.f32.mrb[0].mxu0
    %10344 = vdwg.mxu0
    %v10346 = vsel %vm1251, %v10202, 0
    %v10349 = vsel %vm1791, %v8188, 0
    %10351 = vmatprep.subr.bf16.mxu0 0
    %10352 = vmatpush1.bf16.msra.mxu0 %v10349
    %10353 = vmatprep.subr.bf16.mxu0 0
    %10354 = vmatpush1.bf16.msra.mxu0 0
    %10355 = vmatprep.subr.bf16.mxu0 0
    %10356 = vmatpush1.bf16.msra.mxu0 0
    %10357 = vmatprep.subr.bf16.mxu0 0
    %10358 = vmatpush1.bf16.msra.mxu0 0
    %10359 = vmatprep.subr.bf16.mxu0 0
    %10360 = vmatpush1.bf16.msra.mxu0 0
    %10361 = vmatprep.subr.bf16.mxu0 0
    %10362 = vmatpush1.bf16.msra.mxu0 0
    %10363 = vmatprep.subr.bf16.mxu0 0
    %10364 = vmatpush1.bf16.msra.mxu0 0
    %10365 = vmatprep.subr.bf16.mxu0 0
    %10366 = vmatpush1.bf16.msra.mxu0 0
    %10367 = vmatprep.subr.bf16.mxu0 0
    %10368 = vmatpush1.bf16.msra.mxu0 0
    %10369 = vmatprep.subr.bf16.mxu0 0
    %10370 = vmatpush1.bf16.msra.mxu0 0
    %10371 = vmatprep.subr.bf16.mxu0 0
    %10372 = vmatpush1.bf16.msra.mxu0 0
    %10373 = vmatprep.subr.bf16.mxu0 0
    %10374 = vmatpush1.bf16.msra.mxu0 0
    %10375 = vmatprep.subr.bf16.mxu0 0
    %10376 = vmatpush1.bf16.msra.mxu0 0
    %10377 = vmatprep.subr.bf16.mxu0 0
    %10378 = vmatpush1.bf16.msra.mxu0 0
    %10379 = vmatprep.subr.bf16.mxu0 0
    %10380 = vmatpush1.bf16.msra.mxu0 0
    %10381 = vmatprep.subr.bf16.mxu0 0
    %10382 = vmatpush1.bf16.msra.mxu0 0
    %10383 = vmatprep.mubr.bf16.mxu0 0
    %10384 = vmatmul.mubr.bf16.gmra.mrb[0].mxu0 %v10346
    %v10385 = vpop.f32.mrb[0].mxu0
    %v10386 = vadd.f32 0.0, %v10385
    %v10387 = vpop.f32.mrb[0].mxu0
    %v10388 = vpop.f32.mrb[0].mxu0
    %v10389 = vpop.f32.mrb[0].mxu0
    %10390 = vdwg.mxu0
    %v10392 = vsel %vm1251, %v10203, 0
    %10394 = vmatprep.subr.bf16.mxu0 0
    %10395 = vmatpush1.bf16.msra.mxu0 %v10211
    %10396 = vmatprep.subr.bf16.mxu0 0
    %10397 = vmatpush1.bf16.msra.mxu0 0
    %10398 = vmatprep.subr.bf16.mxu0 0
    %10399 = vmatpush1.bf16.msra.mxu0 0
    %10400 = vmatprep.subr.bf16.mxu0 0
    %10401 = vmatpush1.bf16.msra.mxu0 0
    %10402 = vmatprep.subr.bf16.mxu0 0
    %10403 = vmatpush1.bf16.msra.mxu0 0
    %10404 = vmatprep.subr.bf16.mxu0 0
    %10405 = vmatpush1.bf16.msra.mxu0 0
    %10406 = vmatprep.subr.bf16.mxu0 0
    %10407 = vmatpush1.bf16.msra.mxu0 0
    %10408 = vmatprep.subr.bf16.mxu0 0
    %10409 = vmatpush1.bf16.msra.mxu0 0
    %10410 = vmatprep.subr.bf16.mxu0 0
    %10411 = vmatpush1.bf16.msra.mxu0 0
    %10412 = vmatprep.subr.bf16.mxu0 0
    %10413 = vmatpush1.bf16.msra.mxu0 0
    %10414 = vmatprep.subr.bf16.mxu0 0
    %10415 = vmatpush1.bf16.msra.mxu0 0
    %10416 = vmatprep.subr.bf16.mxu0 0
    %10417 = vmatpush1.bf16.msra.mxu0 0
    %10418 = vmatprep.subr.bf16.mxu0 0
    %10419 = vmatpush1.bf16.msra.mxu0 0
    %10420 = vmatprep.subr.bf16.mxu0 0
    %10421 = vmatpush1.bf16.msra.mxu0 0
    %10422 = vmatprep.subr.bf16.mxu0 0
    %10423 = vmatpush1.bf16.msra.mxu0 0
    %10424 = vmatprep.subr.bf16.mxu0 0
    %10425 = vmatpush1.bf16.msra.mxu0 0
    %10426 = vmatprep.mubr.bf16.mxu0 0
    %10427 = vmatmul.mubr.bf16.gmra.mrb[0].mxu0 %v10392
    %v10428 = vpop.f32.mrb[0].mxu0
    %v10429 = vadd.f32 0.0, %v10428
    %v10430 = vpop.f32.mrb[0].mxu0
    %v10431 = vpop.f32.mrb[0].mxu0
    %v10432 = vpop.f32.mrb[0].mxu0
    %10433 = vdwg.mxu0
    %v10435 = vsel %vm1251, %v10204, 0
    %10437 = vmatprep.subr.bf16.mxu0 0
    %10438 = vmatpush1.bf16.msra.mxu0 %v10257
    %10439 = vmatprep.subr.bf16.mxu0 0
    %10440 = vmatpush1.bf16.msra.mxu0 0
    %10441 = vmatprep.subr.bf16.mxu0 0
    %10442 = vmatpush1.bf16.msra.mxu0 0
    %10443 = vmatprep.subr.bf16.mxu0 0
    %10444 = vmatpush1.bf16.msra.mxu0 0
    %10445 = vmatprep.subr.bf16.mxu0 0
    %10446 = vmatpush1.bf16.msra.mxu0 0
    %10447 = vmatprep.subr.bf16.mxu0 0
    %10448 = vmatpush1.bf16.msra.mxu0 0
    %10449 = vmatprep.subr.bf16.mxu0 0
    %10450 = vmatpush1.bf16.msra.mxu0 0
    %10451 = vmatprep.subr.bf16.mxu0 0
    %10452 = vmatpush1.bf16.msra.mxu0 0
    %10453 = vmatprep.subr.bf16.mxu0 0
    %10454 = vmatpush1.bf16.msra.mxu0 0
    %10455 = vmatprep.subr.bf16.mxu0 0
    %10456 = vmatpush1.bf16.msra.mxu0 0
    %10457 = vmatprep.subr.bf16.mxu0 0
    %10458 = vmatpush1.bf16.msra.mxu0 0
    %10459 = vmatprep.subr.bf16.mxu0 0
    %10460 = vmatpush1.bf16.msra.mxu0 0
    %10461 = vmatprep.subr.bf16.mxu0 0
    %10462 = vmatpush1.bf16.msra.mxu0 0
    %10463 = vmatprep.subr.bf16.mxu0 0
    %10464 = vmatpush1.bf16.msra.mxu0 0
    %10465 = vmatprep.subr.bf16.mxu0 0
    %10466 = vmatpush1.bf16.msra.mxu0 0
    %10467 = vmatprep.subr.bf16.mxu0 0
    %10468 = vmatpush1.bf16.msra.mxu0 0
    %10469 = vmatprep.mubr.bf16.mxu0 0
    %10470 = vmatmul.mubr.bf16.gmra.mrb[0].mxu0 %v10435
    %v10471 = vpop.f32.mrb[0].mxu0
    %v10472 = vadd.f32 0.0, %v10471
    %v10473 = vpop.f32.mrb[0].mxu0
    %v10474 = vpop.f32.mrb[0].mxu0
    %v10475 = vpop.f32.mrb[0].mxu0
    %10476 = vdwg.mxu0
    %v10478 = vsel %vm1251, %v10205, 0
    %10480 = vmatprep.subr.bf16.mxu0 0
    %10481 = vmatpush1.bf16.msra.mxu0 %v10303
    %10482 = vmatprep.subr.bf16.mxu0 0
    %10483 = vmatpush1.bf16.msra.mxu0 0
    %10484 = vmatprep.subr.bf16.mxu0 0
    %10485 = vmatpush1.bf16.msra.mxu0 0
    %10486 = vmatprep.subr.bf16.mxu0 0
    %10487 = vmatpush1.bf16.msra.mxu0 0
    %10488 = vmatprep.subr.bf16.mxu0 0
    %10489 = vmatpush1.bf16.msra.mxu0 0
    %10490 = vmatprep.subr.bf16.mxu0 0
    %10491 = vmatpush1.bf16.msra.mxu0 0
    %10492 = vmatprep.subr.bf16.mxu0 0
    %10493 = vmatpush1.bf16.msra.mxu0 0
    %10494 = vmatprep.subr.bf16.mxu0 0
    %10495 = vmatpush1.bf16.msra.mxu0 0
    %10496 = vmatprep.subr.bf16.mxu0 0
    %10497 = vmatpush1.bf16.msra.mxu0 0
    %10498 = vmatprep.subr.bf16.mxu0 0
    %10499 = vmatpush1.bf16.msra.mxu0 0
    %10500 = vmatprep.subr.bf16.mxu0 0
    %10501 = vmatpush1.bf16.msra.mxu0 0
    %10502 = vmatprep.subr.bf16.mxu0 0
    %10503 = vmatpush1.bf16.msra.mxu0 0
    %10504 = vmatprep.subr.bf16.mxu0 0
    %10505 = vmatpush1.bf16.msra.mxu0 0
    %10506 = vmatprep.subr.bf16.mxu0 0
    %10507 = vmatpush1.bf16.msra.mxu0 0
    %10508 = vmatprep.subr.bf16.mxu0 0
    %10509 = vmatpush1.bf16.msra.mxu0 0
    %10510 = vmatprep.subr.bf16.mxu0 0
    %10511 = vmatpush1.bf16.msra.mxu0 0
    %10512 = vmatprep.mubr.bf16.mxu0 0
    %10513 = vmatmul.mubr.bf16.gmra.mrb[0].mxu0 %v10478
    %v10514 = vpop.f32.mrb[0].mxu0
    %v10515 = vadd.f32 0.0, %v10514
    %v10516 = vpop.f32.mrb[0].mxu0
    %v10517 = vpop.f32.mrb[0].mxu0
    %v10518 = vpop.f32.mrb[0].mxu0
    %10519 = vdwg.mxu0
    %v10521 = vsel %vm1251, %v10206, 0
    %10523 = vmatprep.subr.bf16.mxu0 0
    %10524 = vmatpush1.bf16.msra.mxu0 %v10349
    %10525 = vmatprep.subr.bf16.mxu0 0
    %10526 = vmatpush1.bf16.msra.mxu0 0
    %10527 = vmatprep.subr.bf16.mxu0 0
    %10528 = vmatpush1.bf16.msra.mxu0 0
    %10529 = vmatprep.subr.bf16.mxu0 0
    %10530 = vmatpush1.bf16.msra.mxu0 0
    %10531 = vmatprep.subr.bf16.mxu0 0
    %10532 = vmatpush1.bf16.msra.mxu0 0
    %10533 = vmatprep.subr.bf16.mxu0 0
    %10534 = vmatpush1.bf16.msra.mxu0 0
    %10535 = vmatprep.subr.bf16.mxu0 0
    %10536 = vmatpush1.bf16.msra.mxu0 0
    %10537 = vmatprep.subr.bf16.mxu0 0
    %10538 = vmatpush1.bf16.msra.mxu0 0
    %10539 = vmatprep.subr.bf16.mxu0 0
    %10540 = vmatpush1.bf16.msra.mxu0 0
    %10541 = vmatprep.subr.bf16.mxu0 0
    %10542 = vmatpush1.bf16.msra.mxu0 0
    %10543 = vmatprep.subr.bf16.mxu0 0
    %10544 = vmatpush1.bf16.msra.mxu0 0
    %10545 = vmatprep.subr.bf16.mxu0 0
    %10546 = vmatpush1.bf16.msra.mxu0 0
    %10547 = vmatprep.subr.bf16.mxu0 0
    %10548 = vmatpush1.bf16.msra.mxu0 0
    %10549 = vmatprep.subr.bf16.mxu0 0
    %10550 = vmatpush1.bf16.msra.mxu0 0
    %10551 = vmatprep.subr.bf16.mxu0 0
    %10552 = vmatpush1.bf16.msra.mxu0 0
    %10553 = vmatprep.subr.bf16.mxu0 0
    %10554 = vmatpush1.bf16.msra.mxu0 0
    %10555 = vmatprep.mubr.bf16.mxu0 0
    %10556 = vmatmul.mubr.bf16.gmra.mrb[0].mxu0 %v10521
    %v10557 = vpop.f32.mrb[0].mxu0
    %v10558 = vadd.f32 0.0, %v10557
    %v10559 = vpop.f32.mrb[0].mxu0
    %v10560 = vpop.f32.mrb[0].mxu0
    %v10561 = vpop.f32.mrb[0].mxu0
    %10562 = vdwg.mxu0
    %v10563 = vadd.f32 %v10248, %v10294
    %v10564 = vadd.f32 %v10429, %v10472
    %v10565 = vadd.f32 %v10563, %v10340
    %v10566 = vadd.f32 %v10564, %v10515
    %v10567 = vadd.f32 %v10565, %v10386
    %v10568 = vadd.f32 %v10566, %v10558
    %v10569 = vadd.f32 %v8131, %v10567
    %v10570 = vadd.f32 %v8132, %v10568
    %v10571 = vsel %vm136, %v10569, 0.0
    %10572 = vadd.xlane.f32.xlu0 %v10571
    %v10573 = vpop.xlane.xlu0 %10572
    %v10574 = vsel %vm136, %v10570, 0.0
    %10575 = vadd.xlane.f32.xlu0 %v10574
    %v10576 = vpop.xlane.xlu0 %10575
    %v10577 = vmul.f32 %v10573, %v2535
    %v10578 = vmul.f32 %v10576, %v2535
    %v10579 = vsub.f32 %v10569, %v10577
    %v10580 = vsub.f32 %v10570, %v10578
    %v10581 = vmul.f32 %v10579, %v10579
    %v10582 = vmul.f32 %v10580, %v10580
    %v10583 = vsel %vm136, %v10581, 0.0
    %10584 = vadd.xlane.f32.xlu0 %v10583
    %v10585 = vpop.xlane.xlu0 %10584
    %v10586 = vsel %vm136, %v10582, 0.0
    %10587 = vadd.xlane.f32.xlu0 %v10586
    %v10588 = vpop.xlane.xlu0 %10587
    %v10589 = vmul.f32 %v10585, %v2535
    %v10590 = vmul.f32 %v10588, %v2535
    %v10591 = vadd.f32 %v10589, 1e-05
    %v10592 = vadd.f32 %v10590, 1e-05
    %v10593 = vrsqrt.pop %v10591
    %v10594 = vrsqrt.pop %v10592
    %v10595 = vmul.f32 %v10579, %v10593
    %v10596 = vmul.f32 %v10580, %v10594
    %v10598 = vlaneseq
    %v10599 = vshrl.u32 %v10598, 7
    %v10600 = vsub.s32 0, %v10599
    %v10601 = vrot.slane %v8208, %v10600
    %v10603 = vmul.f32 %v10595, %v10601
    %v10604 = vmul.f32 %v10596, %v10601
    %v10606 = vlaneseq
    %v10607 = vshrl.u32 %v10606, 7
    %v10608 = vsub.s32 0, %v10607
    %v10609 = vrot.slane %v8210, %v10608
    %v10611 = vadd.f32 %v10603, %v10609
    %v10612 = vadd.f32 %v10604, %v10609
    %v10613 = vpack.c.bf16 %v10612, %v10611
    %v10615 = vlaneseq
    %v10616 = vshrl.u32 %v10615, 7
    %v10617 = vsub.s32 0, %v10616
    %v10618 = vrot.slane %v8195, %v10617
    %v10624 = vunpack.c.l.b16 %v8190
    %v10625 = vunpack.c.l.b16 %v8191
    %v10626 = vunpack.c.l.b16 %v8192
    %v10627 = vunpack.c.l.b16 %v8193
    %v10628 = vpack.c.b16 %v10625, %v10624
    %v10629 = vpack.c.b16 %v10627, %v10626
    %v10633 = vsel %vm136, %v10613, 0
    %10635 = vmatprep.subr.bf16.mxu0 0
    %10636 = vmatpush1.bf16.msra.mxu0 %v10628
    %10637 = vmatprep.subr.bf16.mxu0 0
    %10638 = vmatpush1.bf16.msra.mxu0 %v10629
    %10639 = vmatprep.subr.bf16.mxu0 0
    %10640 = vmatpush1.bf16.msra.mxu0 0
    %10641 = vmatprep.subr.bf16.mxu0 0
    %10642 = vmatpush1.bf16.msra.mxu0 0
    %10643 = vmatprep.subr.bf16.mxu0 0
    %10644 = vmatpush1.bf16.msra.mxu0 0
    %10645 = vmatprep.subr.bf16.mxu0 0
    %10646 = vmatpush1.bf16.msra.mxu0 0
    %10647 = vmatprep.subr.bf16.mxu0 0
    %10648 = vmatpush1.bf16.msra.mxu0 0
    %10649 = vmatprep.subr.bf16.mxu0 0
    %10650 = vmatpush1.bf16.msra.mxu0 0
    %10651 = vmatprep.subr.bf16.mxu0 0
    %10652 = vmatpush1.bf16.msra.mxu0 0
    %10653 = vmatprep.subr.bf16.mxu0 0
    %10654 = vmatpush1.bf16.msra.mxu0 0
    %10655 = vmatprep.subr.bf16.mxu0 0
    %10656 = vmatpush1.bf16.msra.mxu0 0
    %10657 = vmatprep.subr.bf16.mxu0 0
    %10658 = vmatpush1.bf16.msra.mxu0 0
    %10659 = vmatprep.subr.bf16.mxu0 0
    %10660 = vmatpush1.bf16.msra.mxu0 0
    %10661 = vmatprep.subr.bf16.mxu0 0
    %10662 = vmatpush1.bf16.msra.mxu0 0
    %10663 = vmatprep.subr.bf16.mxu0 0
    %10664 = vmatpush1.bf16.msra.mxu0 0
    %10665 = vmatprep.subr.bf16.mxu0 0
    %10666 = vmatpush1.bf16.msra.mxu0 0
    %10667 = vmatprep.mubr.bf16.mxu0 0
    %10668 = vmatmul.mubr.bf16.gmra.mrb[0].mxu0 %v10633
    %v10669 = vpop.f32.mrb[0].mxu0
    %v10670 = vadd.f32 %v10618, %v10669
    %v10671 = vpop.f32.mrb[0].mxu0
    %v10672 = vpop.f32.mrb[0].mxu0
    %v10673 = vadd.f32 %v10618, %v10672
    %v10674 = vpop.f32.mrb[0].mxu0
    %10675 = vdwg.mxu0
    %v10676 = vmul.f32 %v10670, 0.5
    %v10677 = vmul.f32 %v10673, 0.5
    %v10678 = vmul.f32 %v10670, 0.044715
    %v10679 = vmul.f32 %v10673, 0.044715
    %v10680 = vmul.f32 %v10678, %v10670
    %v10681 = vmul.f32 %v10679, %v10673
    %v10682 = vmul.f32 %v10680, %v10670
    %v10683 = vmul.f32 %v10681, %v10673
    %v10684 = vadd.f32 %v10670, %v10682
    %v10685 = vadd.f32 %v10673, %v10683
    %v10686 = vmul.f32 %v10684, 0.7978846
    %v10687 = vmul.f32 %v10685, 0.7978846
    %v10688 = vtanh.pop %v10686
    %v10689 = vtanh.pop %v10687
    %v10690 = vadd.f32 %v10688, 1.0
    %v10691 = vadd.f32 %v10689, 1.0
    %v10692 = vmul.f32 %v10676, %v10690
    %v10693 = vmul.f32 %v10677, %v10691
    %v10694 = vpack.c.bf16 %v10693, %v10692
    %v10696 = vlaneseq
    %v10697 = vshrl.u32 %v10696, 7
    %v10698 = vsub.s32 0, %v10697
    %v10699 = vrot.slane %v8206, %v10698
    %v10709 = vunpack.c.l.b16 %v8197
    %v10710 = vunpack.c.l.b16 %v8198
    %v10711 = vunpack.c.l.b16 %v8199
    %v10712 = vunpack.c.l.b16 %v8200
    %v10713 = vunpack.c.l.b16 %v8201
    %v10714 = vunpack.c.l.b16 %v8202
    %v10715 = vunpack.c.l.b16 %v8203
    %v10716 = vunpack.c.l.b16 %v8204
    %v10717 = vpack.c.b16 %v10710, %v10709
    %v10718 = vpack.c.b16 %v10712, %v10711
    %v10719 = vpack.c.b16 %v10714, %v10713
    %v10720 = vpack.c.b16 %v10716, %v10715
    %v10726 = vsel %vm2684, %v10694, 0
    %10728 = vmatprep.subr.bf16.mxu0 0
    %10729 = vmatpush1.bf16.msra.mxu0 %v10717
    %10730 = vmatprep.subr.bf16.mxu0 0
    %10731 = vmatpush1.bf16.msra.mxu0 %v10718
    %10732 = vmatprep.subr.bf16.mxu0 0
    %10733 = vmatpush1.bf16.msra.mxu0 %v10719
    %10734 = vmatprep.subr.bf16.mxu0 0
    %10735 = vmatpush1.bf16.msra.mxu0 %v10720
    %10736 = vmatprep.subr.bf16.mxu0 0
    %10737 = vmatpush1.bf16.msra.mxu0 0
    %10738 = vmatprep.subr.bf16.mxu0 0
    %10739 = vmatpush1.bf16.msra.mxu0 0
    %10740 = vmatprep.subr.bf16.mxu0 0
    %10741 = vmatpush1.bf16.msra.mxu0 0
    %10742 = vmatprep.subr.bf16.mxu0 0
    %10743 = vmatpush1.bf16.msra.mxu0 0
    %10744 = vmatprep.subr.bf16.mxu0 0
    %10745 = vmatpush1.bf16.msra.mxu0 0
    %10746 = vmatprep.subr.bf16.mxu0 0
    %10747 = vmatpush1.bf16.msra.mxu0 0
    %10748 = vmatprep.subr.bf16.mxu0 0
    %10749 = vmatpush1.bf16.msra.mxu0 0
    %10750 = vmatprep.subr.bf16.mxu0 0
    %10751 = vmatpush1.bf16.msra.mxu0 0
    %10752 = vmatprep.subr.bf16.mxu0 0
    %10753 = vmatpush1.bf16.msra.mxu0 0
    %10754 = vmatprep.subr.bf16.mxu0 0
    %10755 = vmatpush1.bf16.msra.mxu0 0
    %10756 = vmatprep.subr.bf16.mxu0 0
    %10757 = vmatpush1.bf16.msra.mxu0 0
    %10758 = vmatprep.subr.bf16.mxu0 0
    %10759 = vmatpush1.bf16.msra.mxu0 0
    %10760 = vmatprep.mubr.bf16.mxu0 0
    %10761 = vmatmul.mubr.bf16.gmra.mrb[0].mxu0 %v10726
    %v10762 = vpop.f32.mrb[0].mxu0
    %v10763 = vadd.f32 %v10699, %v10762
    %v10764 = vpop.f32.mrb[0].mxu0
    %v10765 = vpop.f32.mrb[0].mxu0
    %v10766 = vadd.f32 %v10699, %v10765
    %v10767 = vpop.f32.mrb[0].mxu0
    %10768 = vdwg.mxu0
    %v10769 = vadd.f32 %v10611, %v10763
    %v10770 = vadd.f32 %v10612, %v10766
    %v10771 = vsel %vm136, %v10769, 0.0
    %10772 = vadd.xlane.f32.xlu0 %v10771
    %v10773 = vpop.xlane.xlu0 %10772
    %v10774 = vsel %vm136, %v10770, 0.0
    %10775 = vadd.xlane.f32.xlu0 %v10774
    %v10776 = vpop.xlane.xlu0 %10775
    %v10777 = vmul.f32 %v10773, %v2535
    %v10778 = vmul.f32 %v10776, %v2535
    %v10779 = vsub.f32 %v10769, %v10777
    %v10780 = vsub.f32 %v10770, %v10778
    %v10781 = vmul.f32 %v10779, %v10779
    %v10782 = vmul.f32 %v10780, %v10780
    %v10783 = vsel %vm136, %v10781, 0.0
    %10784 = vadd.xlane.f32.xlu0 %v10783
    %v10785 = vpop.xlane.xlu0 %10784
    %v10786 = vsel %vm136, %v10782, 0.0
    %10787 = vadd.xlane.f32.xlu0 %v10786
    %v10788 = vpop.xlane.xlu0 %10787
    %v10789 = vmul.f32 %v10785, %v2535
    %v10790 = vmul.f32 %v10788, %v2535
    %v10791 = vadd.f32 %v10789, 1e-05
    %v10792 = vadd.f32 %v10790, 1e-05
    %v10793 = vrsqrt.pop %v10791
    %v10794 = vrsqrt.pop %v10792
    %v10795 = vmul.f32 %v10779, %v10793
    %v10796 = vmul.f32 %v10780, %v10794
    %v10798 = vlaneseq
    %v10799 = vshrl.u32 %v10798, 7
    %v10800 = vsub.s32 0, %v10799
    %v10801 = vrot.slane %v8212, %v10800
    %v10803 = vmul.f32 %v10795, %v10801
    %v10804 = vmul.f32 %v10796, %v10801
    %v10806 = vlaneseq
    %v10807 = vshrl.u32 %v10806, 7
    %v10808 = vsub.s32 0, %v10807
    %v10809 = vrot.slane %v8214, %v10808
    %v10811 = vadd.f32 %v10803, %v10809
    %v10812 = vadd.f32 %v10804, %v10809
    %v10815 = vrot.slane %v10812, 7
    %vm10816 = vcmask 1041409
    %v10817 = vsel %vm10816, %v10815, %v10811
    %v10821 = vrot.slane %v8132, 7
    %v10822 = vsel %vm10816, %v10821, %v8131
    %10823 = vrot.lane.b32.xlu0 %v10822, 32
    %v10824 = vpop.permute.xlu0 %10823
    %v10828 = vrot.slane %v5452, 7
    %v10829 = vsel %vm10816, %v10828, %v5451
    %10830 = vrot.lane.b32.xlu0 %v10829, 64
    %v10831 = vpop.permute.xlu0 %10830
    %v10835 = vrot.slane %v2772, 7
    %v10836 = vsel %vm10816, %v10835, %v2771
    %10837 = vrot.lane.b32.xlu0 %v10836, 96
    %v10838 = vpop.permute.xlu0 %10837
    %v10840 = vsel %vm136, %v10817, %v10824
    %v10841 = vsel %vm2684, %v10840, %v10831
    %vm10842 = vcmask 785408
    %v10843 = vsel %vm10842, %v10841, %v10838
    %v10844 = vpack.c.bf16 %v10843, %v10843
    %v10845 = vld [vmem:[%s9] sm:$0xf]
    %v10846 = vld [vmem:[%s9 + $0x4] sm:$0xf]
    %v10847 = vld [vmem:[%s9 + $0x8] sm:$0xf]
    %v10848 = vld [vmem:[%s9 + $0xc] sm:$0xf]
    %v10849 = vld [vmem:[%s9 + $0x10] sm:$0xf]
    %v10850 = vld [vmem:[%s9 + $0x14] sm:$0xf]
    %v10851 = vld [vmem:[%s9 + $0x18] sm:$0xf]
    %v10852 = vld [vmem:[%s9 + $0x1c] sm:$0xf]
    %v10853 = vld [vmem:[%s9 + $0x20] sm:$0xf]
    %v10854 = vld [vmem:[%s9 + $0x24] sm:$0xf]
    %v10855 = vld [vmem:[%s9 + $0x28] sm:$0xf]
    %v10856 = vld [vmem:[%s9 + $0x2c] sm:$0xf]
    %v10857 = vld [vmem:[%s9 + $0x30] sm:$0xf]
    %v10858 = vld [vmem:[%s9 + $0x34] sm:$0xf]
    %v10859 = vld [vmem:[%s9 + $0x38] sm:$0xf]
    %v10860 = vld [vmem:[%s9 + $0x3c] sm:$0xf]
    %v10877 = vunpack.c.l.b16 %v10845
    %v10878 = vunpack.c.l.b16 %v10846
    %v10879 = vunpack.c.l.b16 %v10847
    %v10880 = vunpack.c.l.b16 %v10848
    %v10881 = vunpack.c.l.b16 %v10849
    %v10882 = vunpack.c.l.b16 %v10850
    %v10883 = vunpack.c.l.b16 %v10851
    %v10884 = vunpack.c.l.b16 %v10852
    %v10885 = vunpack.c.l.b16 %v10853
    %v10886 = vunpack.c.l.b16 %v10854
    %v10887 = vunpack.c.l.b16 %v10855
    %v10888 = vunpack.c.l.b16 %v10856
    %v10889 = vunpack.c.l.b16 %v10857
    %v10890 = vunpack.c.l.b16 %v10858
    %v10891 = vunpack.c.l.b16 %v10859
    %v10892 = vunpack.c.l.b16 %v10860
    %v10893 = vpack.c.b16 %v10878, %v10877
    %v10894 = vpack.c.b16 %v10880, %v10879
    %v10895 = vpack.c.b16 %v10882, %v10881
    %v10896 = vpack.c.b16 %v10884, %v10883
    %v10897 = vpack.c.b16 %v10886, %v10885
    %v10898 = vpack.c.b16 %v10888, %v10887
    %v10899 = vpack.c.b16 %v10890, %v10889
    %v10900 = vpack.c.b16 %v10892, %v10891
    %10909 = vmatprep.subr.bf16.mxu0 0
    %10910 = vmatpush1.bf16.msra.mxu0 %v10893
    %10911 = vmatprep.subr.bf16.mxu0 0
    %10912 = vmatpush1.bf16.msra.mxu0 %v10894
    %10913 = vmatprep.subr.bf16.mxu0 0
    %10914 = vmatpush1.bf16.msra.mxu0 %v10895
    %10915 = vmatprep.subr.bf16.mxu0 0
    %10916 = vmatpush1.bf16.msra.mxu0 %v10896
    %10917 = vmatprep.subr.bf16.mxu0 0
    %10918 = vmatpush1.bf16.msra.mxu0 %v10897
    %10919 = vmatprep.subr.bf16.mxu0 0
    %10920 = vmatpush1.bf16.msra.mxu0 %v10898
    %10921 = vmatprep.subr.bf16.mxu0 0
    %10922 = vmatpush1.bf16.msra.mxu0 %v10899
    %10923 = vmatprep.subr.bf16.mxu0 0
    %10924 = vmatpush1.bf16.msra.mxu0 %v10900
    %10925 = vmatprep.subr.bf16.mxu0 0
    %10926 = vmatpush1.bf16.msra.mxu0 0
    %10927 = vmatprep.subr.bf16.mxu0 0
    %10928 = vmatpush1.bf16.msra.mxu0 0
    %10929 = vmatprep.subr.bf16.mxu0 0
    %10930 = vmatpush1.bf16.msra.mxu0 0
    %10931 = vmatprep.subr.bf16.mxu0 0
    %10932 = vmatpush1.bf16.msra.mxu0 0
    %10933 = vmatprep.subr.bf16.mxu0 0
    %10934 = vmatpush1.bf16.msra.mxu0 0
    %10935 = vmatprep.subr.bf16.mxu0 0
    %10936 = vmatpush1.bf16.msra.mxu0 0
    %10937 = vmatprep.subr.bf16.mxu0 0
    %10938 = vmatpush1.bf16.msra.mxu0 0
    %10939 = vmatprep.subr.bf16.mxu0 0
    %10940 = vmatpush1.bf16.msra.mxu0 0
    %10941 = vmatprep.mubr.bf16.mxu0 0
    %10942 = vmatmul.mubr.bf16.gmra.mrb[0].mxu0 %v10844
    %v10943 = vpop.f32.mrb[0].mxu0
    %v10944 = vadd.f32 0.0, %v10943
    %v10945 = vpop.f32.mrb[0].mxu0
    %v10946 = vpop.f32.mrb[0].mxu0
    %v10947 = vpop.f32.mrb[0].mxu0
    %10948 = vdwg.mxu0
    %10949 = vst [vmem:[#allocation2] sm:$0x3] %v10944
    // Predicated region
    $region42: #{my_model_forward.1} parent=1 // pred_check
      _
    $region43: #{my_model_forward.1} parent=1 // pred_check_branch
      %10951 = sbr.rel (0) target = $region45
    $region44: #{my_model_forward.1} parent=1 // pred_region
      %s10953 = ssub.s32 32, 32
      %10954 = vsyncadd [#allocation3], %s10953
      %s10956 = sshll.u32 [#allocation2], 4
      %s10957 = int_to_ptr.vmem [resolvable:$true] %s10956
      %10959 = dma.vmem_to_hbm [thread:$0]  %s10957, 32, %s10, [#allocation3]
    $region45: #{my_model_forward.1} parent=1 // pred_fallthru
      _
    // Predicated region
    $region46: #{my_model_forward.1} parent=1 // pred_check
      _
    $region47: #{my_model_forward.1} parent=1 // pred_check_branch
      %10961 = sbr.rel (0) target = $region49
    $region48: #{my_model_forward.1} parent=1 // pred_region
      %10962 = dma.done [#allocation3], 32
    $region49: #{my_model_forward.1} parent=1 // pred_fallthru
      _
    %10963 = vsyncpa [#allocation3], 1

</llo_original>
